<compile_context>
chip_gen: v7x
topology: tpu7x:2x2x1
jax: 0.10.0
libtpu: 0.0.40
codegen_flags: <defaults>
</compile_context>

<pallas_src>
import functools

import jax
import jax.numpy as jnp
from jax import lax
from jax.experimental import pallas as pl
from jax.experimental.pallas import tpu as pltpu


def _round_up(x, m):
    return (x + m - 1) // m * m


_NEG = -1e30  # finite "-inf": SiLU outputs are >= -0.279, and a finite sentinel keeps
              # the (discarded) pad rows of the conv2 matmul free of inf/NaN.


# ----------------------------------------------------------------------------
# Fused SPPF kernel (one grid step = one batch image).
# ----------------------------------------------------------------------------
def _sppf_kernel(x_ref, w1_ref, b1_ref, w2_ref, b2_ref, o_ref, pbuf, *, H, W, Wp):
    # x_ref : (1, H*Wp, C1p)   w1_ref: (C1p, C_p)    b1_ref: (1, C_p)
    # w2_ref: (4, C_p, C2p)    b2_ref: (1, C2p)      o_ref : (1, H*Wp, C2p)
    # pbuf  : VMEM scratch (H+4, Wp, C_p) in the compute dtype (= cv2 weight dtype)
    C_p = w1_ref.shape[1]
    cdt = pbuf.dtype
    n_flat = H * Wp

    # ---- conv1 (1x1) + folded-BN bias + SiLU (f32 accumulation on the MXU) ----
    y0 = jnp.dot(x_ref[0], w1_ref[...], preferred_element_type=jnp.float32)
    y0 = y0 + b1_ref[...].astype(jnp.float32)
    y0 = (y0 * jax.nn.sigmoid(y0)).astype(cdt)                     # (H*Wp, C_p)

    # conv2 term 0, interleaved before the pools: keeps the live set to ~one
    # intermediate + acc, and lets MXU pushes overlap the pool's VPU/XLU work.
    acc = jnp.dot(y0, w2_ref[0], preferred_element_type=jnp.float32)

    # ---- one-time -inf framing of the pooling scratch ----
    # 2 border rows top/bottom + the right-hand pad columns.  Interior stores below
    # only touch real columns, so the frame stays -inf for all three pools.
    @pl.when(pl.program_id(0) == 0)
    def _init_frame():
        pbuf[0:2] = jnp.full((2, Wp, C_p), _NEG, cdt)
        pbuf[H + 2:H + 4] = jnp.full((2, Wp, C_p), _NEG, cdt)
        pbuf[2:H + 2, W:Wp, :] = jnp.full((H, Wp - W, C_p), _NEG, cdt)

    # store y0 (real columns only) into the scratch interior
    pbuf[2:H + 2, 0:W, :] = y0.reshape(H, Wp, C_p)[:, 0:W, :]

    def pool5():
        # 5 H taps: aligned major-dim slices of the -inf-framed scratch.
        r = pbuf[0:H]
        for d in range(1, 5):
            r = jnp.maximum(r, pbuf[d:d + H])
        # 5 W taps: XLU sublane rolls on the tile-aligned flat layout; any tap that
        # crosses a row edge lands in a -inf pad column, so no masks are needed.
        rf = r.reshape(n_flat, C_p)
        out = rf
        for d in (1, 2):
            out = jnp.maximum(out, pltpu.roll(rf, n_flat - d, axis=0))   # rf[i + d]
            out = jnp.maximum(out, pltpu.roll(rf, d, axis=0))            # rf[i - d]
        return out                                                        # (H*Wp, C_p)

    # ---- 3 chained pools, each immediately accumulated into conv2 ----
    for i in range(1, 4):
        y = pool5()
        acc = acc + jnp.dot(y, w2_ref[i], preferred_element_type=jnp.float32)
        if i < 3:  # feed the next pool; pad columns / border rows stay -inf
            pbuf[2:H + 2, 0:W, :] = y.reshape(H, Wp, C_p)[:, 0:W, :]

    # ---- conv2 bias + SiLU ----
    acc = acc + b2_ref[...].astype(jnp.float32)
    acc = acc * jax.nn.sigmoid(acc)
    o_ref[0] = acc.astype(o_ref.dtype)


# ----------------------------------------------------------------------------
# Parameter preparation: fold BN into weights, split cv2, pad channels to lanes.
# ----------------------------------------------------------------------------
def fold_bn(gamma, beta, running_mean, running_var, eps=1e-5):
    scale = gamma / jnp.sqrt(running_var + eps)
    return scale, beta - running_mean * scale


def prepare_sppf_params(w1, s1, b1, w2, s2, b2, lane=128, dtype=None):
    """dtype=jnp.bfloat16 selects the fast bf16 MXU path (pools / conv2 LHS run in
    bf16 too).  Leave None (weight dtype) for exact f32.  Biases stay f32."""
    C1, C_ = w1.shape
    C4, C2 = w2.shape
    assert C4 == 4 * C_
    C1p, C_p, C2p = _round_up(C1, lane), _round_up(C_, lane), _round_up(C2, lane)
    wdt = dtype if dtype is not None else w1.dtype

    w1f = (w1 * s1[None, :]).astype(wdt)
    w2f = (w2 * s2[None, :]).astype(wdt).reshape(4, C_, C2)

    w1p = jnp.zeros((C1p, C_p), wdt).at[:C1, :C_].set(w1f)
    w2p = jnp.zeros((4, C_p, C2p), wdt).at[:, :C_, :C2].set(w2f)
    b1p = jnp.zeros((1, C_p), jnp.float32).at[0, :C_].set(b1.astype(jnp.float32))
    b2p = jnp.zeros((1, C2p), jnp.float32).at[0, :C2].set(b2.astype(jnp.float32))
    return {"w1": w1p, "b1": b1p, "w2": w2p, "b2": b2p,
            "c1": C1, "c_": C_, "c2": C2}


def _vmem_limit_bytes():
    try:
        cap = int(pltpu.get_tpu_info().vmem_capacity_bytes)
    except Exception:
        cap = 128 * 1024 * 1024  # v5e/v6e physical; conservative for mock/AOT compile
    return min(cap // 2, 64 * 1024 * 1024)


# ----------------------------------------------------------------------------
# Forward passes
# ----------------------------------------------------------------------------
def sppf_forward_nhwc(x_nhwc, params):
    N, H, W, Cin = x_nhwc.shape
    C1p, C_p = params["w1"].shape
    C2p = params["w2"].shape[2]
    c2 = params["c2"]
    cdt = params["w2"].dtype

    # Pad W so (a) there are >= 2 sentinel columns for the pool's roll taps and
    # (b) the sublane axis of every in-kernel reshape is a multiple of 8.
    Wp = _round_up(W + 2, 8)
    x_nhwc = jnp.pad(x_nhwc, ((0, 0), (0, 0), (0, Wp - W), (0, C1p - Cin)))
    x2 = x_nhwc.reshape(N, H * Wp, C1p)

    kernel = functools.partial(_sppf_kernel, H=H, W=W, Wp=Wp)
    out = pl.pallas_call(
        kernel,
        out_shape=jax.ShapeDtypeStruct((N, H * Wp, C2p), x_nhwc.dtype),
        grid=(N,),
        in_specs=[
            pl.BlockSpec((1, H * Wp, C1p), lambda n: (n, 0, 0)),
            pl.BlockSpec((C1p, C_p), lambda n: (0, 0)),
            pl.BlockSpec((1, C_p), lambda n: (0, 0)),
            pl.BlockSpec((4, C_p, C2p), lambda n: (0, 0, 0)),
            pl.BlockSpec((1, C2p), lambda n: (0, 0)),
        ],
        out_specs=pl.BlockSpec((1, H * Wp, C2p), lambda n: (n, 0, 0)),
        scratch_shapes=[pltpu.VMEM((H + 4, Wp, C_p), cdt)],
        compiler_params=pltpu.CompilerParams(
            dimension_semantics=("parallel",),
            vmem_limit_bytes=_vmem_limit_bytes(),
        ),
    )(x2, params["w1"], params["b1"], params["w2"], params["b2"])
    return out.reshape(N, H, Wp, C2p)[:, :, :W, :c2]


def sppf_forward(x_nchw, params):
    # NCHW wrapper for parity with the PyTorch module; prefer the NHWC entry point —
    # the boundary transposes are pure HBM overhead for this op.
    x = jnp.transpose(x_nchw, (0, 2, 3, 1))
    out = sppf_forward_nhwc(x, params)
    return jnp.transpose(out, (0, 3, 1, 2))


# ----------------------------------------------------------------------------
# Pure-JAX reference (correctness check only), in folded-BN form.
# ----------------------------------------------------------------------------
def _ref_sppf(x_nchw, w1f, b1, w2f, b2):
    x = jnp.transpose(x_nchw, (0, 2, 3, 1))

    def pw(t, w, b):
        y = jnp.einsum("nhwc,cd->nhwd", t, w, precision=lax.Precision.HIGHEST) + b
        return y * jax.nn.sigmoid(y)

    def mp(t):
        return lax.reduce_window(
            t, -jnp.inf, lax.max, (1, 5, 5, 1), (1, 1, 1, 1),
            [(0, 0), (2, 2), (2, 2), (0, 0)])

    y0 = pw(x, w1f, b1)
    y1 = mp(y0); y2 = mp(y1); y3 = mp(y2)
    out = pw(jnp.concatenate([y0, y1, y2, y3], -1), w2f, b2)
    return jnp.transpose(out, (0, 3, 1, 2))


if __name__ == "__main__":
    # SPPF(c1=4, c2=8, k=5); small deterministic shapes.
    N, C1, H, W = 2, 4, 16, 16
    C2 = 8
    C_ = C1 // 2

    key = jax.random.PRNGKey(0)
    ks = jax.random.split(key, 11)
    x = jax.random.normal(ks[0], (N, C1, H, W), jnp.float32)

    # cv1: torch weight (C_, C1, 1, 1) -> matmul form (C1, C_); BN params (C_,)
    w1 = 0.2 * jax.random.normal(ks[1], (C1, C_), jnp.float32)
    g1 = 1.0 + 0.1 * jax.random.normal(ks[2], (C_,), jnp.float32)
    be1 = 0.1 * jax.random.normal(ks[3], (C_,), jnp.float32)
    rm1 = 0.1 * jax.random.normal(ks[4], (C_,), jnp.float32)
    rv1 = 0.5 + jax.random.uniform(ks[5], (C_,), jnp.float32)

    # cv2: torch weight (C2, 4*C_, 1, 1) -> matmul form (4*C_, C2); BN params (C2,)
    w2 = 0.2 * jax.random.normal(ks[6], (4 * C_, C2), jnp.float32)
    g2 = 1.0 + 0.1 * jax.random.normal(ks[7], (C2,), jnp.float32)
    be2 = 0.1 * jax.random.normal(ks[8], (C2,), jnp.float32)
    rm2 = 0.1 * jax.random.normal(ks[9], (C2,), jnp.float32)
    rv2 = 0.5 + jax.random.uniform(ks[10], (C2,), jnp.float32)

    s1, b1 = fold_bn(g1, be1, rm1, rv1)
    s2, b2 = fold_bn(g2, be2, rm2, rv2)
    params = prepare_sppf_params(w1, s1, b1, w2, s2, b2)

    out = jax.block_until_ready(sppf_forward(x, params))
    assert out.shape == (N, C2, H, W), out.shape

    ref = jax.block_until_ready(
        _ref_sppf(x, w1 * s1[None, :], b1, w2 * s2[None, :], b2))
    err = float(jnp.max(jnp.abs(out - ref)))
    assert jnp.allclose(out, ref, atol=5e-3, rtol=5e-3), f"mismatch vs reference: {err}"

    print("KERNEL_OK")
</pallas_src>

<mosaic_0001>
module attributes {stable_mosaic.version = 11 : i64} {
  func.func @_sppf_kernel(%arg0: i32, %arg1: memref<1x384x128xf32, #tpu.memory_space<vmem>>, %arg2: memref<128x128xf32, #tpu.memory_space<vmem>>, %arg3: memref<1x128xf32, #tpu.memory_space<vmem>>, %arg4: memref<4x128x128xf32, #tpu.memory_space<vmem>>, %arg5: memref<1x128xf32, #tpu.memory_space<vmem>>, %arg6: memref<1x384x128xf32, #tpu.memory_space<vmem>>, %arg7: memref<20x24x128xf32, #tpu.memory_space<vmem>>) attributes {dimension_semantics = [#tpu.dimension_semantics<parallel>], iteration_bounds = array<i64: 2>, scalar_prefetch = 0 : i64, scratch_operands = 1 : i64, tpu.core_type = #tpu.core_type<tc>, window_params = [{transform_indices = @transform_0, window_bounds = array<i64: 1, 384, 128>}, {pipeline_mode = #tpu.pipeline_mode<synchronous>, transform_indices = @transform_1, window_bounds = array<i64: 128, 128>}, {pipeline_mode = #tpu.pipeline_mode<synchronous>, transform_indices = @transform_2, window_bounds = array<i64: 1, 128>}, {pipeline_mode = #tpu.pipeline_mode<synchronous>, transform_indices = @transform_3, window_bounds = array<i64: 4, 128, 128>}, {pipeline_mode = #tpu.pipeline_mode<synchronous>, transform_indices = @transform_4, window_bounds = array<i64: 1, 128>}, {transform_indices = @transform_5, window_bounds = array<i64: 1, 384, 128>}]} {
    %c0 = arith.constant 0 : index
    %c0_0 = arith.constant 0 : index
    %c0_1 = arith.constant 0 : index
    %0 = vector.load %arg1[%c0, %c0_0, %c0_1] : memref<1x384x128xf32, #tpu.memory_space<vmem>>, vector<1x384x128xf32>
    %1 = vector.shape_cast %0 : vector<1x384x128xf32> to vector<384x128xf32>
    %c0_2 = arith.constant 0 : index
    %c0_3 = arith.constant 0 : index
    %2 = vector.load %arg2[%c0_2, %c0_3] : memref<128x128xf32, #tpu.memory_space<vmem>>, vector<128x128xf32>
    %cst = arith.constant dense<0.000000e+00> : vector<384x128xf32>
    %3 = tpu.matmul %1, %2, %cst {dimension_numbers = #tpu.dot_dimension_numbers<[1], [0], [0], [1], [0, 0, 1, 1], [], []>} : vector<384x128xf32>, vector<128x128xf32>, vector<384x128xf32> -> vector<384x128xf32>
    %c0_4 = arith.constant 0 : index
    %c0_5 = arith.constant 0 : index
    %4 = vector.load %arg3[%c0_4, %c0_5] : memref<1x128xf32, #tpu.memory_space<vmem>>, vector<1x128xf32>
    %5 = vector.broadcast %4 : vector<1x128xf32> to vector<384x128xf32>
    %6 = arith.addf %3, %5 : vector<384x128xf32>
    %7 = arith.negf %6 : vector<384x128xf32>
    %8 = math.exp %7 : vector<384x128xf32>
    %cst_6 = arith.constant 1.000000e+00 : f32
    %9 = vector.broadcast %cst_6 : f32 to vector<384x128xf32>
    %10 = arith.addf %9, %8 : vector<384x128xf32>
    %11 = arith.divf %9, %10 : vector<384x128xf32>
    %12 = arith.mulf %6, %11 : vector<384x128xf32>
    %c0_7 = arith.constant 0 : index
    %c0_8 = arith.constant 0 : index
    %c0_9 = arith.constant 0 : index
    %13 = vector.load %arg4[%c0_7, %c0_8, %c0_9] : memref<4x128x128xf32, #tpu.memory_space<vmem>>, vector<1x128x128xf32>
    %14 = vector.shape_cast %13 : vector<1x128x128xf32> to vector<128x128xf32>
    %cst_10 = arith.constant dense<0.000000e+00> : vector<384x128xf32>
    %15 = tpu.matmul %12, %14, %cst_10 {dimension_numbers = #tpu.dot_dimension_numbers<[1], [0], [0], [1], [0, 0, 1, 1], [], []>} : vector<384x128xf32>, vector<128x128xf32>, vector<384x128xf32> -> vector<384x128xf32>
    %c0_i32 = arith.constant 0 : i32
    %16 = arith.cmpi eq, %arg0, %c0_i32 : i32
    %17 = arith.extui %16 : i1 to i32
    %c0_i32_11 = arith.constant 0 : i32
    %18 = arith.cmpi ne, %17, %c0_i32_11 : i32
    scf.if %18 {
      %cst_88 = arith.constant -1.000000e+30 : f32
      %106 = vector.broadcast %cst_88 : f32 to vector<2x24x128xf32>
      %c0_89 = arith.constant 0 : index
      %c0_90 = arith.constant 0 : index
      %c0_91 = arith.constant 0 : index
      %107 = vector.load %arg7[%c0_89, %c0_90, %c0_91] : memref<20x24x128xf32, #tpu.memory_space<vmem>>, vector<2x24x128xf32>
      tpu.vector_store %arg7[%c0_89, %c0_90, %c0_91], %106 {strides = array<i32>} : memref<20x24x128xf32, #tpu.memory_space<vmem>>, vector<2x24x128xf32>,
      %cst_92 = arith.constant -1.000000e+30 : f32
      %108 = vector.broadcast %cst_92 : f32 to vector<2x24x128xf32>
      %c18 = arith.constant 18 : index
      %c0_93 = arith.constant 0 : index
      %c0_94 = arith.constant 0 : index
      %109 = vector.load %arg7[%c18, %c0_93, %c0_94] : memref<20x24x128xf32, #tpu.memory_space<vmem>>, vector<2x24x128xf32>
      tpu.vector_store %arg7[%c18, %c0_93, %c0_94], %108 {strides = array<i32>} : memref<20x24x128xf32, #tpu.memory_space<vmem>>, vector<2x24x128xf32>,
      %cst_95 = arith.constant -1.000000e+30 : f32
      %110 = vector.broadcast %cst_95 : f32 to vector<16x8x128xf32>
      %c2_96 = arith.constant 2 : index
      %c16 = arith.constant 16 : index
      %c0_97 = arith.constant 0 : index
      %111 = vector.load %arg7[%c2_96, %c16, %c0_97] : memref<20x24x128xf32, #tpu.memory_space<vmem>>, vector<16x8x128xf32>
      tpu.vector_store %arg7[%c2_96, %c16, %c0_97], %110 {strides = array<i32>} : memref<20x24x128xf32, #tpu.memory_space<vmem>>, vector<16x8x128xf32>,
    } else {
    }
    %19 = vector.shape_cast %12 : vector<384x128xf32> to vector<16x24x128xf32>
    %20 = vector.extract_strided_slice %19 {offsets = [0, 0, 0], sizes = [16, 16, 128], strides = [1, 1, 1]} : vector<16x24x128xf32> to vector<16x16x128xf32>
    %c2 = arith.constant 2 : index
    %c0_12 = arith.constant 0 : index
    %c0_13 = arith.constant 0 : index
    %21 = vector.load %arg7[%c2, %c0_12, %c0_13] : memref<20x24x128xf32, #tpu.memory_space<vmem>>, vector<16x16x128xf32>
    tpu.vector_store %arg7[%c2, %c0_12, %c0_13], %20 {strides = array<i32>} : memref<20x24x128xf32, #tpu.memory_space<vmem>>, vector<16x16x128xf32>,
    %c0_14 = arith.constant 0 : index
    %c0_15 = arith.constant 0 : index
    %c0_16 = arith.constant 0 : index
    %22 = vector.load %arg7[%c0_14, %c0_15, %c0_16] : memref<20x24x128xf32, #tpu.memory_space<vmem>>, vector<16x24x128xf32>
    %c1 = arith.constant 1 : index
    %c0_17 = arith.constant 0 : index
    %c0_18 = arith.constant 0 : index
    %23 = vector.load %arg7[%c1, %c0_17, %c0_18] : memref<20x24x128xf32, #tpu.memory_space<vmem>>, vector<16x24x128xf32>
    %24 = arith.maximumf %22, %23 : vector<16x24x128xf32>
    %c2_19 = arith.constant 2 : index
    %c0_20 = arith.constant 0 : index
    %c0_21 = arith.constant 0 : index
    %25 = vector.load %arg7[%c2_19, %c0_20, %c0_21] : memref<20x24x128xf32, #tpu.memory_space<vmem>>, vector<16x24x128xf32>
    %26 = arith.maximumf %24, %25 : vector<16x24x128xf32>
    %c3 = arith.constant 3 : index
    %c0_22 = arith.constant 0 : index
    %c0_23 = arith.constant 0 : index
    %27 = vector.load %arg7[%c3, %c0_22, %c0_23] : memref<20x24x128xf32, #tpu.memory_space<vmem>>, vector<16x24x128xf32>
    %28 = arith.maximumf %26, %27 : vector<16x24x128xf32>
    %c4 = arith.constant 4 : index
    %c0_24 = arith.constant 0 : index
    %c0_25 = arith.constant 0 : index
    %29 = vector.load %arg7[%c4, %c0_24, %c0_25] : memref<20x24x128xf32, #tpu.memory_space<vmem>>, vector<16x24x128xf32>
    %30 = arith.maximumf %28, %29 : vector<16x24x128xf32>
    %31 = vector.shape_cast %30 : vector<16x24x128xf32> to vector<384x128xf32>
    %c383_i32 = arith.constant 383 : i32
    %32 = tpu.dynamic_rotate %31 by %c383_i32 dim 0 : vector<384x128xf32>, i32 -> vector<384x128xf32>
    %33 = arith.maximumf %31, %32 : vector<384x128xf32>
    %c1_i32 = arith.constant 1 : i32
    %34 = tpu.dynamic_rotate %31 by %c1_i32 dim 0 : vector<384x128xf32>, i32 -> vector<384x128xf32>
    %35 = arith.maximumf %33, %34 : vector<384x128xf32>
    %c382_i32 = arith.constant 382 : i32
    %36 = tpu.dynamic_rotate %31 by %c382_i32 dim 0 : vector<384x128xf32>, i32 -> vector<384x128xf32>
    %37 = arith.maximumf %35, %36 : vector<384x128xf32>
    %c2_i32 = arith.constant 2 : i32
    %38 = tpu.dynamic_rotate %31 by %c2_i32 dim 0 : vector<384x128xf32>, i32 -> vector<384x128xf32>
    %39 = arith.maximumf %37, %38 : vector<384x128xf32>
    %c1_26 = arith.constant 1 : index
    %c0_27 = arith.constant 0 : index
    %c0_28 = arith.constant 0 : index
    %40 = vector.load %arg4[%c1_26, %c0_27, %c0_28] : memref<4x128x128xf32, #tpu.memory_space<vmem>>, vector<1x128x128xf32>
    %41 = vector.shape_cast %40 : vector<1x128x128xf32> to vector<128x128xf32>
    %cst_29 = arith.constant dense<0.000000e+00> : vector<384x128xf32>
    %42 = tpu.matmul %39, %41, %cst_29 {dimension_numbers = #tpu.dot_dimension_numbers<[1], [0], [0], [1], [0, 0, 1, 1], [], []>} : vector<384x128xf32>, vector<128x128xf32>, vector<384x128xf32> -> vector<384x128xf32>
    %43 = arith.addf %15, %42 : vector<384x128xf32>
    %44 = vector.shape_cast %39 : vector<384x128xf32> to vector<16x24x128xf32>
    %45 = vector.extract_strided_slice %44 {offsets = [0, 0, 0], sizes = [16, 16, 128], strides = [1, 1, 1]} : vector<16x24x128xf32> to vector<16x16x128xf32>
    %c2_30 = arith.constant 2 : index
    %c0_31 = arith.constant 0 : index
    %c0_32 = arith.constant 0 : index
    %46 = vector.load %arg7[%c2_30, %c0_31, %c0_32] : memref<20x24x128xf32, #tpu.memory_space<vmem>>, vector<16x16x128xf32>
    tpu.vector_store %arg7[%c2_30, %c0_31, %c0_32], %45 {strides = array<i32>} : memref<20x24x128xf32, #tpu.memory_space<vmem>>, vector<16x16x128xf32>,
    %c0_33 = arith.constant 0 : index
    %c0_34 = arith.constant 0 : index
    %c0_35 = arith.constant 0 : index
    %47 = vector.load %arg7[%c0_33, %c0_34, %c0_35] : memref<20x24x128xf32, #tpu.memory_space<vmem>>, vector<16x24x128xf32>
    %c1_36 = arith.constant 1 : index
    %c0_37 = arith.constant 0 : index
    %c0_38 = arith.constant 0 : index
    %48 = vector.load %arg7[%c1_36, %c0_37, %c0_38] : memref<20x24x128xf32, #tpu.memory_space<vmem>>, vector<16x24x128xf32>
    %49 = arith.maximumf %47, %48 : vector<16x24x128xf32>
    %c2_39 = arith.constant 2 : index
    %c0_40 = arith.constant 0 : index
    %c0_41 = arith.constant 0 : index
    %50 = vector.load %arg7[%c2_39, %c0_40, %c0_41] : memref<20x24x128xf32, #tpu.memory_space<vmem>>, vector<16x24x128xf32>
    %51 = arith.maximumf %49, %50 : vector<16x24x128xf32>
    %c3_42 = arith.constant 3 : index
    %c0_43 = arith.constant 0 : index
    %c0_44 = arith.constant 0 : index
    %52 = vector.load %arg7[%c3_42, %c0_43, %c0_44] : memref<20x24x128xf32, #tpu.memory_space<vmem>>, vector<16x24x128xf32>
    %53 = arith.maximumf %51, %52 : vector<16x24x128xf32>
    %c4_45 = arith.constant 4 : index
    %c0_46 = arith.constant 0 : index
    %c0_47 = arith.constant 0 : index
    %54 = vector.load %arg7[%c4_45, %c0_46, %c0_47] : memref<20x24x128xf32, #tpu.memory_space<vmem>>, vector<16x24x128xf32>
    %55 = arith.maximumf %53, %54 : vector<16x24x128xf32>
    %56 = vector.shape_cast %55 : vector<16x24x128xf32> to vector<384x128xf32>
    %c383_i32_48 = arith.constant 383 : i32
    %57 = tpu.dynamic_rotate %56 by %c383_i32_48 dim 0 : vector<384x128xf32>, i32 -> vector<384x128xf32>
    %58 = arith.maximumf %56, %57 : vector<384x128xf32>
    %c1_i32_49 = arith.constant 1 : i32
    %59 = tpu.dynamic_rotate %56 by %c1_i32_49 dim 0 : vector<384x128xf32>, i32 -> vector<384x128xf32>
    %60 = arith.maximumf %58, %59 : vector<384x128xf32>
    %c382_i32_50 = arith.constant 382 : i32
    %61 = tpu.dynamic_rotate %56 by %c382_i32_50 dim 0 : vector<384x128xf32>, i32 -> vector<384x128xf32>
    %62 = arith.maximumf %60, %61 : vector<384x128xf32>
    %c2_i32_51 = arith.constant 2 : i32
    %63 = tpu.dynamic_rotate %56 by %c2_i32_51 dim 0 : vector<384x128xf32>, i32 -> vector<384x128xf32>
    %64 = arith.maximumf %62, %63 : vector<384x128xf32>
    %c2_52 = arith.constant 2 : index
    %c0_53 = arith.constant 0 : index
    %c0_54 = arith.constant 0 : index
    %65 = vector.load %arg4[%c2_52, %c0_53, %c0_54] : memref<4x128x128xf32, #tpu.memory_space<vmem>>, vector<1x128x128xf32>
    %66 = vector.shape_cast %65 : vector<1x128x128xf32> to vector<128x128xf32>
    %cst_55 = arith.constant dense<0.000000e+00> : vector<384x128xf32>
    %67 = tpu.matmul %64, %66, %cst_55 {dimension_numbers = #tpu.dot_dimension_numbers<[1], [0], [0], [1], [0, 0, 1, 1], [], []>} : vector<384x128xf32>, vector<128x128xf32>, vector<384x128xf32> -> vector<384x128xf32>
    %68 = arith.addf %43, %67 : vector<384x128xf32>
    %69 = vector.shape_cast %64 : vector<384x128xf32> to vector<16x24x128xf32>
    %70 = vector.extract_strided_slice %69 {offsets = [0, 0, 0], sizes = [16, 16, 128], strides = [1, 1, 1]} : vector<16x24x128xf32> to vector<16x16x128xf32>
    %c2_56 = arith.constant 2 : index
    %c0_57 = arith.constant 0 : index
    %c0_58 = arith.constant 0 : index
    %71 = vector.load %arg7[%c2_56, %c0_57, %c0_58] : memref<20x24x128xf32, #tpu.memory_space<vmem>>, vector<16x16x128xf32>
    tpu.vector_store %arg7[%c2_56, %c0_57, %c0_58], %70 {strides = array<i32>} : memref<20x24x128xf32, #tpu.memory_space<vmem>>, vector<16x16x128xf32>,
    %c0_59 = arith.constant 0 : index
    %c0_60 = arith.constant 0 : index
    %c0_61 = arith.constant 0 : index
    %72 = vector.load %arg7[%c0_59, %c0_60, %c0_61] : memref<20x24x128xf32, #tpu.memory_space<vmem>>, vector<16x24x128xf32>
    %c1_62 = arith.constant 1 : index
    %c0_63 = arith.constant 0 : index
    %c0_64 = arith.constant 0 : index
    %73 = vector.load %arg7[%c1_62, %c0_63, %c0_64] : memref<20x24x128xf32, #tpu.memory_space<vmem>>, vector<16x24x128xf32>
    %74 = arith.maximumf %72, %73 : vector<16x24x128xf32>
    %c2_65 = arith.constant 2 : index
    %c0_66 = arith.constant 0 : index
    %c0_67 = arith.constant 0 : index
    %75 = vector.load %arg7[%c2_65, %c0_66, %c0_67] : memref<20x24x128xf32, #tpu.memory_space<vmem>>, vector<16x24x128xf32>
    %76 = arith.maximumf %74, %75 : vector<16x24x128xf32>
    %c3_68 = arith.constant 3 : index
    %c0_69 = arith.constant 0 : index
    %c0_70 = arith.constant 0 : index
    %77 = vector.load %arg7[%c3_68, %c0_69, %c0_70] : memref<20x24x128xf32, #tpu.memory_space<vmem>>, vector<16x24x128xf32>
    %78 = arith.maximumf %76, %77 : vector<16x24x128xf32>
    %c4_71 = arith.constant 4 : index
    %c0_72 = arith.constant 0 : index
    %c0_73 = arith.constant 0 : index
    %79 = vector.load %arg7[%c4_71, %c0_72, %c0_73] : memref<20x24x128xf32, #tpu.memory_space<vmem>>, vector<16x24x128xf32>
    %80 = arith.maximumf %78, %79 : vector<16x24x128xf32>
    %81 = vector.shape_cast %80 : vector<16x24x128xf32> to vector<384x128xf32>
    %c383_i32_74 = arith.constant 383 : i32
    %82 = tpu.dynamic_rotate %81 by %c383_i32_74 dim 0 : vector<384x128xf32>, i32 -> vector<384x128xf32>
    %83 = arith.maximumf %81, %82 : vector<384x128xf32>
    %c1_i32_75 = arith.constant 1 : i32
    %84 = tpu.dynamic_rotate %81 by %c1_i32_75 dim 0 : vector<384x128xf32>, i32 -> vector<384x128xf32>
    %85 = arith.maximumf %83, %84 : vector<384x128xf32>
    %c382_i32_76 = arith.constant 382 : i32
    %86 = tpu.dynamic_rotate %81 by %c382_i32_76 dim 0 : vector<384x128xf32>, i32 -> vector<384x128xf32>
    %87 = arith.maximumf %85, %86 : vector<384x128xf32>
    %c2_i32_77 = arith.constant 2 : i32
    %88 = tpu.dynamic_rotate %81 by %c2_i32_77 dim 0 : vector<384x128xf32>, i32 -> vector<384x128xf32>
    %89 = arith.maximumf %87, %88 : vector<384x128xf32>
    %c3_78 = arith.constant 3 : index
    %c0_79 = arith.constant 0 : index
    %c0_80 = arith.constant 0 : index
    %90 = vector.load %arg4[%c3_78, %c0_79, %c0_80] : memref<4x128x128xf32, #tpu.memory_space<vmem>>, vector<1x128x128xf32>
    %91 = vector.shape_cast %90 : vector<1x128x128xf32> to vector<128x128xf32>
    %cst_81 = arith.constant dense<0.000000e+00> : vector<384x128xf32>
    %92 = tpu.matmul %89, %91, %cst_81 {dimension_numbers = #tpu.dot_dimension_numbers<[1], [0], [0], [1], [0, 0, 1, 1], [], []>} : vector<384x128xf32>, vector<128x128xf32>, vector<384x128xf32> -> vector<384x128xf32>
    %93 = arith.addf %68, %92 : vector<384x128xf32>
    %c0_82 = arith.constant 0 : index
    %c0_83 = arith.constant 0 : index
    %94 = vector.load %arg5[%c0_82, %c0_83] : memref<1x128xf32, #tpu.memory_space<vmem>>, vector<1x128xf32>
    %95 = vector.broadcast %94 : vector<1x128xf32> to vector<384x128xf32>
    %96 = arith.addf %93, %95 : vector<384x128xf32>
    %97 = arith.negf %96 : vector<384x128xf32>
    %98 = math.exp %97 : vector<384x128xf32>
    %cst_84 = arith.constant 1.000000e+00 : f32
    %99 = vector.broadcast %cst_84 : f32 to vector<384x128xf32>
    %100 = arith.addf %99, %98 : vector<384x128xf32>
    %101 = arith.divf %99, %100 : vector<384x128xf32>
    %102 = arith.mulf %96, %101 : vector<384x128xf32>
    %c0_85 = arith.constant 0 : index
    %c0_86 = arith.constant 0 : index
    %c0_87 = arith.constant 0 : index
    %103 = vector.load %arg6[%c0_85, %c0_86, %c0_87] : memref<1x384x128xf32, #tpu.memory_space<vmem>>, vector<1x384x128xf32>
    %104 = vector.shape_cast %103 : vector<1x384x128xf32> to vector<384x128xf32>
    %105 = vector.shape_cast %102 : vector<384x128xf32> to vector<1x384x128xf32>
    tpu.vector_store %arg6[%c0_85, %c0_86, %c0_87], %105 {strides = array<i32>} : memref<1x384x128xf32, #tpu.memory_space<vmem>>, vector<1x384x128xf32>,
    return
  }
  func.func @transform_0(%arg0: i32) -> (i32, i32, i32) {
    %c0_i32 = arith.constant 0 : i32
    %c0_i32_0 = arith.constant 0 : i32
    %c0_i32_1 = arith.constant 0 : i32
    return %arg0, %c0_i32, %c0_i32_0 : i32, i32, i32
  }
  func.func @transform_1(%arg0: i32) -> (i32, i32) {
    %c0_i32 = arith.constant 0 : i32
    %c0_i32_0 = arith.constant 0 : i32
    %c0_i32_1 = arith.constant 0 : i32
    return %c0_i32, %c0_i32_0 : i32, i32
  }
  func.func @transform_2(%arg0: i32) -> (i32, i32) {
    %c0_i32 = arith.constant 0 : i32
    %c0_i32_0 = arith.constant 0 : i32
    %c0_i32_1 = arith.constant 0 : i32
    return %c0_i32, %c0_i32_0 : i32, i32
  }
  func.func @transform_3(%arg0: i32) -> (i32, i32, i32) {
    %c0_i32 = arith.constant 0 : i32
    %c0_i32_0 = arith.constant 0 : i32
    %c0_i32_1 = arith.constant 0 : i32
    %c0_i32_2 = arith.constant 0 : i32
    return %c0_i32, %c0_i32_0, %c0_i32_1 : i32, i32, i32
  }
  func.func @transform_4(%arg0: i32) -> (i32, i32) {
    %c0_i32 = arith.constant 0 : i32
    %c0_i32_0 = arith.constant 0 : i32
    %c0_i32_1 = arith.constant 0 : i32
    return %c0_i32, %c0_i32_0 : i32, i32
  }
  func.func @transform_5(%arg0: i32) -> (i32, i32, i32) {
    %c0_i32 = arith.constant 0 : i32
    %c0_i32_0 = arith.constant 0 : i32
    %c0_i32_1 = arith.constant 0 : i32
    return %arg0, %c0_i32, %c0_i32_0 : i32, i32, i32
  }
}

</mosaic_0001>

<llo_original>
// kernel: tpu_custom_call.1
$region0: #{tpu_custom_call.1}
  #allocation0 [shape = 'u32[]', space=smem, size = 0x4, offset = 0x4, fixed_abs, tag = 'smem constant byte address 0x4 - core index']
  #allocation1 [shape = 'u32[144,128]{1,0:T(1,128)}', space=vmem, size = 0x12000, scoped, tag = 'internal scratch']
  #allocation2 [shape = 'f32[20,24,128]{2,1,0:T(8,128)}', space=vmem, size = 0x3c000, scoped, tag = 'scratch operand']
  %s0 = inlined_call_operand.hbm [shape: f32[2,384,128], index: 0, kind: input, shape index: {}]
  %s1 = inlined_call_operand.hbm [shape: f32[128,128], index: 1, kind: input, shape index: {}]
  %s2 = inlined_call_operand.hbm [shape: f32[1,128], index: 2, kind: input, shape index: {}]
  %s3 = inlined_call_operand.hbm [shape: f32[4,128,128], index: 3, kind: input, shape index: {}]
  %s4 = inlined_call_operand.hbm [shape: f32[1,128], index: 4, kind: input, shape index: {}]
  %s5 = inlined_call_operand.hbm [shape: f32[2,384,128], index: 5, kind: output, shape index: {}]
  %s6 = sld [smem:[#allocation0]]
  $region77: #{tpu_custom_call.1} parent=0
    _
  %s8 = ssub.s32 1, %s6
  %s9 = scalar_select 0, %s8, %s6
  $region1: #{tpu_custom_call.1} parent=0
    #allocation3 [shape = 'u8[393216]{0}', space=vmem, size = 0x60000, scoped, tag = 'input window, operand 0']
    #allocation4 [shape = 's32[2]{0}', space=sflag, size = 0x8, scoped, tag = 'scoped memory for tpu_custom_call.1']
    #allocation5 [shape = 's32[2]{0}', space=sflag, size = 0x8, scoped, tag = 'scoped memory for tpu_custom_call.1']
    #allocation6 [shape = 'u8[65536]{0}', space=vmem, size = 0x10000, scoped, tag = 'input window, operand 1, single buffered']
    #allocation7 [shape = 's32[1]{0}', space=sflag, size = 0x4, scoped, tag = 'scoped memory for tpu_custom_call.1']
    #allocation8 [shape = 'u8[512]{0}', space=vmem, size = 0x400, scoped, tag = 'input window, operand 2, single buffered']
    #allocation9 [shape = 'u8[262144]{0}', space=vmem, size = 0x40000, scoped, tag = 'input window, operand 3, single buffered']
    #allocation10 [shape = 's32[1]{0}', space=sflag, size = 0x4, scoped, tag = 'scoped memory for tpu_custom_call.1']
    #allocation11 [shape = 'u8[512]{0}', space=vmem, size = 0x400, scoped, tag = 'input window, operand 4, single buffered']
    #allocation12 [shape = 'u8[393216]{0}', space=vmem, size = 0x60000, scoped, tag = 'output window, operand 0']
    %10 = vsyncpa [#allocation4], 0
    %s11 = scalar_lea.sflag [#allocation4], 1
    %12 = vsyncpa %s11, 0
    %13 = vsyncpa [#allocation7], 0
    %14 = vsyncpa [#allocation10], 0
    %15 = vsyncpa [#allocation5], 0
    %s16 = scalar_lea.sflag [#allocation5], 1
    %17 = vsyncpa %s16, 0
    loop: start=0, step=1, limit=4
    $region2: #{tpu_custom_call.1} parent=1 // loop_pre_header
      _
    $region3: #{tpu_custom_call.1} parent=1 // loop_header
      %s19 = sphi 0, %s23
      %p20 = scmp.ge.s32.totalorder %s19, 4
      %s29 = sphi 0, %s31
      %s32 = sphi 0, %s29
      %s33 = sphi 0, %s32
      %s49 = sphi 0, %s33
      %s53 = sphi 0, %s53
      %s55 = sphi 0, %s53
      %s56 = sphi 0, %s55
      %s70 = sphi 0, %s56
      %s74 = sphi 0, %s74
      %s76 = sphi 0, %s74
      %s77 = sphi 0, %s76
      %s91 = sphi 0, %s77
      %s95 = sphi 0, %s95
      %s97 = sphi 0, %s95
      %s98 = sphi 0, %s97
      %s112 = sphi 0, %s98
      %s116 = sphi 0, %s116
      %s118 = sphi 0, %s116
      %s119 = sphi 0, %s118
      %s133 = sphi 0, %s119
      %s139 = sphi 0, %s141
      %s142 = sphi 0, %s139
      %s143 = sphi 0, %s142
      %s159 = sphi 0, %s143
    $region4: #{tpu_custom_call.1} parent=1 // loop_header_branch
      %22 = sbr.rel (%p20) target = $region8
    $region5: #{tpu_custom_call.1} parent=1 // loop_body
      %s24 = ssub.s32 %s19, 1
      %s25 = ssub.s32 %s19, 2
      %s26 = sadd.s32 %s19, 1
      %s27 = ssub.s32 %s19, %s26
      %p28 = scmp.eq.s32.totalorder %s27, 0
      %s30 = sadd.s32 %s29, 1
      %s31 = scalar_select %p28, %s29, %s30
      %p34 = pneg %p28
      %p35 = scmp.eq.s32.totalorder %s19, 1
      %p36 = por %p34, %p35
      %p37 = scmp.ne.s32.totalorder %s29, %s32
      %p38 = scmp.eq.s32.totalorder %s19, 0
      %p39 = por %p37, %p38
      %p40 = scmp.ne.s32.totalorder %s29, %s32
      %p41 = scmp.eq.s32.totalorder %s24, 1
      %p42 = por %p40, %p41
      %p43 = scmp.ne.s32.totalorder %s32, %s33
      %p44 = scmp.eq.s32.totalorder %s24, 0
      %p45 = por %p43, %p44
      %p46 = scmp.ne.s32.totalorder %s32, %s33
      %p47 = scmp.eq.s32.totalorder %s25, 1
      %p48 = por %p46, %p47
      %p50 = scmp.ne.s32.totalorder %s33, %s49
      %p51 = scmp.eq.s32.totalorder %s25, 0
      %p52 = por %p50, %p51
      %s54 = sadd.s32 %s53, 1
      %p57 = scmp.eq.s32.totalorder %s19, 1
      %p58 = scmp.ne.s32.totalorder %s53, %s55
      %p59 = scmp.eq.s32.totalorder %s19, 0
      %p60 = por %p58, %p59
      %p61 = scmp.ne.s32.totalorder %s53, %s55
      %p62 = scmp.eq.s32.totalorder %s24, 1
      %p63 = por %p61, %p62
      %p64 = scmp.ne.s32.totalorder %s55, %s56
      %p65 = scmp.eq.s32.totalorder %s24, 0
      %p66 = por %p64, %p65
      %p67 = scmp.ne.s32.totalorder %s55, %s56
      %p68 = scmp.eq.s32.totalorder %s25, 1
      %p69 = por %p67, %p68
      %p71 = scmp.ne.s32.totalorder %s56, %s70
      %p72 = scmp.eq.s32.totalorder %s25, 0
      %p73 = por %p71, %p72
      %s75 = sadd.s32 %s74, 1
      %p78 = scmp.eq.s32.totalorder %s19, 1
      %p79 = scmp.ne.s32.totalorder %s74, %s76
      %p80 = scmp.eq.s32.totalorder %s19, 0
      %p81 = por %p79, %p80
      %p82 = scmp.ne.s32.totalorder %s74, %s76
      %p83 = scmp.eq.s32.totalorder %s24, 1
      %p84 = por %p82, %p83
      %p85 = scmp.ne.s32.totalorder %s76, %s77
      %p86 = scmp.eq.s32.totalorder %s24, 0
      %p87 = por %p85, %p86
      %p88 = scmp.ne.s32.totalorder %s76, %s77
      %p89 = scmp.eq.s32.totalorder %s25, 1
      %p90 = por %p88, %p89
      %p92 = scmp.ne.s32.totalorder %s77, %s91
      %p93 = scmp.eq.s32.totalorder %s25, 0
      %p94 = por %p92, %p93
      %s96 = sadd.s32 %s95, 1
      %p99 = scmp.eq.s32.totalorder %s19, 1
      %p100 = scmp.ne.s32.totalorder %s95, %s97
      %p101 = scmp.eq.s32.totalorder %s19, 0
      %p102 = por %p100, %p101
      %p103 = scmp.ne.s32.totalorder %s95, %s97
      %p104 = scmp.eq.s32.totalorder %s24, 1
      %p105 = por %p103, %p104
      %p106 = scmp.ne.s32.totalorder %s97, %s98
      %p107 = scmp.eq.s32.totalorder %s24, 0
      %p108 = por %p106, %p107
      %p109 = scmp.ne.s32.totalorder %s97, %s98
      %p110 = scmp.eq.s32.totalorder %s25, 1
      %p111 = por %p109, %p110
      %p113 = scmp.ne.s32.totalorder %s98, %s112
      %p114 = scmp.eq.s32.totalorder %s25, 0
      %p115 = por %p113, %p114
      %s117 = sadd.s32 %s116, 1
      %p120 = scmp.eq.s32.totalorder %s19, 1
      %p121 = scmp.ne.s32.totalorder %s116, %s118
      %p122 = scmp.eq.s32.totalorder %s19, 0
      %p123 = por %p121, %p122
      %p124 = scmp.ne.s32.totalorder %s116, %s118
      %p125 = scmp.eq.s32.totalorder %s24, 1
      %p126 = por %p124, %p125
      %p127 = scmp.ne.s32.totalorder %s118, %s119
      %p128 = scmp.eq.s32.totalorder %s24, 0
      %p129 = por %p127, %p128
      %p130 = scmp.ne.s32.totalorder %s118, %s119
      %p131 = scmp.eq.s32.totalorder %s25, 1
      %p132 = por %p130, %p131
      %p134 = scmp.ne.s32.totalorder %s119, %s133
      %p135 = scmp.eq.s32.totalorder %s25, 0
      %p136 = por %p134, %p135
      %s137 = ssub.s32 %s19, %s26
      %p138 = scmp.eq.s32.totalorder %s137, 0
      %s140 = sadd.s32 %s139, 1
      %s141 = scalar_select %p138, %s139, %s140
      %p144 = pneg %p138
      %p145 = scmp.eq.s32.totalorder %s19, 1
      %p146 = por %p144, %p145
      %p147 = scmp.ne.s32.totalorder %s139, %s142
      %p148 = scmp.eq.s32.totalorder %s19, 0
      %p149 = por %p147, %p148
      %p150 = scmp.ne.s32.totalorder %s139, %s142
      %p151 = scmp.eq.s32.totalorder %s24, 1
      %p152 = por %p150, %p151
      %p153 = scmp.ne.s32.totalorder %s142, %s143
      %p154 = scmp.eq.s32.totalorder %s24, 0
      %p155 = por %p153, %p154
      %p156 = scmp.ne.s32.totalorder %s142, %s143
      %p157 = scmp.eq.s32.totalorder %s25, 1
      %p158 = por %p156, %p157
      %p160 = scmp.ne.s32.totalorder %s143, %s159
      %p161 = scmp.eq.s32.totalorder %s25, 0
      %p162 = por %p160, %p161
      %p163 = scmp.le.s32.totalorder 1, %s19
      %p164 = scmp.lt.s32.totalorder %s19, 3
      %p165 = pnand %p163, %p164
      %p166 = pneg %p165
      // Predicated region
      $region9: #{tpu_custom_call.1} parent=5 // pred_check
        _
      $region10: #{tpu_custom_call.1} parent=5 // pred_check_branch
        %168 = sbr.rel (%p165) target = $region12
      $region11: #{tpu_custom_call.1} parent=5 // pred_region
        %s169 = ssub.s32 %s19, 1
        // Predicated region
        $region13: #{tpu_custom_call.1} parent=11 // pred_check
          %p170 = pneg %p66
        $region14: #{tpu_custom_call.1} parent=11 // pred_check_branch
          %172 = sbr.rel (%p170) target = $region16
        $region15: #{tpu_custom_call.1} parent=11 // pred_region
          %s174 = ssub.s32 2048, 2048
          %175 = vsyncadd [#allocation7], %s174
          %s176 = sshll.u32 [#allocation6], 4
          %s177 = int_to_ptr.vmem [resolvable:$true] %s176
          %182 = dma.hbm_to_vmem [thread:$0]  %s1, 2048, %s177, [#allocation7], 128, 128, 8
        $region16: #{tpu_custom_call.1} parent=11 // pred_fallthru
          _
        // Predicated region
        $region17: #{tpu_custom_call.1} parent=11 // pred_check
          %p183 = pneg %p87
        $region18: #{tpu_custom_call.1} parent=11 // pred_check_branch
          %185 = sbr.rel (%p183) target = $region20
        $region19: #{tpu_custom_call.1} parent=11 // pred_region
          %s187 = ssub.s32 16, 16
          %188 = vsyncadd [#allocation7], %s187
          %s190 = sshll.u32 [#allocation8], 4
          %s191 = int_to_ptr.vmem [resolvable:$true] %s190
          %193 = dma.hbm_to_vmem [thread:$0]  %s2, 16, %s191, [#allocation7]
        $region20: #{tpu_custom_call.1} parent=11 // pred_fallthru
          _
        // Predicated region
        $region21: #{tpu_custom_call.1} parent=11 // pred_check
          %p194 = pneg %p108
        $region22: #{tpu_custom_call.1} parent=11 // pred_check_branch
          %196 = sbr.rel (%p194) target = $region24
        $region23: #{tpu_custom_call.1} parent=11 // pred_region
          %s198 = ssub.s32 8192, 8192
          %199 = vsyncadd [#allocation10], %s198
          %s200 = sshll.u32 [#allocation9], 4
          %s201 = int_to_ptr.vmem [resolvable:$true] %s200
          %206 = dma.hbm_to_vmem [thread:$0]  %s3, 8192, %s201, [#allocation10], 128, 128, 8
        $region24: #{tpu_custom_call.1} parent=11 // pred_fallthru
          _
        // Predicated region
        $region25: #{tpu_custom_call.1} parent=11 // pred_check
          %p207 = pneg %p129
        $region26: #{tpu_custom_call.1} parent=11 // pred_check_branch
          %209 = sbr.rel (%p207) target = $region28
        $region27: #{tpu_custom_call.1} parent=11 // pred_region
          %s211 = ssub.s32 16, 16
          %212 = vsyncadd [#allocation10], %s211
          %s214 = sshll.u32 [#allocation11], 4
          %s215 = int_to_ptr.vmem [resolvable:$true] %s214
          %217 = dma.hbm_to_vmem [thread:$0]  %s4, 16, %s215, [#allocation10]
        $region28: #{tpu_custom_call.1} parent=11 // pred_fallthru
          _
      $region12: #{tpu_custom_call.1} parent=5 // pred_fallthru
        _
      %p218 = scmp.lt.s32.totalorder %s19, 2
      // Predicated region
      $region29: #{tpu_custom_call.1} parent=5 // pred_check
        %p219 = pneg %p218
      $region30: #{tpu_custom_call.1} parent=5 // pred_check_branch
        %221 = sbr.rel (%p219) target = $region32
      $region31: #{tpu_custom_call.1} parent=5 // pred_region
        // Predicated region
        $region33: #{tpu_custom_call.1} parent=31 // pred_check
          %p222 = pneg %p39
        $region34: #{tpu_custom_call.1} parent=31 // pred_check_branch
          %224 = sbr.rel (%p222) target = $region36
        $region35: #{tpu_custom_call.1} parent=31 // pred_region
          %s225 = sand.u32 %s29, 1
          %s226 = scalar_lea.sflag [#allocation4], %s225
          %s227 = sand.u32 %s29, 1
          %s228 = smul.addr %s227, 384
          %s229 = scalar_lea.vmem [#allocation3], %s228
          %s231 = ssub.s32 6144, 6144
          %232 = vsyncadd %s226, %s231
          %s233 = smul.addr %s19, 48
          %s234 = smul.addr %s233, 128
          %s235 = scalar_lea.hbm %s0, %s234
          %s236 = sshll.u32 %s229, 4
          %s237 = int_to_ptr.vmem [resolvable:$true] %s236
          %242 = dma.hbm_to_vmem [thread:$0]  %s235, 6144, %s237, %s226, 128, 128, 8
        $region36: #{tpu_custom_call.1} parent=31 // pred_fallthru
          _
      $region32: #{tpu_custom_call.1} parent=5 // pred_fallthru
        _
      %p243 = scmp.le.s32.totalorder 1, %s19
      %p244 = scmp.lt.s32.totalorder %s19, 3
      %p245 = pnand %p243, %p244
      %p246 = pneg %p245
      // Predicated region
      $region37: #{tpu_custom_call.1} parent=5 // pred_check
        _
      $region38: #{tpu_custom_call.1} parent=5 // pred_check_branch
        %248 = sbr.rel (%p245) target = $region40
      $region39: #{tpu_custom_call.1} parent=5 // pred_region
        %s249 = ssub.s32 %s19, 1
        %s250 = sand.u32 %s32, 1
        %s251 = scalar_lea.sflag [#allocation4], %s250
        %s252 = sand.u32 %s32, 1
        %s253 = smul.addr %s252, 384
        %s254 = scalar_lea.vmem [#allocation3], %s253
        // Predicated region
        $region41: #{tpu_custom_call.1} parent=39 // pred_check
          %p255 = pneg %p45
        $region42: #{tpu_custom_call.1} parent=39 // pred_check_branch
          %257 = sbr.rel (%p255) target = $region44
        $region43: #{tpu_custom_call.1} parent=39 // pred_region
          %258 = dma.done %s251, 6144
        $region44: #{tpu_custom_call.1} parent=39 // pred_fallthru
          _
        // Predicated region
        $region45: #{tpu_custom_call.1} parent=39 // pred_check
          %p259 = pneg %p66
        $region46: #{tpu_custom_call.1} parent=39 // pred_check_branch
          %261 = sbr.rel (%p259) target = $region48
        $region47: #{tpu_custom_call.1} parent=39 // pred_region
          %262 = dma.done [#allocation7], 2048
        $region48: #{tpu_custom_call.1} parent=39 // pred_fallthru
          _
        // Predicated region
        $region49: #{tpu_custom_call.1} parent=39 // pred_check
          %p263 = pneg %p87
        $region50: #{tpu_custom_call.1} parent=39 // pred_check_branch
          %265 = sbr.rel (%p263) target = $region52
        $region51: #{tpu_custom_call.1} parent=39 // pred_region
          %266 = dma.done [#allocation7], 16
        $region52: #{tpu_custom_call.1} parent=39 // pred_fallthru
          _
        // Predicated region
        $region53: #{tpu_custom_call.1} parent=39 // pred_check
          %p267 = pneg %p108
        $region54: #{tpu_custom_call.1} parent=39 // pred_check_branch
          %269 = sbr.rel (%p267) target = $region56
        $region55: #{tpu_custom_call.1} parent=39 // pred_region
          %270 = dma.done [#allocation10], 8192
        $region56: #{tpu_custom_call.1} parent=39 // pred_fallthru
          _
        // Predicated region
        $region57: #{tpu_custom_call.1} parent=39 // pred_check
          %p271 = pneg %p129
        $region58: #{tpu_custom_call.1} parent=39 // pred_check_branch
          %273 = sbr.rel (%p271) target = $region60
        $region59: #{tpu_custom_call.1} parent=39 // pred_region
          %274 = dma.done [#allocation10], 16
        $region60: #{tpu_custom_call.1} parent=39 // pred_fallthru
          _
        %s275 = sand.u32 %s32, 1
        %s276 = scalar_lea.sflag [#allocation4], %s275
        %s277 = sand.u32 %s32, 1
        %s278 = smul.addr %s277, 384
        %s279 = scalar_lea.vmem [#allocation3], %s278
        %p280 = pneg %p45
        %p281 = pneg %p42
        %p282 = pneg %p66
        %p283 = pneg %p63
        %p284 = pneg %p87
        %p285 = pneg %p84
        %p286 = pneg %p108
        %p287 = pneg %p105
        %p288 = pneg %p129
        %p289 = pneg %p126
        %p290 = pneg %p155
        %p291 = pneg %p152
        %s292 = sand.u32 %s142, 1
        %s293 = scalar_lea.sflag [#allocation5], %s292
        %s294 = sand.u32 %s142, 1
        %s295 = smul.addr %s294, 384
        %s296 = scalar_lea.vmem [#allocation12], %s295
        %v297 = vld [vmem:[%s254] sm:$0xff]
        %v298 = vld [vmem:[%s254 + $0x8] sm:$0xff]
        %v299 = vld [vmem:[%s254 + $0x10] sm:$0xff]
        %v300 = vld [vmem:[%s254 + $0x18] sm:$0xff]
        %v301 = vld [vmem:[%s254 + $0x20] sm:$0xff]
        %v302 = vld [vmem:[%s254 + $0x28] sm:$0xff]
        %v303 = vld [vmem:[%s254 + $0x30] sm:$0xff]
        %v304 = vld [vmem:[%s254 + $0x38] sm:$0xff]
        %v305 = vld [vmem:[%s254 + $0x40] sm:$0xff]
        %v306 = vld [vmem:[%s254 + $0x48] sm:$0xff]
        %v307 = vld [vmem:[%s254 + $0x50] sm:$0xff]
        %v308 = vld [vmem:[%s254 + $0x58] sm:$0xff]
        %v309 = vld [vmem:[%s254 + $0x60] sm:$0xff]
        %v310 = vld [vmem:[%s254 + $0x68] sm:$0xff]
        %v311 = vld [vmem:[%s254 + $0x70] sm:$0xff]
        %v312 = vld [vmem:[%s254 + $0x78] sm:$0xff]
        %v313 = vld [vmem:[%s254 + $0x80] sm:$0xff]
        %v314 = vld [vmem:[%s254 + $0x88] sm:$0xff]
        %v315 = vld [vmem:[%s254 + $0x90] sm:$0xff]
        %v316 = vld [vmem:[%s254 + $0x98] sm:$0xff]
        %v317 = vld [vmem:[%s254 + $0xa0] sm:$0xff]
        %v318 = vld [vmem:[%s254 + $0xa8] sm:$0xff]
        %v319 = vld [vmem:[%s254 + $0xb0] sm:$0xff]
        %v320 = vld [vmem:[%s254 + $0xb8] sm:$0xff]
        %v321 = vld [vmem:[%s254 + $0xc0] sm:$0xff]
        %v322 = vld [vmem:[%s254 + $0xc8] sm:$0xff]
        %v323 = vld [vmem:[%s254 + $0xd0] sm:$0xff]
        %v324 = vld [vmem:[%s254 + $0xd8] sm:$0xff]
        %v325 = vld [vmem:[%s254 + $0xe0] sm:$0xff]
        %v326 = vld [vmem:[%s254 + $0xe8] sm:$0xff]
        %v327 = vld [vmem:[%s254 + $0xf0] sm:$0xff]
        %v328 = vld [vmem:[%s254 + $0xf8] sm:$0xff]
        %v329 = vld [vmem:[%s254 + $0x100] sm:$0xff]
        %v330 = vld [vmem:[%s254 + $0x108] sm:$0xff]
        %v331 = vld [vmem:[%s254 + $0x110] sm:$0xff]
        %v332 = vld [vmem:[%s254 + $0x118] sm:$0xff]
        %v333 = vld [vmem:[%s254 + $0x120] sm:$0xff]
        %v334 = vld [vmem:[%s254 + $0x128] sm:$0xff]
        %v335 = vld [vmem:[%s254 + $0x130] sm:$0xff]
        %v336 = vld [vmem:[%s254 + $0x138] sm:$0xff]
        %v337 = vld [vmem:[%s254 + $0x140] sm:$0xff]
        %v338 = vld [vmem:[%s254 + $0x148] sm:$0xff]
        %v339 = vld [vmem:[%s254 + $0x150] sm:$0xff]
        %v340 = vld [vmem:[%s254 + $0x158] sm:$0xff]
        %v341 = vld [vmem:[%s254 + $0x160] sm:$0xff]
        %v342 = vld [vmem:[%s254 + $0x168] sm:$0xff]
        %v343 = vld [vmem:[%s254 + $0x170] sm:$0xff]
        %v344 = vld [vmem:[%s254 + $0x178] sm:$0xff]
        %v345 = vld [vmem:[#allocation6] sm:$0xff]
        %v346 = vld [vmem:[#allocation6 + $0x8] sm:$0xff]
        %v347 = vld [vmem:[#allocation6 + $0x10] sm:$0xff]
        %v348 = vld [vmem:[#allocation6 + $0x18] sm:$0xff]
        %v349 = vld [vmem:[#allocation6 + $0x20] sm:$0xff]
        %v350 = vld [vmem:[#allocation6 + $0x28] sm:$0xff]
        %v351 = vld [vmem:[#allocation6 + $0x30] sm:$0xff]
        %v352 = vld [vmem:[#allocation6 + $0x38] sm:$0xff]
        %v353 = vld [vmem:[#allocation6 + $0x40] sm:$0xff]
        %v354 = vld [vmem:[#allocation6 + $0x48] sm:$0xff]
        %v355 = vld [vmem:[#allocation6 + $0x50] sm:$0xff]
        %v356 = vld [vmem:[#allocation6 + $0x58] sm:$0xff]
        %v357 = vld [vmem:[#allocation6 + $0x60] sm:$0xff]
        %v358 = vld [vmem:[#allocation6 + $0x68] sm:$0xff]
        %v359 = vld [vmem:[#allocation6 + $0x70] sm:$0xff]
        %v360 = vld [vmem:[#allocation6 + $0x78] sm:$0xff]
        %v361 = vld [vmem:[#allocation8] sm:$0x1]
        %v363 = vlaneseq
        %v364 = vshrl.u32 %v363, 7
        %v365 = vsub.s32 0, %v364
        %v366 = vrot.slane %v361, %v365
        %368 = vmatprep.subr.mxu0 0.0
        %369 = vmatpush1.msra.mxu0 %v345
        %370 = vmatprep.subr.mxu0 0.0
        %371 = vmatpush1.msra.mxu0 %v346
        %372 = vmatprep.subr.mxu0 0.0
        %373 = vmatpush1.msra.mxu0 %v347
        %374 = vmatprep.subr.mxu0 0.0
        %375 = vmatpush1.msra.mxu0 %v348
        %376 = vmatprep.subr.mxu0 0.0
        %377 = vmatpush1.msra.mxu0 %v349
        %378 = vmatprep.subr.mxu0 0.0
        %379 = vmatpush1.msra.mxu0 %v350
        %380 = vmatprep.subr.mxu0 0.0
        %381 = vmatpush1.msra.mxu0 %v351
        %382 = vmatprep.subr.mxu0 0.0
        %383 = vmatpush1.msra.mxu0 %v352
        %384 = vmatprep.subr.mxu0 0.0
        %385 = vmatpush1.msra.mxu0 %v353
        %386 = vmatprep.subr.mxu0 0.0
        %387 = vmatpush1.msra.mxu0 %v354
        %388 = vmatprep.subr.mxu0 0.0
        %389 = vmatpush1.msra.mxu0 %v355
        %390 = vmatprep.subr.mxu0 0.0
        %391 = vmatpush1.msra.mxu0 %v356
        %392 = vmatprep.subr.mxu0 0.0
        %393 = vmatpush1.msra.mxu0 %v357
        %394 = vmatprep.subr.mxu0 0.0
        %395 = vmatpush1.msra.mxu0 %v358
        %396 = vmatprep.subr.mxu0 0.0
        %397 = vmatpush1.msra.mxu0 %v359
        %398 = vmatprep.subr.mxu0 0.0
        %399 = vmatpush1.msra.mxu0 %v360
        %400 = vmatprep.subr.mxu0 0.0
        %401 = vmatpush1.msra.mxu0 0.0
        %402 = vmatprep.subr.mxu0 0.0
        %403 = vmatpush1.msra.mxu0 0.0
        %404 = vmatprep.subr.mxu0 0.0
        %405 = vmatpush1.msra.mxu0 0.0
        %406 = vmatprep.subr.mxu0 0.0
        %407 = vmatpush1.msra.mxu0 0.0
        %408 = vmatprep.subr.mxu0 0.0
        %409 = vmatpush1.msra.mxu0 0.0
        %410 = vmatprep.subr.mxu0 0.0
        %411 = vmatpush1.msra.mxu0 0.0
        %412 = vmatprep.subr.mxu0 0.0
        %413 = vmatpush1.msra.mxu0 0.0
        %414 = vmatprep.subr.mxu0 0.0
        %415 = vmatpush1.msra.mxu0 0.0
        %416 = vmatprep.subr.mxu0 0.0
        %417 = vmatpush1.msra.mxu0 0.0
        %418 = vmatprep.subr.mxu0 0.0
        %419 = vmatpush1.msra.mxu0 0.0
        %420 = vmatprep.subr.mxu0 0.0
        %421 = vmatpush1.msra.mxu0 0.0
        %422 = vmatprep.subr.mxu0 0.0
        %423 = vmatpush1.msra.mxu0 0.0
        %424 = vmatprep.subr.mxu0 0.0
        %425 = vmatpush1.msra.mxu0 0.0
        %426 = vmatprep.subr.mxu0 0.0
        %427 = vmatpush1.msra.mxu0 0.0
        %428 = vmatprep.subr.mxu0 0.0
        %429 = vmatpush1.msra.mxu0 0.0
        %430 = vmatprep.subr.mxu0 0.0
        %431 = vmatpush1.msra.mxu0 0.0
        %432 = vmatprep.mubr.f32.mxu0 0.0
        %433 = vmatmul.mubr.f32.gmra.mrb[0].mxu0 %v297
        %v434 = vpop.f32.mrb[0].mxu0
        %v435 = vadd.f32 %v366, %v434
        %v436 = vpop.f32.mrb[0].mxu0
        %437 = vmatprep.mubr.f32.mxu0 0.0
        %438 = vmatmul.mubr.f32.gmra.mrb[0].mxu0 %v298
        %v439 = vpop.f32.mrb[0].mxu0
        %v440 = vadd.f32 %v366, %v439
        %v441 = vpop.f32.mrb[0].mxu0
        %442 = vmatprep.mubr.f32.mxu0 0.0
        %443 = vmatmul.mubr.f32.gmra.mrb[0].mxu0 %v299
        %v444 = vpop.f32.mrb[0].mxu0
        %v445 = vadd.f32 %v366, %v444
        %v446 = vpop.f32.mrb[0].mxu0
        %447 = vmatprep.mubr.f32.mxu0 0.0
        %448 = vmatmul.mubr.f32.gmra.mrb[0].mxu0 %v300
        %v449 = vpop.f32.mrb[0].mxu0
        %v450 = vadd.f32 %v366, %v449
        %v451 = vpop.f32.mrb[0].mxu0
        %452 = vmatprep.mubr.f32.mxu0 0.0
        %453 = vmatmul.mubr.f32.gmra.mrb[0].mxu0 %v301
        %v454 = vpop.f32.mrb[0].mxu0
        %v455 = vadd.f32 %v366, %v454
        %v456 = vpop.f32.mrb[0].mxu0
        %457 = vmatprep.mubr.f32.mxu0 0.0
        %458 = vmatmul.mubr.f32.gmra.mrb[0].mxu0 %v302
        %v459 = vpop.f32.mrb[0].mxu0
        %v460 = vadd.f32 %v366, %v459
        %v461 = vpop.f32.mrb[0].mxu0
        %462 = vmatprep.mubr.f32.mxu0 0.0
        %463 = vmatmul.mubr.f32.gmra.mrb[0].mxu0 %v303
        %v464 = vpop.f32.mrb[0].mxu0
        %v465 = vadd.f32 %v366, %v464
        %v466 = vpop.f32.mrb[0].mxu0
        %467 = vmatprep.mubr.f32.mxu0 0.0
        %468 = vmatmul.mubr.f32.gmra.mrb[0].mxu0 %v304
        %v469 = vpop.f32.mrb[0].mxu0
        %v470 = vadd.f32 %v366, %v469
        %v471 = vpop.f32.mrb[0].mxu0
        %472 = vmatprep.mubr.f32.mxu0 0.0
        %473 = vmatmul.mubr.f32.gmra.mrb[0].mxu0 %v305
        %v474 = vpop.f32.mrb[0].mxu0
        %v475 = vadd.f32 %v366, %v474
        %v476 = vpop.f32.mrb[0].mxu0
        %477 = vmatprep.mubr.f32.mxu0 0.0
        %478 = vmatmul.mubr.f32.gmra.mrb[0].mxu0 %v306
        %v479 = vpop.f32.mrb[0].mxu0
        %v480 = vadd.f32 %v366, %v479
        %v481 = vpop.f32.mrb[0].mxu0
        %482 = vmatprep.mubr.f32.mxu0 0.0
        %483 = vmatmul.mubr.f32.gmra.mrb[0].mxu0 %v307
        %v484 = vpop.f32.mrb[0].mxu0
        %v485 = vadd.f32 %v366, %v484
        %v486 = vpop.f32.mrb[0].mxu0
        %487 = vmatprep.mubr.f32.mxu0 0.0
        %488 = vmatmul.mubr.f32.gmra.mrb[0].mxu0 %v308
        %v489 = vpop.f32.mrb[0].mxu0
        %v490 = vadd.f32 %v366, %v489
        %v491 = vpop.f32.mrb[0].mxu0
        %492 = vmatprep.mubr.f32.mxu0 0.0
        %493 = vmatmul.mubr.f32.gmra.mrb[0].mxu0 %v309
        %v494 = vpop.f32.mrb[0].mxu0
        %v495 = vadd.f32 %v366, %v494
        %v496 = vpop.f32.mrb[0].mxu0
        %497 = vmatprep.mubr.f32.mxu0 0.0
        %498 = vmatmul.mubr.f32.gmra.mrb[0].mxu0 %v310
        %v499 = vpop.f32.mrb[0].mxu0
        %v500 = vadd.f32 %v366, %v499
        %v501 = vpop.f32.mrb[0].mxu0
        %502 = vmatprep.mubr.f32.mxu0 0.0
        %503 = vmatmul.mubr.f32.gmra.mrb[0].mxu0 %v311
        %v504 = vpop.f32.mrb[0].mxu0
        %v505 = vadd.f32 %v366, %v504
        %v506 = vpop.f32.mrb[0].mxu0
        %507 = vmatprep.mubr.f32.mxu0 0.0
        %508 = vmatmul.mubr.f32.gmra.mrb[0].mxu0 %v312
        %v509 = vpop.f32.mrb[0].mxu0
        %v510 = vadd.f32 %v366, %v509
        %v511 = vpop.f32.mrb[0].mxu0
        %512 = vmatprep.mubr.f32.mxu0 0.0
        %513 = vmatmul.mubr.f32.gmra.mrb[0].mxu0 %v313
        %v514 = vpop.f32.mrb[0].mxu0
        %v515 = vadd.f32 %v366, %v514
        %v516 = vpop.f32.mrb[0].mxu0
        %517 = vmatprep.mubr.f32.mxu0 0.0
        %518 = vmatmul.mubr.f32.gmra.mrb[0].mxu0 %v314
        %v519 = vpop.f32.mrb[0].mxu0
        %v520 = vadd.f32 %v366, %v519
        %v521 = vpop.f32.mrb[0].mxu0
        %522 = vmatprep.mubr.f32.mxu0 0.0
        %523 = vmatmul.mubr.f32.gmra.mrb[0].mxu0 %v315
        %v524 = vpop.f32.mrb[0].mxu0
        %v525 = vadd.f32 %v366, %v524
        %v526 = vpop.f32.mrb[0].mxu0
        %527 = vmatprep.mubr.f32.mxu0 0.0
        %528 = vmatmul.mubr.f32.gmra.mrb[0].mxu0 %v316
        %v529 = vpop.f32.mrb[0].mxu0
        %v530 = vadd.f32 %v366, %v529
        %v531 = vpop.f32.mrb[0].mxu0
        %532 = vmatprep.mubr.f32.mxu0 0.0
        %533 = vmatmul.mubr.f32.gmra.mrb[0].mxu0 %v317
        %v534 = vpop.f32.mrb[0].mxu0
        %v535 = vadd.f32 %v366, %v534
        %v536 = vpop.f32.mrb[0].mxu0
        %537 = vmatprep.mubr.f32.mxu0 0.0
        %538 = vmatmul.mubr.f32.gmra.mrb[0].mxu0 %v318
        %v539 = vpop.f32.mrb[0].mxu0
        %v540 = vadd.f32 %v366, %v539
        %v541 = vpop.f32.mrb[0].mxu0
        %542 = vmatprep.mubr.f32.mxu0 0.0
        %543 = vmatmul.mubr.f32.gmra.mrb[0].mxu0 %v319
        %v544 = vpop.f32.mrb[0].mxu0
        %v545 = vadd.f32 %v366, %v544
        %v546 = vpop.f32.mrb[0].mxu0
        %547 = vmatprep.mubr.f32.mxu0 0.0
        %548 = vmatmul.mubr.f32.gmra.mrb[0].mxu0 %v320
        %v549 = vpop.f32.mrb[0].mxu0
        %v550 = vadd.f32 %v366, %v549
        %v551 = vpop.f32.mrb[0].mxu0
        %552 = vmatprep.mubr.f32.mxu0 0.0
        %553 = vmatmul.mubr.f32.gmra.mrb[0].mxu0 %v321
        %v554 = vpop.f32.mrb[0].mxu0
        %v555 = vadd.f32 %v366, %v554
        %v556 = vpop.f32.mrb[0].mxu0
        %557 = vmatprep.mubr.f32.mxu0 0.0
        %558 = vmatmul.mubr.f32.gmra.mrb[0].mxu0 %v322
        %v559 = vpop.f32.mrb[0].mxu0
        %v560 = vadd.f32 %v366, %v559
        %v561 = vpop.f32.mrb[0].mxu0
        %562 = vmatprep.mubr.f32.mxu0 0.0
        %563 = vmatmul.mubr.f32.gmra.mrb[0].mxu0 %v323
        %v564 = vpop.f32.mrb[0].mxu0
        %v565 = vadd.f32 %v366, %v564
        %v566 = vpop.f32.mrb[0].mxu0
        %567 = vmatprep.mubr.f32.mxu0 0.0
        %568 = vmatmul.mubr.f32.gmra.mrb[0].mxu0 %v324
        %v569 = vpop.f32.mrb[0].mxu0
        %v570 = vadd.f32 %v366, %v569
        %v571 = vpop.f32.mrb[0].mxu0
        %572 = vmatprep.mubr.f32.mxu0 0.0
        %573 = vmatmul.mubr.f32.gmra.mrb[0].mxu0 %v325
        %v574 = vpop.f32.mrb[0].mxu0
        %v575 = vadd.f32 %v366, %v574
        %v576 = vpop.f32.mrb[0].mxu0
        %577 = vmatprep.mubr.f32.mxu0 0.0
        %578 = vmatmul.mubr.f32.gmra.mrb[0].mxu0 %v326
        %v579 = vpop.f32.mrb[0].mxu0
        %v580 = vadd.f32 %v366, %v579
        %v581 = vpop.f32.mrb[0].mxu0
        %582 = vmatprep.mubr.f32.mxu0 0.0
        %583 = vmatmul.mubr.f32.gmra.mrb[0].mxu0 %v327
        %v584 = vpop.f32.mrb[0].mxu0
        %v585 = vadd.f32 %v366, %v584
        %v586 = vpop.f32.mrb[0].mxu0
        %587 = vmatprep.mubr.f32.mxu0 0.0
        %588 = vmatmul.mubr.f32.gmra.mrb[0].mxu0 %v328
        %v589 = vpop.f32.mrb[0].mxu0
        %v590 = vadd.f32 %v366, %v589
        %v591 = vpop.f32.mrb[0].mxu0
        %592 = vmatprep.mubr.f32.mxu0 0.0
        %593 = vmatmul.mubr.f32.gmra.mrb[0].mxu0 %v329
        %v594 = vpop.f32.mrb[0].mxu0
        %v595 = vadd.f32 %v366, %v594
        %v596 = vpop.f32.mrb[0].mxu0
        %597 = vmatprep.mubr.f32.mxu0 0.0
        %598 = vmatmul.mubr.f32.gmra.mrb[0].mxu0 %v330
        %v599 = vpop.f32.mrb[0].mxu0
        %v600 = vadd.f32 %v366, %v599
        %v601 = vpop.f32.mrb[0].mxu0
        %602 = vmatprep.mubr.f32.mxu0 0.0
        %603 = vmatmul.mubr.f32.gmra.mrb[0].mxu0 %v331
        %v604 = vpop.f32.mrb[0].mxu0
        %v605 = vadd.f32 %v366, %v604
        %v606 = vpop.f32.mrb[0].mxu0
        %607 = vmatprep.mubr.f32.mxu0 0.0
        %608 = vmatmul.mubr.f32.gmra.mrb[0].mxu0 %v332
        %v609 = vpop.f32.mrb[0].mxu0
        %v610 = vadd.f32 %v366, %v609
        %v611 = vpop.f32.mrb[0].mxu0
        %612 = vmatprep.mubr.f32.mxu0 0.0
        %613 = vmatmul.mubr.f32.gmra.mrb[0].mxu0 %v333
        %v614 = vpop.f32.mrb[0].mxu0
        %v615 = vadd.f32 %v366, %v614
        %v616 = vpop.f32.mrb[0].mxu0
        %617 = vmatprep.mubr.f32.mxu0 0.0
        %618 = vmatmul.mubr.f32.gmra.mrb[0].mxu0 %v334
        %v619 = vpop.f32.mrb[0].mxu0
        %v620 = vadd.f32 %v366, %v619
        %v621 = vpop.f32.mrb[0].mxu0
        %622 = vmatprep.mubr.f32.mxu0 0.0
        %623 = vmatmul.mubr.f32.gmra.mrb[0].mxu0 %v335
        %v624 = vpop.f32.mrb[0].mxu0
        %v625 = vadd.f32 %v366, %v624
        %v626 = vpop.f32.mrb[0].mxu0
        %627 = vmatprep.mubr.f32.mxu0 0.0
        %628 = vmatmul.mubr.f32.gmra.mrb[0].mxu0 %v336
        %v629 = vpop.f32.mrb[0].mxu0
        %v630 = vadd.f32 %v366, %v629
        %v631 = vpop.f32.mrb[0].mxu0
        %632 = vmatprep.mubr.f32.mxu0 0.0
        %633 = vmatmul.mubr.f32.gmra.mrb[0].mxu0 %v337
        %v634 = vpop.f32.mrb[0].mxu0
        %v635 = vadd.f32 %v366, %v634
        %v636 = vpop.f32.mrb[0].mxu0
        %637 = vmatprep.mubr.f32.mxu0 0.0
        %638 = vmatmul.mubr.f32.gmra.mrb[0].mxu0 %v338
        %v639 = vpop.f32.mrb[0].mxu0
        %v640 = vadd.f32 %v366, %v639
        %v641 = vpop.f32.mrb[0].mxu0
        %642 = vmatprep.mubr.f32.mxu0 0.0
        %643 = vmatmul.mubr.f32.gmra.mrb[0].mxu0 %v339
        %v644 = vpop.f32.mrb[0].mxu0
        %v645 = vadd.f32 %v366, %v644
        %v646 = vpop.f32.mrb[0].mxu0
        %647 = vmatprep.mubr.f32.mxu0 0.0
        %648 = vmatmul.mubr.f32.gmra.mrb[0].mxu0 %v340
        %v649 = vpop.f32.mrb[0].mxu0
        %v650 = vadd.f32 %v366, %v649
        %v651 = vpop.f32.mrb[0].mxu0
        %652 = vmatprep.mubr.f32.mxu0 0.0
        %653 = vmatmul.mubr.f32.gmra.mrb[0].mxu0 %v341
        %v654 = vpop.f32.mrb[0].mxu0
        %v655 = vadd.f32 %v366, %v654
        %v656 = vpop.f32.mrb[0].mxu0
        %657 = vmatprep.mubr.f32.mxu0 0.0
        %658 = vmatmul.mubr.f32.gmra.mrb[0].mxu0 %v342
        %v659 = vpop.f32.mrb[0].mxu0
        %v660 = vadd.f32 %v366, %v659
        %v661 = vpop.f32.mrb[0].mxu0
        %662 = vmatprep.mubr.f32.mxu0 0.0
        %663 = vmatmul.mubr.f32.gmra.mrb[0].mxu0 %v343
        %v664 = vpop.f32.mrb[0].mxu0
        %v665 = vadd.f32 %v366, %v664
        %v666 = vpop.f32.mrb[0].mxu0
        %667 = vmatprep.mubr.f32.mxu0 0.0
        %668 = vmatmul.mubr.f32.gmra.mrb[0].mxu0 %v344
        %v669 = vpop.f32.mrb[0].mxu0
        %v670 = vadd.f32 %v366, %v669
        %v671 = vpop.f32.mrb[0].mxu0
        %672 = vdwg.mxu0
        %v673 = vxor.u32 %v435, 2147483648
        %v674 = vxor.u32 %v440, 2147483648
        %v675 = vxor.u32 %v445, 2147483648
        %v676 = vxor.u32 %v450, 2147483648
        %v677 = vxor.u32 %v455, 2147483648
        %v678 = vxor.u32 %v460, 2147483648
        %v679 = vxor.u32 %v465, 2147483648
        %v680 = vxor.u32 %v470, 2147483648
        %v681 = vxor.u32 %v475, 2147483648
        %v682 = vxor.u32 %v480, 2147483648
        %v683 = vxor.u32 %v485, 2147483648
        %v684 = vxor.u32 %v490, 2147483648
        %v685 = vxor.u32 %v495, 2147483648
        %v686 = vxor.u32 %v500, 2147483648
        %v687 = vxor.u32 %v505, 2147483648
        %v688 = vxor.u32 %v510, 2147483648
        %v689 = vxor.u32 %v515, 2147483648
        %v690 = vxor.u32 %v520, 2147483648
        %v691 = vxor.u32 %v525, 2147483648
        %v692 = vxor.u32 %v530, 2147483648
        %v693 = vxor.u32 %v535, 2147483648
        %v694 = vxor.u32 %v540, 2147483648
        %v695 = vxor.u32 %v545, 2147483648
        %v696 = vxor.u32 %v550, 2147483648
        %v697 = vxor.u32 %v555, 2147483648
        %v698 = vxor.u32 %v560, 2147483648
        %v699 = vxor.u32 %v565, 2147483648
        %v700 = vxor.u32 %v570, 2147483648
        %v701 = vxor.u32 %v575, 2147483648
        %v702 = vxor.u32 %v580, 2147483648
        %v703 = vxor.u32 %v585, 2147483648
        %v704 = vxor.u32 %v590, 2147483648
        %v705 = vxor.u32 %v595, 2147483648
        %v706 = vxor.u32 %v600, 2147483648
        %v707 = vxor.u32 %v605, 2147483648
        %v708 = vxor.u32 %v610, 2147483648
        %v709 = vxor.u32 %v615, 2147483648
        %v710 = vxor.u32 %v620, 2147483648
        %v711 = vxor.u32 %v625, 2147483648
        %v712 = vxor.u32 %v630, 2147483648
        %v713 = vxor.u32 %v635, 2147483648
        %v714 = vxor.u32 %v640, 2147483648
        %v715 = vxor.u32 %v645, 2147483648
        %v716 = vxor.u32 %v650, 2147483648
        %v717 = vxor.u32 %v655, 2147483648
        %v718 = vxor.u32 %v660, 2147483648
        %v719 = vxor.u32 %v665, 2147483648
        %v720 = vxor.u32 %v670, 2147483648
        %v721 = vmul.f32 %v673, 1.442695
        %v722 = vpow.pop %v721
        %v723 = vmul.f32 %v674, 1.442695
        %v724 = vpow.pop %v723
        %v725 = vmul.f32 %v675, 1.442695
        %v726 = vpow.pop %v725
        %v727 = vmul.f32 %v676, 1.442695
        %v728 = vpow.pop %v727
        %v729 = vmul.f32 %v677, 1.442695
        %v730 = vpow.pop %v729
        %v731 = vmul.f32 %v678, 1.442695
        %v732 = vpow.pop %v731
        %v733 = vmul.f32 %v679, 1.442695
        %v734 = vpow.pop %v733
        %v735 = vmul.f32 %v680, 1.442695
        %v736 = vpow.pop %v735
        %v737 = vmul.f32 %v681, 1.442695
        %v738 = vpow.pop %v737
        %v739 = vmul.f32 %v682, 1.442695
        %v740 = vpow.pop %v739
        %v741 = vmul.f32 %v683, 1.442695
        %v742 = vpow.pop %v741
        %v743 = vmul.f32 %v684, 1.442695
        %v744 = vpow.pop %v743
        %v745 = vmul.f32 %v685, 1.442695
        %v746 = vpow.pop %v745
        %v747 = vmul.f32 %v686, 1.442695
        %v748 = vpow.pop %v747
        %v749 = vmul.f32 %v687, 1.442695
        %v750 = vpow.pop %v749
        %v751 = vmul.f32 %v688, 1.442695
        %v752 = vpow.pop %v751
        %v753 = vmul.f32 %v689, 1.442695
        %v754 = vpow.pop %v753
        %v755 = vmul.f32 %v690, 1.442695
        %v756 = vpow.pop %v755
        %v757 = vmul.f32 %v691, 1.442695
        %v758 = vpow.pop %v757
        %v759 = vmul.f32 %v692, 1.442695
        %v760 = vpow.pop %v759
        %v761 = vmul.f32 %v693, 1.442695
        %v762 = vpow.pop %v761
        %v763 = vmul.f32 %v694, 1.442695
        %v764 = vpow.pop %v763
        %v765 = vmul.f32 %v695, 1.442695
        %v766 = vpow.pop %v765
        %v767 = vmul.f32 %v696, 1.442695
        %v768 = vpow.pop %v767
        %v769 = vmul.f32 %v697, 1.442695
        %v770 = vpow.pop %v769
        %v771 = vmul.f32 %v698, 1.442695
        %v772 = vpow.pop %v771
        %v773 = vmul.f32 %v699, 1.442695
        %v774 = vpow.pop %v773
        %v775 = vmul.f32 %v700, 1.442695
        %v776 = vpow.pop %v775
        %v777 = vmul.f32 %v701, 1.442695
        %v778 = vpow.pop %v777
        %v779 = vmul.f32 %v702, 1.442695
        %v780 = vpow.pop %v779
        %v781 = vmul.f32 %v703, 1.442695
        %v782 = vpow.pop %v781
        %v783 = vmul.f32 %v704, 1.442695
        %v784 = vpow.pop %v783
        %v785 = vmul.f32 %v705, 1.442695
        %v786 = vpow.pop %v785
        %v787 = vmul.f32 %v706, 1.442695
        %v788 = vpow.pop %v787
        %v789 = vmul.f32 %v707, 1.442695
        %v790 = vpow.pop %v789
        %v791 = vmul.f32 %v708, 1.442695
        %v792 = vpow.pop %v791
        %v793 = vmul.f32 %v709, 1.442695
        %v794 = vpow.pop %v793
        %v795 = vmul.f32 %v710, 1.442695
        %v796 = vpow.pop %v795
        %v797 = vmul.f32 %v711, 1.442695
        %v798 = vpow.pop %v797
        %v799 = vmul.f32 %v712, 1.442695
        %v800 = vpow.pop %v799
        %v801 = vmul.f32 %v713, 1.442695
        %v802 = vpow.pop %v801
        %v803 = vmul.f32 %v714, 1.442695
        %v804 = vpow.pop %v803
        %v805 = vmul.f32 %v715, 1.442695
        %v806 = vpow.pop %v805
        %v807 = vmul.f32 %v716, 1.442695
        %v808 = vpow.pop %v807
        %v809 = vmul.f32 %v717, 1.442695
        %v810 = vpow.pop %v809
        %v811 = vmul.f32 %v718, 1.442695
        %v812 = vpow.pop %v811
        %v813 = vmul.f32 %v719, 1.442695
        %v814 = vpow.pop %v813
        %v815 = vmul.f32 %v720, 1.442695
        %v816 = vpow.pop %v815
        %v817 = vadd.f32 %v722, 1.0
        %v818 = vadd.f32 %v724, 1.0
        %v819 = vadd.f32 %v726, 1.0
        %v820 = vadd.f32 %v728, 1.0
        %v821 = vadd.f32 %v730, 1.0
        %v822 = vadd.f32 %v732, 1.0
        %v823 = vadd.f32 %v734, 1.0
        %v824 = vadd.f32 %v736, 1.0
        %v825 = vadd.f32 %v738, 1.0
        %v826 = vadd.f32 %v740, 1.0
        %v827 = vadd.f32 %v742, 1.0
        %v828 = vadd.f32 %v744, 1.0
        %v829 = vadd.f32 %v746, 1.0
        %v830 = vadd.f32 %v748, 1.0
        %v831 = vadd.f32 %v750, 1.0
        %v832 = vadd.f32 %v752, 1.0
        %v833 = vadd.f32 %v754, 1.0
        %v834 = vadd.f32 %v756, 1.0
        %v835 = vadd.f32 %v758, 1.0
        %v836 = vadd.f32 %v760, 1.0
        %v837 = vadd.f32 %v762, 1.0
        %v838 = vadd.f32 %v764, 1.0
        %v839 = vadd.f32 %v766, 1.0
        %v840 = vadd.f32 %v768, 1.0
        %v841 = vadd.f32 %v770, 1.0
        %v842 = vadd.f32 %v772, 1.0
        %v843 = vadd.f32 %v774, 1.0
        %v844 = vadd.f32 %v776, 1.0
        %v845 = vadd.f32 %v778, 1.0
        %v846 = vadd.f32 %v780, 1.0
        %v847 = vadd.f32 %v782, 1.0
        %v848 = vadd.f32 %v784, 1.0
        %v849 = vadd.f32 %v786, 1.0
        %v850 = vadd.f32 %v788, 1.0
        %v851 = vadd.f32 %v790, 1.0
        %v852 = vadd.f32 %v792, 1.0
        %v853 = vadd.f32 %v794, 1.0
        %v854 = vadd.f32 %v796, 1.0
        %v855 = vadd.f32 %v798, 1.0
        %v856 = vadd.f32 %v800, 1.0
        %v857 = vadd.f32 %v802, 1.0
        %v858 = vadd.f32 %v804, 1.0
        %v859 = vadd.f32 %v806, 1.0
        %v860 = vadd.f32 %v808, 1.0
        %v861 = vadd.f32 %v810, 1.0
        %v862 = vadd.f32 %v812, 1.0
        %v863 = vadd.f32 %v814, 1.0
        %v864 = vadd.f32 %v816, 1.0
        %v865 = vrcp.pop %v817
        %v866 = vmul.f32 1.0, %v865
        %v867 = vrcp.pop %v818
        %v868 = vmul.f32 1.0, %v867
        %v869 = vrcp.pop %v819
        %v870 = vmul.f32 1.0, %v869
        %v871 = vrcp.pop %v820
        %v872 = vmul.f32 1.0, %v871
        %v873 = vrcp.pop %v821
        %v874 = vmul.f32 1.0, %v873
        %v875 = vrcp.pop %v822
        %v876 = vmul.f32 1.0, %v875
        %v877 = vrcp.pop %v823
        %v878 = vmul.f32 1.0, %v877
        %v879 = vrcp.pop %v824
        %v880 = vmul.f32 1.0, %v879
        %v881 = vrcp.pop %v825
        %v882 = vmul.f32 1.0, %v881
        %v883 = vrcp.pop %v826
        %v884 = vmul.f32 1.0, %v883
        %v885 = vrcp.pop %v827
        %v886 = vmul.f32 1.0, %v885
        %v887 = vrcp.pop %v828
        %v888 = vmul.f32 1.0, %v887
        %v889 = vrcp.pop %v829
        %v890 = vmul.f32 1.0, %v889
        %v891 = vrcp.pop %v830
        %v892 = vmul.f32 1.0, %v891
        %v893 = vrcp.pop %v831
        %v894 = vmul.f32 1.0, %v893
        %v895 = vrcp.pop %v832
        %v896 = vmul.f32 1.0, %v895
        %v897 = vrcp.pop %v833
        %v898 = vmul.f32 1.0, %v897
        %v899 = vrcp.pop %v834
        %v900 = vmul.f32 1.0, %v899
        %v901 = vrcp.pop %v835
        %v902 = vmul.f32 1.0, %v901
        %v903 = vrcp.pop %v836
        %v904 = vmul.f32 1.0, %v903
        %v905 = vrcp.pop %v837
        %v906 = vmul.f32 1.0, %v905
        %v907 = vrcp.pop %v838
        %v908 = vmul.f32 1.0, %v907
        %v909 = vrcp.pop %v839
        %v910 = vmul.f32 1.0, %v909
        %v911 = vrcp.pop %v840
        %v912 = vmul.f32 1.0, %v911
        %v913 = vrcp.pop %v841
        %v914 = vmul.f32 1.0, %v913
        %v915 = vrcp.pop %v842
        %v916 = vmul.f32 1.0, %v915
        %v917 = vrcp.pop %v843
        %v918 = vmul.f32 1.0, %v917
        %v919 = vrcp.pop %v844
        %v920 = vmul.f32 1.0, %v919
        %v921 = vrcp.pop %v845
        %v922 = vmul.f32 1.0, %v921
        %v923 = vrcp.pop %v846
        %v924 = vmul.f32 1.0, %v923
        %v925 = vrcp.pop %v847
        %v926 = vmul.f32 1.0, %v925
        %v927 = vrcp.pop %v848
        %v928 = vmul.f32 1.0, %v927
        %v929 = vrcp.pop %v849
        %v930 = vmul.f32 1.0, %v929
        %v931 = vrcp.pop %v850
        %v932 = vmul.f32 1.0, %v931
        %v933 = vrcp.pop %v851
        %v934 = vmul.f32 1.0, %v933
        %v935 = vrcp.pop %v852
        %v936 = vmul.f32 1.0, %v935
        %v937 = vrcp.pop %v853
        %v938 = vmul.f32 1.0, %v937
        %v939 = vrcp.pop %v854
        %v940 = vmul.f32 1.0, %v939
        %v941 = vrcp.pop %v855
        %v942 = vmul.f32 1.0, %v941
        %v943 = vrcp.pop %v856
        %v944 = vmul.f32 1.0, %v943
        %v945 = vrcp.pop %v857
        %v946 = vmul.f32 1.0, %v945
        %v947 = vrcp.pop %v858
        %v948 = vmul.f32 1.0, %v947
        %v949 = vrcp.pop %v859
        %v950 = vmul.f32 1.0, %v949
        %v951 = vrcp.pop %v860
        %v952 = vmul.f32 1.0, %v951
        %v953 = vrcp.pop %v861
        %v954 = vmul.f32 1.0, %v953
        %v955 = vrcp.pop %v862
        %v956 = vmul.f32 1.0, %v955
        %v957 = vrcp.pop %v863
        %v958 = vmul.f32 1.0, %v957
        %v959 = vrcp.pop %v864
        %v960 = vmul.f32 1.0, %v959
        %v961 = vmul.f32 %v435, %v866
        %v962 = vmul.f32 %v440, %v868
        %v963 = vmul.f32 %v445, %v870
        %v964 = vmul.f32 %v450, %v872
        %v965 = vmul.f32 %v455, %v874
        %v966 = vmul.f32 %v460, %v876
        %v967 = vmul.f32 %v465, %v878
        %v968 = vmul.f32 %v470, %v880
        %v969 = vmul.f32 %v475, %v882
        %v970 = vmul.f32 %v480, %v884
        %v971 = vmul.f32 %v485, %v886
        %v972 = vmul.f32 %v490, %v888
        %v973 = vmul.f32 %v495, %v890
        %v974 = vmul.f32 %v500, %v892
        %v975 = vmul.f32 %v505, %v894
        %v976 = vmul.f32 %v510, %v896
        %v977 = vmul.f32 %v515, %v898
        %v978 = vmul.f32 %v520, %v900
        %v979 = vmul.f32 %v525, %v902
        %v980 = vmul.f32 %v530, %v904
        %v981 = vmul.f32 %v535, %v906
        %v982 = vmul.f32 %v540, %v908
        %v983 = vmul.f32 %v545, %v910
        %v984 = vmul.f32 %v550, %v912
        %v985 = vmul.f32 %v555, %v914
        %v986 = vmul.f32 %v560, %v916
        %v987 = vmul.f32 %v565, %v918
        %v988 = vmul.f32 %v570, %v920
        %v989 = vmul.f32 %v575, %v922
        %v990 = vmul.f32 %v580, %v924
        %v991 = vmul.f32 %v585, %v926
        %v992 = vmul.f32 %v590, %v928
        %v993 = vmul.f32 %v595, %v930
        %v994 = vmul.f32 %v600, %v932
        %v995 = vmul.f32 %v605, %v934
        %v996 = vmul.f32 %v610, %v936
        %v997 = vmul.f32 %v615, %v938
        %v998 = vmul.f32 %v620, %v940
        %v999 = vmul.f32 %v625, %v942
        %v1000 = vmul.f32 %v630, %v944
        %v1001 = vmul.f32 %v635, %v946
        %v1002 = vmul.f32 %v640, %v948
        %v1003 = vmul.f32 %v645, %v950
        %v1004 = vmul.f32 %v650, %v952
        %v1005 = vmul.f32 %v655, %v954
        %v1006 = vmul.f32 %v660, %v956
        %v1007 = vmul.f32 %v665, %v958
        %v1008 = vmul.f32 %v670, %v960
        %v1009 = vld [vmem:[#allocation9] sm:$0xff]
        %v1010 = vld [vmem:[#allocation9 + $0x8] sm:$0xff]
        %v1011 = vld [vmem:[#allocation9 + $0x10] sm:$0xff]
        %v1012 = vld [vmem:[#allocation9 + $0x18] sm:$0xff]
        %v1013 = vld [vmem:[#allocation9 + $0x20] sm:$0xff]
        %v1014 = vld [vmem:[#allocation9 + $0x28] sm:$0xff]
        %v1015 = vld [vmem:[#allocation9 + $0x30] sm:$0xff]
        %v1016 = vld [vmem:[#allocation9 + $0x38] sm:$0xff]
        %v1017 = vld [vmem:[#allocation9 + $0x40] sm:$0xff]
        %v1018 = vld [vmem:[#allocation9 + $0x48] sm:$0xff]
        %v1019 = vld [vmem:[#allocation9 + $0x50] sm:$0xff]
        %v1020 = vld [vmem:[#allocation9 + $0x58] sm:$0xff]
        %v1021 = vld [vmem:[#allocation9 + $0x60] sm:$0xff]
        %v1022 = vld [vmem:[#allocation9 + $0x68] sm:$0xff]
        %v1023 = vld [vmem:[#allocation9 + $0x70] sm:$0xff]
        %v1024 = vld [vmem:[#allocation9 + $0x78] sm:$0xff]
        %p1025 = scmp.eq.s32.totalorder %s24, 0
        // Predicated region
        $region61: #{tpu_custom_call.1} parent=39 // pred_check
          %p1026 = pneg %p1025
        $region62: #{tpu_custom_call.1} parent=39 // pred_check_branch
          %1028 = sbr.rel (%p1026) target = $region64
        $region63: #{tpu_custom_call.1} parent=39 // pred_region
          %1029 = vst [vmem:[#allocation2] sm:$0xff] -1e+30
          %1030 = vst [vmem:[#allocation2 + $0x8] sm:$0xff] -1e+30
          %1031 = vst [vmem:[#allocation2 + $0x10] sm:$0xff] -1e+30
          %1032 = vst [vmem:[#allocation2 + $0x18] sm:$0xff] -1e+30
          %1033 = vst [vmem:[#allocation2 + $0x20] sm:$0xff] -1e+30
          %1034 = vst [vmem:[#allocation2 + $0x28] sm:$0xff] -1e+30
          %s1035 = scalar_lea.vmem [#allocation2], 432
          %1036 = vst [vmem:[%s1035] sm:$0xff] -1e+30
          %1037 = vst [vmem:[%s1035 + $0x8] sm:$0xff] -1e+30
          %1038 = vst [vmem:[%s1035 + $0x10] sm:$0xff] -1e+30
          %1039 = vst [vmem:[%s1035 + $0x18] sm:$0xff] -1e+30
          %1040 = vst [vmem:[%s1035 + $0x20] sm:$0xff] -1e+30
          %1041 = vst [vmem:[%s1035 + $0x28] sm:$0xff] -1e+30
          %s1042 = scalar_lea.vmem [#allocation2], 48
          %1043 = vst [vmem:[%s1042 + $0x10] sm:$0xff] -1e+30
          %1044 = vst [vmem:[%s1042 + $0x28] sm:$0xff] -1e+30
          %1045 = vst [vmem:[%s1042 + $0x40] sm:$0xff] -1e+30
          %1046 = vst [vmem:[%s1042 + $0x58] sm:$0xff] -1e+30
          %1047 = vst [vmem:[%s1042 + $0x70] sm:$0xff] -1e+30
          %1048 = vst [vmem:[%s1042 + $0x88] sm:$0xff] -1e+30
          %1049 = vst [vmem:[%s1042 + $0xa0] sm:$0xff] -1e+30
          %1050 = vst [vmem:[%s1042 + $0xb8] sm:$0xff] -1e+30
          %1051 = vst [vmem:[%s1042 + $0xd0] sm:$0xff] -1e+30
          %1052 = vst [vmem:[%s1042 + $0xe8] sm:$0xff] -1e+30
          %1053 = vst [vmem:[%s1042 + $0x100] sm:$0xff] -1e+30
          %1054 = vst [vmem:[%s1042 + $0x118] sm:$0xff] -1e+30
          %1055 = vst [vmem:[%s1042 + $0x130] sm:$0xff] -1e+30
          %1056 = vst [vmem:[%s1042 + $0x148] sm:$0xff] -1e+30
          %1057 = vst [vmem:[%s1042 + $0x160] sm:$0xff] -1e+30
          %1058 = vst [vmem:[%s1042 + $0x178] sm:$0xff] -1e+30
        $region64: #{tpu_custom_call.1} parent=39 // pred_fallthru
          _
        %s1059 = scalar_lea.vmem [#allocation2], 48
        %1060 = vst [vmem:[%s1059] sm:$0xff] %v961
        %1061 = vst [vmem:[%s1059 + $0x8] sm:$0xff] %v962
        %1062 = vst [vmem:[%s1059 + $0x18] sm:$0xff] %v964
        %1063 = vst [vmem:[%s1059 + $0x20] sm:$0xff] %v965
        %1064 = vst [vmem:[%s1059 + $0x30] sm:$0xff] %v967
        %1065 = vst [vmem:[%s1059 + $0x38] sm:$0xff] %v968
        %1066 = vst [vmem:[%s1059 + $0x48] sm:$0xff] %v970
        %1067 = vst [vmem:[%s1059 + $0x50] sm:$0xff] %v971
        %1068 = vst [vmem:[%s1059 + $0x60] sm:$0xff] %v973
        %1069 = vst [vmem:[%s1059 + $0x68] sm:$0xff] %v974
        %1070 = vst [vmem:[%s1059 + $0x78] sm:$0xff] %v976
        %1071 = vst [vmem:[%s1059 + $0x80] sm:$0xff] %v977
        %1072 = vst [vmem:[%s1059 + $0x90] sm:$0xff] %v979
        %1073 = vst [vmem:[%s1059 + $0x98] sm:$0xff] %v980
        %1074 = vst [vmem:[%s1059 + $0xa8] sm:$0xff] %v982
        %1075 = vst [vmem:[%s1059 + $0xb0] sm:$0xff] %v983
        %1076 = vst [vmem:[%s1059 + $0xc0] sm:$0xff] %v985
        %1077 = vst [vmem:[%s1059 + $0xc8] sm:$0xff] %v986
        %1078 = vst [vmem:[%s1059 + $0xd8] sm:$0xff] %v988
        %1079 = vst [vmem:[%s1059 + $0xe0] sm:$0xff] %v989
        %1080 = vst [vmem:[%s1059 + $0xf0] sm:$0xff] %v991
        %1081 = vst [vmem:[%s1059 + $0xf8] sm:$0xff] %v992
        %1082 = vst [vmem:[%s1059 + $0x108] sm:$0xff] %v994
        %1083 = vst [vmem:[%s1059 + $0x110] sm:$0xff] %v995
        %1084 = vst [vmem:[%s1059 + $0x120] sm:$0xff] %v997
        %1085 = vst [vmem:[%s1059 + $0x128] sm:$0xff] %v998
        %1086 = vst [vmem:[%s1059 + $0x138] sm:$0xff] %v1000
        %1087 = vst [vmem:[%s1059 + $0x140] sm:$0xff] %v1001
        %1088 = vst [vmem:[%s1059 + $0x150] sm:$0xff] %v1003
        %1089 = vst [vmem:[%s1059 + $0x158] sm:$0xff] %v1004
        %1090 = vst [vmem:[%s1059 + $0x168] sm:$0xff] %v1006
        %1091 = vst [vmem:[%s1059 + $0x170] sm:$0xff] %v1007
        %v1092 = vld [vmem:[#allocation2] sm:$0xff]
        %v1093 = vld [vmem:[#allocation2 + $0x8] sm:$0xff]
        %v1094 = vld [vmem:[#allocation2 + $0x10] sm:$0xff]
        %v1095 = vld [vmem:[#allocation2 + $0x18] sm:$0xff]
        %v1096 = vld [vmem:[#allocation2 + $0x20] sm:$0xff]
        %v1097 = vld [vmem:[#allocation2 + $0x28] sm:$0xff]
        %v1098 = vld [vmem:[#allocation2 + $0x30] sm:$0xff]
        %v1099 = vld [vmem:[#allocation2 + $0x38] sm:$0xff]
        %v1100 = vld [vmem:[#allocation2 + $0x40] sm:$0xff]
        %v1101 = vld [vmem:[#allocation2 + $0x48] sm:$0xff]
        %v1102 = vld [vmem:[#allocation2 + $0x50] sm:$0xff]
        %v1103 = vld [vmem:[#allocation2 + $0x58] sm:$0xff]
        %v1104 = vld [vmem:[#allocation2 + $0x60] sm:$0xff]
        %v1105 = vld [vmem:[#allocation2 + $0x68] sm:$0xff]
        %v1106 = vld [vmem:[#allocation2 + $0x70] sm:$0xff]
        %v1107 = vld [vmem:[#allocation2 + $0x78] sm:$0xff]
        %v1108 = vld [vmem:[#allocation2 + $0x80] sm:$0xff]
        %v1109 = vld [vmem:[#allocation2 + $0x88] sm:$0xff]
        %v1110 = vld [vmem:[#allocation2 + $0x90] sm:$0xff]
        %v1111 = vld [vmem:[#allocation2 + $0x98] sm:$0xff]
        %v1112 = vld [vmem:[#allocation2 + $0xa0] sm:$0xff]
        %v1113 = vld [vmem:[#allocation2 + $0xa8] sm:$0xff]
        %v1114 = vld [vmem:[#allocation2 + $0xb0] sm:$0xff]
        %v1115 = vld [vmem:[#allocation2 + $0xb8] sm:$0xff]
        %v1116 = vld [vmem:[#allocation2 + $0xc0] sm:$0xff]
        %v1117 = vld [vmem:[#allocation2 + $0xc8] sm:$0xff]
        %v1118 = vld [vmem:[#allocation2 + $0xd0] sm:$0xff]
        %v1119 = vld [vmem:[#allocation2 + $0xd8] sm:$0xff]
        %v1120 = vld [vmem:[#allocation2 + $0xe0] sm:$0xff]
        %v1121 = vld [vmem:[#allocation2 + $0xe8] sm:$0xff]
        %v1122 = vld [vmem:[#allocation2 + $0xf0] sm:$0xff]
        %v1123 = vld [vmem:[#allocation2 + $0xf8] sm:$0xff]
        %v1124 = vld [vmem:[#allocation2 + $0x100] sm:$0xff]
        %v1125 = vld [vmem:[#allocation2 + $0x108] sm:$0xff]
        %v1126 = vld [vmem:[#allocation2 + $0x110] sm:$0xff]
        %v1127 = vld [vmem:[#allocation2 + $0x118] sm:$0xff]
        %v1128 = vld [vmem:[#allocation2 + $0x120] sm:$0xff]
        %v1129 = vld [vmem:[#allocation2 + $0x128] sm:$0xff]
        %v1130 = vld [vmem:[#allocation2 + $0x130] sm:$0xff]
        %v1131 = vld [vmem:[#allocation2 + $0x138] sm:$0xff]
        %v1132 = vld [vmem:[#allocation2 + $0x140] sm:$0xff]
        %v1133 = vld [vmem:[#allocation2 + $0x148] sm:$0xff]
        %v1134 = vld [vmem:[#allocation2 + $0x150] sm:$0xff]
        %v1135 = vld [vmem:[#allocation2 + $0x158] sm:$0xff]
        %v1136 = vld [vmem:[#allocation2 + $0x160] sm:$0xff]
        %v1137 = vld [vmem:[#allocation2 + $0x168] sm:$0xff]
        %v1138 = vld [vmem:[#allocation2 + $0x170] sm:$0xff]
        %v1139 = vld [vmem:[#allocation2 + $0x178] sm:$0xff]
        %s1140 = scalar_lea.vmem [#allocation2], 24
        %v1141 = vld [vmem:[%s1140] sm:$0xff]
        %v1142 = vld [vmem:[%s1140 + $0x8] sm:$0xff]
        %v1143 = vld [vmem:[%s1140 + $0x10] sm:$0xff]
        %v1144 = vld [vmem:[%s1140 + $0x18] sm:$0xff]
        %v1145 = vld [vmem:[%s1140 + $0x20] sm:$0xff]
        %v1146 = vld [vmem:[%s1140 + $0x28] sm:$0xff]
        %v1147 = vld [vmem:[%s1140 + $0x30] sm:$0xff]
        %v1148 = vld [vmem:[%s1140 + $0x38] sm:$0xff]
        %v1149 = vld [vmem:[%s1140 + $0x40] sm:$0xff]
        %v1150 = vld [vmem:[%s1140 + $0x48] sm:$0xff]
        %v1151 = vld [vmem:[%s1140 + $0x50] sm:$0xff]
        %v1152 = vld [vmem:[%s1140 + $0x58] sm:$0xff]
        %v1153 = vld [vmem:[%s1140 + $0x60] sm:$0xff]
        %v1154 = vld [vmem:[%s1140 + $0x68] sm:$0xff]
        %v1155 = vld [vmem:[%s1140 + $0x70] sm:$0xff]
        %v1156 = vld [vmem:[%s1140 + $0x78] sm:$0xff]
        %v1157 = vld [vmem:[%s1140 + $0x80] sm:$0xff]
        %v1158 = vld [vmem:[%s1140 + $0x88] sm:$0xff]
        %v1159 = vld [vmem:[%s1140 + $0x90] sm:$0xff]
        %v1160 = vld [vmem:[%s1140 + $0x98] sm:$0xff]
        %v1161 = vld [vmem:[%s1140 + $0xa0] sm:$0xff]
        %v1162 = vld [vmem:[%s1140 + $0xa8] sm:$0xff]
        %v1163 = vld [vmem:[%s1140 + $0xb0] sm:$0xff]
        %v1164 = vld [vmem:[%s1140 + $0xb8] sm:$0xff]
        %v1165 = vld [vmem:[%s1140 + $0xc0] sm:$0xff]
        %v1166 = vld [vmem:[%s1140 + $0xc8] sm:$0xff]
        %v1167 = vld [vmem:[%s1140 + $0xd0] sm:$0xff]
        %v1168 = vld [vmem:[%s1140 + $0xd8] sm:$0xff]
        %v1169 = vld [vmem:[%s1140 + $0xe0] sm:$0xff]
        %v1170 = vld [vmem:[%s1140 + $0xe8] sm:$0xff]
        %v1171 = vld [vmem:[%s1140 + $0xf0] sm:$0xff]
        %v1172 = vld [vmem:[%s1140 + $0xf8] sm:$0xff]
        %v1173 = vld [vmem:[%s1140 + $0x100] sm:$0xff]
        %v1174 = vld [vmem:[%s1140 + $0x108] sm:$0xff]
        %v1175 = vld [vmem:[%s1140 + $0x110] sm:$0xff]
        %v1176 = vld [vmem:[%s1140 + $0x118] sm:$0xff]
        %v1177 = vld [vmem:[%s1140 + $0x120] sm:$0xff]
        %v1178 = vld [vmem:[%s1140 + $0x128] sm:$0xff]
        %v1179 = vld [vmem:[%s1140 + $0x130] sm:$0xff]
        %v1180 = vld [vmem:[%s1140 + $0x138] sm:$0xff]
        %v1181 = vld [vmem:[%s1140 + $0x140] sm:$0xff]
        %v1182 = vld [vmem:[%s1140 + $0x148] sm:$0xff]
        %v1183 = vld [vmem:[%s1140 + $0x150] sm:$0xff]
        %v1184 = vld [vmem:[%s1140 + $0x158] sm:$0xff]
        %v1185 = vld [vmem:[%s1140 + $0x160] sm:$0xff]
        %v1186 = vld [vmem:[%s1140 + $0x168] sm:$0xff]
        %v1187 = vld [vmem:[%s1140 + $0x170] sm:$0xff]
        %v1188 = vld [vmem:[%s1140 + $0x178] sm:$0xff]
        %v1189 = vmax.f32 %v1092, %v1141
        %v1190 = vmax.f32 %v1093, %v1142
        %v1191 = vmax.f32 %v1094, %v1143
        %v1192 = vmax.f32 %v1095, %v1144
        %v1193 = vmax.f32 %v1096, %v1145
        %v1194 = vmax.f32 %v1097, %v1146
        %v1195 = vmax.f32 %v1098, %v1147
        %v1196 = vmax.f32 %v1099, %v1148
        %v1197 = vmax.f32 %v1100, %v1149
        %v1198 = vmax.f32 %v1101, %v1150
        %v1199 = vmax.f32 %v1102, %v1151
        %v1200 = vmax.f32 %v1103, %v1152
        %v1201 = vmax.f32 %v1104, %v1153
        %v1202 = vmax.f32 %v1105, %v1154
        %v1203 = vmax.f32 %v1106, %v1155
        %v1204 = vmax.f32 %v1107, %v1156
        %v1205 = vmax.f32 %v1108, %v1157
        %v1206 = vmax.f32 %v1109, %v1158
        %v1207 = vmax.f32 %v1110, %v1159
        %v1208 = vmax.f32 %v1111, %v1160
        %v1209 = vmax.f32 %v1112, %v1161
        %v1210 = vmax.f32 %v1113, %v1162
        %v1211 = vmax.f32 %v1114, %v1163
        %v1212 = vmax.f32 %v1115, %v1164
        %v1213 = vmax.f32 %v1116, %v1165
        %v1214 = vmax.f32 %v1117, %v1166
        %v1215 = vmax.f32 %v1118, %v1167
        %v1216 = vmax.f32 %v1119, %v1168
        %v1217 = vmax.f32 %v1120, %v1169
        %v1218 = vmax.f32 %v1121, %v1170
        %v1219 = vmax.f32 %v1122, %v1171
        %v1220 = vmax.f32 %v1123, %v1172
        %v1221 = vmax.f32 %v1124, %v1173
        %v1222 = vmax.f32 %v1125, %v1174
        %v1223 = vmax.f32 %v1126, %v1175
        %v1224 = vmax.f32 %v1127, %v1176
        %v1225 = vmax.f32 %v1128, %v1177
        %v1226 = vmax.f32 %v1129, %v1178
        %v1227 = vmax.f32 %v1130, %v1179
        %v1228 = vmax.f32 %v1131, %v1180
        %v1229 = vmax.f32 %v1132, %v1181
        %v1230 = vmax.f32 %v1133, %v1182
        %v1231 = vmax.f32 %v1134, %v1183
        %v1232 = vmax.f32 %v1135, %v1184
        %v1233 = vmax.f32 %v1136, %v1185
        %v1234 = vmax.f32 %v1137, %v1186
        %v1235 = vmax.f32 %v1138, %v1187
        %v1236 = vmax.f32 %v1139, %v1188
        %v1237 = vld [vmem:[%s1059] sm:$0xff]
        %v1238 = vld [vmem:[%s1059 + $0x8] sm:$0xff]
        %v1239 = vld [vmem:[%s1059 + $0x10] sm:$0xff]
        %v1240 = vld [vmem:[%s1059 + $0x18] sm:$0xff]
        %v1241 = vld [vmem:[%s1059 + $0x20] sm:$0xff]
        %v1242 = vld [vmem:[%s1059 + $0x28] sm:$0xff]
        %v1243 = vld [vmem:[%s1059 + $0x30] sm:$0xff]
        %v1244 = vld [vmem:[%s1059 + $0x38] sm:$0xff]
        %v1245 = vld [vmem:[%s1059 + $0x40] sm:$0xff]
        %v1246 = vld [vmem:[%s1059 + $0x48] sm:$0xff]
        %v1247 = vld [vmem:[%s1059 + $0x50] sm:$0xff]
        %v1248 = vld [vmem:[%s1059 + $0x58] sm:$0xff]
        %v1249 = vld [vmem:[%s1059 + $0x60] sm:$0xff]
        %v1250 = vld [vmem:[%s1059 + $0x68] sm:$0xff]
        %v1251 = vld [vmem:[%s1059 + $0x70] sm:$0xff]
        %v1252 = vld [vmem:[%s1059 + $0x78] sm:$0xff]
        %v1253 = vld [vmem:[%s1059 + $0x80] sm:$0xff]
        %v1254 = vld [vmem:[%s1059 + $0x88] sm:$0xff]
        %v1255 = vld [vmem:[%s1059 + $0x90] sm:$0xff]
        %v1256 = vld [vmem:[%s1059 + $0x98] sm:$0xff]
        %v1257 = vld [vmem:[%s1059 + $0xa0] sm:$0xff]
        %v1258 = vld [vmem:[%s1059 + $0xa8] sm:$0xff]
        %v1259 = vld [vmem:[%s1059 + $0xb0] sm:$0xff]
        %v1260 = vld [vmem:[%s1059 + $0xb8] sm:$0xff]
        %v1261 = vld [vmem:[%s1059 + $0xc0] sm:$0xff]
        %v1262 = vld [vmem:[%s1059 + $0xc8] sm:$0xff]
        %v1263 = vld [vmem:[%s1059 + $0xd0] sm:$0xff]
        %v1264 = vld [vmem:[%s1059 + $0xd8] sm:$0xff]
        %v1265 = vld [vmem:[%s1059 + $0xe0] sm:$0xff]
        %v1266 = vld [vmem:[%s1059 + $0xe8] sm:$0xff]
        %v1267 = vld [vmem:[%s1059 + $0xf0] sm:$0xff]
        %v1268 = vld [vmem:[%s1059 + $0xf8] sm:$0xff]
        %v1269 = vld [vmem:[%s1059 + $0x100] sm:$0xff]
        %v1270 = vld [vmem:[%s1059 + $0x108] sm:$0xff]
        %v1271 = vld [vmem:[%s1059 + $0x110] sm:$0xff]
        %v1272 = vld [vmem:[%s1059 + $0x118] sm:$0xff]
        %v1273 = vld [vmem:[%s1059 + $0x120] sm:$0xff]
        %v1274 = vld [vmem:[%s1059 + $0x128] sm:$0xff]
        %v1275 = vld [vmem:[%s1059 + $0x130] sm:$0xff]
        %v1276 = vld [vmem:[%s1059 + $0x138] sm:$0xff]
        %v1277 = vld [vmem:[%s1059 + $0x140] sm:$0xff]
        %v1278 = vld [vmem:[%s1059 + $0x148] sm:$0xff]
        %v1279 = vld [vmem:[%s1059 + $0x150] sm:$0xff]
        %v1280 = vld [vmem:[%s1059 + $0x158] sm:$0xff]
        %v1281 = vld [vmem:[%s1059 + $0x160] sm:$0xff]
        %v1282 = vld [vmem:[%s1059 + $0x168] sm:$0xff]
        %v1283 = vld [vmem:[%s1059 + $0x170] sm:$0xff]
        %v1284 = vld [vmem:[%s1059 + $0x178] sm:$0xff]
        %v1285 = vmax.f32 %v1189, %v1237
        %v1286 = vmax.f32 %v1190, %v1238
        %v1287 = vmax.f32 %v1191, %v1239
        %v1288 = vmax.f32 %v1192, %v1240
        %v1289 = vmax.f32 %v1193, %v1241
        %v1290 = vmax.f32 %v1194, %v1242
        %v1291 = vmax.f32 %v1195, %v1243
        %v1292 = vmax.f32 %v1196, %v1244
        %v1293 = vmax.f32 %v1197, %v1245
        %v1294 = vmax.f32 %v1198, %v1246
        %v1295 = vmax.f32 %v1199, %v1247
        %v1296 = vmax.f32 %v1200, %v1248
        %v1297 = vmax.f32 %v1201, %v1249
        %v1298 = vmax.f32 %v1202, %v1250
        %v1299 = vmax.f32 %v1203, %v1251
        %v1300 = vmax.f32 %v1204, %v1252
        %v1301 = vmax.f32 %v1205, %v1253
        %v1302 = vmax.f32 %v1206, %v1254
        %v1303 = vmax.f32 %v1207, %v1255
        %v1304 = vmax.f32 %v1208, %v1256
        %v1305 = vmax.f32 %v1209, %v1257
        %v1306 = vmax.f32 %v1210, %v1258
        %v1307 = vmax.f32 %v1211, %v1259
        %v1308 = vmax.f32 %v1212, %v1260
        %v1309 = vmax.f32 %v1213, %v1261
        %v1310 = vmax.f32 %v1214, %v1262
        %v1311 = vmax.f32 %v1215, %v1263
        %v1312 = vmax.f32 %v1216, %v1264
        %v1313 = vmax.f32 %v1217, %v1265
        %v1314 = vmax.f32 %v1218, %v1266
        %v1315 = vmax.f32 %v1219, %v1267
        %v1316 = vmax.f32 %v1220, %v1268
        %v1317 = vmax.f32 %v1221, %v1269
        %v1318 = vmax.f32 %v1222, %v1270
        %v1319 = vmax.f32 %v1223, %v1271
        %v1320 = vmax.f32 %v1224, %v1272
        %v1321 = vmax.f32 %v1225, %v1273
        %v1322 = vmax.f32 %v1226, %v1274
        %v1323 = vmax.f32 %v1227, %v1275
        %v1324 = vmax.f32 %v1228, %v1276
        %v1325 = vmax.f32 %v1229, %v1277
        %v1326 = vmax.f32 %v1230, %v1278
        %v1327 = vmax.f32 %v1231, %v1279
        %v1328 = vmax.f32 %v1232, %v1280
        %v1329 = vmax.f32 %v1233, %v1281
        %v1330 = vmax.f32 %v1234, %v1282
        %v1331 = vmax.f32 %v1235, %v1283
        %v1332 = vmax.f32 %v1236, %v1284
        %s1333 = scalar_lea.vmem [#allocation2], 72
        %v1334 = vld [vmem:[%s1333] sm:$0xff]
        %v1335 = vld [vmem:[%s1333 + $0x8] sm:$0xff]
        %v1336 = vld [vmem:[%s1333 + $0x10] sm:$0xff]
        %v1337 = vld [vmem:[%s1333 + $0x18] sm:$0xff]
        %v1338 = vld [vmem:[%s1333 + $0x20] sm:$0xff]
        %v1339 = vld [vmem:[%s1333 + $0x28] sm:$0xff]
        %v1340 = vld [vmem:[%s1333 + $0x30] sm:$0xff]
        %v1341 = vld [vmem:[%s1333 + $0x38] sm:$0xff]
        %v1342 = vld [vmem:[%s1333 + $0x40] sm:$0xff]
        %v1343 = vld [vmem:[%s1333 + $0x48] sm:$0xff]
        %v1344 = vld [vmem:[%s1333 + $0x50] sm:$0xff]
        %v1345 = vld [vmem:[%s1333 + $0x58] sm:$0xff]
        %v1346 = vld [vmem:[%s1333 + $0x60] sm:$0xff]
        %v1347 = vld [vmem:[%s1333 + $0x68] sm:$0xff]
        %v1348 = vld [vmem:[%s1333 + $0x70] sm:$0xff]
        %v1349 = vld [vmem:[%s1333 + $0x78] sm:$0xff]
        %v1350 = vld [vmem:[%s1333 + $0x80] sm:$0xff]
        %v1351 = vld [vmem:[%s1333 + $0x88] sm:$0xff]
        %v1352 = vld [vmem:[%s1333 + $0x90] sm:$0xff]
        %v1353 = vld [vmem:[%s1333 + $0x98] sm:$0xff]
        %v1354 = vld [vmem:[%s1333 + $0xa0] sm:$0xff]
        %v1355 = vld [vmem:[%s1333 + $0xa8] sm:$0xff]
        %v1356 = vld [vmem:[%s1333 + $0xb0] sm:$0xff]
        %v1357 = vld [vmem:[%s1333 + $0xb8] sm:$0xff]
        %v1358 = vld [vmem:[%s1333 + $0xc0] sm:$0xff]
        %v1359 = vld [vmem:[%s1333 + $0xc8] sm:$0xff]
        %v1360 = vld [vmem:[%s1333 + $0xd0] sm:$0xff]
        %v1361 = vld [vmem:[%s1333 + $0xd8] sm:$0xff]
        %v1362 = vld [vmem:[%s1333 + $0xe0] sm:$0xff]
        %v1363 = vld [vmem:[%s1333 + $0xe8] sm:$0xff]
        %v1364 = vld [vmem:[%s1333 + $0xf0] sm:$0xff]
        %v1365 = vld [vmem:[%s1333 + $0xf8] sm:$0xff]
        %v1366 = vld [vmem:[%s1333 + $0x100] sm:$0xff]
        %v1367 = vld [vmem:[%s1333 + $0x108] sm:$0xff]
        %v1368 = vld [vmem:[%s1333 + $0x110] sm:$0xff]
        %v1369 = vld [vmem:[%s1333 + $0x118] sm:$0xff]
        %v1370 = vld [vmem:[%s1333 + $0x120] sm:$0xff]
        %v1371 = vld [vmem:[%s1333 + $0x128] sm:$0xff]
        %v1372 = vld [vmem:[%s1333 + $0x130] sm:$0xff]
        %v1373 = vld [vmem:[%s1333 + $0x138] sm:$0xff]
        %v1374 = vld [vmem:[%s1333 + $0x140] sm:$0xff]
        %v1375 = vld [vmem:[%s1333 + $0x148] sm:$0xff]
        %v1376 = vld [vmem:[%s1333 + $0x150] sm:$0xff]
        %v1377 = vld [vmem:[%s1333 + $0x158] sm:$0xff]
        %v1378 = vld [vmem:[%s1333 + $0x160] sm:$0xff]
        %v1379 = vld [vmem:[%s1333 + $0x168] sm:$0xff]
        %v1380 = vld [vmem:[%s1333 + $0x170] sm:$0xff]
        %v1381 = vld [vmem:[%s1333 + $0x178] sm:$0xff]
        %v1382 = vmax.f32 %v1285, %v1334
        %v1383 = vmax.f32 %v1286, %v1335
        %v1384 = vmax.f32 %v1287, %v1336
        %v1385 = vmax.f32 %v1288, %v1337
        %v1386 = vmax.f32 %v1289, %v1338
        %v1387 = vmax.f32 %v1290, %v1339
        %v1388 = vmax.f32 %v1291, %v1340
        %v1389 = vmax.f32 %v1292, %v1341
        %v1390 = vmax.f32 %v1293, %v1342
        %v1391 = vmax.f32 %v1294, %v1343
        %v1392 = vmax.f32 %v1295, %v1344
        %v1393 = vmax.f32 %v1296, %v1345
        %v1394 = vmax.f32 %v1297, %v1346
        %v1395 = vmax.f32 %v1298, %v1347
        %v1396 = vmax.f32 %v1299, %v1348
        %v1397 = vmax.f32 %v1300, %v1349
        %v1398 = vmax.f32 %v1301, %v1350
        %v1399 = vmax.f32 %v1302, %v1351
        %v1400 = vmax.f32 %v1303, %v1352
        %v1401 = vmax.f32 %v1304, %v1353
        %v1402 = vmax.f32 %v1305, %v1354
        %v1403 = vmax.f32 %v1306, %v1355
        %v1404 = vmax.f32 %v1307, %v1356
        %v1405 = vmax.f32 %v1308, %v1357
        %v1406 = vmax.f32 %v1309, %v1358
        %v1407 = vmax.f32 %v1310, %v1359
        %v1408 = vmax.f32 %v1311, %v1360
        %v1409 = vmax.f32 %v1312, %v1361
        %v1410 = vmax.f32 %v1313, %v1362
        %v1411 = vmax.f32 %v1314, %v1363
        %v1412 = vmax.f32 %v1315, %v1364
        %v1413 = vmax.f32 %v1316, %v1365
        %v1414 = vmax.f32 %v1317, %v1366
        %v1415 = vmax.f32 %v1318, %v1367
        %v1416 = vmax.f32 %v1319, %v1368
        %v1417 = vmax.f32 %v1320, %v1369
        %v1418 = vmax.f32 %v1321, %v1370
        %v1419 = vmax.f32 %v1322, %v1371
        %v1420 = vmax.f32 %v1323, %v1372
        %v1421 = vmax.f32 %v1324, %v1373
        %v1422 = vmax.f32 %v1325, %v1374
        %v1423 = vmax.f32 %v1326, %v1375
        %v1424 = vmax.f32 %v1327, %v1376
        %v1425 = vmax.f32 %v1328, %v1377
        %v1426 = vmax.f32 %v1329, %v1378
        %v1427 = vmax.f32 %v1330, %v1379
        %v1428 = vmax.f32 %v1331, %v1380
        %v1429 = vmax.f32 %v1332, %v1381
        %s1430 = scalar_lea.vmem [#allocation2], 96
        %v1431 = vld [vmem:[%s1430] sm:$0xff]
        %v1432 = vld [vmem:[%s1430 + $0x8] sm:$0xff]
        %v1433 = vld [vmem:[%s1430 + $0x10] sm:$0xff]
        %v1434 = vld [vmem:[%s1430 + $0x18] sm:$0xff]
        %v1435 = vld [vmem:[%s1430 + $0x20] sm:$0xff]
        %v1436 = vld [vmem:[%s1430 + $0x28] sm:$0xff]
        %v1437 = vld [vmem:[%s1430 + $0x30] sm:$0xff]
        %v1438 = vld [vmem:[%s1430 + $0x38] sm:$0xff]
        %v1439 = vld [vmem:[%s1430 + $0x40] sm:$0xff]
        %v1440 = vld [vmem:[%s1430 + $0x48] sm:$0xff]
        %v1441 = vld [vmem:[%s1430 + $0x50] sm:$0xff]
        %v1442 = vld [vmem:[%s1430 + $0x58] sm:$0xff]
        %v1443 = vld [vmem:[%s1430 + $0x60] sm:$0xff]
        %v1444 = vld [vmem:[%s1430 + $0x68] sm:$0xff]
        %v1445 = vld [vmem:[%s1430 + $0x70] sm:$0xff]
        %v1446 = vld [vmem:[%s1430 + $0x78] sm:$0xff]
        %v1447 = vld [vmem:[%s1430 + $0x80] sm:$0xff]
        %v1448 = vld [vmem:[%s1430 + $0x88] sm:$0xff]
        %v1449 = vld [vmem:[%s1430 + $0x90] sm:$0xff]
        %v1450 = vld [vmem:[%s1430 + $0x98] sm:$0xff]
        %v1451 = vld [vmem:[%s1430 + $0xa0] sm:$0xff]
        %v1452 = vld [vmem:[%s1430 + $0xa8] sm:$0xff]
        %v1453 = vld [vmem:[%s1430 + $0xb0] sm:$0xff]
        %v1454 = vld [vmem:[%s1430 + $0xb8] sm:$0xff]
        %v1455 = vld [vmem:[%s1430 + $0xc0] sm:$0xff]
        %v1456 = vld [vmem:[%s1430 + $0xc8] sm:$0xff]
        %v1457 = vld [vmem:[%s1430 + $0xd0] sm:$0xff]
        %v1458 = vld [vmem:[%s1430 + $0xd8] sm:$0xff]
        %v1459 = vld [vmem:[%s1430 + $0xe0] sm:$0xff]
        %v1460 = vld [vmem:[%s1430 + $0xe8] sm:$0xff]
        %v1461 = vld [vmem:[%s1430 + $0xf0] sm:$0xff]
        %v1462 = vld [vmem:[%s1430 + $0xf8] sm:$0xff]
        %v1463 = vld [vmem:[%s1430 + $0x100] sm:$0xff]
        %v1464 = vld [vmem:[%s1430 + $0x108] sm:$0xff]
        %v1465 = vld [vmem:[%s1430 + $0x110] sm:$0xff]
        %v1466 = vld [vmem:[%s1430 + $0x118] sm:$0xff]
        %v1467 = vld [vmem:[%s1430 + $0x120] sm:$0xff]
        %v1468 = vld [vmem:[%s1430 + $0x128] sm:$0xff]
        %v1469 = vld [vmem:[%s1430 + $0x130] sm:$0xff]
        %v1470 = vld [vmem:[%s1430 + $0x138] sm:$0xff]
        %v1471 = vld [vmem:[%s1430 + $0x140] sm:$0xff]
        %v1472 = vld [vmem:[%s1430 + $0x148] sm:$0xff]
        %v1473 = vld [vmem:[%s1430 + $0x150] sm:$0xff]
        %v1474 = vld [vmem:[%s1430 + $0x158] sm:$0xff]
        %v1475 = vld [vmem:[%s1430 + $0x160] sm:$0xff]
        %v1476 = vld [vmem:[%s1430 + $0x168] sm:$0xff]
        %v1477 = vld [vmem:[%s1430 + $0x170] sm:$0xff]
        %v1478 = vld [vmem:[%s1430 + $0x178] sm:$0xff]
        %v1479 = vmax.f32 %v1382, %v1431
        %v1480 = vmax.f32 %v1383, %v1432
        %v1481 = vmax.f32 %v1384, %v1433
        %v1482 = vmax.f32 %v1385, %v1434
        %v1483 = vmax.f32 %v1386, %v1435
        %v1484 = vmax.f32 %v1387, %v1436
        %v1485 = vmax.f32 %v1388, %v1437
        %v1486 = vmax.f32 %v1389, %v1438
        %v1487 = vmax.f32 %v1390, %v1439
        %v1488 = vmax.f32 %v1391, %v1440
        %v1489 = vmax.f32 %v1392, %v1441
        %v1490 = vmax.f32 %v1393, %v1442
        %v1491 = vmax.f32 %v1394, %v1443
        %v1492 = vmax.f32 %v1395, %v1444
        %v1493 = vmax.f32 %v1396, %v1445
        %v1494 = vmax.f32 %v1397, %v1446
        %v1495 = vmax.f32 %v1398, %v1447
        %v1496 = vmax.f32 %v1399, %v1448
        %v1497 = vmax.f32 %v1400, %v1449
        %v1498 = vmax.f32 %v1401, %v1450
        %v1499 = vmax.f32 %v1402, %v1451
        %v1500 = vmax.f32 %v1403, %v1452
        %v1501 = vmax.f32 %v1404, %v1453
        %v1502 = vmax.f32 %v1405, %v1454
        %v1503 = vmax.f32 %v1406, %v1455
        %v1504 = vmax.f32 %v1407, %v1456
        %v1505 = vmax.f32 %v1408, %v1457
        %v1506 = vmax.f32 %v1409, %v1458
        %v1507 = vmax.f32 %v1410, %v1459
        %v1508 = vmax.f32 %v1411, %v1460
        %v1509 = vmax.f32 %v1412, %v1461
        %v1510 = vmax.f32 %v1413, %v1462
        %v1511 = vmax.f32 %v1414, %v1463
        %v1512 = vmax.f32 %v1415, %v1464
        %v1513 = vmax.f32 %v1416, %v1465
        %v1514 = vmax.f32 %v1417, %v1466
        %v1515 = vmax.f32 %v1418, %v1467
        %v1516 = vmax.f32 %v1419, %v1468
        %v1517 = vmax.f32 %v1420, %v1469
        %v1518 = vmax.f32 %v1421, %v1470
        %v1519 = vmax.f32 %v1422, %v1471
        %v1520 = vmax.f32 %v1423, %v1472
        %v1521 = vmax.f32 %v1424, %v1473
        %v1522 = vmax.f32 %v1425, %v1474
        %v1523 = vmax.f32 %v1426, %v1475
        %v1524 = vmax.f32 %v1427, %v1476
        %v1525 = vmax.f32 %v1428, %v1477
        %v1526 = vmax.f32 %v1429, %v1478
        %v1527 = vrot.slane %v1479, 1
        %v1528 = vrot.slane %v1480, 1
        %v1529 = vrot.slane %v1481, 1
        %v1530 = vrot.slane %v1482, 1
        %v1531 = vrot.slane %v1483, 1
        %v1532 = vrot.slane %v1484, 1
        %v1533 = vrot.slane %v1485, 1
        %v1534 = vrot.slane %v1486, 1
        %v1535 = vrot.slane %v1487, 1
        %v1536 = vrot.slane %v1488, 1
        %v1537 = vrot.slane %v1489, 1
        %v1538 = vrot.slane %v1490, 1
        %v1539 = vrot.slane %v1491, 1
        %v1540 = vrot.slane %v1492, 1
        %v1541 = vrot.slane %v1493, 1
        %v1542 = vrot.slane %v1494, 1
        %v1543 = vrot.slane %v1495, 1
        %v1544 = vrot.slane %v1496, 1
        %v1545 = vrot.slane %v1497, 1
        %v1546 = vrot.slane %v1498, 1
        %v1547 = vrot.slane %v1499, 1
        %v1548 = vrot.slane %v1500, 1
        %v1549 = vrot.slane %v1501, 1
        %v1550 = vrot.slane %v1502, 1
        %v1551 = vrot.slane %v1503, 1
        %v1552 = vrot.slane %v1504, 1
        %v1553 = vrot.slane %v1505, 1
        %v1554 = vrot.slane %v1506, 1
        %v1555 = vrot.slane %v1507, 1
        %v1556 = vrot.slane %v1508, 1
        %v1557 = vrot.slane %v1509, 1
        %v1558 = vrot.slane %v1510, 1
        %v1559 = vrot.slane %v1511, 1
        %v1560 = vrot.slane %v1512, 1
        %v1561 = vrot.slane %v1513, 1
        %v1562 = vrot.slane %v1514, 1
        %v1563 = vrot.slane %v1515, 1
        %v1564 = vrot.slane %v1516, 1
        %v1565 = vrot.slane %v1517, 1
        %v1566 = vrot.slane %v1518, 1
        %v1567 = vrot.slane %v1519, 1
        %v1568 = vrot.slane %v1520, 1
        %v1569 = vrot.slane %v1521, 1
        %v1570 = vrot.slane %v1522, 1
        %v1571 = vrot.slane %v1523, 1
        %v1572 = vrot.slane %v1524, 1
        %v1573 = vrot.slane %v1525, 1
        %v1574 = vrot.slane %v1526, 1
        %v1575 = vlaneseq
        %v1576 = vshrl.u32 %v1575, 7
        %vm1577 = vcmp.lt.s32.totalorder %v1576, 7
        %v1578 = vsel %vm1577, %v1573, %v1574
        %v1579 = vsel %vm1577, %v1572, %v1573
        %v1580 = vsel %vm1577, %v1571, %v1572
        %v1581 = vsel %vm1577, %v1570, %v1571
        %v1582 = vsel %vm1577, %v1569, %v1570
        %v1583 = vsel %vm1577, %v1568, %v1569
        %v1584 = vsel %vm1577, %v1567, %v1568
        %v1585 = vsel %vm1577, %v1566, %v1567
        %v1586 = vsel %vm1577, %v1565, %v1566
        %v1587 = vsel %vm1577, %v1564, %v1565
        %v1588 = vsel %vm1577, %v1563, %v1564
        %v1589 = vsel %vm1577, %v1562, %v1563
        %v1590 = vsel %vm1577, %v1561, %v1562
        %v1591 = vsel %vm1577, %v1560, %v1561
        %v1592 = vsel %vm1577, %v1559, %v1560
        %v1593 = vsel %vm1577, %v1558, %v1559
        %v1594 = vsel %vm1577, %v1557, %v1558
        %v1595 = vsel %vm1577, %v1556, %v1557
        %v1596 = vsel %vm1577, %v1555, %v1556
        %v1597 = vsel %vm1577, %v1554, %v1555
        %v1598 = vsel %vm1577, %v1553, %v1554
        %v1599 = vsel %vm1577, %v1552, %v1553
        %v1600 = vsel %vm1577, %v1551, %v1552
        %v1601 = vsel %vm1577, %v1550, %v1551
        %v1602 = vsel %vm1577, %v1549, %v1550
        %v1603 = vsel %vm1577, %v1548, %v1549
        %v1604 = vsel %vm1577, %v1547, %v1548
        %v1605 = vsel %vm1577, %v1546, %v1547
        %v1606 = vsel %vm1577, %v1545, %v1546
        %v1607 = vsel %vm1577, %v1544, %v1545
        %v1608 = vsel %vm1577, %v1543, %v1544
        %v1609 = vsel %vm1577, %v1542, %v1543
        %v1610 = vsel %vm1577, %v1541, %v1542
        %v1611 = vsel %vm1577, %v1540, %v1541
        %v1612 = vsel %vm1577, %v1539, %v1540
        %v1613 = vsel %vm1577, %v1538, %v1539
        %v1614 = vsel %vm1577, %v1537, %v1538
        %v1615 = vsel %vm1577, %v1536, %v1537
        %v1616 = vsel %vm1577, %v1535, %v1536
        %v1617 = vsel %vm1577, %v1534, %v1535
        %v1618 = vsel %vm1577, %v1533, %v1534
        %v1619 = vsel %vm1577, %v1532, %v1533
        %v1620 = vsel %vm1577, %v1531, %v1532
        %v1621 = vsel %vm1577, %v1530, %v1531
        %v1622 = vsel %vm1577, %v1529, %v1530
        %v1623 = vsel %vm1577, %v1528, %v1529
        %v1624 = vsel %vm1577, %v1527, %v1528
        %v1625 = vsel %vm1577, %v1574, %v1527
        %v1626 = vmax.f32 %v1479, %v1624
        %v1627 = vmax.f32 %v1480, %v1623
        %v1628 = vmax.f32 %v1481, %v1622
        %v1629 = vmax.f32 %v1482, %v1621
        %v1630 = vmax.f32 %v1483, %v1620
        %v1631 = vmax.f32 %v1484, %v1619
        %v1632 = vmax.f32 %v1485, %v1618
        %v1633 = vmax.f32 %v1486, %v1617
        %v1634 = vmax.f32 %v1487, %v1616
        %v1635 = vmax.f32 %v1488, %v1615
        %v1636 = vmax.f32 %v1489, %v1614
        %v1637 = vmax.f32 %v1490, %v1613
        %v1638 = vmax.f32 %v1491, %v1612
        %v1639 = vmax.f32 %v1492, %v1611
        %v1640 = vmax.f32 %v1493, %v1610
        %v1641 = vmax.f32 %v1494, %v1609
        %v1642 = vmax.f32 %v1495, %v1608
        %v1643 = vmax.f32 %v1496, %v1607
        %v1644 = vmax.f32 %v1497, %v1606
        %v1645 = vmax.f32 %v1498, %v1605
        %v1646 = vmax.f32 %v1499, %v1604
        %v1647 = vmax.f32 %v1500, %v1603
        %v1648 = vmax.f32 %v1501, %v1602
        %v1649 = vmax.f32 %v1502, %v1601
        %v1650 = vmax.f32 %v1503, %v1600
        %v1651 = vmax.f32 %v1504, %v1599
        %v1652 = vmax.f32 %v1505, %v1598
        %v1653 = vmax.f32 %v1506, %v1597
        %v1654 = vmax.f32 %v1507, %v1596
        %v1655 = vmax.f32 %v1508, %v1595
        %v1656 = vmax.f32 %v1509, %v1594
        %v1657 = vmax.f32 %v1510, %v1593
        %v1658 = vmax.f32 %v1511, %v1592
        %v1659 = vmax.f32 %v1512, %v1591
        %v1660 = vmax.f32 %v1513, %v1590
        %v1661 = vmax.f32 %v1514, %v1589
        %v1662 = vmax.f32 %v1515, %v1588
        %v1663 = vmax.f32 %v1516, %v1587
        %v1664 = vmax.f32 %v1517, %v1586
        %v1665 = vmax.f32 %v1518, %v1585
        %v1666 = vmax.f32 %v1519, %v1584
        %v1667 = vmax.f32 %v1520, %v1583
        %v1668 = vmax.f32 %v1521, %v1582
        %v1669 = vmax.f32 %v1522, %v1581
        %v1670 = vmax.f32 %v1523, %v1580
        %v1671 = vmax.f32 %v1524, %v1579
        %v1672 = vmax.f32 %v1525, %v1578
        %v1673 = vmax.f32 %v1526, %v1625
        %v1674 = vrot.slane %v1479, 7
        %v1675 = vrot.slane %v1480, 7
        %v1676 = vrot.slane %v1481, 7
        %v1677 = vrot.slane %v1482, 7
        %v1678 = vrot.slane %v1483, 7
        %v1679 = vrot.slane %v1484, 7
        %v1680 = vrot.slane %v1485, 7
        %v1681 = vrot.slane %v1486, 7
        %v1682 = vrot.slane %v1487, 7
        %v1683 = vrot.slane %v1488, 7
        %v1684 = vrot.slane %v1489, 7
        %v1685 = vrot.slane %v1490, 7
        %v1686 = vrot.slane %v1491, 7
        %v1687 = vrot.slane %v1492, 7
        %v1688 = vrot.slane %v1493, 7
        %v1689 = vrot.slane %v1494, 7
        %v1690 = vrot.slane %v1495, 7
        %v1691 = vrot.slane %v1496, 7
        %v1692 = vrot.slane %v1497, 7
        %v1693 = vrot.slane %v1498, 7
        %v1694 = vrot.slane %v1499, 7
        %v1695 = vrot.slane %v1500, 7
        %v1696 = vrot.slane %v1501, 7
        %v1697 = vrot.slane %v1502, 7
        %v1698 = vrot.slane %v1503, 7
        %v1699 = vrot.slane %v1504, 7
        %v1700 = vrot.slane %v1505, 7
        %v1701 = vrot.slane %v1506, 7
        %v1702 = vrot.slane %v1507, 7
        %v1703 = vrot.slane %v1508, 7
        %v1704 = vrot.slane %v1509, 7
        %v1705 = vrot.slane %v1510, 7
        %v1706 = vrot.slane %v1511, 7
        %v1707 = vrot.slane %v1512, 7
        %v1708 = vrot.slane %v1513, 7
        %v1709 = vrot.slane %v1514, 7
        %v1710 = vrot.slane %v1515, 7
        %v1711 = vrot.slane %v1516, 7
        %v1712 = vrot.slane %v1517, 7
        %v1713 = vrot.slane %v1518, 7
        %v1714 = vrot.slane %v1519, 7
        %v1715 = vrot.slane %v1520, 7
        %v1716 = vrot.slane %v1521, 7
        %v1717 = vrot.slane %v1522, 7
        %v1718 = vrot.slane %v1523, 7
        %v1719 = vrot.slane %v1524, 7
        %v1720 = vrot.slane %v1525, 7
        %v1721 = vrot.slane %v1526, 7
        %vm1722 = vcmp.lt.s32.totalorder %v1576, 1
        %v1723 = vsel %vm1722, %v1720, %v1721
        %v1724 = vsel %vm1722, %v1719, %v1720
        %v1725 = vsel %vm1722, %v1718, %v1719
        %v1726 = vsel %vm1722, %v1717, %v1718
        %v1727 = vsel %vm1722, %v1716, %v1717
        %v1728 = vsel %vm1722, %v1715, %v1716
        %v1729 = vsel %vm1722, %v1714, %v1715
        %v1730 = vsel %vm1722, %v1713, %v1714
        %v1731 = vsel %vm1722, %v1712, %v1713
        %v1732 = vsel %vm1722, %v1711, %v1712
        %v1733 = vsel %vm1722, %v1710, %v1711
        %v1734 = vsel %vm1722, %v1709, %v1710
        %v1735 = vsel %vm1722, %v1708, %v1709
        %v1736 = vsel %vm1722, %v1707, %v1708
        %v1737 = vsel %vm1722, %v1706, %v1707
        %v1738 = vsel %vm1722, %v1705, %v1706
        %v1739 = vsel %vm1722, %v1704, %v1705
        %v1740 = vsel %vm1722, %v1703, %v1704
        %v1741 = vsel %vm1722, %v1702, %v1703
        %v1742 = vsel %vm1722, %v1701, %v1702
        %v1743 = vsel %vm1722, %v1700, %v1701
        %v1744 = vsel %vm1722, %v1699, %v1700
        %v1745 = vsel %vm1722, %v1698, %v1699
        %v1746 = vsel %vm1722, %v1697, %v1698
        %v1747 = vsel %vm1722, %v1696, %v1697
        %v1748 = vsel %vm1722, %v1695, %v1696
        %v1749 = vsel %vm1722, %v1694, %v1695
        %v1750 = vsel %vm1722, %v1693, %v1694
        %v1751 = vsel %vm1722, %v1692, %v1693
        %v1752 = vsel %vm1722, %v1691, %v1692
        %v1753 = vsel %vm1722, %v1690, %v1691
        %v1754 = vsel %vm1722, %v1689, %v1690
        %v1755 = vsel %vm1722, %v1688, %v1689
        %v1756 = vsel %vm1722, %v1687, %v1688
        %v1757 = vsel %vm1722, %v1686, %v1687
        %v1758 = vsel %vm1722, %v1685, %v1686
        %v1759 = vsel %vm1722, %v1684, %v1685
        %v1760 = vsel %vm1722, %v1683, %v1684
        %v1761 = vsel %vm1722, %v1682, %v1683
        %v1762 = vsel %vm1722, %v1681, %v1682
        %v1763 = vsel %vm1722, %v1680, %v1681
        %v1764 = vsel %vm1722, %v1679, %v1680
        %v1765 = vsel %vm1722, %v1678, %v1679
        %v1766 = vsel %vm1722, %v1677, %v1678
        %v1767 = vsel %vm1722, %v1676, %v1677
        %v1768 = vsel %vm1722, %v1675, %v1676
        %v1769 = vsel %vm1722, %v1674, %v1675
        %v1770 = vsel %vm1722, %v1721, %v1674
        %v1771 = vmax.f32 %v1626, %v1770
        %v1772 = vmax.f32 %v1627, %v1769
        %v1773 = vmax.f32 %v1628, %v1768
        %v1774 = vmax.f32 %v1629, %v1767
        %v1775 = vmax.f32 %v1630, %v1766
        %v1776 = vmax.f32 %v1631, %v1765
        %v1777 = vmax.f32 %v1632, %v1764
        %v1778 = vmax.f32 %v1633, %v1763
        %v1779 = vmax.f32 %v1634, %v1762
        %v1780 = vmax.f32 %v1635, %v1761
        %v1781 = vmax.f32 %v1636, %v1760
        %v1782 = vmax.f32 %v1637, %v1759
        %v1783 = vmax.f32 %v1638, %v1758
        %v1784 = vmax.f32 %v1639, %v1757
        %v1785 = vmax.f32 %v1640, %v1756
        %v1786 = vmax.f32 %v1641, %v1755
        %v1787 = vmax.f32 %v1642, %v1754
        %v1788 = vmax.f32 %v1643, %v1753
        %v1789 = vmax.f32 %v1644, %v1752
        %v1790 = vmax.f32 %v1645, %v1751
        %v1791 = vmax.f32 %v1646, %v1750
        %v1792 = vmax.f32 %v1647, %v1749
        %v1793 = vmax.f32 %v1648, %v1748
        %v1794 = vmax.f32 %v1649, %v1747
        %v1795 = vmax.f32 %v1650, %v1746
        %v1796 = vmax.f32 %v1651, %v1745
        %v1797 = vmax.f32 %v1652, %v1744
        %v1798 = vmax.f32 %v1653, %v1743
        %v1799 = vmax.f32 %v1654, %v1742
        %v1800 = vmax.f32 %v1655, %v1741
        %v1801 = vmax.f32 %v1656, %v1740
        %v1802 = vmax.f32 %v1657, %v1739
        %v1803 = vmax.f32 %v1658, %v1738
        %v1804 = vmax.f32 %v1659, %v1737
        %v1805 = vmax.f32 %v1660, %v1736
        %v1806 = vmax.f32 %v1661, %v1735
        %v1807 = vmax.f32 %v1662, %v1734
        %v1808 = vmax.f32 %v1663, %v1733
        %v1809 = vmax.f32 %v1664, %v1732
        %v1810 = vmax.f32 %v1665, %v1731
        %v1811 = vmax.f32 %v1666, %v1730
        %v1812 = vmax.f32 %v1667, %v1729
        %v1813 = vmax.f32 %v1668, %v1728
        %v1814 = vmax.f32 %v1669, %v1727
        %v1815 = vmax.f32 %v1670, %v1726
        %v1816 = vmax.f32 %v1671, %v1725
        %v1817 = vmax.f32 %v1672, %v1724
        %v1818 = vmax.f32 %v1673, %v1723
        %v1819 = vrot.slane %v1479, 2
        %v1820 = vrot.slane %v1480, 2
        %v1821 = vrot.slane %v1481, 2
        %v1822 = vrot.slane %v1482, 2
        %v1823 = vrot.slane %v1483, 2
        %v1824 = vrot.slane %v1484, 2
        %v1825 = vrot.slane %v1485, 2
        %v1826 = vrot.slane %v1486, 2
        %v1827 = vrot.slane %v1487, 2
        %v1828 = vrot.slane %v1488, 2
        %v1829 = vrot.slane %v1489, 2
        %v1830 = vrot.slane %v1490, 2
        %v1831 = vrot.slane %v1491, 2
        %v1832 = vrot.slane %v1492, 2
        %v1833 = vrot.slane %v1493, 2
        %v1834 = vrot.slane %v1494, 2
        %v1835 = vrot.slane %v1495, 2
        %v1836 = vrot.slane %v1496, 2
        %v1837 = vrot.slane %v1497, 2
        %v1838 = vrot.slane %v1498, 2
        %v1839 = vrot.slane %v1499, 2
        %v1840 = vrot.slane %v1500, 2
        %v1841 = vrot.slane %v1501, 2
        %v1842 = vrot.slane %v1502, 2
        %v1843 = vrot.slane %v1503, 2
        %v1844 = vrot.slane %v1504, 2
        %v1845 = vrot.slane %v1505, 2
        %v1846 = vrot.slane %v1506, 2
        %v1847 = vrot.slane %v1507, 2
        %v1848 = vrot.slane %v1508, 2
        %v1849 = vrot.slane %v1509, 2
        %v1850 = vrot.slane %v1510, 2
        %v1851 = vrot.slane %v1511, 2
        %v1852 = vrot.slane %v1512, 2
        %v1853 = vrot.slane %v1513, 2
        %v1854 = vrot.slane %v1514, 2
        %v1855 = vrot.slane %v1515, 2
        %v1856 = vrot.slane %v1516, 2
        %v1857 = vrot.slane %v1517, 2
        %v1858 = vrot.slane %v1518, 2
        %v1859 = vrot.slane %v1519, 2
        %v1860 = vrot.slane %v1520, 2
        %v1861 = vrot.slane %v1521, 2
        %v1862 = vrot.slane %v1522, 2
        %v1863 = vrot.slane %v1523, 2
        %v1864 = vrot.slane %v1524, 2
        %v1865 = vrot.slane %v1525, 2
        %v1866 = vrot.slane %v1526, 2
        %vm1867 = vcmp.lt.s32.totalorder %v1576, 6
        %v1868 = vsel %vm1867, %v1865, %v1866
        %v1869 = vsel %vm1867, %v1864, %v1865
        %v1870 = vsel %vm1867, %v1863, %v1864
        %v1871 = vsel %vm1867, %v1862, %v1863
        %v1872 = vsel %vm1867, %v1861, %v1862
        %v1873 = vsel %vm1867, %v1860, %v1861
        %v1874 = vsel %vm1867, %v1859, %v1860
        %v1875 = vsel %vm1867, %v1858, %v1859
        %v1876 = vsel %vm1867, %v1857, %v1858
        %v1877 = vsel %vm1867, %v1856, %v1857
        %v1878 = vsel %vm1867, %v1855, %v1856
        %v1879 = vsel %vm1867, %v1854, %v1855
        %v1880 = vsel %vm1867, %v1853, %v1854
        %v1881 = vsel %vm1867, %v1852, %v1853
        %v1882 = vsel %vm1867, %v1851, %v1852
        %v1883 = vsel %vm1867, %v1850, %v1851
        %v1884 = vsel %vm1867, %v1849, %v1850
        %v1885 = vsel %vm1867, %v1848, %v1849
        %v1886 = vsel %vm1867, %v1847, %v1848
        %v1887 = vsel %vm1867, %v1846, %v1847
        %v1888 = vsel %vm1867, %v1845, %v1846
        %v1889 = vsel %vm1867, %v1844, %v1845
        %v1890 = vsel %vm1867, %v1843, %v1844
        %v1891 = vsel %vm1867, %v1842, %v1843
        %v1892 = vsel %vm1867, %v1841, %v1842
        %v1893 = vsel %vm1867, %v1840, %v1841
        %v1894 = vsel %vm1867, %v1839, %v1840
        %v1895 = vsel %vm1867, %v1838, %v1839
        %v1896 = vsel %vm1867, %v1837, %v1838
        %v1897 = vsel %vm1867, %v1836, %v1837
        %v1898 = vsel %vm1867, %v1835, %v1836
        %v1899 = vsel %vm1867, %v1834, %v1835
        %v1900 = vsel %vm1867, %v1833, %v1834
        %v1901 = vsel %vm1867, %v1832, %v1833
        %v1902 = vsel %vm1867, %v1831, %v1832
        %v1903 = vsel %vm1867, %v1830, %v1831
        %v1904 = vsel %vm1867, %v1829, %v1830
        %v1905 = vsel %vm1867, %v1828, %v1829
        %v1906 = vsel %vm1867, %v1827, %v1828
        %v1907 = vsel %vm1867, %v1826, %v1827
        %v1908 = vsel %vm1867, %v1825, %v1826
        %v1909 = vsel %vm1867, %v1824, %v1825
        %v1910 = vsel %vm1867, %v1823, %v1824
        %v1911 = vsel %vm1867, %v1822, %v1823
        %v1912 = vsel %vm1867, %v1821, %v1822
        %v1913 = vsel %vm1867, %v1820, %v1821
        %v1914 = vsel %vm1867, %v1819, %v1820
        %v1915 = vsel %vm1867, %v1866, %v1819
        %v1916 = vmax.f32 %v1771, %v1914
        %v1917 = vmax.f32 %v1772, %v1913
        %v1918 = vmax.f32 %v1773, %v1912
        %v1919 = vmax.f32 %v1774, %v1911
        %v1920 = vmax.f32 %v1775, %v1910
        %v1921 = vmax.f32 %v1776, %v1909
        %v1922 = vmax.f32 %v1777, %v1908
        %v1923 = vmax.f32 %v1778, %v1907
        %v1924 = vmax.f32 %v1779, %v1906
        %v1925 = vmax.f32 %v1780, %v1905
        %v1926 = vmax.f32 %v1781, %v1904
        %v1927 = vmax.f32 %v1782, %v1903
        %v1928 = vmax.f32 %v1783, %v1902
        %v1929 = vmax.f32 %v1784, %v1901
        %v1930 = vmax.f32 %v1785, %v1900
        %v1931 = vmax.f32 %v1786, %v1899
        %v1932 = vmax.f32 %v1787, %v1898
        %v1933 = vmax.f32 %v1788, %v1897
        %v1934 = vmax.f32 %v1789, %v1896
        %v1935 = vmax.f32 %v1790, %v1895
        %v1936 = vmax.f32 %v1791, %v1894
        %v1937 = vmax.f32 %v1792, %v1893
        %v1938 = vmax.f32 %v1793, %v1892
        %v1939 = vmax.f32 %v1794, %v1891
        %v1940 = vmax.f32 %v1795, %v1890
        %v1941 = vmax.f32 %v1796, %v1889
        %v1942 = vmax.f32 %v1797, %v1888
        %v1943 = vmax.f32 %v1798, %v1887
        %v1944 = vmax.f32 %v1799, %v1886
        %v1945 = vmax.f32 %v1800, %v1885
        %v1946 = vmax.f32 %v1801, %v1884
        %v1947 = vmax.f32 %v1802, %v1883
        %v1948 = vmax.f32 %v1803, %v1882
        %v1949 = vmax.f32 %v1804, %v1881
        %v1950 = vmax.f32 %v1805, %v1880
        %v1951 = vmax.f32 %v1806, %v1879
        %v1952 = vmax.f32 %v1807, %v1878
        %v1953 = vmax.f32 %v1808, %v1877
        %v1954 = vmax.f32 %v1809, %v1876
        %v1955 = vmax.f32 %v1810, %v1875
        %v1956 = vmax.f32 %v1811, %v1874
        %v1957 = vmax.f32 %v1812, %v1873
        %v1958 = vmax.f32 %v1813, %v1872
        %v1959 = vmax.f32 %v1814, %v1871
        %v1960 = vmax.f32 %v1815, %v1870
        %v1961 = vmax.f32 %v1816, %v1869
        %v1962 = vmax.f32 %v1817, %v1868
        %v1963 = vmax.f32 %v1818, %v1915
        %v1964 = vrot.slane %v1479, 6
        %v1965 = vrot.slane %v1480, 6
        %v1966 = vrot.slane %v1481, 6
        %v1967 = vrot.slane %v1482, 6
        %v1968 = vrot.slane %v1483, 6
        %v1969 = vrot.slane %v1484, 6
        %v1970 = vrot.slane %v1485, 6
        %v1971 = vrot.slane %v1486, 6
        %v1972 = vrot.slane %v1487, 6
        %v1973 = vrot.slane %v1488, 6
        %v1974 = vrot.slane %v1489, 6
        %v1975 = vrot.slane %v1490, 6
        %v1976 = vrot.slane %v1491, 6
        %v1977 = vrot.slane %v1492, 6
        %v1978 = vrot.slane %v1493, 6
        %v1979 = vrot.slane %v1494, 6
        %v1980 = vrot.slane %v1495, 6
        %v1981 = vrot.slane %v1496, 6
        %v1982 = vrot.slane %v1497, 6
        %v1983 = vrot.slane %v1498, 6
        %v1984 = vrot.slane %v1499, 6
        %v1985 = vrot.slane %v1500, 6
        %v1986 = vrot.slane %v1501, 6
        %v1987 = vrot.slane %v1502, 6
        %v1988 = vrot.slane %v1503, 6
        %v1989 = vrot.slane %v1504, 6
        %v1990 = vrot.slane %v1505, 6
        %v1991 = vrot.slane %v1506, 6
        %v1992 = vrot.slane %v1507, 6
        %v1993 = vrot.slane %v1508, 6
        %v1994 = vrot.slane %v1509, 6
        %v1995 = vrot.slane %v1510, 6
        %v1996 = vrot.slane %v1511, 6
        %v1997 = vrot.slane %v1512, 6
        %v1998 = vrot.slane %v1513, 6
        %v1999 = vrot.slane %v1514, 6
        %v2000 = vrot.slane %v1515, 6
        %v2001 = vrot.slane %v1516, 6
        %v2002 = vrot.slane %v1517, 6
        %v2003 = vrot.slane %v1518, 6
        %v2004 = vrot.slane %v1519, 6
        %v2005 = vrot.slane %v1520, 6
        %v2006 = vrot.slane %v1521, 6
        %v2007 = vrot.slane %v1522, 6
        %v2008 = vrot.slane %v1523, 6
        %v2009 = vrot.slane %v1524, 6
        %v2010 = vrot.slane %v1525, 6
        %v2011 = vrot.slane %v1526, 6
        %vm2012 = vcmp.lt.s32.totalorder %v1576, 2
        %v2013 = vsel %vm2012, %v2010, %v2011
        %v2014 = vsel %vm2012, %v2009, %v2010
        %v2015 = vsel %vm2012, %v2008, %v2009
        %v2016 = vsel %vm2012, %v2007, %v2008
        %v2017 = vsel %vm2012, %v2006, %v2007
        %v2018 = vsel %vm2012, %v2005, %v2006
        %v2019 = vsel %vm2012, %v2004, %v2005
        %v2020 = vsel %vm2012, %v2003, %v2004
        %v2021 = vsel %vm2012, %v2002, %v2003
        %v2022 = vsel %vm2012, %v2001, %v2002
        %v2023 = vsel %vm2012, %v2000, %v2001
        %v2024 = vsel %vm2012, %v1999, %v2000
        %v2025 = vsel %vm2012, %v1998, %v1999
        %v2026 = vsel %vm2012, %v1997, %v1998
        %v2027 = vsel %vm2012, %v1996, %v1997
        %v2028 = vsel %vm2012, %v1995, %v1996
        %v2029 = vsel %vm2012, %v1994, %v1995
        %v2030 = vsel %vm2012, %v1993, %v1994
        %v2031 = vsel %vm2012, %v1992, %v1993
        %v2032 = vsel %vm2012, %v1991, %v1992
        %v2033 = vsel %vm2012, %v1990, %v1991
        %v2034 = vsel %vm2012, %v1989, %v1990
        %v2035 = vsel %vm2012, %v1988, %v1989
        %v2036 = vsel %vm2012, %v1987, %v1988
        %v2037 = vsel %vm2012, %v1986, %v1987
        %v2038 = vsel %vm2012, %v1985, %v1986
        %v2039 = vsel %vm2012, %v1984, %v1985
        %v2040 = vsel %vm2012, %v1983, %v1984
        %v2041 = vsel %vm2012, %v1982, %v1983
        %v2042 = vsel %vm2012, %v1981, %v1982
        %v2043 = vsel %vm2012, %v1980, %v1981
        %v2044 = vsel %vm2012, %v1979, %v1980
        %v2045 = vsel %vm2012, %v1978, %v1979
        %v2046 = vsel %vm2012, %v1977, %v1978
        %v2047 = vsel %vm2012, %v1976, %v1977
        %v2048 = vsel %vm2012, %v1975, %v1976
        %v2049 = vsel %vm2012, %v1974, %v1975
        %v2050 = vsel %vm2012, %v1973, %v1974
        %v2051 = vsel %vm2012, %v1972, %v1973
        %v2052 = vsel %vm2012, %v1971, %v1972
        %v2053 = vsel %vm2012, %v1970, %v1971
        %v2054 = vsel %vm2012, %v1969, %v1970
        %v2055 = vsel %vm2012, %v1968, %v1969
        %v2056 = vsel %vm2012, %v1967, %v1968
        %v2057 = vsel %vm2012, %v1966, %v1967
        %v2058 = vsel %vm2012, %v1965, %v1966
        %v2059 = vsel %vm2012, %v1964, %v1965
        %v2060 = vsel %vm2012, %v2011, %v1964
        %v2061 = vmax.f32 %v1916, %v2060
        %v2062 = vmax.f32 %v1917, %v2059
        %v2063 = vmax.f32 %v1918, %v2058
        %v2064 = vmax.f32 %v1919, %v2057
        %v2065 = vmax.f32 %v1920, %v2056
        %v2066 = vmax.f32 %v1921, %v2055
        %v2067 = vmax.f32 %v1922, %v2054
        %v2068 = vmax.f32 %v1923, %v2053
        %v2069 = vmax.f32 %v1924, %v2052
        %v2070 = vmax.f32 %v1925, %v2051
        %v2071 = vmax.f32 %v1926, %v2050
        %v2072 = vmax.f32 %v1927, %v2049
        %v2073 = vmax.f32 %v1928, %v2048
        %v2074 = vmax.f32 %v1929, %v2047
        %v2075 = vmax.f32 %v1930, %v2046
        %v2076 = vmax.f32 %v1931, %v2045
        %v2077 = vmax.f32 %v1932, %v2044
        %v2078 = vmax.f32 %v1933, %v2043
        %v2079 = vmax.f32 %v1934, %v2042
        %v2080 = vmax.f32 %v1935, %v2041
        %v2081 = vmax.f32 %v1936, %v2040
        %v2082 = vmax.f32 %v1937, %v2039
        %v2083 = vmax.f32 %v1938, %v2038
        %v2084 = vmax.f32 %v1939, %v2037
        %v2085 = vmax.f32 %v1940, %v2036
        %v2086 = vmax.f32 %v1941, %v2035
        %v2087 = vmax.f32 %v1942, %v2034
        %v2088 = vmax.f32 %v1943, %v2033
        %v2089 = vmax.f32 %v1944, %v2032
        %v2090 = vmax.f32 %v1945, %v2031
        %v2091 = vmax.f32 %v1946, %v2030
        %v2092 = vmax.f32 %v1947, %v2029
        %v2093 = vmax.f32 %v1948, %v2028
        %v2094 = vmax.f32 %v1949, %v2027
        %v2095 = vmax.f32 %v1950, %v2026
        %v2096 = vmax.f32 %v1951, %v2025
        %v2097 = vmax.f32 %v1952, %v2024
        %v2098 = vmax.f32 %v1953, %v2023
        %v2099 = vmax.f32 %v1954, %v2022
        %v2100 = vmax.f32 %v1955, %v2021
        %v2101 = vmax.f32 %v1956, %v2020
        %v2102 = vmax.f32 %v1957, %v2019
        %v2103 = vmax.f32 %v1958, %v2018
        %v2104 = vmax.f32 %v1959, %v2017
        %v2105 = vmax.f32 %v1960, %v2016
        %v2106 = vmax.f32 %v1961, %v2015
        %v2107 = vmax.f32 %v1962, %v2014
        %v2108 = vmax.f32 %v1963, %v2013
        %s2109 = scalar_lea.vmem [#allocation9], 128
        %v2110 = vld [vmem:[%s2109] sm:$0xff]
        %v2111 = vld [vmem:[%s2109 + $0x8] sm:$0xff]
        %v2112 = vld [vmem:[%s2109 + $0x10] sm:$0xff]
        %v2113 = vld [vmem:[%s2109 + $0x18] sm:$0xff]
        %v2114 = vld [vmem:[%s2109 + $0x20] sm:$0xff]
        %v2115 = vld [vmem:[%s2109 + $0x28] sm:$0xff]
        %v2116 = vld [vmem:[%s2109 + $0x30] sm:$0xff]
        %v2117 = vld [vmem:[%s2109 + $0x38] sm:$0xff]
        %v2118 = vld [vmem:[%s2109 + $0x40] sm:$0xff]
        %v2119 = vld [vmem:[%s2109 + $0x48] sm:$0xff]
        %v2120 = vld [vmem:[%s2109 + $0x50] sm:$0xff]
        %v2121 = vld [vmem:[%s2109 + $0x58] sm:$0xff]
        %v2122 = vld [vmem:[%s2109 + $0x60] sm:$0xff]
        %v2123 = vld [vmem:[%s2109 + $0x68] sm:$0xff]
        %v2124 = vld [vmem:[%s2109 + $0x70] sm:$0xff]
        %v2125 = vld [vmem:[%s2109 + $0x78] sm:$0xff]
        %2126 = vmatprep.subr.mxu0 0.0
        %2127 = vmatpush1.msra.mxu0 %v2110
        %2128 = vmatprep.subr.mxu0 0.0
        %2129 = vmatpush1.msra.mxu0 %v2111
        %2130 = vmatprep.subr.mxu0 0.0
        %2131 = vmatpush1.msra.mxu0 %v2112
        %2132 = vmatprep.subr.mxu0 0.0
        %2133 = vmatpush1.msra.mxu0 %v2113
        %2134 = vmatprep.subr.mxu0 0.0
        %2135 = vmatpush1.msra.mxu0 %v2114
        %2136 = vmatprep.subr.mxu0 0.0
        %2137 = vmatpush1.msra.mxu0 %v2115
        %2138 = vmatprep.subr.mxu0 0.0
        %2139 = vmatpush1.msra.mxu0 %v2116
        %2140 = vmatprep.subr.mxu0 0.0
        %2141 = vmatpush1.msra.mxu0 %v2117
        %2142 = vmatprep.subr.mxu0 0.0
        %2143 = vmatpush1.msra.mxu0 %v2118
        %2144 = vmatprep.subr.mxu0 0.0
        %2145 = vmatpush1.msra.mxu0 %v2119
        %2146 = vmatprep.subr.mxu0 0.0
        %2147 = vmatpush1.msra.mxu0 %v2120
        %2148 = vmatprep.subr.mxu0 0.0
        %2149 = vmatpush1.msra.mxu0 %v2121
        %2150 = vmatprep.subr.mxu0 0.0
        %2151 = vmatpush1.msra.mxu0 %v2122
        %2152 = vmatprep.subr.mxu0 0.0
        %2153 = vmatpush1.msra.mxu0 %v2123
        %2154 = vmatprep.subr.mxu0 0.0
        %2155 = vmatpush1.msra.mxu0 %v2124
        %2156 = vmatprep.subr.mxu0 0.0
        %2157 = vmatpush1.msra.mxu0 %v2125
        %2158 = vmatprep.subr.mxu0 0.0
        %2159 = vmatpush1.msra.mxu0 0.0
        %2160 = vmatprep.subr.mxu0 0.0
        %2161 = vmatpush1.msra.mxu0 0.0
        %2162 = vmatprep.subr.mxu0 0.0
        %2163 = vmatpush1.msra.mxu0 0.0
        %2164 = vmatprep.subr.mxu0 0.0
        %2165 = vmatpush1.msra.mxu0 0.0
        %2166 = vmatprep.subr.mxu0 0.0
        %2167 = vmatpush1.msra.mxu0 0.0
        %2168 = vmatprep.subr.mxu0 0.0
        %2169 = vmatpush1.msra.mxu0 0.0
        %2170 = vmatprep.subr.mxu0 0.0
        %2171 = vmatpush1.msra.mxu0 0.0
        %2172 = vmatprep.subr.mxu0 0.0
        %2173 = vmatpush1.msra.mxu0 0.0
        %2174 = vmatprep.subr.mxu0 0.0
        %2175 = vmatpush1.msra.mxu0 0.0
        %2176 = vmatprep.subr.mxu0 0.0
        %2177 = vmatpush1.msra.mxu0 0.0
        %2178 = vmatprep.subr.mxu0 0.0
        %2179 = vmatpush1.msra.mxu0 0.0
        %2180 = vmatprep.subr.mxu0 0.0
        %2181 = vmatpush1.msra.mxu0 0.0
        %2182 = vmatprep.subr.mxu0 0.0
        %2183 = vmatpush1.msra.mxu0 0.0
        %2184 = vmatprep.subr.mxu0 0.0
        %2185 = vmatpush1.msra.mxu0 0.0
        %2186 = vmatprep.subr.mxu0 0.0
        %2187 = vmatpush1.msra.mxu0 0.0
        %2188 = vmatprep.subr.mxu0 0.0
        %2189 = vmatpush1.msra.mxu0 0.0
        %2190 = vmatprep.mubr.f32.mxu0 0.0
        %2191 = vmatmul.mubr.f32.gmra.mrb[0].mxu0 %v2061
        %v2192 = vpop.f32.mrb[0].mxu0
        %v2193 = vadd.f32 0.0, %v2192
        %v2194 = vpop.f32.mrb[0].mxu0
        %2195 = vmatprep.mubr.f32.mxu0 0.0
        %2196 = vmatmul.mubr.f32.gmra.mrb[0].mxu0 %v2062
        %v2197 = vpop.f32.mrb[0].mxu0
        %v2198 = vadd.f32 0.0, %v2197
        %v2199 = vpop.f32.mrb[0].mxu0
        %2200 = vmatprep.mubr.f32.mxu0 0.0
        %2201 = vmatmul.mubr.f32.gmra.mrb[0].mxu0 %v2063
        %v2202 = vpop.f32.mrb[0].mxu0
        %v2203 = vadd.f32 0.0, %v2202
        %v2204 = vpop.f32.mrb[0].mxu0
        %2205 = vmatprep.mubr.f32.mxu0 0.0
        %2206 = vmatmul.mubr.f32.gmra.mrb[0].mxu0 %v2064
        %v2207 = vpop.f32.mrb[0].mxu0
        %v2208 = vadd.f32 0.0, %v2207
        %v2209 = vpop.f32.mrb[0].mxu0
        %2210 = vmatprep.mubr.f32.mxu0 0.0
        %2211 = vmatmul.mubr.f32.gmra.mrb[0].mxu0 %v2065
        %v2212 = vpop.f32.mrb[0].mxu0
        %v2213 = vadd.f32 0.0, %v2212
        %v2214 = vpop.f32.mrb[0].mxu0
        %2215 = vmatprep.mubr.f32.mxu0 0.0
        %2216 = vmatmul.mubr.f32.gmra.mrb[0].mxu0 %v2066
        %v2217 = vpop.f32.mrb[0].mxu0
        %v2218 = vadd.f32 0.0, %v2217
        %v2219 = vpop.f32.mrb[0].mxu0
        %2220 = vmatprep.mubr.f32.mxu0 0.0
        %2221 = vmatmul.mubr.f32.gmra.mrb[0].mxu0 %v2067
        %v2222 = vpop.f32.mrb[0].mxu0
        %v2223 = vadd.f32 0.0, %v2222
        %v2224 = vpop.f32.mrb[0].mxu0
        %2225 = vmatprep.mubr.f32.mxu0 0.0
        %2226 = vmatmul.mubr.f32.gmra.mrb[0].mxu0 %v2068
        %v2227 = vpop.f32.mrb[0].mxu0
        %v2228 = vadd.f32 0.0, %v2227
        %v2229 = vpop.f32.mrb[0].mxu0
        %2230 = vmatprep.mubr.f32.mxu0 0.0
        %2231 = vmatmul.mubr.f32.gmra.mrb[0].mxu0 %v2069
        %v2232 = vpop.f32.mrb[0].mxu0
        %v2233 = vadd.f32 0.0, %v2232
        %v2234 = vpop.f32.mrb[0].mxu0
        %2235 = vmatprep.mubr.f32.mxu0 0.0
        %2236 = vmatmul.mubr.f32.gmra.mrb[0].mxu0 %v2070
        %v2237 = vpop.f32.mrb[0].mxu0
        %v2238 = vadd.f32 0.0, %v2237
        %v2239 = vpop.f32.mrb[0].mxu0
        %2240 = vmatprep.mubr.f32.mxu0 0.0
        %2241 = vmatmul.mubr.f32.gmra.mrb[0].mxu0 %v2071
        %v2242 = vpop.f32.mrb[0].mxu0
        %v2243 = vadd.f32 0.0, %v2242
        %v2244 = vpop.f32.mrb[0].mxu0
        %2245 = vmatprep.mubr.f32.mxu0 0.0
        %2246 = vmatmul.mubr.f32.gmra.mrb[0].mxu0 %v2072
        %v2247 = vpop.f32.mrb[0].mxu0
        %v2248 = vadd.f32 0.0, %v2247
        %v2249 = vpop.f32.mrb[0].mxu0
        %2250 = vmatprep.mubr.f32.mxu0 0.0
        %2251 = vmatmul.mubr.f32.gmra.mrb[0].mxu0 %v2073
        %v2252 = vpop.f32.mrb[0].mxu0
        %v2253 = vadd.f32 0.0, %v2252
        %v2254 = vpop.f32.mrb[0].mxu0
        %2255 = vmatprep.mubr.f32.mxu0 0.0
        %2256 = vmatmul.mubr.f32.gmra.mrb[0].mxu0 %v2074
        %v2257 = vpop.f32.mrb[0].mxu0
        %v2258 = vadd.f32 0.0, %v2257
        %v2259 = vpop.f32.mrb[0].mxu0
        %2260 = vmatprep.mubr.f32.mxu0 0.0
        %2261 = vmatmul.mubr.f32.gmra.mrb[0].mxu0 %v2075
        %v2262 = vpop.f32.mrb[0].mxu0
        %v2263 = vadd.f32 0.0, %v2262
        %v2264 = vpop.f32.mrb[0].mxu0
        %2265 = vmatprep.mubr.f32.mxu0 0.0
        %2266 = vmatmul.mubr.f32.gmra.mrb[0].mxu0 %v2076
        %v2267 = vpop.f32.mrb[0].mxu0
        %v2268 = vadd.f32 0.0, %v2267
        %v2269 = vpop.f32.mrb[0].mxu0
        %2270 = vmatprep.mubr.f32.mxu0 0.0
        %2271 = vmatmul.mubr.f32.gmra.mrb[0].mxu0 %v2077
        %v2272 = vpop.f32.mrb[0].mxu0
        %v2273 = vadd.f32 0.0, %v2272
        %v2274 = vpop.f32.mrb[0].mxu0
        %2275 = vmatprep.mubr.f32.mxu0 0.0
        %2276 = vmatmul.mubr.f32.gmra.mrb[0].mxu0 %v2078
        %v2277 = vpop.f32.mrb[0].mxu0
        %v2278 = vadd.f32 0.0, %v2277
        %v2279 = vpop.f32.mrb[0].mxu0
        %2280 = vmatprep.mubr.f32.mxu0 0.0
        %2281 = vmatmul.mubr.f32.gmra.mrb[0].mxu0 %v2079
        %v2282 = vpop.f32.mrb[0].mxu0
        %v2283 = vadd.f32 0.0, %v2282
        %v2284 = vpop.f32.mrb[0].mxu0
        %2285 = vmatprep.mubr.f32.mxu0 0.0
        %2286 = vmatmul.mubr.f32.gmra.mrb[0].mxu0 %v2080
        %v2287 = vpop.f32.mrb[0].mxu0
        %v2288 = vadd.f32 0.0, %v2287
        %v2289 = vpop.f32.mrb[0].mxu0
        %2290 = vmatprep.mubr.f32.mxu0 0.0
        %2291 = vmatmul.mubr.f32.gmra.mrb[0].mxu0 %v2081
        %v2292 = vpop.f32.mrb[0].mxu0
        %v2293 = vadd.f32 0.0, %v2292
        %v2294 = vpop.f32.mrb[0].mxu0
        %2295 = vmatprep.mubr.f32.mxu0 0.0
        %2296 = vmatmul.mubr.f32.gmra.mrb[0].mxu0 %v2082
        %v2297 = vpop.f32.mrb[0].mxu0
        %v2298 = vadd.f32 0.0, %v2297
        %v2299 = vpop.f32.mrb[0].mxu0
        %2300 = vmatprep.mubr.f32.mxu0 0.0
        %2301 = vmatmul.mubr.f32.gmra.mrb[0].mxu0 %v2083
        %v2302 = vpop.f32.mrb[0].mxu0
        %v2303 = vadd.f32 0.0, %v2302
        %v2304 = vpop.f32.mrb[0].mxu0
        %2305 = vmatprep.mubr.f32.mxu0 0.0
        %2306 = vmatmul.mubr.f32.gmra.mrb[0].mxu0 %v2084
        %v2307 = vpop.f32.mrb[0].mxu0
        %v2308 = vadd.f32 0.0, %v2307
        %v2309 = vpop.f32.mrb[0].mxu0
        %2310 = vmatprep.mubr.f32.mxu0 0.0
        %2311 = vmatmul.mubr.f32.gmra.mrb[0].mxu0 %v2085
        %v2312 = vpop.f32.mrb[0].mxu0
        %v2313 = vadd.f32 0.0, %v2312
        %v2314 = vpop.f32.mrb[0].mxu0
        %2315 = vmatprep.mubr.f32.mxu0 0.0
        %2316 = vmatmul.mubr.f32.gmra.mrb[0].mxu0 %v2086
        %v2317 = vpop.f32.mrb[0].mxu0
        %v2318 = vadd.f32 0.0, %v2317
        %v2319 = vpop.f32.mrb[0].mxu0
        %2320 = vmatprep.mubr.f32.mxu0 0.0
        %2321 = vmatmul.mubr.f32.gmra.mrb[0].mxu0 %v2087
        %v2322 = vpop.f32.mrb[0].mxu0
        %v2323 = vadd.f32 0.0, %v2322
        %v2324 = vpop.f32.mrb[0].mxu0
        %2325 = vmatprep.mubr.f32.mxu0 0.0
        %2326 = vmatmul.mubr.f32.gmra.mrb[0].mxu0 %v2088
        %v2327 = vpop.f32.mrb[0].mxu0
        %v2328 = vadd.f32 0.0, %v2327
        %v2329 = vpop.f32.mrb[0].mxu0
        %2330 = vmatprep.mubr.f32.mxu0 0.0
        %2331 = vmatmul.mubr.f32.gmra.mrb[0].mxu0 %v2089
        %v2332 = vpop.f32.mrb[0].mxu0
        %v2333 = vadd.f32 0.0, %v2332
        %v2334 = vpop.f32.mrb[0].mxu0
        %2335 = vmatprep.mubr.f32.mxu0 0.0
        %2336 = vmatmul.mubr.f32.gmra.mrb[0].mxu0 %v2090
        %v2337 = vpop.f32.mrb[0].mxu0
        %v2338 = vadd.f32 0.0, %v2337
        %v2339 = vpop.f32.mrb[0].mxu0
        %2340 = vmatprep.mubr.f32.mxu0 0.0
        %2341 = vmatmul.mubr.f32.gmra.mrb[0].mxu0 %v2091
        %v2342 = vpop.f32.mrb[0].mxu0
        %v2343 = vadd.f32 0.0, %v2342
        %v2344 = vpop.f32.mrb[0].mxu0
        %2345 = vmatprep.mubr.f32.mxu0 0.0
        %2346 = vmatmul.mubr.f32.gmra.mrb[0].mxu0 %v2092
        %v2347 = vpop.f32.mrb[0].mxu0
        %v2348 = vadd.f32 0.0, %v2347
        %v2349 = vpop.f32.mrb[0].mxu0
        %2350 = vmatprep.mubr.f32.mxu0 0.0
        %2351 = vmatmul.mubr.f32.gmra.mrb[0].mxu0 %v2093
        %v2352 = vpop.f32.mrb[0].mxu0
        %v2353 = vadd.f32 0.0, %v2352
        %v2354 = vpop.f32.mrb[0].mxu0
        %2355 = vmatprep.mubr.f32.mxu0 0.0
        %2356 = vmatmul.mubr.f32.gmra.mrb[0].mxu0 %v2094
        %v2357 = vpop.f32.mrb[0].mxu0
        %v2358 = vadd.f32 0.0, %v2357
        %v2359 = vpop.f32.mrb[0].mxu0
        %2360 = vmatprep.mubr.f32.mxu0 0.0
        %2361 = vmatmul.mubr.f32.gmra.mrb[0].mxu0 %v2095
        %v2362 = vpop.f32.mrb[0].mxu0
        %v2363 = vadd.f32 0.0, %v2362
        %v2364 = vpop.f32.mrb[0].mxu0
        %2365 = vmatprep.mubr.f32.mxu0 0.0
        %2366 = vmatmul.mubr.f32.gmra.mrb[0].mxu0 %v2096
        %v2367 = vpop.f32.mrb[0].mxu0
        %v2368 = vadd.f32 0.0, %v2367
        %v2369 = vpop.f32.mrb[0].mxu0
        %2370 = vmatprep.mubr.f32.mxu0 0.0
        %2371 = vmatmul.mubr.f32.gmra.mrb[0].mxu0 %v2097
        %v2372 = vpop.f32.mrb[0].mxu0
        %v2373 = vadd.f32 0.0, %v2372
        %v2374 = vpop.f32.mrb[0].mxu0
        %2375 = vmatprep.mubr.f32.mxu0 0.0
        %2376 = vmatmul.mubr.f32.gmra.mrb[0].mxu0 %v2098
        %v2377 = vpop.f32.mrb[0].mxu0
        %v2378 = vadd.f32 0.0, %v2377
        %v2379 = vpop.f32.mrb[0].mxu0
        %2380 = vmatprep.mubr.f32.mxu0 0.0
        %2381 = vmatmul.mubr.f32.gmra.mrb[0].mxu0 %v2099
        %v2382 = vpop.f32.mrb[0].mxu0
        %v2383 = vadd.f32 0.0, %v2382
        %v2384 = vpop.f32.mrb[0].mxu0
        %2385 = vmatprep.mubr.f32.mxu0 0.0
        %2386 = vmatmul.mubr.f32.gmra.mrb[0].mxu0 %v2100
        %v2387 = vpop.f32.mrb[0].mxu0
        %v2388 = vadd.f32 0.0, %v2387
        %v2389 = vpop.f32.mrb[0].mxu0
        %2390 = vmatprep.mubr.f32.mxu0 0.0
        %2391 = vmatmul.mubr.f32.gmra.mrb[0].mxu0 %v2101
        %v2392 = vpop.f32.mrb[0].mxu0
        %v2393 = vadd.f32 0.0, %v2392
        %v2394 = vpop.f32.mrb[0].mxu0
        %2395 = vmatprep.mubr.f32.mxu0 0.0
        %2396 = vmatmul.mubr.f32.gmra.mrb[0].mxu0 %v2102
        %v2397 = vpop.f32.mrb[0].mxu0
        %v2398 = vadd.f32 0.0, %v2397
        %v2399 = vpop.f32.mrb[0].mxu0
        %2400 = vmatprep.mubr.f32.mxu0 0.0
        %2401 = vmatmul.mubr.f32.gmra.mrb[0].mxu0 %v2103
        %v2402 = vpop.f32.mrb[0].mxu0
        %v2403 = vadd.f32 0.0, %v2402
        %v2404 = vpop.f32.mrb[0].mxu0
        %2405 = vmatprep.mubr.f32.mxu0 0.0
        %2406 = vmatmul.mubr.f32.gmra.mrb[0].mxu0 %v2104
        %v2407 = vpop.f32.mrb[0].mxu0
        %v2408 = vadd.f32 0.0, %v2407
        %v2409 = vpop.f32.mrb[0].mxu0
        %2410 = vmatprep.mubr.f32.mxu0 0.0
        %2411 = vmatmul.mubr.f32.gmra.mrb[0].mxu0 %v2105
        %v2412 = vpop.f32.mrb[0].mxu0
        %v2413 = vadd.f32 0.0, %v2412
        %v2414 = vpop.f32.mrb[0].mxu0
        %2415 = vmatprep.mubr.f32.mxu0 0.0
        %2416 = vmatmul.mubr.f32.gmra.mrb[0].mxu0 %v2106
        %v2417 = vpop.f32.mrb[0].mxu0
        %v2418 = vadd.f32 0.0, %v2417
        %v2419 = vpop.f32.mrb[0].mxu0
        %2420 = vmatprep.mubr.f32.mxu0 0.0
        %2421 = vmatmul.mubr.f32.gmra.mrb[0].mxu0 %v2107
        %v2422 = vpop.f32.mrb[0].mxu0
        %v2423 = vadd.f32 0.0, %v2422
        %v2424 = vpop.f32.mrb[0].mxu0
        %2425 = vmatprep.mubr.f32.mxu0 0.0
        %2426 = vmatmul.mubr.f32.gmra.mrb[0].mxu0 %v2108
        %v2427 = vpop.f32.mrb[0].mxu0
        %v2428 = vadd.f32 0.0, %v2427
        %v2429 = vpop.f32.mrb[0].mxu0
        %2430 = vdwg.mxu0
        %2431 = vmatprep.subr.mxu0 0.0
        %2432 = vmatpush1.msra.mxu0 %v1009
        %2433 = vmatprep.subr.mxu0 0.0
        %2434 = vmatpush1.msra.mxu0 %v1010
        %2435 = vmatprep.subr.mxu0 0.0
        %2436 = vmatpush1.msra.mxu0 %v1011
        %2437 = vmatprep.subr.mxu0 0.0
        %2438 = vmatpush1.msra.mxu0 %v1012
        %2439 = vmatprep.subr.mxu0 0.0
        %2440 = vmatpush1.msra.mxu0 %v1013
        %2441 = vmatprep.subr.mxu0 0.0
        %2442 = vmatpush1.msra.mxu0 %v1014
        %2443 = vmatprep.subr.mxu0 0.0
        %2444 = vmatpush1.msra.mxu0 %v1015
        %2445 = vmatprep.subr.mxu0 0.0
        %2446 = vmatpush1.msra.mxu0 %v1016
        %2447 = vmatprep.subr.mxu0 0.0
        %2448 = vmatpush1.msra.mxu0 %v1017
        %2449 = vmatprep.subr.mxu0 0.0
        %2450 = vmatpush1.msra.mxu0 %v1018
        %2451 = vmatprep.subr.mxu0 0.0
        %2452 = vmatpush1.msra.mxu0 %v1019
        %2453 = vmatprep.subr.mxu0 0.0
        %2454 = vmatpush1.msra.mxu0 %v1020
        %2455 = vmatprep.subr.mxu0 0.0
        %2456 = vmatpush1.msra.mxu0 %v1021
        %2457 = vmatprep.subr.mxu0 0.0
        %2458 = vmatpush1.msra.mxu0 %v1022
        %2459 = vmatprep.subr.mxu0 0.0
        %2460 = vmatpush1.msra.mxu0 %v1023
        %2461 = vmatprep.subr.mxu0 0.0
        %2462 = vmatpush1.msra.mxu0 %v1024
        %2463 = vmatprep.subr.mxu0 0.0
        %2464 = vmatpush1.msra.mxu0 0.0
        %2465 = vmatprep.subr.mxu0 0.0
        %2466 = vmatpush1.msra.mxu0 0.0
        %2467 = vmatprep.subr.mxu0 0.0
        %2468 = vmatpush1.msra.mxu0 0.0
        %2469 = vmatprep.subr.mxu0 0.0
        %2470 = vmatpush1.msra.mxu0 0.0
        %2471 = vmatprep.subr.mxu0 0.0
        %2472 = vmatpush1.msra.mxu0 0.0
        %2473 = vmatprep.subr.mxu0 0.0
        %2474 = vmatpush1.msra.mxu0 0.0
        %2475 = vmatprep.subr.mxu0 0.0
        %2476 = vmatpush1.msra.mxu0 0.0
        %2477 = vmatprep.subr.mxu0 0.0
        %2478 = vmatpush1.msra.mxu0 0.0
        %2479 = vmatprep.subr.mxu0 0.0
        %2480 = vmatpush1.msra.mxu0 0.0
        %2481 = vmatprep.subr.mxu0 0.0
        %2482 = vmatpush1.msra.mxu0 0.0
        %2483 = vmatprep.subr.mxu0 0.0
        %2484 = vmatpush1.msra.mxu0 0.0
        %2485 = vmatprep.subr.mxu0 0.0
        %2486 = vmatpush1.msra.mxu0 0.0
        %2487 = vmatprep.subr.mxu0 0.0
        %2488 = vmatpush1.msra.mxu0 0.0
        %2489 = vmatprep.subr.mxu0 0.0
        %2490 = vmatpush1.msra.mxu0 0.0
        %2491 = vmatprep.subr.mxu0 0.0
        %2492 = vmatpush1.msra.mxu0 0.0
        %2493 = vmatprep.subr.mxu0 0.0
        %2494 = vmatpush1.msra.mxu0 0.0
        %2495 = vmatprep.mubr.f32.mxu0 0.0
        %2496 = vmatmul.mubr.f32.gmra.mrb[0].mxu0 %v961
        %v2497 = vpop.f32.mrb[0].mxu0
        %v2498 = vadd.f32 %v2193, %v2497
        %v2499 = vpop.f32.mrb[0].mxu0
        %2500 = vmatprep.mubr.f32.mxu0 0.0
        %2501 = vmatmul.mubr.f32.gmra.mrb[0].mxu0 %v962
        %v2502 = vpop.f32.mrb[0].mxu0
        %v2503 = vadd.f32 %v2198, %v2502
        %v2504 = vpop.f32.mrb[0].mxu0
        %2505 = vmatprep.mubr.f32.mxu0 0.0
        %2506 = vmatmul.mubr.f32.gmra.mrb[0].mxu0 %v963
        %v2507 = vpop.f32.mrb[0].mxu0
        %v2508 = vadd.f32 %v2203, %v2507
        %v2509 = vpop.f32.mrb[0].mxu0
        %2510 = vmatprep.mubr.f32.mxu0 0.0
        %2511 = vmatmul.mubr.f32.gmra.mrb[0].mxu0 %v964
        %v2512 = vpop.f32.mrb[0].mxu0
        %v2513 = vadd.f32 %v2208, %v2512
        %v2514 = vpop.f32.mrb[0].mxu0
        %2515 = vmatprep.mubr.f32.mxu0 0.0
        %2516 = vmatmul.mubr.f32.gmra.mrb[0].mxu0 %v965
        %v2517 = vpop.f32.mrb[0].mxu0
        %v2518 = vadd.f32 %v2213, %v2517
        %v2519 = vpop.f32.mrb[0].mxu0
        %2520 = vmatprep.mubr.f32.mxu0 0.0
        %2521 = vmatmul.mubr.f32.gmra.mrb[0].mxu0 %v966
        %v2522 = vpop.f32.mrb[0].mxu0
        %v2523 = vadd.f32 %v2218, %v2522
        %v2524 = vpop.f32.mrb[0].mxu0
        %2525 = vmatprep.mubr.f32.mxu0 0.0
        %2526 = vmatmul.mubr.f32.gmra.mrb[0].mxu0 %v967
        %v2527 = vpop.f32.mrb[0].mxu0
        %v2528 = vadd.f32 %v2223, %v2527
        %v2529 = vpop.f32.mrb[0].mxu0
        %2530 = vmatprep.mubr.f32.mxu0 0.0
        %2531 = vmatmul.mubr.f32.gmra.mrb[0].mxu0 %v968
        %v2532 = vpop.f32.mrb[0].mxu0
        %v2533 = vadd.f32 %v2228, %v2532
        %v2534 = vpop.f32.mrb[0].mxu0
        %2535 = vmatprep.mubr.f32.mxu0 0.0
        %2536 = vmatmul.mubr.f32.gmra.mrb[0].mxu0 %v969
        %v2537 = vpop.f32.mrb[0].mxu0
        %v2538 = vadd.f32 %v2233, %v2537
        %v2539 = vpop.f32.mrb[0].mxu0
        %2540 = vmatprep.mubr.f32.mxu0 0.0
        %2541 = vmatmul.mubr.f32.gmra.mrb[0].mxu0 %v970
        %v2542 = vpop.f32.mrb[0].mxu0
        %v2543 = vadd.f32 %v2238, %v2542
        %v2544 = vpop.f32.mrb[0].mxu0
        %2545 = vmatprep.mubr.f32.mxu0 0.0
        %2546 = vmatmul.mubr.f32.gmra.mrb[0].mxu0 %v971
        %v2547 = vpop.f32.mrb[0].mxu0
        %v2548 = vadd.f32 %v2243, %v2547
        %v2549 = vpop.f32.mrb[0].mxu0
        %2550 = vmatprep.mubr.f32.mxu0 0.0
        %2551 = vmatmul.mubr.f32.gmra.mrb[0].mxu0 %v972
        %v2552 = vpop.f32.mrb[0].mxu0
        %v2553 = vadd.f32 %v2248, %v2552
        %v2554 = vpop.f32.mrb[0].mxu0
        %2555 = vmatprep.mubr.f32.mxu0 0.0
        %2556 = vmatmul.mubr.f32.gmra.mrb[0].mxu0 %v973
        %v2557 = vpop.f32.mrb[0].mxu0
        %v2558 = vadd.f32 %v2253, %v2557
        %v2559 = vpop.f32.mrb[0].mxu0
        %2560 = vmatprep.mubr.f32.mxu0 0.0
        %2561 = vmatmul.mubr.f32.gmra.mrb[0].mxu0 %v974
        %v2562 = vpop.f32.mrb[0].mxu0
        %v2563 = vadd.f32 %v2258, %v2562
        %v2564 = vpop.f32.mrb[0].mxu0
        %2565 = vmatprep.mubr.f32.mxu0 0.0
        %2566 = vmatmul.mubr.f32.gmra.mrb[0].mxu0 %v975
        %v2567 = vpop.f32.mrb[0].mxu0
        %v2568 = vadd.f32 %v2263, %v2567
        %v2569 = vpop.f32.mrb[0].mxu0
        %2570 = vmatprep.mubr.f32.mxu0 0.0
        %2571 = vmatmul.mubr.f32.gmra.mrb[0].mxu0 %v976
        %v2572 = vpop.f32.mrb[0].mxu0
        %v2573 = vadd.f32 %v2268, %v2572
        %v2574 = vpop.f32.mrb[0].mxu0
        %2575 = vmatprep.mubr.f32.mxu0 0.0
        %2576 = vmatmul.mubr.f32.gmra.mrb[0].mxu0 %v977
        %v2577 = vpop.f32.mrb[0].mxu0
        %v2578 = vadd.f32 %v2273, %v2577
        %v2579 = vpop.f32.mrb[0].mxu0
        %2580 = vmatprep.mubr.f32.mxu0 0.0
        %2581 = vmatmul.mubr.f32.gmra.mrb[0].mxu0 %v978
        %v2582 = vpop.f32.mrb[0].mxu0
        %v2583 = vadd.f32 %v2278, %v2582
        %v2584 = vpop.f32.mrb[0].mxu0
        %2585 = vmatprep.mubr.f32.mxu0 0.0
        %2586 = vmatmul.mubr.f32.gmra.mrb[0].mxu0 %v979
        %v2587 = vpop.f32.mrb[0].mxu0
        %v2588 = vadd.f32 %v2283, %v2587
        %v2589 = vpop.f32.mrb[0].mxu0
        %2590 = vmatprep.mubr.f32.mxu0 0.0
        %2591 = vmatmul.mubr.f32.gmra.mrb[0].mxu0 %v980
        %v2592 = vpop.f32.mrb[0].mxu0
        %v2593 = vadd.f32 %v2288, %v2592
        %v2594 = vpop.f32.mrb[0].mxu0
        %2595 = vmatprep.mubr.f32.mxu0 0.0
        %2596 = vmatmul.mubr.f32.gmra.mrb[0].mxu0 %v981
        %v2597 = vpop.f32.mrb[0].mxu0
        %v2598 = vadd.f32 %v2293, %v2597
        %v2599 = vpop.f32.mrb[0].mxu0
        %2600 = vmatprep.mubr.f32.mxu0 0.0
        %2601 = vmatmul.mubr.f32.gmra.mrb[0].mxu0 %v982
        %v2602 = vpop.f32.mrb[0].mxu0
        %v2603 = vadd.f32 %v2298, %v2602
        %v2604 = vpop.f32.mrb[0].mxu0
        %2605 = vmatprep.mubr.f32.mxu0 0.0
        %2606 = vmatmul.mubr.f32.gmra.mrb[0].mxu0 %v983
        %v2607 = vpop.f32.mrb[0].mxu0
        %v2608 = vadd.f32 %v2303, %v2607
        %v2609 = vpop.f32.mrb[0].mxu0
        %2610 = vmatprep.mubr.f32.mxu0 0.0
        %2611 = vmatmul.mubr.f32.gmra.mrb[0].mxu0 %v984
        %v2612 = vpop.f32.mrb[0].mxu0
        %v2613 = vadd.f32 %v2308, %v2612
        %v2614 = vpop.f32.mrb[0].mxu0
        %2615 = vmatprep.mubr.f32.mxu0 0.0
        %2616 = vmatmul.mubr.f32.gmra.mrb[0].mxu0 %v985
        %v2617 = vpop.f32.mrb[0].mxu0
        %v2618 = vadd.f32 %v2313, %v2617
        %v2619 = vpop.f32.mrb[0].mxu0
        %2620 = vmatprep.mubr.f32.mxu0 0.0
        %2621 = vmatmul.mubr.f32.gmra.mrb[0].mxu0 %v986
        %v2622 = vpop.f32.mrb[0].mxu0
        %v2623 = vadd.f32 %v2318, %v2622
        %v2624 = vpop.f32.mrb[0].mxu0
        %2625 = vmatprep.mubr.f32.mxu0 0.0
        %2626 = vmatmul.mubr.f32.gmra.mrb[0].mxu0 %v987
        %v2627 = vpop.f32.mrb[0].mxu0
        %v2628 = vadd.f32 %v2323, %v2627
        %v2629 = vpop.f32.mrb[0].mxu0
        %2630 = vmatprep.mubr.f32.mxu0 0.0
        %2631 = vmatmul.mubr.f32.gmra.mrb[0].mxu0 %v988
        %v2632 = vpop.f32.mrb[0].mxu0
        %v2633 = vadd.f32 %v2328, %v2632
        %v2634 = vpop.f32.mrb[0].mxu0
        %2635 = vmatprep.mubr.f32.mxu0 0.0
        %2636 = vmatmul.mubr.f32.gmra.mrb[0].mxu0 %v989
        %v2637 = vpop.f32.mrb[0].mxu0
        %v2638 = vadd.f32 %v2333, %v2637
        %v2639 = vpop.f32.mrb[0].mxu0
        %2640 = vmatprep.mubr.f32.mxu0 0.0
        %2641 = vmatmul.mubr.f32.gmra.mrb[0].mxu0 %v990
        %v2642 = vpop.f32.mrb[0].mxu0
        %v2643 = vadd.f32 %v2338, %v2642
        %v2644 = vpop.f32.mrb[0].mxu0
        %2645 = vmatprep.mubr.f32.mxu0 0.0
        %2646 = vmatmul.mubr.f32.gmra.mrb[0].mxu0 %v991
        %v2647 = vpop.f32.mrb[0].mxu0
        %v2648 = vadd.f32 %v2343, %v2647
        %v2649 = vpop.f32.mrb[0].mxu0
        %2650 = vmatprep.mubr.f32.mxu0 0.0
        %2651 = vmatmul.mubr.f32.gmra.mrb[0].mxu0 %v992
        %v2652 = vpop.f32.mrb[0].mxu0
        %v2653 = vadd.f32 %v2348, %v2652
        %v2654 = vpop.f32.mrb[0].mxu0
        %2655 = vmatprep.mubr.f32.mxu0 0.0
        %2656 = vmatmul.mubr.f32.gmra.mrb[0].mxu0 %v993
        %v2657 = vpop.f32.mrb[0].mxu0
        %v2658 = vadd.f32 %v2353, %v2657
        %v2659 = vpop.f32.mrb[0].mxu0
        %2660 = vmatprep.mubr.f32.mxu0 0.0
        %2661 = vmatmul.mubr.f32.gmra.mrb[0].mxu0 %v994
        %v2662 = vpop.f32.mrb[0].mxu0
        %v2663 = vadd.f32 %v2358, %v2662
        %v2664 = vpop.f32.mrb[0].mxu0
        %2665 = vmatprep.mubr.f32.mxu0 0.0
        %2666 = vmatmul.mubr.f32.gmra.mrb[0].mxu0 %v995
        %v2667 = vpop.f32.mrb[0].mxu0
        %v2668 = vadd.f32 %v2363, %v2667
        %v2669 = vpop.f32.mrb[0].mxu0
        %2670 = vmatprep.mubr.f32.mxu0 0.0
        %2671 = vmatmul.mubr.f32.gmra.mrb[0].mxu0 %v996
        %v2672 = vpop.f32.mrb[0].mxu0
        %v2673 = vadd.f32 %v2368, %v2672
        %v2674 = vpop.f32.mrb[0].mxu0
        %2675 = vmatprep.mubr.f32.mxu0 0.0
        %2676 = vmatmul.mubr.f32.gmra.mrb[0].mxu0 %v997
        %v2677 = vpop.f32.mrb[0].mxu0
        %v2678 = vadd.f32 %v2373, %v2677
        %v2679 = vpop.f32.mrb[0].mxu0
        %2680 = vmatprep.mubr.f32.mxu0 0.0
        %2681 = vmatmul.mubr.f32.gmra.mrb[0].mxu0 %v998
        %v2682 = vpop.f32.mrb[0].mxu0
        %v2683 = vadd.f32 %v2378, %v2682
        %v2684 = vpop.f32.mrb[0].mxu0
        %2685 = vmatprep.mubr.f32.mxu0 0.0
        %2686 = vmatmul.mubr.f32.gmra.mrb[0].mxu0 %v999
        %v2687 = vpop.f32.mrb[0].mxu0
        %v2688 = vadd.f32 %v2383, %v2687
        %v2689 = vpop.f32.mrb[0].mxu0
        %2690 = vmatprep.mubr.f32.mxu0 0.0
        %2691 = vmatmul.mubr.f32.gmra.mrb[0].mxu0 %v1000
        %v2692 = vpop.f32.mrb[0].mxu0
        %v2693 = vadd.f32 %v2388, %v2692
        %v2694 = vpop.f32.mrb[0].mxu0
        %2695 = vmatprep.mubr.f32.mxu0 0.0
        %2696 = vmatmul.mubr.f32.gmra.mrb[0].mxu0 %v1001
        %v2697 = vpop.f32.mrb[0].mxu0
        %v2698 = vadd.f32 %v2393, %v2697
        %v2699 = vpop.f32.mrb[0].mxu0
        %2700 = vmatprep.mubr.f32.mxu0 0.0
        %2701 = vmatmul.mubr.f32.gmra.mrb[0].mxu0 %v1002
        %v2702 = vpop.f32.mrb[0].mxu0
        %v2703 = vadd.f32 %v2398, %v2702
        %v2704 = vpop.f32.mrb[0].mxu0
        %2705 = vmatprep.mubr.f32.mxu0 0.0
        %2706 = vmatmul.mubr.f32.gmra.mrb[0].mxu0 %v1003
        %v2707 = vpop.f32.mrb[0].mxu0
        %v2708 = vadd.f32 %v2403, %v2707
        %v2709 = vpop.f32.mrb[0].mxu0
        %2710 = vmatprep.mubr.f32.mxu0 0.0
        %2711 = vmatmul.mubr.f32.gmra.mrb[0].mxu0 %v1004
        %v2712 = vpop.f32.mrb[0].mxu0
        %v2713 = vadd.f32 %v2408, %v2712
        %v2714 = vpop.f32.mrb[0].mxu0
        %2715 = vmatprep.mubr.f32.mxu0 0.0
        %2716 = vmatmul.mubr.f32.gmra.mrb[0].mxu0 %v1005
        %v2717 = vpop.f32.mrb[0].mxu0
        %v2718 = vadd.f32 %v2413, %v2717
        %v2719 = vpop.f32.mrb[0].mxu0
        %2720 = vmatprep.mubr.f32.mxu0 0.0
        %2721 = vmatmul.mubr.f32.gmra.mrb[0].mxu0 %v1006
        %v2722 = vpop.f32.mrb[0].mxu0
        %v2723 = vadd.f32 %v2418, %v2722
        %v2724 = vpop.f32.mrb[0].mxu0
        %2725 = vmatprep.mubr.f32.mxu0 0.0
        %2726 = vmatmul.mubr.f32.gmra.mrb[0].mxu0 %v1007
        %v2727 = vpop.f32.mrb[0].mxu0
        %v2728 = vadd.f32 %v2423, %v2727
        %v2729 = vpop.f32.mrb[0].mxu0
        %2730 = vmatprep.mubr.f32.mxu0 0.0
        %2731 = vmatmul.mubr.f32.gmra.mrb[0].mxu0 %v1008
        %v2732 = vpop.f32.mrb[0].mxu0
        %v2733 = vadd.f32 %v2428, %v2732
        %v2734 = vpop.f32.mrb[0].mxu0
        %2735 = vdwg.mxu0
        %2736 = vst [vmem:[%s1059] sm:$0xff] %v2061
        %2737 = vst [vmem:[%s1059 + $0x8] sm:$0xff] %v2062
        %2738 = vst [vmem:[%s1059 + $0x18] sm:$0xff] %v2064
        %2739 = vst [vmem:[%s1059 + $0x20] sm:$0xff] %v2065
        %2740 = vst [vmem:[%s1059 + $0x30] sm:$0xff] %v2067
        %2741 = vst [vmem:[%s1059 + $0x38] sm:$0xff] %v2068
        %2742 = vst [vmem:[%s1059 + $0x48] sm:$0xff] %v2070
        %2743 = vst [vmem:[%s1059 + $0x50] sm:$0xff] %v2071
        %2744 = vst [vmem:[%s1059 + $0x60] sm:$0xff] %v2073
        %2745 = vst [vmem:[%s1059 + $0x68] sm:$0xff] %v2074
        %2746 = vst [vmem:[%s1059 + $0x78] sm:$0xff] %v2076
        %2747 = vst [vmem:[%s1059 + $0x80] sm:$0xff] %v2077
        %2748 = vst [vmem:[%s1059 + $0x90] sm:$0xff] %v2079
        %2749 = vst [vmem:[%s1059 + $0x98] sm:$0xff] %v2080
        %2750 = vst [vmem:[%s1059 + $0xa8] sm:$0xff] %v2082
        %2751 = vst [vmem:[%s1059 + $0xb0] sm:$0xff] %v2083
        %2752 = vst [vmem:[%s1059 + $0xc0] sm:$0xff] %v2085
        %2753 = vst [vmem:[%s1059 + $0xc8] sm:$0xff] %v2086
        %2754 = vst [vmem:[%s1059 + $0xd8] sm:$0xff] %v2088
        %2755 = vst [vmem:[%s1059 + $0xe0] sm:$0xff] %v2089
        %2756 = vst [vmem:[%s1059 + $0xf0] sm:$0xff] %v2091
        %2757 = vst [vmem:[%s1059 + $0xf8] sm:$0xff] %v2092
        %2758 = vst [vmem:[%s1059 + $0x108] sm:$0xff] %v2094
        %2759 = vst [vmem:[%s1059 + $0x110] sm:$0xff] %v2095
        %2760 = vst [vmem:[%s1059 + $0x120] sm:$0xff] %v2097
        %2761 = vst [vmem:[%s1059 + $0x128] sm:$0xff] %v2098
        %2762 = vst [vmem:[%s1059 + $0x138] sm:$0xff] %v2100
        %2763 = vst [vmem:[%s1059 + $0x140] sm:$0xff] %v2101
        %2764 = vst [vmem:[%s1059 + $0x150] sm:$0xff] %v2103
        %2765 = vst [vmem:[%s1059 + $0x158] sm:$0xff] %v2104
        %2766 = vst [vmem:[%s1059 + $0x168] sm:$0xff] %v2106
        %2767 = vst [vmem:[%s1059 + $0x170] sm:$0xff] %v2107
        %v2768 = vld [vmem:[#allocation2] sm:$0xff]
        %v2769 = vld [vmem:[#allocation2 + $0x8] sm:$0xff]
        %v2770 = vld [vmem:[#allocation2 + $0x10] sm:$0xff]
        %v2771 = vld [vmem:[#allocation2 + $0x18] sm:$0xff]
        %v2772 = vld [vmem:[#allocation2 + $0x20] sm:$0xff]
        %v2773 = vld [vmem:[#allocation2 + $0x28] sm:$0xff]
        %v2774 = vld [vmem:[#allocation2 + $0x30] sm:$0xff]
        %v2775 = vld [vmem:[#allocation2 + $0x38] sm:$0xff]
        %v2776 = vld [vmem:[#allocation2 + $0x40] sm:$0xff]
        %v2777 = vld [vmem:[#allocation2 + $0x48] sm:$0xff]
        %v2778 = vld [vmem:[#allocation2 + $0x50] sm:$0xff]
        %v2779 = vld [vmem:[#allocation2 + $0x58] sm:$0xff]
        %v2780 = vld [vmem:[#allocation2 + $0x60] sm:$0xff]
        %v2781 = vld [vmem:[#allocation2 + $0x68] sm:$0xff]
        %v2782 = vld [vmem:[#allocation2 + $0x70] sm:$0xff]
        %v2783 = vld [vmem:[#allocation2 + $0x78] sm:$0xff]
        %v2784 = vld [vmem:[#allocation2 + $0x80] sm:$0xff]
        %v2785 = vld [vmem:[#allocation2 + $0x88] sm:$0xff]
        %v2786 = vld [vmem:[#allocation2 + $0x90] sm:$0xff]
        %v2787 = vld [vmem:[#allocation2 + $0x98] sm:$0xff]
        %v2788 = vld [vmem:[#allocation2 + $0xa0] sm:$0xff]
        %v2789 = vld [vmem:[#allocation2 + $0xa8] sm:$0xff]
        %v2790 = vld [vmem:[#allocation2 + $0xb0] sm:$0xff]
        %v2791 = vld [vmem:[#allocation2 + $0xb8] sm:$0xff]
        %v2792 = vld [vmem:[#allocation2 + $0xc0] sm:$0xff]
        %v2793 = vld [vmem:[#allocation2 + $0xc8] sm:$0xff]
        %v2794 = vld [vmem:[#allocation2 + $0xd0] sm:$0xff]
        %v2795 = vld [vmem:[#allocation2 + $0xd8] sm:$0xff]
        %v2796 = vld [vmem:[#allocation2 + $0xe0] sm:$0xff]
        %v2797 = vld [vmem:[#allocation2 + $0xe8] sm:$0xff]
        %v2798 = vld [vmem:[#allocation2 + $0xf0] sm:$0xff]
        %v2799 = vld [vmem:[#allocation2 + $0xf8] sm:$0xff]
        %v2800 = vld [vmem:[#allocation2 + $0x100] sm:$0xff]
        %v2801 = vld [vmem:[#allocation2 + $0x108] sm:$0xff]
        %v2802 = vld [vmem:[#allocation2 + $0x110] sm:$0xff]
        %v2803 = vld [vmem:[#allocation2 + $0x118] sm:$0xff]
        %v2804 = vld [vmem:[#allocation2 + $0x120] sm:$0xff]
        %v2805 = vld [vmem:[#allocation2 + $0x128] sm:$0xff]
        %v2806 = vld [vmem:[#allocation2 + $0x130] sm:$0xff]
        %v2807 = vld [vmem:[#allocation2 + $0x138] sm:$0xff]
        %v2808 = vld [vmem:[#allocation2 + $0x140] sm:$0xff]
        %v2809 = vld [vmem:[#allocation2 + $0x148] sm:$0xff]
        %v2810 = vld [vmem:[#allocation2 + $0x150] sm:$0xff]
        %v2811 = vld [vmem:[#allocation2 + $0x158] sm:$0xff]
        %v2812 = vld [vmem:[#allocation2 + $0x160] sm:$0xff]
        %v2813 = vld [vmem:[#allocation2 + $0x168] sm:$0xff]
        %v2814 = vld [vmem:[#allocation2 + $0x170] sm:$0xff]
        %v2815 = vld [vmem:[#allocation2 + $0x178] sm:$0xff]
        %v2816 = vld [vmem:[%s1140] sm:$0xff]
        %v2817 = vld [vmem:[%s1140 + $0x8] sm:$0xff]
        %v2818 = vld [vmem:[%s1140 + $0x10] sm:$0xff]
        %v2819 = vld [vmem:[%s1140 + $0x18] sm:$0xff]
        %v2820 = vld [vmem:[%s1140 + $0x20] sm:$0xff]
        %v2821 = vld [vmem:[%s1140 + $0x28] sm:$0xff]
        %v2822 = vld [vmem:[%s1140 + $0x30] sm:$0xff]
        %v2823 = vld [vmem:[%s1140 + $0x38] sm:$0xff]
        %v2824 = vld [vmem:[%s1140 + $0x40] sm:$0xff]
        %v2825 = vld [vmem:[%s1140 + $0x48] sm:$0xff]
        %v2826 = vld [vmem:[%s1140 + $0x50] sm:$0xff]
        %v2827 = vld [vmem:[%s1140 + $0x58] sm:$0xff]
        %v2828 = vld [vmem:[%s1140 + $0x60] sm:$0xff]
        %v2829 = vld [vmem:[%s1140 + $0x68] sm:$0xff]
        %v2830 = vld [vmem:[%s1140 + $0x70] sm:$0xff]
        %v2831 = vld [vmem:[%s1140 + $0x78] sm:$0xff]
        %v2832 = vld [vmem:[%s1140 + $0x80] sm:$0xff]
        %v2833 = vld [vmem:[%s1140 + $0x88] sm:$0xff]
        %v2834 = vld [vmem:[%s1140 + $0x90] sm:$0xff]
        %v2835 = vld [vmem:[%s1140 + $0x98] sm:$0xff]
        %v2836 = vld [vmem:[%s1140 + $0xa0] sm:$0xff]
        %v2837 = vld [vmem:[%s1140 + $0xa8] sm:$0xff]
        %v2838 = vld [vmem:[%s1140 + $0xb0] sm:$0xff]
        %v2839 = vld [vmem:[%s1140 + $0xb8] sm:$0xff]
        %v2840 = vld [vmem:[%s1140 + $0xc0] sm:$0xff]
        %v2841 = vld [vmem:[%s1140 + $0xc8] sm:$0xff]
        %v2842 = vld [vmem:[%s1140 + $0xd0] sm:$0xff]
        %v2843 = vld [vmem:[%s1140 + $0xd8] sm:$0xff]
        %v2844 = vld [vmem:[%s1140 + $0xe0] sm:$0xff]
        %v2845 = vld [vmem:[%s1140 + $0xe8] sm:$0xff]
        %v2846 = vld [vmem:[%s1140 + $0xf0] sm:$0xff]
        %v2847 = vld [vmem:[%s1140 + $0xf8] sm:$0xff]
        %v2848 = vld [vmem:[%s1140 + $0x100] sm:$0xff]
        %v2849 = vld [vmem:[%s1140 + $0x108] sm:$0xff]
        %v2850 = vld [vmem:[%s1140 + $0x110] sm:$0xff]
        %v2851 = vld [vmem:[%s1140 + $0x118] sm:$0xff]
        %v2852 = vld [vmem:[%s1140 + $0x120] sm:$0xff]
        %v2853 = vld [vmem:[%s1140 + $0x128] sm:$0xff]
        %v2854 = vld [vmem:[%s1140 + $0x130] sm:$0xff]
        %v2855 = vld [vmem:[%s1140 + $0x138] sm:$0xff]
        %v2856 = vld [vmem:[%s1140 + $0x140] sm:$0xff]
        %v2857 = vld [vmem:[%s1140 + $0x148] sm:$0xff]
        %v2858 = vld [vmem:[%s1140 + $0x150] sm:$0xff]
        %v2859 = vld [vmem:[%s1140 + $0x158] sm:$0xff]
        %v2860 = vld [vmem:[%s1140 + $0x160] sm:$0xff]
        %v2861 = vld [vmem:[%s1140 + $0x168] sm:$0xff]
        %v2862 = vld [vmem:[%s1140 + $0x170] sm:$0xff]
        %v2863 = vld [vmem:[%s1140 + $0x178] sm:$0xff]
        %v2864 = vmax.f32 %v2768, %v2816
        %v2865 = vmax.f32 %v2769, %v2817
        %v2866 = vmax.f32 %v2770, %v2818
        %v2867 = vmax.f32 %v2771, %v2819
        %v2868 = vmax.f32 %v2772, %v2820
        %v2869 = vmax.f32 %v2773, %v2821
        %v2870 = vmax.f32 %v2774, %v2822
        %v2871 = vmax.f32 %v2775, %v2823
        %v2872 = vmax.f32 %v2776, %v2824
        %v2873 = vmax.f32 %v2777, %v2825
        %v2874 = vmax.f32 %v2778, %v2826
        %v2875 = vmax.f32 %v2779, %v2827
        %v2876 = vmax.f32 %v2780, %v2828
        %v2877 = vmax.f32 %v2781, %v2829
        %v2878 = vmax.f32 %v2782, %v2830
        %v2879 = vmax.f32 %v2783, %v2831
        %v2880 = vmax.f32 %v2784, %v2832
        %v2881 = vmax.f32 %v2785, %v2833
        %v2882 = vmax.f32 %v2786, %v2834
        %v2883 = vmax.f32 %v2787, %v2835
        %v2884 = vmax.f32 %v2788, %v2836
        %v2885 = vmax.f32 %v2789, %v2837
        %v2886 = vmax.f32 %v2790, %v2838
        %v2887 = vmax.f32 %v2791, %v2839
        %v2888 = vmax.f32 %v2792, %v2840
        %v2889 = vmax.f32 %v2793, %v2841
        %v2890 = vmax.f32 %v2794, %v2842
        %v2891 = vmax.f32 %v2795, %v2843
        %v2892 = vmax.f32 %v2796, %v2844
        %v2893 = vmax.f32 %v2797, %v2845
        %v2894 = vmax.f32 %v2798, %v2846
        %v2895 = vmax.f32 %v2799, %v2847
        %v2896 = vmax.f32 %v2800, %v2848
        %v2897 = vmax.f32 %v2801, %v2849
        %v2898 = vmax.f32 %v2802, %v2850
        %v2899 = vmax.f32 %v2803, %v2851
        %v2900 = vmax.f32 %v2804, %v2852
        %v2901 = vmax.f32 %v2805, %v2853
        %v2902 = vmax.f32 %v2806, %v2854
        %v2903 = vmax.f32 %v2807, %v2855
        %v2904 = vmax.f32 %v2808, %v2856
        %v2905 = vmax.f32 %v2809, %v2857
        %v2906 = vmax.f32 %v2810, %v2858
        %v2907 = vmax.f32 %v2811, %v2859
        %v2908 = vmax.f32 %v2812, %v2860
        %v2909 = vmax.f32 %v2813, %v2861
        %v2910 = vmax.f32 %v2814, %v2862
        %v2911 = vmax.f32 %v2815, %v2863
        %v2912 = vld [vmem:[%s1059] sm:$0xff]
        %v2913 = vld [vmem:[%s1059 + $0x8] sm:$0xff]
        %v2914 = vld [vmem:[%s1059 + $0x10] sm:$0xff]
        %v2915 = vld [vmem:[%s1059 + $0x18] sm:$0xff]
        %v2916 = vld [vmem:[%s1059 + $0x20] sm:$0xff]
        %v2917 = vld [vmem:[%s1059 + $0x28] sm:$0xff]
        %v2918 = vld [vmem:[%s1059 + $0x30] sm:$0xff]
        %v2919 = vld [vmem:[%s1059 + $0x38] sm:$0xff]
        %v2920 = vld [vmem:[%s1059 + $0x40] sm:$0xff]
        %v2921 = vld [vmem:[%s1059 + $0x48] sm:$0xff]
        %v2922 = vld [vmem:[%s1059 + $0x50] sm:$0xff]
        %v2923 = vld [vmem:[%s1059 + $0x58] sm:$0xff]
        %v2924 = vld [vmem:[%s1059 + $0x60] sm:$0xff]
        %v2925 = vld [vmem:[%s1059 + $0x68] sm:$0xff]
        %v2926 = vld [vmem:[%s1059 + $0x70] sm:$0xff]
        %v2927 = vld [vmem:[%s1059 + $0x78] sm:$0xff]
        %v2928 = vld [vmem:[%s1059 + $0x80] sm:$0xff]
        %v2929 = vld [vmem:[%s1059 + $0x88] sm:$0xff]
        %v2930 = vld [vmem:[%s1059 + $0x90] sm:$0xff]
        %v2931 = vld [vmem:[%s1059 + $0x98] sm:$0xff]
        %v2932 = vld [vmem:[%s1059 + $0xa0] sm:$0xff]
        %v2933 = vld [vmem:[%s1059 + $0xa8] sm:$0xff]
        %v2934 = vld [vmem:[%s1059 + $0xb0] sm:$0xff]
        %v2935 = vld [vmem:[%s1059 + $0xb8] sm:$0xff]
        %v2936 = vld [vmem:[%s1059 + $0xc0] sm:$0xff]
        %v2937 = vld [vmem:[%s1059 + $0xc8] sm:$0xff]
        %v2938 = vld [vmem:[%s1059 + $0xd0] sm:$0xff]
        %v2939 = vld [vmem:[%s1059 + $0xd8] sm:$0xff]
        %v2940 = vld [vmem:[%s1059 + $0xe0] sm:$0xff]
        %v2941 = vld [vmem:[%s1059 + $0xe8] sm:$0xff]
        %v2942 = vld [vmem:[%s1059 + $0xf0] sm:$0xff]
        %v2943 = vld [vmem:[%s1059 + $0xf8] sm:$0xff]
        %v2944 = vld [vmem:[%s1059 + $0x100] sm:$0xff]
        %v2945 = vld [vmem:[%s1059 + $0x108] sm:$0xff]
        %v2946 = vld [vmem:[%s1059 + $0x110] sm:$0xff]
        %v2947 = vld [vmem:[%s1059 + $0x118] sm:$0xff]
        %v2948 = vld [vmem:[%s1059 + $0x120] sm:$0xff]
        %v2949 = vld [vmem:[%s1059 + $0x128] sm:$0xff]
        %v2950 = vld [vmem:[%s1059 + $0x130] sm:$0xff]
        %v2951 = vld [vmem:[%s1059 + $0x138] sm:$0xff]
        %v2952 = vld [vmem:[%s1059 + $0x140] sm:$0xff]
        %v2953 = vld [vmem:[%s1059 + $0x148] sm:$0xff]
        %v2954 = vld [vmem:[%s1059 + $0x150] sm:$0xff]
        %v2955 = vld [vmem:[%s1059 + $0x158] sm:$0xff]
        %v2956 = vld [vmem:[%s1059 + $0x160] sm:$0xff]
        %v2957 = vld [vmem:[%s1059 + $0x168] sm:$0xff]
        %v2958 = vld [vmem:[%s1059 + $0x170] sm:$0xff]
        %v2959 = vld [vmem:[%s1059 + $0x178] sm:$0xff]
        %v2960 = vmax.f32 %v2864, %v2912
        %v2961 = vmax.f32 %v2865, %v2913
        %v2962 = vmax.f32 %v2866, %v2914
        %v2963 = vmax.f32 %v2867, %v2915
        %v2964 = vmax.f32 %v2868, %v2916
        %v2965 = vmax.f32 %v2869, %v2917
        %v2966 = vmax.f32 %v2870, %v2918
        %v2967 = vmax.f32 %v2871, %v2919
        %v2968 = vmax.f32 %v2872, %v2920
        %v2969 = vmax.f32 %v2873, %v2921
        %v2970 = vmax.f32 %v2874, %v2922
        %v2971 = vmax.f32 %v2875, %v2923
        %v2972 = vmax.f32 %v2876, %v2924
        %v2973 = vmax.f32 %v2877, %v2925
        %v2974 = vmax.f32 %v2878, %v2926
        %v2975 = vmax.f32 %v2879, %v2927
        %v2976 = vmax.f32 %v2880, %v2928
        %v2977 = vmax.f32 %v2881, %v2929
        %v2978 = vmax.f32 %v2882, %v2930
        %v2979 = vmax.f32 %v2883, %v2931
        %v2980 = vmax.f32 %v2884, %v2932
        %v2981 = vmax.f32 %v2885, %v2933
        %v2982 = vmax.f32 %v2886, %v2934
        %v2983 = vmax.f32 %v2887, %v2935
        %v2984 = vmax.f32 %v2888, %v2936
        %v2985 = vmax.f32 %v2889, %v2937
        %v2986 = vmax.f32 %v2890, %v2938
        %v2987 = vmax.f32 %v2891, %v2939
        %v2988 = vmax.f32 %v2892, %v2940
        %v2989 = vmax.f32 %v2893, %v2941
        %v2990 = vmax.f32 %v2894, %v2942
        %v2991 = vmax.f32 %v2895, %v2943
        %v2992 = vmax.f32 %v2896, %v2944
        %v2993 = vmax.f32 %v2897, %v2945
        %v2994 = vmax.f32 %v2898, %v2946
        %v2995 = vmax.f32 %v2899, %v2947
        %v2996 = vmax.f32 %v2900, %v2948
        %v2997 = vmax.f32 %v2901, %v2949
        %v2998 = vmax.f32 %v2902, %v2950
        %v2999 = vmax.f32 %v2903, %v2951
        %v3000 = vmax.f32 %v2904, %v2952
        %v3001 = vmax.f32 %v2905, %v2953
        %v3002 = vmax.f32 %v2906, %v2954
        %v3003 = vmax.f32 %v2907, %v2955
        %v3004 = vmax.f32 %v2908, %v2956
        %v3005 = vmax.f32 %v2909, %v2957
        %v3006 = vmax.f32 %v2910, %v2958
        %v3007 = vmax.f32 %v2911, %v2959
        %v3008 = vld [vmem:[%s1333] sm:$0xff]
        %v3009 = vld [vmem:[%s1333 + $0x8] sm:$0xff]
        %v3010 = vld [vmem:[%s1333 + $0x10] sm:$0xff]
        %v3011 = vld [vmem:[%s1333 + $0x18] sm:$0xff]
        %v3012 = vld [vmem:[%s1333 + $0x20] sm:$0xff]
        %v3013 = vld [vmem:[%s1333 + $0x28] sm:$0xff]
        %v3014 = vld [vmem:[%s1333 + $0x30] sm:$0xff]
        %v3015 = vld [vmem:[%s1333 + $0x38] sm:$0xff]
        %v3016 = vld [vmem:[%s1333 + $0x40] sm:$0xff]
        %v3017 = vld [vmem:[%s1333 + $0x48] sm:$0xff]
        %v3018 = vld [vmem:[%s1333 + $0x50] sm:$0xff]
        %v3019 = vld [vmem:[%s1333 + $0x58] sm:$0xff]
        %v3020 = vld [vmem:[%s1333 + $0x60] sm:$0xff]
        %v3021 = vld [vmem:[%s1333 + $0x68] sm:$0xff]
        %v3022 = vld [vmem:[%s1333 + $0x70] sm:$0xff]
        %v3023 = vld [vmem:[%s1333 + $0x78] sm:$0xff]
        %v3024 = vld [vmem:[%s1333 + $0x80] sm:$0xff]
        %v3025 = vld [vmem:[%s1333 + $0x88] sm:$0xff]
        %v3026 = vld [vmem:[%s1333 + $0x90] sm:$0xff]
        %v3027 = vld [vmem:[%s1333 + $0x98] sm:$0xff]
        %v3028 = vld [vmem:[%s1333 + $0xa0] sm:$0xff]
        %v3029 = vld [vmem:[%s1333 + $0xa8] sm:$0xff]
        %v3030 = vld [vmem:[%s1333 + $0xb0] sm:$0xff]
        %v3031 = vld [vmem:[%s1333 + $0xb8] sm:$0xff]
        %v3032 = vld [vmem:[%s1333 + $0xc0] sm:$0xff]
        %v3033 = vld [vmem:[%s1333 + $0xc8] sm:$0xff]
        %v3034 = vld [vmem:[%s1333 + $0xd0] sm:$0xff]
        %v3035 = vld [vmem:[%s1333 + $0xd8] sm:$0xff]
        %v3036 = vld [vmem:[%s1333 + $0xe0] sm:$0xff]
        %v3037 = vld [vmem:[%s1333 + $0xe8] sm:$0xff]
        %v3038 = vld [vmem:[%s1333 + $0xf0] sm:$0xff]
        %v3039 = vld [vmem:[%s1333 + $0xf8] sm:$0xff]
        %v3040 = vld [vmem:[%s1333 + $0x100] sm:$0xff]
        %v3041 = vld [vmem:[%s1333 + $0x108] sm:$0xff]
        %v3042 = vld [vmem:[%s1333 + $0x110] sm:$0xff]
        %v3043 = vld [vmem:[%s1333 + $0x118] sm:$0xff]
        %v3044 = vld [vmem:[%s1333 + $0x120] sm:$0xff]
        %v3045 = vld [vmem:[%s1333 + $0x128] sm:$0xff]
        %v3046 = vld [vmem:[%s1333 + $0x130] sm:$0xff]
        %v3047 = vld [vmem:[%s1333 + $0x138] sm:$0xff]
        %v3048 = vld [vmem:[%s1333 + $0x140] sm:$0xff]
        %v3049 = vld [vmem:[%s1333 + $0x148] sm:$0xff]
        %v3050 = vld [vmem:[%s1333 + $0x150] sm:$0xff]
        %v3051 = vld [vmem:[%s1333 + $0x158] sm:$0xff]
        %v3052 = vld [vmem:[%s1333 + $0x160] sm:$0xff]
        %v3053 = vld [vmem:[%s1333 + $0x168] sm:$0xff]
        %v3054 = vld [vmem:[%s1333 + $0x170] sm:$0xff]
        %v3055 = vld [vmem:[%s1333 + $0x178] sm:$0xff]
        %v3056 = vmax.f32 %v2960, %v3008
        %v3057 = vmax.f32 %v2961, %v3009
        %v3058 = vmax.f32 %v2962, %v3010
        %v3059 = vmax.f32 %v2963, %v3011
        %v3060 = vmax.f32 %v2964, %v3012
        %v3061 = vmax.f32 %v2965, %v3013
        %v3062 = vmax.f32 %v2966, %v3014
        %v3063 = vmax.f32 %v2967, %v3015
        %v3064 = vmax.f32 %v2968, %v3016
        %v3065 = vmax.f32 %v2969, %v3017
        %v3066 = vmax.f32 %v2970, %v3018
        %v3067 = vmax.f32 %v2971, %v3019
        %v3068 = vmax.f32 %v2972, %v3020
        %v3069 = vmax.f32 %v2973, %v3021
        %v3070 = vmax.f32 %v2974, %v3022
        %v3071 = vmax.f32 %v2975, %v3023
        %v3072 = vmax.f32 %v2976, %v3024
        %v3073 = vmax.f32 %v2977, %v3025
        %v3074 = vmax.f32 %v2978, %v3026
        %v3075 = vmax.f32 %v2979, %v3027
        %v3076 = vmax.f32 %v2980, %v3028
        %v3077 = vmax.f32 %v2981, %v3029
        %v3078 = vmax.f32 %v2982, %v3030
        %v3079 = vmax.f32 %v2983, %v3031
        %v3080 = vmax.f32 %v2984, %v3032
        %v3081 = vmax.f32 %v2985, %v3033
        %v3082 = vmax.f32 %v2986, %v3034
        %v3083 = vmax.f32 %v2987, %v3035
        %v3084 = vmax.f32 %v2988, %v3036
        %v3085 = vmax.f32 %v2989, %v3037
        %v3086 = vmax.f32 %v2990, %v3038
        %v3087 = vmax.f32 %v2991, %v3039
        %v3088 = vmax.f32 %v2992, %v3040
        %v3089 = vmax.f32 %v2993, %v3041
        %v3090 = vmax.f32 %v2994, %v3042
        %v3091 = vmax.f32 %v2995, %v3043
        %v3092 = vmax.f32 %v2996, %v3044
        %v3093 = vmax.f32 %v2997, %v3045
        %v3094 = vmax.f32 %v2998, %v3046
        %v3095 = vmax.f32 %v2999, %v3047
        %v3096 = vmax.f32 %v3000, %v3048
        %v3097 = vmax.f32 %v3001, %v3049
        %v3098 = vmax.f32 %v3002, %v3050
        %v3099 = vmax.f32 %v3003, %v3051
        %v3100 = vmax.f32 %v3004, %v3052
        %v3101 = vmax.f32 %v3005, %v3053
        %v3102 = vmax.f32 %v3006, %v3054
        %v3103 = vmax.f32 %v3007, %v3055
        %v3104 = vld [vmem:[%s1430] sm:$0xff]
        %v3105 = vld [vmem:[%s1430 + $0x8] sm:$0xff]
        %v3106 = vld [vmem:[%s1430 + $0x10] sm:$0xff]
        %v3107 = vld [vmem:[%s1430 + $0x18] sm:$0xff]
        %v3108 = vld [vmem:[%s1430 + $0x20] sm:$0xff]
        %v3109 = vld [vmem:[%s1430 + $0x28] sm:$0xff]
        %v3110 = vld [vmem:[%s1430 + $0x30] sm:$0xff]
        %v3111 = vld [vmem:[%s1430 + $0x38] sm:$0xff]
        %v3112 = vld [vmem:[%s1430 + $0x40] sm:$0xff]
        %v3113 = vld [vmem:[%s1430 + $0x48] sm:$0xff]
        %v3114 = vld [vmem:[%s1430 + $0x50] sm:$0xff]
        %v3115 = vld [vmem:[%s1430 + $0x58] sm:$0xff]
        %v3116 = vld [vmem:[%s1430 + $0x60] sm:$0xff]
        %v3117 = vld [vmem:[%s1430 + $0x68] sm:$0xff]
        %v3118 = vld [vmem:[%s1430 + $0x70] sm:$0xff]
        %v3119 = vld [vmem:[%s1430 + $0x78] sm:$0xff]
        %v3120 = vld [vmem:[%s1430 + $0x80] sm:$0xff]
        %v3121 = vld [vmem:[%s1430 + $0x88] sm:$0xff]
        %v3122 = vld [vmem:[%s1430 + $0x90] sm:$0xff]
        %v3123 = vld [vmem:[%s1430 + $0x98] sm:$0xff]
        %v3124 = vld [vmem:[%s1430 + $0xa0] sm:$0xff]
        %v3125 = vld [vmem:[%s1430 + $0xa8] sm:$0xff]
        %v3126 = vld [vmem:[%s1430 + $0xb0] sm:$0xff]
        %v3127 = vld [vmem:[%s1430 + $0xb8] sm:$0xff]
        %v3128 = vld [vmem:[%s1430 + $0xc0] sm:$0xff]
        %v3129 = vld [vmem:[%s1430 + $0xc8] sm:$0xff]
        %v3130 = vld [vmem:[%s1430 + $0xd0] sm:$0xff]
        %v3131 = vld [vmem:[%s1430 + $0xd8] sm:$0xff]
        %v3132 = vld [vmem:[%s1430 + $0xe0] sm:$0xff]
        %v3133 = vld [vmem:[%s1430 + $0xe8] sm:$0xff]
        %v3134 = vld [vmem:[%s1430 + $0xf0] sm:$0xff]
        %v3135 = vld [vmem:[%s1430 + $0xf8] sm:$0xff]
        %v3136 = vld [vmem:[%s1430 + $0x100] sm:$0xff]
        %v3137 = vld [vmem:[%s1430 + $0x108] sm:$0xff]
        %v3138 = vld [vmem:[%s1430 + $0x110] sm:$0xff]
        %v3139 = vld [vmem:[%s1430 + $0x118] sm:$0xff]
        %v3140 = vld [vmem:[%s1430 + $0x120] sm:$0xff]
        %v3141 = vld [vmem:[%s1430 + $0x128] sm:$0xff]
        %v3142 = vld [vmem:[%s1430 + $0x130] sm:$0xff]
        %v3143 = vld [vmem:[%s1430 + $0x138] sm:$0xff]
        %v3144 = vld [vmem:[%s1430 + $0x140] sm:$0xff]
        %v3145 = vld [vmem:[%s1430 + $0x148] sm:$0xff]
        %v3146 = vld [vmem:[%s1430 + $0x150] sm:$0xff]
        %v3147 = vld [vmem:[%s1430 + $0x158] sm:$0xff]
        %v3148 = vld [vmem:[%s1430 + $0x160] sm:$0xff]
        %v3149 = vld [vmem:[%s1430 + $0x168] sm:$0xff]
        %v3150 = vld [vmem:[%s1430 + $0x170] sm:$0xff]
        %v3151 = vld [vmem:[%s1430 + $0x178] sm:$0xff]
        %v3152 = vmax.f32 %v3056, %v3104
        %v3153 = vmax.f32 %v3057, %v3105
        %v3154 = vmax.f32 %v3058, %v3106
        %v3155 = vmax.f32 %v3059, %v3107
        %v3156 = vmax.f32 %v3060, %v3108
        %v3157 = vmax.f32 %v3061, %v3109
        %v3158 = vmax.f32 %v3062, %v3110
        %v3159 = vmax.f32 %v3063, %v3111
        %v3160 = vmax.f32 %v3064, %v3112
        %v3161 = vmax.f32 %v3065, %v3113
        %v3162 = vmax.f32 %v3066, %v3114
        %v3163 = vmax.f32 %v3067, %v3115
        %v3164 = vmax.f32 %v3068, %v3116
        %v3165 = vmax.f32 %v3069, %v3117
        %v3166 = vmax.f32 %v3070, %v3118
        %v3167 = vmax.f32 %v3071, %v3119
        %v3168 = vmax.f32 %v3072, %v3120
        %v3169 = vmax.f32 %v3073, %v3121
        %v3170 = vmax.f32 %v3074, %v3122
        %v3171 = vmax.f32 %v3075, %v3123
        %v3172 = vmax.f32 %v3076, %v3124
        %v3173 = vmax.f32 %v3077, %v3125
        %v3174 = vmax.f32 %v3078, %v3126
        %v3175 = vmax.f32 %v3079, %v3127
        %v3176 = vmax.f32 %v3080, %v3128
        %v3177 = vmax.f32 %v3081, %v3129
        %v3178 = vmax.f32 %v3082, %v3130
        %v3179 = vmax.f32 %v3083, %v3131
        %v3180 = vmax.f32 %v3084, %v3132
        %v3181 = vmax.f32 %v3085, %v3133
        %v3182 = vmax.f32 %v3086, %v3134
        %v3183 = vmax.f32 %v3087, %v3135
        %v3184 = vmax.f32 %v3088, %v3136
        %v3185 = vmax.f32 %v3089, %v3137
        %v3186 = vmax.f32 %v3090, %v3138
        %v3187 = vmax.f32 %v3091, %v3139
        %v3188 = vmax.f32 %v3092, %v3140
        %v3189 = vmax.f32 %v3093, %v3141
        %v3190 = vmax.f32 %v3094, %v3142
        %v3191 = vmax.f32 %v3095, %v3143
        %v3192 = vmax.f32 %v3096, %v3144
        %v3193 = vmax.f32 %v3097, %v3145
        %v3194 = vmax.f32 %v3098, %v3146
        %v3195 = vmax.f32 %v3099, %v3147
        %v3196 = vmax.f32 %v3100, %v3148
        %v3197 = vmax.f32 %v3101, %v3149
        %v3198 = vmax.f32 %v3102, %v3150
        %v3199 = vmax.f32 %v3103, %v3151
        %v3200 = vrot.slane %v3152, 1
        %v3201 = vrot.slane %v3153, 1
        %v3202 = vrot.slane %v3154, 1
        %v3203 = vrot.slane %v3155, 1
        %v3204 = vrot.slane %v3156, 1
        %v3205 = vrot.slane %v3157, 1
        %v3206 = vrot.slane %v3158, 1
        %v3207 = vrot.slane %v3159, 1
        %v3208 = vrot.slane %v3160, 1
        %v3209 = vrot.slane %v3161, 1
        %v3210 = vrot.slane %v3162, 1
        %v3211 = vrot.slane %v3163, 1
        %v3212 = vrot.slane %v3164, 1
        %v3213 = vrot.slane %v3165, 1
        %v3214 = vrot.slane %v3166, 1
        %v3215 = vrot.slane %v3167, 1
        %v3216 = vrot.slane %v3168, 1
        %v3217 = vrot.slane %v3169, 1
        %v3218 = vrot.slane %v3170, 1
        %v3219 = vrot.slane %v3171, 1
        %v3220 = vrot.slane %v3172, 1
        %v3221 = vrot.slane %v3173, 1
        %v3222 = vrot.slane %v3174, 1
        %v3223 = vrot.slane %v3175, 1
        %v3224 = vrot.slane %v3176, 1
        %v3225 = vrot.slane %v3177, 1
        %v3226 = vrot.slane %v3178, 1
        %v3227 = vrot.slane %v3179, 1
        %v3228 = vrot.slane %v3180, 1
        %v3229 = vrot.slane %v3181, 1
        %v3230 = vrot.slane %v3182, 1
        %v3231 = vrot.slane %v3183, 1
        %v3232 = vrot.slane %v3184, 1
        %v3233 = vrot.slane %v3185, 1
        %v3234 = vrot.slane %v3186, 1
        %v3235 = vrot.slane %v3187, 1
        %v3236 = vrot.slane %v3188, 1
        %v3237 = vrot.slane %v3189, 1
        %v3238 = vrot.slane %v3190, 1
        %v3239 = vrot.slane %v3191, 1
        %v3240 = vrot.slane %v3192, 1
        %v3241 = vrot.slane %v3193, 1
        %v3242 = vrot.slane %v3194, 1
        %v3243 = vrot.slane %v3195, 1
        %v3244 = vrot.slane %v3196, 1
        %v3245 = vrot.slane %v3197, 1
        %v3246 = vrot.slane %v3198, 1
        %v3247 = vrot.slane %v3199, 1
        %v3248 = vsel %vm1577, %v3246, %v3247
        %v3249 = vsel %vm1577, %v3245, %v3246
        %v3250 = vsel %vm1577, %v3244, %v3245
        %v3251 = vsel %vm1577, %v3243, %v3244
        %v3252 = vsel %vm1577, %v3242, %v3243
        %v3253 = vsel %vm1577, %v3241, %v3242
        %v3254 = vsel %vm1577, %v3240, %v3241
        %v3255 = vsel %vm1577, %v3239, %v3240
        %v3256 = vsel %vm1577, %v3238, %v3239
        %v3257 = vsel %vm1577, %v3237, %v3238
        %v3258 = vsel %vm1577, %v3236, %v3237
        %v3259 = vsel %vm1577, %v3235, %v3236
        %v3260 = vsel %vm1577, %v3234, %v3235
        %v3261 = vsel %vm1577, %v3233, %v3234
        %v3262 = vsel %vm1577, %v3232, %v3233
        %v3263 = vsel %vm1577, %v3231, %v3232
        %v3264 = vsel %vm1577, %v3230, %v3231
        %v3265 = vsel %vm1577, %v3229, %v3230
        %v3266 = vsel %vm1577, %v3228, %v3229
        %v3267 = vsel %vm1577, %v3227, %v3228
        %v3268 = vsel %vm1577, %v3226, %v3227
        %v3269 = vsel %vm1577, %v3225, %v3226
        %v3270 = vsel %vm1577, %v3224, %v3225
        %v3271 = vsel %vm1577, %v3223, %v3224
        %v3272 = vsel %vm1577, %v3222, %v3223
        %v3273 = vsel %vm1577, %v3221, %v3222
        %v3274 = vsel %vm1577, %v3220, %v3221
        %v3275 = vsel %vm1577, %v3219, %v3220
        %v3276 = vsel %vm1577, %v3218, %v3219
        %v3277 = vsel %vm1577, %v3217, %v3218
        %v3278 = vsel %vm1577, %v3216, %v3217
        %v3279 = vsel %vm1577, %v3215, %v3216
        %v3280 = vsel %vm1577, %v3214, %v3215
        %v3281 = vsel %vm1577, %v3213, %v3214
        %v3282 = vsel %vm1577, %v3212, %v3213
        %v3283 = vsel %vm1577, %v3211, %v3212
        %v3284 = vsel %vm1577, %v3210, %v3211
        %v3285 = vsel %vm1577, %v3209, %v3210
        %v3286 = vsel %vm1577, %v3208, %v3209
        %v3287 = vsel %vm1577, %v3207, %v3208
        %v3288 = vsel %vm1577, %v3206, %v3207
        %v3289 = vsel %vm1577, %v3205, %v3206
        %v3290 = vsel %vm1577, %v3204, %v3205
        %v3291 = vsel %vm1577, %v3203, %v3204
        %v3292 = vsel %vm1577, %v3202, %v3203
        %v3293 = vsel %vm1577, %v3201, %v3202
        %v3294 = vsel %vm1577, %v3200, %v3201
        %v3295 = vsel %vm1577, %v3247, %v3200
        %v3296 = vmax.f32 %v3152, %v3294
        %v3297 = vmax.f32 %v3153, %v3293
        %v3298 = vmax.f32 %v3154, %v3292
        %v3299 = vmax.f32 %v3155, %v3291
        %v3300 = vmax.f32 %v3156, %v3290
        %v3301 = vmax.f32 %v3157, %v3289
        %v3302 = vmax.f32 %v3158, %v3288
        %v3303 = vmax.f32 %v3159, %v3287
        %v3304 = vmax.f32 %v3160, %v3286
        %v3305 = vmax.f32 %v3161, %v3285
        %v3306 = vmax.f32 %v3162, %v3284
        %v3307 = vmax.f32 %v3163, %v3283
        %v3308 = vmax.f32 %v3164, %v3282
        %v3309 = vmax.f32 %v3165, %v3281
        %v3310 = vmax.f32 %v3166, %v3280
        %v3311 = vmax.f32 %v3167, %v3279
        %v3312 = vmax.f32 %v3168, %v3278
        %v3313 = vmax.f32 %v3169, %v3277
        %v3314 = vmax.f32 %v3170, %v3276
        %v3315 = vmax.f32 %v3171, %v3275
        %v3316 = vmax.f32 %v3172, %v3274
        %v3317 = vmax.f32 %v3173, %v3273
        %v3318 = vmax.f32 %v3174, %v3272
        %v3319 = vmax.f32 %v3175, %v3271
        %v3320 = vmax.f32 %v3176, %v3270
        %v3321 = vmax.f32 %v3177, %v3269
        %v3322 = vmax.f32 %v3178, %v3268
        %v3323 = vmax.f32 %v3179, %v3267
        %v3324 = vmax.f32 %v3180, %v3266
        %v3325 = vmax.f32 %v3181, %v3265
        %v3326 = vmax.f32 %v3182, %v3264
        %v3327 = vmax.f32 %v3183, %v3263
        %v3328 = vmax.f32 %v3184, %v3262
        %v3329 = vmax.f32 %v3185, %v3261
        %v3330 = vmax.f32 %v3186, %v3260
        %v3331 = vmax.f32 %v3187, %v3259
        %v3332 = vmax.f32 %v3188, %v3258
        %v3333 = vmax.f32 %v3189, %v3257
        %v3334 = vmax.f32 %v3190, %v3256
        %v3335 = vmax.f32 %v3191, %v3255
        %v3336 = vmax.f32 %v3192, %v3254
        %v3337 = vmax.f32 %v3193, %v3253
        %v3338 = vmax.f32 %v3194, %v3252
        %v3339 = vmax.f32 %v3195, %v3251
        %v3340 = vmax.f32 %v3196, %v3250
        %v3341 = vmax.f32 %v3197, %v3249
        %v3342 = vmax.f32 %v3198, %v3248
        %v3343 = vmax.f32 %v3199, %v3295
        %v3344 = vrot.slane %v3152, 7
        %v3345 = vrot.slane %v3153, 7
        %v3346 = vrot.slane %v3154, 7
        %v3347 = vrot.slane %v3155, 7
        %v3348 = vrot.slane %v3156, 7
        %v3349 = vrot.slane %v3157, 7
        %v3350 = vrot.slane %v3158, 7
        %v3351 = vrot.slane %v3159, 7
        %v3352 = vrot.slane %v3160, 7
        %v3353 = vrot.slane %v3161, 7
        %v3354 = vrot.slane %v3162, 7
        %v3355 = vrot.slane %v3163, 7
        %v3356 = vrot.slane %v3164, 7
        %v3357 = vrot.slane %v3165, 7
        %v3358 = vrot.slane %v3166, 7
        %v3359 = vrot.slane %v3167, 7
        %v3360 = vrot.slane %v3168, 7
        %v3361 = vrot.slane %v3169, 7
        %v3362 = vrot.slane %v3170, 7
        %v3363 = vrot.slane %v3171, 7
        %v3364 = vrot.slane %v3172, 7
        %v3365 = vrot.slane %v3173, 7
        %v3366 = vrot.slane %v3174, 7
        %v3367 = vrot.slane %v3175, 7
        %v3368 = vrot.slane %v3176, 7
        %v3369 = vrot.slane %v3177, 7
        %v3370 = vrot.slane %v3178, 7
        %v3371 = vrot.slane %v3179, 7
        %v3372 = vrot.slane %v3180, 7
        %v3373 = vrot.slane %v3181, 7
        %v3374 = vrot.slane %v3182, 7
        %v3375 = vrot.slane %v3183, 7
        %v3376 = vrot.slane %v3184, 7
        %v3377 = vrot.slane %v3185, 7
        %v3378 = vrot.slane %v3186, 7
        %v3379 = vrot.slane %v3187, 7
        %v3380 = vrot.slane %v3188, 7
        %v3381 = vrot.slane %v3189, 7
        %v3382 = vrot.slane %v3190, 7
        %v3383 = vrot.slane %v3191, 7
        %v3384 = vrot.slane %v3192, 7
        %v3385 = vrot.slane %v3193, 7
        %v3386 = vrot.slane %v3194, 7
        %v3387 = vrot.slane %v3195, 7
        %v3388 = vrot.slane %v3196, 7
        %v3389 = vrot.slane %v3197, 7
        %v3390 = vrot.slane %v3198, 7
        %v3391 = vrot.slane %v3199, 7
        %v3392 = vsel %vm1722, %v3390, %v3391
        %v3393 = vsel %vm1722, %v3389, %v3390
        %v3394 = vsel %vm1722, %v3388, %v3389
        %v3395 = vsel %vm1722, %v3387, %v3388
        %v3396 = vsel %vm1722, %v3386, %v3387
        %v3397 = vsel %vm1722, %v3385, %v3386
        %v3398 = vsel %vm1722, %v3384, %v3385
        %v3399 = vsel %vm1722, %v3383, %v3384
        %v3400 = vsel %vm1722, %v3382, %v3383
        %v3401 = vsel %vm1722, %v3381, %v3382
        %v3402 = vsel %vm1722, %v3380, %v3381
        %v3403 = vsel %vm1722, %v3379, %v3380
        %v3404 = vsel %vm1722, %v3378, %v3379
        %v3405 = vsel %vm1722, %v3377, %v3378
        %v3406 = vsel %vm1722, %v3376, %v3377
        %v3407 = vsel %vm1722, %v3375, %v3376
        %v3408 = vsel %vm1722, %v3374, %v3375
        %v3409 = vsel %vm1722, %v3373, %v3374
        %v3410 = vsel %vm1722, %v3372, %v3373
        %v3411 = vsel %vm1722, %v3371, %v3372
        %v3412 = vsel %vm1722, %v3370, %v3371
        %v3413 = vsel %vm1722, %v3369, %v3370
        %v3414 = vsel %vm1722, %v3368, %v3369
        %v3415 = vsel %vm1722, %v3367, %v3368
        %v3416 = vsel %vm1722, %v3366, %v3367
        %v3417 = vsel %vm1722, %v3365, %v3366
        %v3418 = vsel %vm1722, %v3364, %v3365
        %v3419 = vsel %vm1722, %v3363, %v3364
        %v3420 = vsel %vm1722, %v3362, %v3363
        %v3421 = vsel %vm1722, %v3361, %v3362
        %v3422 = vsel %vm1722, %v3360, %v3361
        %v3423 = vsel %vm1722, %v3359, %v3360
        %v3424 = vsel %vm1722, %v3358, %v3359
        %v3425 = vsel %vm1722, %v3357, %v3358
        %v3426 = vsel %vm1722, %v3356, %v3357
        %v3427 = vsel %vm1722, %v3355, %v3356
        %v3428 = vsel %vm1722, %v3354, %v3355
        %v3429 = vsel %vm1722, %v3353, %v3354
        %v3430 = vsel %vm1722, %v3352, %v3353
        %v3431 = vsel %vm1722, %v3351, %v3352
        %v3432 = vsel %vm1722, %v3350, %v3351
        %v3433 = vsel %vm1722, %v3349, %v3350
        %v3434 = vsel %vm1722, %v3348, %v3349
        %v3435 = vsel %vm1722, %v3347, %v3348
        %v3436 = vsel %vm1722, %v3346, %v3347
        %v3437 = vsel %vm1722, %v3345, %v3346
        %v3438 = vsel %vm1722, %v3344, %v3345
        %v3439 = vsel %vm1722, %v3391, %v3344
        %v3440 = vmax.f32 %v3296, %v3439
        %v3441 = vmax.f32 %v3297, %v3438
        %v3442 = vmax.f32 %v3298, %v3437
        %v3443 = vmax.f32 %v3299, %v3436
        %v3444 = vmax.f32 %v3300, %v3435
        %v3445 = vmax.f32 %v3301, %v3434
        %v3446 = vmax.f32 %v3302, %v3433
        %v3447 = vmax.f32 %v3303, %v3432
        %v3448 = vmax.f32 %v3304, %v3431
        %v3449 = vmax.f32 %v3305, %v3430
        %v3450 = vmax.f32 %v3306, %v3429
        %v3451 = vmax.f32 %v3307, %v3428
        %v3452 = vmax.f32 %v3308, %v3427
        %v3453 = vmax.f32 %v3309, %v3426
        %v3454 = vmax.f32 %v3310, %v3425
        %v3455 = vmax.f32 %v3311, %v3424
        %v3456 = vmax.f32 %v3312, %v3423
        %v3457 = vmax.f32 %v3313, %v3422
        %v3458 = vmax.f32 %v3314, %v3421
        %v3459 = vmax.f32 %v3315, %v3420
        %v3460 = vmax.f32 %v3316, %v3419
        %v3461 = vmax.f32 %v3317, %v3418
        %v3462 = vmax.f32 %v3318, %v3417
        %v3463 = vmax.f32 %v3319, %v3416
        %v3464 = vmax.f32 %v3320, %v3415
        %v3465 = vmax.f32 %v3321, %v3414
        %v3466 = vmax.f32 %v3322, %v3413
        %v3467 = vmax.f32 %v3323, %v3412
        %v3468 = vmax.f32 %v3324, %v3411
        %v3469 = vmax.f32 %v3325, %v3410
        %v3470 = vmax.f32 %v3326, %v3409
        %v3471 = vmax.f32 %v3327, %v3408
        %v3472 = vmax.f32 %v3328, %v3407
        %v3473 = vmax.f32 %v3329, %v3406
        %v3474 = vmax.f32 %v3330, %v3405
        %v3475 = vmax.f32 %v3331, %v3404
        %v3476 = vmax.f32 %v3332, %v3403
        %v3477 = vmax.f32 %v3333, %v3402
        %v3478 = vmax.f32 %v3334, %v3401
        %v3479 = vmax.f32 %v3335, %v3400
        %v3480 = vmax.f32 %v3336, %v3399
        %v3481 = vmax.f32 %v3337, %v3398
        %v3482 = vmax.f32 %v3338, %v3397
        %v3483 = vmax.f32 %v3339, %v3396
        %v3484 = vmax.f32 %v3340, %v3395
        %v3485 = vmax.f32 %v3341, %v3394
        %v3486 = vmax.f32 %v3342, %v3393
        %v3487 = vmax.f32 %v3343, %v3392
        %v3488 = vrot.slane %v3152, 2
        %v3489 = vrot.slane %v3153, 2
        %v3490 = vrot.slane %v3154, 2
        %v3491 = vrot.slane %v3155, 2
        %v3492 = vrot.slane %v3156, 2
        %v3493 = vrot.slane %v3157, 2
        %v3494 = vrot.slane %v3158, 2
        %v3495 = vrot.slane %v3159, 2
        %v3496 = vrot.slane %v3160, 2
        %v3497 = vrot.slane %v3161, 2
        %v3498 = vrot.slane %v3162, 2
        %v3499 = vrot.slane %v3163, 2
        %v3500 = vrot.slane %v3164, 2
        %v3501 = vrot.slane %v3165, 2
        %v3502 = vrot.slane %v3166, 2
        %v3503 = vrot.slane %v3167, 2
        %v3504 = vrot.slane %v3168, 2
        %v3505 = vrot.slane %v3169, 2
        %v3506 = vrot.slane %v3170, 2
        %v3507 = vrot.slane %v3171, 2
        %v3508 = vrot.slane %v3172, 2
        %v3509 = vrot.slane %v3173, 2
        %v3510 = vrot.slane %v3174, 2
        %v3511 = vrot.slane %v3175, 2
        %v3512 = vrot.slane %v3176, 2
        %v3513 = vrot.slane %v3177, 2
        %v3514 = vrot.slane %v3178, 2
        %v3515 = vrot.slane %v3179, 2
        %v3516 = vrot.slane %v3180, 2
        %v3517 = vrot.slane %v3181, 2
        %v3518 = vrot.slane %v3182, 2
        %v3519 = vrot.slane %v3183, 2
        %v3520 = vrot.slane %v3184, 2
        %v3521 = vrot.slane %v3185, 2
        %v3522 = vrot.slane %v3186, 2
        %v3523 = vrot.slane %v3187, 2
        %v3524 = vrot.slane %v3188, 2
        %v3525 = vrot.slane %v3189, 2
        %v3526 = vrot.slane %v3190, 2
        %v3527 = vrot.slane %v3191, 2
        %v3528 = vrot.slane %v3192, 2
        %v3529 = vrot.slane %v3193, 2
        %v3530 = vrot.slane %v3194, 2
        %v3531 = vrot.slane %v3195, 2
        %v3532 = vrot.slane %v3196, 2
        %v3533 = vrot.slane %v3197, 2
        %v3534 = vrot.slane %v3198, 2
        %v3535 = vrot.slane %v3199, 2
        %v3536 = vsel %vm1867, %v3534, %v3535
        %v3537 = vsel %vm1867, %v3533, %v3534
        %v3538 = vsel %vm1867, %v3532, %v3533
        %v3539 = vsel %vm1867, %v3531, %v3532
        %v3540 = vsel %vm1867, %v3530, %v3531
        %v3541 = vsel %vm1867, %v3529, %v3530
        %v3542 = vsel %vm1867, %v3528, %v3529
        %v3543 = vsel %vm1867, %v3527, %v3528
        %v3544 = vsel %vm1867, %v3526, %v3527
        %v3545 = vsel %vm1867, %v3525, %v3526
        %v3546 = vsel %vm1867, %v3524, %v3525
        %v3547 = vsel %vm1867, %v3523, %v3524
        %v3548 = vsel %vm1867, %v3522, %v3523
        %v3549 = vsel %vm1867, %v3521, %v3522
        %v3550 = vsel %vm1867, %v3520, %v3521
        %v3551 = vsel %vm1867, %v3519, %v3520
        %v3552 = vsel %vm1867, %v3518, %v3519
        %v3553 = vsel %vm1867, %v3517, %v3518
        %v3554 = vsel %vm1867, %v3516, %v3517
        %v3555 = vsel %vm1867, %v3515, %v3516
        %v3556 = vsel %vm1867, %v3514, %v3515
        %v3557 = vsel %vm1867, %v3513, %v3514
        %v3558 = vsel %vm1867, %v3512, %v3513
        %v3559 = vsel %vm1867, %v3511, %v3512
        %v3560 = vsel %vm1867, %v3510, %v3511
        %v3561 = vsel %vm1867, %v3509, %v3510
        %v3562 = vsel %vm1867, %v3508, %v3509
        %v3563 = vsel %vm1867, %v3507, %v3508
        %v3564 = vsel %vm1867, %v3506, %v3507
        %v3565 = vsel %vm1867, %v3505, %v3506
        %v3566 = vsel %vm1867, %v3504, %v3505
        %v3567 = vsel %vm1867, %v3503, %v3504
        %v3568 = vsel %vm1867, %v3502, %v3503
        %v3569 = vsel %vm1867, %v3501, %v3502
        %v3570 = vsel %vm1867, %v3500, %v3501
        %v3571 = vsel %vm1867, %v3499, %v3500
        %v3572 = vsel %vm1867, %v3498, %v3499
        %v3573 = vsel %vm1867, %v3497, %v3498
        %v3574 = vsel %vm1867, %v3496, %v3497
        %v3575 = vsel %vm1867, %v3495, %v3496
        %v3576 = vsel %vm1867, %v3494, %v3495
        %v3577 = vsel %vm1867, %v3493, %v3494
        %v3578 = vsel %vm1867, %v3492, %v3493
        %v3579 = vsel %vm1867, %v3491, %v3492
        %v3580 = vsel %vm1867, %v3490, %v3491
        %v3581 = vsel %vm1867, %v3489, %v3490
        %v3582 = vsel %vm1867, %v3488, %v3489
        %v3583 = vsel %vm1867, %v3535, %v3488
        %v3584 = vmax.f32 %v3440, %v3582
        %v3585 = vmax.f32 %v3441, %v3581
        %v3586 = vmax.f32 %v3442, %v3580
        %v3587 = vmax.f32 %v3443, %v3579
        %v3588 = vmax.f32 %v3444, %v3578
        %v3589 = vmax.f32 %v3445, %v3577
        %v3590 = vmax.f32 %v3446, %v3576
        %v3591 = vmax.f32 %v3447, %v3575
        %v3592 = vmax.f32 %v3448, %v3574
        %v3593 = vmax.f32 %v3449, %v3573
        %v3594 = vmax.f32 %v3450, %v3572
        %v3595 = vmax.f32 %v3451, %v3571
        %v3596 = vmax.f32 %v3452, %v3570
        %v3597 = vmax.f32 %v3453, %v3569
        %v3598 = vmax.f32 %v3454, %v3568
        %v3599 = vmax.f32 %v3455, %v3567
        %v3600 = vmax.f32 %v3456, %v3566
        %v3601 = vmax.f32 %v3457, %v3565
        %v3602 = vmax.f32 %v3458, %v3564
        %v3603 = vmax.f32 %v3459, %v3563
        %v3604 = vmax.f32 %v3460, %v3562
        %v3605 = vmax.f32 %v3461, %v3561
        %v3606 = vmax.f32 %v3462, %v3560
        %v3607 = vmax.f32 %v3463, %v3559
        %v3608 = vmax.f32 %v3464, %v3558
        %v3609 = vmax.f32 %v3465, %v3557
        %v3610 = vmax.f32 %v3466, %v3556
        %v3611 = vmax.f32 %v3467, %v3555
        %v3612 = vmax.f32 %v3468, %v3554
        %v3613 = vmax.f32 %v3469, %v3553
        %v3614 = vmax.f32 %v3470, %v3552
        %v3615 = vmax.f32 %v3471, %v3551
        %v3616 = vmax.f32 %v3472, %v3550
        %v3617 = vmax.f32 %v3473, %v3549
        %v3618 = vmax.f32 %v3474, %v3548
        %v3619 = vmax.f32 %v3475, %v3547
        %v3620 = vmax.f32 %v3476, %v3546
        %v3621 = vmax.f32 %v3477, %v3545
        %v3622 = vmax.f32 %v3478, %v3544
        %v3623 = vmax.f32 %v3479, %v3543
        %v3624 = vmax.f32 %v3480, %v3542
        %v3625 = vmax.f32 %v3481, %v3541
        %v3626 = vmax.f32 %v3482, %v3540
        %v3627 = vmax.f32 %v3483, %v3539
        %v3628 = vmax.f32 %v3484, %v3538
        %v3629 = vmax.f32 %v3485, %v3537
        %v3630 = vmax.f32 %v3486, %v3536
        %v3631 = vmax.f32 %v3487, %v3583
        %v3632 = vrot.slane %v3152, 6
        %v3633 = vrot.slane %v3153, 6
        %v3634 = vrot.slane %v3154, 6
        %v3635 = vrot.slane %v3155, 6
        %v3636 = vrot.slane %v3156, 6
        %v3637 = vrot.slane %v3157, 6
        %v3638 = vrot.slane %v3158, 6
        %v3639 = vrot.slane %v3159, 6
        %v3640 = vrot.slane %v3160, 6
        %v3641 = vrot.slane %v3161, 6
        %v3642 = vrot.slane %v3162, 6
        %v3643 = vrot.slane %v3163, 6
        %v3644 = vrot.slane %v3164, 6
        %v3645 = vrot.slane %v3165, 6
        %v3646 = vrot.slane %v3166, 6
        %v3647 = vrot.slane %v3167, 6
        %v3648 = vrot.slane %v3168, 6
        %v3649 = vrot.slane %v3169, 6
        %v3650 = vrot.slane %v3170, 6
        %v3651 = vrot.slane %v3171, 6
        %v3652 = vrot.slane %v3172, 6
        %v3653 = vrot.slane %v3173, 6
        %v3654 = vrot.slane %v3174, 6
        %v3655 = vrot.slane %v3175, 6
        %v3656 = vrot.slane %v3176, 6
        %v3657 = vrot.slane %v3177, 6
        %v3658 = vrot.slane %v3178, 6
        %v3659 = vrot.slane %v3179, 6
        %v3660 = vrot.slane %v3180, 6
        %v3661 = vrot.slane %v3181, 6
        %v3662 = vrot.slane %v3182, 6
        %v3663 = vrot.slane %v3183, 6
        %v3664 = vrot.slane %v3184, 6
        %v3665 = vrot.slane %v3185, 6
        %v3666 = vrot.slane %v3186, 6
        %v3667 = vrot.slane %v3187, 6
        %v3668 = vrot.slane %v3188, 6
        %v3669 = vrot.slane %v3189, 6
        %v3670 = vrot.slane %v3190, 6
        %v3671 = vrot.slane %v3191, 6
        %v3672 = vrot.slane %v3192, 6
        %v3673 = vrot.slane %v3193, 6
        %v3674 = vrot.slane %v3194, 6
        %v3675 = vrot.slane %v3195, 6
        %v3676 = vrot.slane %v3196, 6
        %v3677 = vrot.slane %v3197, 6
        %v3678 = vrot.slane %v3198, 6
        %v3679 = vrot.slane %v3199, 6
        %v3680 = vsel %vm2012, %v3678, %v3679
        %v3681 = vsel %vm2012, %v3677, %v3678
        %v3682 = vsel %vm2012, %v3676, %v3677
        %v3683 = vsel %vm2012, %v3675, %v3676
        %v3684 = vsel %vm2012, %v3674, %v3675
        %v3685 = vsel %vm2012, %v3673, %v3674
        %v3686 = vsel %vm2012, %v3672, %v3673
        %v3687 = vsel %vm2012, %v3671, %v3672
        %v3688 = vsel %vm2012, %v3670, %v3671
        %v3689 = vsel %vm2012, %v3669, %v3670
        %v3690 = vsel %vm2012, %v3668, %v3669
        %v3691 = vsel %vm2012, %v3667, %v3668
        %v3692 = vsel %vm2012, %v3666, %v3667
        %v3693 = vsel %vm2012, %v3665, %v3666
        %v3694 = vsel %vm2012, %v3664, %v3665
        %v3695 = vsel %vm2012, %v3663, %v3664
        %v3696 = vsel %vm2012, %v3662, %v3663
        %v3697 = vsel %vm2012, %v3661, %v3662
        %v3698 = vsel %vm2012, %v3660, %v3661
        %v3699 = vsel %vm2012, %v3659, %v3660
        %v3700 = vsel %vm2012, %v3658, %v3659
        %v3701 = vsel %vm2012, %v3657, %v3658
        %v3702 = vsel %vm2012, %v3656, %v3657
        %v3703 = vsel %vm2012, %v3655, %v3656
        %v3704 = vsel %vm2012, %v3654, %v3655
        %v3705 = vsel %vm2012, %v3653, %v3654
        %v3706 = vsel %vm2012, %v3652, %v3653
        %v3707 = vsel %vm2012, %v3651, %v3652
        %v3708 = vsel %vm2012, %v3650, %v3651
        %v3709 = vsel %vm2012, %v3649, %v3650
        %v3710 = vsel %vm2012, %v3648, %v3649
        %v3711 = vsel %vm2012, %v3647, %v3648
        %v3712 = vsel %vm2012, %v3646, %v3647
        %v3713 = vsel %vm2012, %v3645, %v3646
        %v3714 = vsel %vm2012, %v3644, %v3645
        %v3715 = vsel %vm2012, %v3643, %v3644
        %v3716 = vsel %vm2012, %v3642, %v3643
        %v3717 = vsel %vm2012, %v3641, %v3642
        %v3718 = vsel %vm2012, %v3640, %v3641
        %v3719 = vsel %vm2012, %v3639, %v3640
        %v3720 = vsel %vm2012, %v3638, %v3639
        %v3721 = vsel %vm2012, %v3637, %v3638
        %v3722 = vsel %vm2012, %v3636, %v3637
        %v3723 = vsel %vm2012, %v3635, %v3636
        %v3724 = vsel %vm2012, %v3634, %v3635
        %v3725 = vsel %vm2012, %v3633, %v3634
        %v3726 = vsel %vm2012, %v3632, %v3633
        %v3727 = vsel %vm2012, %v3679, %v3632
        %v3728 = vmax.f32 %v3584, %v3727
        %v3729 = vmax.f32 %v3585, %v3726
        %v3730 = vmax.f32 %v3586, %v3725
        %v3731 = vmax.f32 %v3587, %v3724
        %v3732 = vmax.f32 %v3588, %v3723
        %v3733 = vmax.f32 %v3589, %v3722
        %v3734 = vmax.f32 %v3590, %v3721
        %v3735 = vmax.f32 %v3591, %v3720
        %v3736 = vmax.f32 %v3592, %v3719
        %v3737 = vmax.f32 %v3593, %v3718
        %v3738 = vmax.f32 %v3594, %v3717
        %v3739 = vmax.f32 %v3595, %v3716
        %v3740 = vmax.f32 %v3596, %v3715
        %v3741 = vmax.f32 %v3597, %v3714
        %v3742 = vmax.f32 %v3598, %v3713
        %v3743 = vmax.f32 %v3599, %v3712
        %v3744 = vmax.f32 %v3600, %v3711
        %v3745 = vmax.f32 %v3601, %v3710
        %v3746 = vmax.f32 %v3602, %v3709
        %v3747 = vmax.f32 %v3603, %v3708
        %v3748 = vmax.f32 %v3604, %v3707
        %v3749 = vmax.f32 %v3605, %v3706
        %v3750 = vmax.f32 %v3606, %v3705
        %v3751 = vmax.f32 %v3607, %v3704
        %v3752 = vmax.f32 %v3608, %v3703
        %v3753 = vmax.f32 %v3609, %v3702
        %v3754 = vmax.f32 %v3610, %v3701
        %v3755 = vmax.f32 %v3611, %v3700
        %v3756 = vmax.f32 %v3612, %v3699
        %v3757 = vmax.f32 %v3613, %v3698
        %v3758 = vmax.f32 %v3614, %v3697
        %v3759 = vmax.f32 %v3615, %v3696
        %v3760 = vmax.f32 %v3616, %v3695
        %v3761 = vmax.f32 %v3617, %v3694
        %v3762 = vmax.f32 %v3618, %v3693
        %v3763 = vmax.f32 %v3619, %v3692
        %v3764 = vmax.f32 %v3620, %v3691
        %v3765 = vmax.f32 %v3621, %v3690
        %v3766 = vmax.f32 %v3622, %v3689
        %v3767 = vmax.f32 %v3623, %v3688
        %v3768 = vmax.f32 %v3624, %v3687
        %v3769 = vmax.f32 %v3625, %v3686
        %v3770 = vmax.f32 %v3626, %v3685
        %v3771 = vmax.f32 %v3627, %v3684
        %v3772 = vmax.f32 %v3628, %v3683
        %v3773 = vmax.f32 %v3629, %v3682
        %v3774 = vmax.f32 %v3630, %v3681
        %v3775 = vmax.f32 %v3631, %v3680
        %s3776 = scalar_lea.vmem [#allocation9], 256
        %v3777 = vld [vmem:[%s3776] sm:$0xff]
        %v3778 = vld [vmem:[%s3776 + $0x8] sm:$0xff]
        %v3779 = vld [vmem:[%s3776 + $0x10] sm:$0xff]
        %v3780 = vld [vmem:[%s3776 + $0x18] sm:$0xff]
        %v3781 = vld [vmem:[%s3776 + $0x20] sm:$0xff]
        %v3782 = vld [vmem:[%s3776 + $0x28] sm:$0xff]
        %v3783 = vld [vmem:[%s3776 + $0x30] sm:$0xff]
        %v3784 = vld [vmem:[%s3776 + $0x38] sm:$0xff]
        %v3785 = vld [vmem:[%s3776 + $0x40] sm:$0xff]
        %v3786 = vld [vmem:[%s3776 + $0x48] sm:$0xff]
        %v3787 = vld [vmem:[%s3776 + $0x50] sm:$0xff]
        %v3788 = vld [vmem:[%s3776 + $0x58] sm:$0xff]
        %v3789 = vld [vmem:[%s3776 + $0x60] sm:$0xff]
        %v3790 = vld [vmem:[%s3776 + $0x68] sm:$0xff]
        %v3791 = vld [vmem:[%s3776 + $0x70] sm:$0xff]
        %v3792 = vld [vmem:[%s3776 + $0x78] sm:$0xff]
        %3793 = vmatprep.subr.mxu0 0.0
        %3794 = vmatpush1.msra.mxu0 %v3777
        %3795 = vmatprep.subr.mxu0 0.0
        %3796 = vmatpush1.msra.mxu0 %v3778
        %3797 = vmatprep.subr.mxu0 0.0
        %3798 = vmatpush1.msra.mxu0 %v3779
        %3799 = vmatprep.subr.mxu0 0.0
        %3800 = vmatpush1.msra.mxu0 %v3780
        %3801 = vmatprep.subr.mxu0 0.0
        %3802 = vmatpush1.msra.mxu0 %v3781
        %3803 = vmatprep.subr.mxu0 0.0
        %3804 = vmatpush1.msra.mxu0 %v3782
        %3805 = vmatprep.subr.mxu0 0.0
        %3806 = vmatpush1.msra.mxu0 %v3783
        %3807 = vmatprep.subr.mxu0 0.0
        %3808 = vmatpush1.msra.mxu0 %v3784
        %3809 = vmatprep.subr.mxu0 0.0
        %3810 = vmatpush1.msra.mxu0 %v3785
        %3811 = vmatprep.subr.mxu0 0.0
        %3812 = vmatpush1.msra.mxu0 %v3786
        %3813 = vmatprep.subr.mxu0 0.0
        %3814 = vmatpush1.msra.mxu0 %v3787
        %3815 = vmatprep.subr.mxu0 0.0
        %3816 = vmatpush1.msra.mxu0 %v3788
        %3817 = vmatprep.subr.mxu0 0.0
        %3818 = vmatpush1.msra.mxu0 %v3789
        %3819 = vmatprep.subr.mxu0 0.0
        %3820 = vmatpush1.msra.mxu0 %v3790
        %3821 = vmatprep.subr.mxu0 0.0
        %3822 = vmatpush1.msra.mxu0 %v3791
        %3823 = vmatprep.subr.mxu0 0.0
        %3824 = vmatpush1.msra.mxu0 %v3792
        %3825 = vmatprep.subr.mxu0 0.0
        %3826 = vmatpush1.msra.mxu0 0.0
        %3827 = vmatprep.subr.mxu0 0.0
        %3828 = vmatpush1.msra.mxu0 0.0
        %3829 = vmatprep.subr.mxu0 0.0
        %3830 = vmatpush1.msra.mxu0 0.0
        %3831 = vmatprep.subr.mxu0 0.0
        %3832 = vmatpush1.msra.mxu0 0.0
        %3833 = vmatprep.subr.mxu0 0.0
        %3834 = vmatpush1.msra.mxu0 0.0
        %3835 = vmatprep.subr.mxu0 0.0
        %3836 = vmatpush1.msra.mxu0 0.0
        %3837 = vmatprep.subr.mxu0 0.0
        %3838 = vmatpush1.msra.mxu0 0.0
        %3839 = vmatprep.subr.mxu0 0.0
        %3840 = vmatpush1.msra.mxu0 0.0
        %3841 = vmatprep.subr.mxu0 0.0
        %3842 = vmatpush1.msra.mxu0 0.0
        %3843 = vmatprep.subr.mxu0 0.0
        %3844 = vmatpush1.msra.mxu0 0.0
        %3845 = vmatprep.subr.mxu0 0.0
        %3846 = vmatpush1.msra.mxu0 0.0
        %3847 = vmatprep.subr.mxu0 0.0
        %3848 = vmatpush1.msra.mxu0 0.0
        %3849 = vmatprep.subr.mxu0 0.0
        %3850 = vmatpush1.msra.mxu0 0.0
        %3851 = vmatprep.subr.mxu0 0.0
        %3852 = vmatpush1.msra.mxu0 0.0
        %3853 = vmatprep.subr.mxu0 0.0
        %3854 = vmatpush1.msra.mxu0 0.0
        %3855 = vmatprep.subr.mxu0 0.0
        %3856 = vmatpush1.msra.mxu0 0.0
        %3857 = vmatprep.mubr.f32.mxu0 0.0
        %3858 = vmatmul.mubr.f32.gmra.mrb[0].mxu0 %v3728
        %v3859 = vpop.f32.mrb[0].mxu0
        %v3860 = vadd.f32 0.0, %v3859
        %v3861 = vpop.f32.mrb[0].mxu0
        %3862 = vmatprep.mubr.f32.mxu0 0.0
        %3863 = vmatmul.mubr.f32.gmra.mrb[0].mxu0 %v3729
        %v3864 = vpop.f32.mrb[0].mxu0
        %v3865 = vadd.f32 0.0, %v3864
        %v3866 = vpop.f32.mrb[0].mxu0
        %3867 = vmatprep.mubr.f32.mxu0 0.0
        %3868 = vmatmul.mubr.f32.gmra.mrb[0].mxu0 %v3730
        %v3869 = vpop.f32.mrb[0].mxu0
        %v3870 = vadd.f32 0.0, %v3869
        %v3871 = vpop.f32.mrb[0].mxu0
        %3872 = vmatprep.mubr.f32.mxu0 0.0
        %3873 = vmatmul.mubr.f32.gmra.mrb[0].mxu0 %v3731
        %v3874 = vpop.f32.mrb[0].mxu0
        %v3875 = vadd.f32 0.0, %v3874
        %v3876 = vpop.f32.mrb[0].mxu0
        %3877 = vmatprep.mubr.f32.mxu0 0.0
        %3878 = vmatmul.mubr.f32.gmra.mrb[0].mxu0 %v3732
        %v3879 = vpop.f32.mrb[0].mxu0
        %v3880 = vadd.f32 0.0, %v3879
        %v3881 = vpop.f32.mrb[0].mxu0
        %3882 = vmatprep.mubr.f32.mxu0 0.0
        %3883 = vmatmul.mubr.f32.gmra.mrb[0].mxu0 %v3733
        %v3884 = vpop.f32.mrb[0].mxu0
        %v3885 = vadd.f32 0.0, %v3884
        %v3886 = vpop.f32.mrb[0].mxu0
        %3887 = vmatprep.mubr.f32.mxu0 0.0
        %3888 = vmatmul.mubr.f32.gmra.mrb[0].mxu0 %v3734
        %v3889 = vpop.f32.mrb[0].mxu0
        %v3890 = vadd.f32 0.0, %v3889
        %v3891 = vpop.f32.mrb[0].mxu0
        %3892 = vmatprep.mubr.f32.mxu0 0.0
        %3893 = vmatmul.mubr.f32.gmra.mrb[0].mxu0 %v3735
        %v3894 = vpop.f32.mrb[0].mxu0
        %v3895 = vadd.f32 0.0, %v3894
        %v3896 = vpop.f32.mrb[0].mxu0
        %3897 = vmatprep.mubr.f32.mxu0 0.0
        %3898 = vmatmul.mubr.f32.gmra.mrb[0].mxu0 %v3736
        %v3899 = vpop.f32.mrb[0].mxu0
        %v3900 = vadd.f32 0.0, %v3899
        %v3901 = vpop.f32.mrb[0].mxu0
        %3902 = vmatprep.mubr.f32.mxu0 0.0
        %3903 = vmatmul.mubr.f32.gmra.mrb[0].mxu0 %v3737
        %v3904 = vpop.f32.mrb[0].mxu0
        %v3905 = vadd.f32 0.0, %v3904
        %v3906 = vpop.f32.mrb[0].mxu0
        %3907 = vmatprep.mubr.f32.mxu0 0.0
        %3908 = vmatmul.mubr.f32.gmra.mrb[0].mxu0 %v3738
        %v3909 = vpop.f32.mrb[0].mxu0
        %v3910 = vadd.f32 0.0, %v3909
        %v3911 = vpop.f32.mrb[0].mxu0
        %3912 = vmatprep.mubr.f32.mxu0 0.0
        %3913 = vmatmul.mubr.f32.gmra.mrb[0].mxu0 %v3739
        %v3914 = vpop.f32.mrb[0].mxu0
        %v3915 = vadd.f32 0.0, %v3914
        %v3916 = vpop.f32.mrb[0].mxu0
        %3917 = vmatprep.mubr.f32.mxu0 0.0
        %3918 = vmatmul.mubr.f32.gmra.mrb[0].mxu0 %v3740
        %v3919 = vpop.f32.mrb[0].mxu0
        %v3920 = vadd.f32 0.0, %v3919
        %v3921 = vpop.f32.mrb[0].mxu0
        %3922 = vmatprep.mubr.f32.mxu0 0.0
        %3923 = vmatmul.mubr.f32.gmra.mrb[0].mxu0 %v3741
        %v3924 = vpop.f32.mrb[0].mxu0
        %v3925 = vadd.f32 0.0, %v3924
        %v3926 = vpop.f32.mrb[0].mxu0
        %3927 = vmatprep.mubr.f32.mxu0 0.0
        %3928 = vmatmul.mubr.f32.gmra.mrb[0].mxu0 %v3742
        %v3929 = vpop.f32.mrb[0].mxu0
        %v3930 = vadd.f32 0.0, %v3929
        %v3931 = vpop.f32.mrb[0].mxu0
        %3932 = vmatprep.mubr.f32.mxu0 0.0
        %3933 = vmatmul.mubr.f32.gmra.mrb[0].mxu0 %v3743
        %v3934 = vpop.f32.mrb[0].mxu0
        %v3935 = vadd.f32 0.0, %v3934
        %v3936 = vpop.f32.mrb[0].mxu0
        %3937 = vmatprep.mubr.f32.mxu0 0.0
        %3938 = vmatmul.mubr.f32.gmra.mrb[0].mxu0 %v3744
        %v3939 = vpop.f32.mrb[0].mxu0
        %v3940 = vadd.f32 0.0, %v3939
        %v3941 = vpop.f32.mrb[0].mxu0
        %3942 = vmatprep.mubr.f32.mxu0 0.0
        %3943 = vmatmul.mubr.f32.gmra.mrb[0].mxu0 %v3745
        %v3944 = vpop.f32.mrb[0].mxu0
        %v3945 = vadd.f32 0.0, %v3944
        %v3946 = vpop.f32.mrb[0].mxu0
        %3947 = vmatprep.mubr.f32.mxu0 0.0
        %3948 = vmatmul.mubr.f32.gmra.mrb[0].mxu0 %v3746
        %v3949 = vpop.f32.mrb[0].mxu0
        %v3950 = vadd.f32 0.0, %v3949
        %v3951 = vpop.f32.mrb[0].mxu0
        %3952 = vmatprep.mubr.f32.mxu0 0.0
        %3953 = vmatmul.mubr.f32.gmra.mrb[0].mxu0 %v3747
        %v3954 = vpop.f32.mrb[0].mxu0
        %v3955 = vadd.f32 0.0, %v3954
        %v3956 = vpop.f32.mrb[0].mxu0
        %3957 = vmatprep.mubr.f32.mxu0 0.0
        %3958 = vmatmul.mubr.f32.gmra.mrb[0].mxu0 %v3748
        %v3959 = vpop.f32.mrb[0].mxu0
        %v3960 = vadd.f32 0.0, %v3959
        %v3961 = vpop.f32.mrb[0].mxu0
        %3962 = vmatprep.mubr.f32.mxu0 0.0
        %3963 = vmatmul.mubr.f32.gmra.mrb[0].mxu0 %v3749
        %v3964 = vpop.f32.mrb[0].mxu0
        %v3965 = vadd.f32 0.0, %v3964
        %v3966 = vpop.f32.mrb[0].mxu0
        %3967 = vmatprep.mubr.f32.mxu0 0.0
        %3968 = vmatmul.mubr.f32.gmra.mrb[0].mxu0 %v3750
        %v3969 = vpop.f32.mrb[0].mxu0
        %v3970 = vadd.f32 0.0, %v3969
        %v3971 = vpop.f32.mrb[0].mxu0
        %3972 = vmatprep.mubr.f32.mxu0 0.0
        %3973 = vmatmul.mubr.f32.gmra.mrb[0].mxu0 %v3751
        %v3974 = vpop.f32.mrb[0].mxu0
        %v3975 = vadd.f32 0.0, %v3974
        %v3976 = vpop.f32.mrb[0].mxu0
        %3977 = vmatprep.mubr.f32.mxu0 0.0
        %3978 = vmatmul.mubr.f32.gmra.mrb[0].mxu0 %v3752
        %v3979 = vpop.f32.mrb[0].mxu0
        %v3980 = vadd.f32 0.0, %v3979
        %v3981 = vpop.f32.mrb[0].mxu0
        %3982 = vmatprep.mubr.f32.mxu0 0.0
        %3983 = vmatmul.mubr.f32.gmra.mrb[0].mxu0 %v3753
        %v3984 = vpop.f32.mrb[0].mxu0
        %v3985 = vadd.f32 0.0, %v3984
        %v3986 = vpop.f32.mrb[0].mxu0
        %3987 = vmatprep.mubr.f32.mxu0 0.0
        %3988 = vmatmul.mubr.f32.gmra.mrb[0].mxu0 %v3754
        %v3989 = vpop.f32.mrb[0].mxu0
        %v3990 = vadd.f32 0.0, %v3989
        %v3991 = vpop.f32.mrb[0].mxu0
        %3992 = vmatprep.mubr.f32.mxu0 0.0
        %3993 = vmatmul.mubr.f32.gmra.mrb[0].mxu0 %v3755
        %v3994 = vpop.f32.mrb[0].mxu0
        %v3995 = vadd.f32 0.0, %v3994
        %v3996 = vpop.f32.mrb[0].mxu0
        %3997 = vmatprep.mubr.f32.mxu0 0.0
        %3998 = vmatmul.mubr.f32.gmra.mrb[0].mxu0 %v3756
        %v3999 = vpop.f32.mrb[0].mxu0
        %v4000 = vadd.f32 0.0, %v3999
        %v4001 = vpop.f32.mrb[0].mxu0
        %4002 = vmatprep.mubr.f32.mxu0 0.0
        %4003 = vmatmul.mubr.f32.gmra.mrb[0].mxu0 %v3757
        %v4004 = vpop.f32.mrb[0].mxu0
        %v4005 = vadd.f32 0.0, %v4004
        %v4006 = vpop.f32.mrb[0].mxu0
        %4007 = vmatprep.mubr.f32.mxu0 0.0
        %4008 = vmatmul.mubr.f32.gmra.mrb[0].mxu0 %v3758
        %v4009 = vpop.f32.mrb[0].mxu0
        %v4010 = vadd.f32 0.0, %v4009
        %v4011 = vpop.f32.mrb[0].mxu0
        %4012 = vmatprep.mubr.f32.mxu0 0.0
        %4013 = vmatmul.mubr.f32.gmra.mrb[0].mxu0 %v3759
        %v4014 = vpop.f32.mrb[0].mxu0
        %v4015 = vadd.f32 0.0, %v4014
        %v4016 = vpop.f32.mrb[0].mxu0
        %4017 = vmatprep.mubr.f32.mxu0 0.0
        %4018 = vmatmul.mubr.f32.gmra.mrb[0].mxu0 %v3760
        %v4019 = vpop.f32.mrb[0].mxu0
        %v4020 = vadd.f32 0.0, %v4019
        %v4021 = vpop.f32.mrb[0].mxu0
        %4022 = vmatprep.mubr.f32.mxu0 0.0
        %4023 = vmatmul.mubr.f32.gmra.mrb[0].mxu0 %v3761
        %v4024 = vpop.f32.mrb[0].mxu0
        %v4025 = vadd.f32 0.0, %v4024
        %v4026 = vpop.f32.mrb[0].mxu0
        %4027 = vmatprep.mubr.f32.mxu0 0.0
        %4028 = vmatmul.mubr.f32.gmra.mrb[0].mxu0 %v3762
        %v4029 = vpop.f32.mrb[0].mxu0
        %v4030 = vadd.f32 0.0, %v4029
        %v4031 = vpop.f32.mrb[0].mxu0
        %4032 = vmatprep.mubr.f32.mxu0 0.0
        %4033 = vmatmul.mubr.f32.gmra.mrb[0].mxu0 %v3763
        %v4034 = vpop.f32.mrb[0].mxu0
        %v4035 = vadd.f32 0.0, %v4034
        %v4036 = vpop.f32.mrb[0].mxu0
        %4037 = vmatprep.mubr.f32.mxu0 0.0
        %4038 = vmatmul.mubr.f32.gmra.mrb[0].mxu0 %v3764
        %v4039 = vpop.f32.mrb[0].mxu0
        %v4040 = vadd.f32 0.0, %v4039
        %v4041 = vpop.f32.mrb[0].mxu0
        %4042 = vmatprep.mubr.f32.mxu0 0.0
        %4043 = vmatmul.mubr.f32.gmra.mrb[0].mxu0 %v3765
        %v4044 = vpop.f32.mrb[0].mxu0
        %v4045 = vadd.f32 0.0, %v4044
        %v4046 = vpop.f32.mrb[0].mxu0
        %4047 = vmatprep.mubr.f32.mxu0 0.0
        %4048 = vmatmul.mubr.f32.gmra.mrb[0].mxu0 %v3766
        %v4049 = vpop.f32.mrb[0].mxu0
        %v4050 = vadd.f32 0.0, %v4049
        %v4051 = vpop.f32.mrb[0].mxu0
        %4052 = vmatprep.mubr.f32.mxu0 0.0
        %4053 = vmatmul.mubr.f32.gmra.mrb[0].mxu0 %v3767
        %v4054 = vpop.f32.mrb[0].mxu0
        %v4055 = vadd.f32 0.0, %v4054
        %v4056 = vpop.f32.mrb[0].mxu0
        %4057 = vmatprep.mubr.f32.mxu0 0.0
        %4058 = vmatmul.mubr.f32.gmra.mrb[0].mxu0 %v3768
        %v4059 = vpop.f32.mrb[0].mxu0
        %v4060 = vadd.f32 0.0, %v4059
        %v4061 = vpop.f32.mrb[0].mxu0
        %4062 = vmatprep.mubr.f32.mxu0 0.0
        %4063 = vmatmul.mubr.f32.gmra.mrb[0].mxu0 %v3769
        %v4064 = vpop.f32.mrb[0].mxu0
        %v4065 = vadd.f32 0.0, %v4064
        %v4066 = vpop.f32.mrb[0].mxu0
        %4067 = vmatprep.mubr.f32.mxu0 0.0
        %4068 = vmatmul.mubr.f32.gmra.mrb[0].mxu0 %v3770
        %v4069 = vpop.f32.mrb[0].mxu0
        %v4070 = vadd.f32 0.0, %v4069
        %v4071 = vpop.f32.mrb[0].mxu0
        %4072 = vmatprep.mubr.f32.mxu0 0.0
        %4073 = vmatmul.mubr.f32.gmra.mrb[0].mxu0 %v3771
        %v4074 = vpop.f32.mrb[0].mxu0
        %v4075 = vadd.f32 0.0, %v4074
        %v4076 = vpop.f32.mrb[0].mxu0
        %4077 = vmatprep.mubr.f32.mxu0 0.0
        %4078 = vmatmul.mubr.f32.gmra.mrb[0].mxu0 %v3772
        %v4079 = vpop.f32.mrb[0].mxu0
        %v4080 = vadd.f32 0.0, %v4079
        %v4081 = vpop.f32.mrb[0].mxu0
        %4082 = vmatprep.mubr.f32.mxu0 0.0
        %4083 = vmatmul.mubr.f32.gmra.mrb[0].mxu0 %v3773
        %v4084 = vpop.f32.mrb[0].mxu0
        %v4085 = vadd.f32 0.0, %v4084
        %v4086 = vpop.f32.mrb[0].mxu0
        %4087 = vmatprep.mubr.f32.mxu0 0.0
        %4088 = vmatmul.mubr.f32.gmra.mrb[0].mxu0 %v3774
        %v4089 = vpop.f32.mrb[0].mxu0
        %v4090 = vadd.f32 0.0, %v4089
        %v4091 = vpop.f32.mrb[0].mxu0
        %4092 = vmatprep.mubr.f32.mxu0 0.0
        %4093 = vmatmul.mubr.f32.gmra.mrb[0].mxu0 %v3775
        %v4094 = vpop.f32.mrb[0].mxu0
        %v4095 = vadd.f32 0.0, %v4094
        %v4096 = vpop.f32.mrb[0].mxu0
        %4097 = vdwg.mxu0
        %v4098 = vadd.f32 %v2498, %v3860
        %v4099 = vadd.f32 %v2503, %v3865
        %v4100 = vadd.f32 %v2508, %v3870
        %v4101 = vadd.f32 %v2513, %v3875
        %v4102 = vadd.f32 %v2518, %v3880
        %v4103 = vadd.f32 %v2523, %v3885
        %v4104 = vadd.f32 %v2528, %v3890
        %v4105 = vadd.f32 %v2533, %v3895
        %v4106 = vadd.f32 %v2538, %v3900
        %v4107 = vadd.f32 %v2543, %v3905
        %v4108 = vadd.f32 %v2548, %v3910
        %v4109 = vadd.f32 %v2553, %v3915
        %v4110 = vadd.f32 %v2558, %v3920
        %v4111 = vadd.f32 %v2563, %v3925
        %v4112 = vadd.f32 %v2568, %v3930
        %v4113 = vadd.f32 %v2573, %v3935
        %v4114 = vadd.f32 %v2578, %v3940
        %v4115 = vadd.f32 %v2583, %v3945
        %v4116 = vadd.f32 %v2588, %v3950
        %v4117 = vadd.f32 %v2593, %v3955
        %v4118 = vadd.f32 %v2598, %v3960
        %v4119 = vadd.f32 %v2603, %v3965
        %v4120 = vadd.f32 %v2608, %v3970
        %v4121 = vadd.f32 %v2613, %v3975
        %v4122 = vadd.f32 %v2618, %v3980
        %v4123 = vadd.f32 %v2623, %v3985
        %v4124 = vadd.f32 %v2628, %v3990
        %v4125 = vadd.f32 %v2633, %v3995
        %v4126 = vadd.f32 %v2638, %v4000
        %v4127 = vadd.f32 %v2643, %v4005
        %v4128 = vadd.f32 %v2648, %v4010
        %v4129 = vadd.f32 %v2653, %v4015
        %v4130 = vadd.f32 %v2658, %v4020
        %v4131 = vadd.f32 %v2663, %v4025
        %v4132 = vadd.f32 %v2668, %v4030
        %v4133 = vadd.f32 %v2673, %v4035
        %v4134 = vadd.f32 %v2678, %v4040
        %v4135 = vadd.f32 %v2683, %v4045
        %v4136 = vadd.f32 %v2688, %v4050
        %v4137 = vadd.f32 %v2693, %v4055
        %v4138 = vadd.f32 %v2698, %v4060
        %v4139 = vadd.f32 %v2703, %v4065
        %v4140 = vadd.f32 %v2708, %v4070
        %v4141 = vadd.f32 %v2713, %v4075
        %v4142 = vadd.f32 %v2718, %v4080
        %v4143 = vadd.f32 %v2723, %v4085
        %v4144 = vadd.f32 %v2728, %v4090
        %v4145 = vadd.f32 %v2733, %v4095
        %4146 = vst [vmem:[%s1059] sm:$0xff] %v3728
        %4147 = vst [vmem:[%s1059 + $0x8] sm:$0xff] %v3729
        %4148 = vst [vmem:[%s1059 + $0x18] sm:$0xff] %v3731
        %4149 = vst [vmem:[%s1059 + $0x20] sm:$0xff] %v3732
        %4150 = vst [vmem:[%s1059 + $0x30] sm:$0xff] %v3734
        %4151 = vst [vmem:[%s1059 + $0x38] sm:$0xff] %v3735
        %4152 = vst [vmem:[%s1059 + $0x48] sm:$0xff] %v3737
        %4153 = vst [vmem:[%s1059 + $0x50] sm:$0xff] %v3738
        %4154 = vst [vmem:[%s1059 + $0x60] sm:$0xff] %v3740
        %4155 = vst [vmem:[%s1059 + $0x68] sm:$0xff] %v3741
        %4156 = vst [vmem:[%s1059 + $0x78] sm:$0xff] %v3743
        %4157 = vst [vmem:[%s1059 + $0x80] sm:$0xff] %v3744
        %4158 = vst [vmem:[%s1059 + $0x90] sm:$0xff] %v3746
        %4159 = vst [vmem:[%s1059 + $0x98] sm:$0xff] %v3747
        %4160 = vst [vmem:[%s1059 + $0xa8] sm:$0xff] %v3749
        %4161 = vst [vmem:[%s1059 + $0xb0] sm:$0xff] %v3750
        %4162 = vst [vmem:[%s1059 + $0xc0] sm:$0xff] %v3752
        %4163 = vst [vmem:[%s1059 + $0xc8] sm:$0xff] %v3753
        %4164 = vst [vmem:[%s1059 + $0xd8] sm:$0xff] %v3755
        %4165 = vst [vmem:[%s1059 + $0xe0] sm:$0xff] %v3756
        %4166 = vst [vmem:[%s1059 + $0xf0] sm:$0xff] %v3758
        %4167 = vst [vmem:[%s1059 + $0xf8] sm:$0xff] %v3759
        %4168 = vst [vmem:[%s1059 + $0x108] sm:$0xff] %v3761
        %4169 = vst [vmem:[%s1059 + $0x110] sm:$0xff] %v3762
        %4170 = vst [vmem:[%s1059 + $0x120] sm:$0xff] %v3764
        %4171 = vst [vmem:[%s1059 + $0x128] sm:$0xff] %v3765
        %4172 = vst [vmem:[%s1059 + $0x138] sm:$0xff] %v3767
        %4173 = vst [vmem:[%s1059 + $0x140] sm:$0xff] %v3768
        %4174 = vst [vmem:[%s1059 + $0x150] sm:$0xff] %v3770
        %4175 = vst [vmem:[%s1059 + $0x158] sm:$0xff] %v3771
        %4176 = vst [vmem:[%s1059 + $0x168] sm:$0xff] %v3773
        %4177 = vst [vmem:[%s1059 + $0x170] sm:$0xff] %v3774
        %v4178 = vld [vmem:[#allocation2] sm:$0xff]
        %v4179 = vld [vmem:[#allocation2 + $0x8] sm:$0xff]
        %v4180 = vld [vmem:[#allocation2 + $0x10] sm:$0xff]
        %v4181 = vld [vmem:[#allocation2 + $0x18] sm:$0xff]
        %v4182 = vld [vmem:[#allocation2 + $0x20] sm:$0xff]
        %v4183 = vld [vmem:[#allocation2 + $0x28] sm:$0xff]
        %v4184 = vld [vmem:[#allocation2 + $0x30] sm:$0xff]
        %v4185 = vld [vmem:[#allocation2 + $0x38] sm:$0xff]
        %v4186 = vld [vmem:[#allocation2 + $0x40] sm:$0xff]
        %v4187 = vld [vmem:[#allocation2 + $0x48] sm:$0xff]
        %v4188 = vld [vmem:[#allocation2 + $0x50] sm:$0xff]
        %v4189 = vld [vmem:[#allocation2 + $0x58] sm:$0xff]
        %v4190 = vld [vmem:[#allocation2 + $0x60] sm:$0xff]
        %v4191 = vld [vmem:[#allocation2 + $0x68] sm:$0xff]
        %v4192 = vld [vmem:[#allocation2 + $0x70] sm:$0xff]
        %v4193 = vld [vmem:[#allocation2 + $0x78] sm:$0xff]
        %v4194 = vld [vmem:[#allocation2 + $0x80] sm:$0xff]
        %v4195 = vld [vmem:[#allocation2 + $0x88] sm:$0xff]
        %v4196 = vld [vmem:[#allocation2 + $0x90] sm:$0xff]
        %v4197 = vld [vmem:[#allocation2 + $0x98] sm:$0xff]
        %v4198 = vld [vmem:[#allocation2 + $0xa0] sm:$0xff]
        %v4199 = vld [vmem:[#allocation2 + $0xa8] sm:$0xff]
        %v4200 = vld [vmem:[#allocation2 + $0xb0] sm:$0xff]
        %v4201 = vld [vmem:[#allocation2 + $0xb8] sm:$0xff]
        %v4202 = vld [vmem:[#allocation2 + $0xc0] sm:$0xff]
        %v4203 = vld [vmem:[#allocation2 + $0xc8] sm:$0xff]
        %v4204 = vld [vmem:[#allocation2 + $0xd0] sm:$0xff]
        %v4205 = vld [vmem:[#allocation2 + $0xd8] sm:$0xff]
        %v4206 = vld [vmem:[#allocation2 + $0xe0] sm:$0xff]
        %v4207 = vld [vmem:[#allocation2 + $0xe8] sm:$0xff]
        %v4208 = vld [vmem:[#allocation2 + $0xf0] sm:$0xff]
        %v4209 = vld [vmem:[#allocation2 + $0xf8] sm:$0xff]
        %v4210 = vld [vmem:[#allocation2 + $0x100] sm:$0xff]
        %v4211 = vld [vmem:[#allocation2 + $0x108] sm:$0xff]
        %v4212 = vld [vmem:[#allocation2 + $0x110] sm:$0xff]
        %v4213 = vld [vmem:[#allocation2 + $0x118] sm:$0xff]
        %v4214 = vld [vmem:[#allocation2 + $0x120] sm:$0xff]
        %v4215 = vld [vmem:[#allocation2 + $0x128] sm:$0xff]
        %v4216 = vld [vmem:[#allocation2 + $0x130] sm:$0xff]
        %v4217 = vld [vmem:[#allocation2 + $0x138] sm:$0xff]
        %v4218 = vld [vmem:[#allocation2 + $0x140] sm:$0xff]
        %v4219 = vld [vmem:[#allocation2 + $0x148] sm:$0xff]
        %v4220 = vld [vmem:[#allocation2 + $0x150] sm:$0xff]
        %v4221 = vld [vmem:[#allocation2 + $0x158] sm:$0xff]
        %v4222 = vld [vmem:[#allocation2 + $0x160] sm:$0xff]
        %v4223 = vld [vmem:[#allocation2 + $0x168] sm:$0xff]
        %v4224 = vld [vmem:[#allocation2 + $0x170] sm:$0xff]
        %v4225 = vld [vmem:[#allocation2 + $0x178] sm:$0xff]
        %v4226 = vld [vmem:[%s1140] sm:$0xff]
        %v4227 = vld [vmem:[%s1140 + $0x8] sm:$0xff]
        %v4228 = vld [vmem:[%s1140 + $0x10] sm:$0xff]
        %v4229 = vld [vmem:[%s1140 + $0x18] sm:$0xff]
        %v4230 = vld [vmem:[%s1140 + $0x20] sm:$0xff]
        %v4231 = vld [vmem:[%s1140 + $0x28] sm:$0xff]
        %v4232 = vld [vmem:[%s1140 + $0x30] sm:$0xff]
        %v4233 = vld [vmem:[%s1140 + $0x38] sm:$0xff]
        %v4234 = vld [vmem:[%s1140 + $0x40] sm:$0xff]
        %v4235 = vld [vmem:[%s1140 + $0x48] sm:$0xff]
        %v4236 = vld [vmem:[%s1140 + $0x50] sm:$0xff]
        %v4237 = vld [vmem:[%s1140 + $0x58] sm:$0xff]
        %v4238 = vld [vmem:[%s1140 + $0x60] sm:$0xff]
        %v4239 = vld [vmem:[%s1140 + $0x68] sm:$0xff]
        %v4240 = vld [vmem:[%s1140 + $0x70] sm:$0xff]
        %v4241 = vld [vmem:[%s1140 + $0x78] sm:$0xff]
        %v4242 = vld [vmem:[%s1140 + $0x80] sm:$0xff]
        %v4243 = vld [vmem:[%s1140 + $0x88] sm:$0xff]
        %v4244 = vld [vmem:[%s1140 + $0x90] sm:$0xff]
        %v4245 = vld [vmem:[%s1140 + $0x98] sm:$0xff]
        %v4246 = vld [vmem:[%s1140 + $0xa0] sm:$0xff]
        %v4247 = vld [vmem:[%s1140 + $0xa8] sm:$0xff]
        %v4248 = vld [vmem:[%s1140 + $0xb0] sm:$0xff]
        %v4249 = vld [vmem:[%s1140 + $0xb8] sm:$0xff]
        %v4250 = vld [vmem:[%s1140 + $0xc0] sm:$0xff]
        %v4251 = vld [vmem:[%s1140 + $0xc8] sm:$0xff]
        %v4252 = vld [vmem:[%s1140 + $0xd0] sm:$0xff]
        %v4253 = vld [vmem:[%s1140 + $0xd8] sm:$0xff]
        %v4254 = vld [vmem:[%s1140 + $0xe0] sm:$0xff]
        %v4255 = vld [vmem:[%s1140 + $0xe8] sm:$0xff]
        %v4256 = vld [vmem:[%s1140 + $0xf0] sm:$0xff]
        %v4257 = vld [vmem:[%s1140 + $0xf8] sm:$0xff]
        %v4258 = vld [vmem:[%s1140 + $0x100] sm:$0xff]
        %v4259 = vld [vmem:[%s1140 + $0x108] sm:$0xff]
        %v4260 = vld [vmem:[%s1140 + $0x110] sm:$0xff]
        %v4261 = vld [vmem:[%s1140 + $0x118] sm:$0xff]
        %v4262 = vld [vmem:[%s1140 + $0x120] sm:$0xff]
        %v4263 = vld [vmem:[%s1140 + $0x128] sm:$0xff]
        %v4264 = vld [vmem:[%s1140 + $0x130] sm:$0xff]
        %v4265 = vld [vmem:[%s1140 + $0x138] sm:$0xff]
        %v4266 = vld [vmem:[%s1140 + $0x140] sm:$0xff]
        %v4267 = vld [vmem:[%s1140 + $0x148] sm:$0xff]
        %v4268 = vld [vmem:[%s1140 + $0x150] sm:$0xff]
        %v4269 = vld [vmem:[%s1140 + $0x158] sm:$0xff]
        %v4270 = vld [vmem:[%s1140 + $0x160] sm:$0xff]
        %v4271 = vld [vmem:[%s1140 + $0x168] sm:$0xff]
        %v4272 = vld [vmem:[%s1140 + $0x170] sm:$0xff]
        %v4273 = vld [vmem:[%s1140 + $0x178] sm:$0xff]
        %v4274 = vmax.f32 %v4178, %v4226
        %v4275 = vmax.f32 %v4179, %v4227
        %v4276 = vmax.f32 %v4180, %v4228
        %v4277 = vmax.f32 %v4181, %v4229
        %v4278 = vmax.f32 %v4182, %v4230
        %v4279 = vmax.f32 %v4183, %v4231
        %v4280 = vmax.f32 %v4184, %v4232
        %v4281 = vmax.f32 %v4185, %v4233
        %v4282 = vmax.f32 %v4186, %v4234
        %v4283 = vmax.f32 %v4187, %v4235
        %v4284 = vmax.f32 %v4188, %v4236
        %v4285 = vmax.f32 %v4189, %v4237
        %v4286 = vmax.f32 %v4190, %v4238
        %v4287 = vmax.f32 %v4191, %v4239
        %v4288 = vmax.f32 %v4192, %v4240
        %v4289 = vmax.f32 %v4193, %v4241
        %v4290 = vmax.f32 %v4194, %v4242
        %v4291 = vmax.f32 %v4195, %v4243
        %v4292 = vmax.f32 %v4196, %v4244
        %v4293 = vmax.f32 %v4197, %v4245
        %v4294 = vmax.f32 %v4198, %v4246
        %v4295 = vmax.f32 %v4199, %v4247
        %v4296 = vmax.f32 %v4200, %v4248
        %v4297 = vmax.f32 %v4201, %v4249
        %v4298 = vmax.f32 %v4202, %v4250
        %v4299 = vmax.f32 %v4203, %v4251
        %v4300 = vmax.f32 %v4204, %v4252
        %v4301 = vmax.f32 %v4205, %v4253
        %v4302 = vmax.f32 %v4206, %v4254
        %v4303 = vmax.f32 %v4207, %v4255
        %v4304 = vmax.f32 %v4208, %v4256
        %v4305 = vmax.f32 %v4209, %v4257
        %v4306 = vmax.f32 %v4210, %v4258
        %v4307 = vmax.f32 %v4211, %v4259
        %v4308 = vmax.f32 %v4212, %v4260
        %v4309 = vmax.f32 %v4213, %v4261
        %v4310 = vmax.f32 %v4214, %v4262
        %v4311 = vmax.f32 %v4215, %v4263
        %v4312 = vmax.f32 %v4216, %v4264
        %v4313 = vmax.f32 %v4217, %v4265
        %v4314 = vmax.f32 %v4218, %v4266
        %v4315 = vmax.f32 %v4219, %v4267
        %v4316 = vmax.f32 %v4220, %v4268
        %v4317 = vmax.f32 %v4221, %v4269
        %v4318 = vmax.f32 %v4222, %v4270
        %v4319 = vmax.f32 %v4223, %v4271
        %v4320 = vmax.f32 %v4224, %v4272
        %v4321 = vmax.f32 %v4225, %v4273
        %v4322 = vld [vmem:[%s1059] sm:$0xff]
        %v4323 = vld [vmem:[%s1059 + $0x8] sm:$0xff]
        %v4324 = vld [vmem:[%s1059 + $0x10] sm:$0xff]
        %v4325 = vld [vmem:[%s1059 + $0x18] sm:$0xff]
        %v4326 = vld [vmem:[%s1059 + $0x20] sm:$0xff]
        %v4327 = vld [vmem:[%s1059 + $0x28] sm:$0xff]
        %v4328 = vld [vmem:[%s1059 + $0x30] sm:$0xff]
        %v4329 = vld [vmem:[%s1059 + $0x38] sm:$0xff]
        %v4330 = vld [vmem:[%s1059 + $0x40] sm:$0xff]
        %v4331 = vld [vmem:[%s1059 + $0x48] sm:$0xff]
        %v4332 = vld [vmem:[%s1059 + $0x50] sm:$0xff]
        %v4333 = vld [vmem:[%s1059 + $0x58] sm:$0xff]
        %v4334 = vld [vmem:[%s1059 + $0x60] sm:$0xff]
        %v4335 = vld [vmem:[%s1059 + $0x68] sm:$0xff]
        %v4336 = vld [vmem:[%s1059 + $0x70] sm:$0xff]
        %v4337 = vld [vmem:[%s1059 + $0x78] sm:$0xff]
        %v4338 = vld [vmem:[%s1059 + $0x80] sm:$0xff]
        %v4339 = vld [vmem:[%s1059 + $0x88] sm:$0xff]
        %v4340 = vld [vmem:[%s1059 + $0x90] sm:$0xff]
        %v4341 = vld [vmem:[%s1059 + $0x98] sm:$0xff]
        %v4342 = vld [vmem:[%s1059 + $0xa0] sm:$0xff]
        %v4343 = vld [vmem:[%s1059 + $0xa8] sm:$0xff]
        %v4344 = vld [vmem:[%s1059 + $0xb0] sm:$0xff]
        %v4345 = vld [vmem:[%s1059 + $0xb8] sm:$0xff]
        %v4346 = vld [vmem:[%s1059 + $0xc0] sm:$0xff]
        %v4347 = vld [vmem:[%s1059 + $0xc8] sm:$0xff]
        %v4348 = vld [vmem:[%s1059 + $0xd0] sm:$0xff]
        %v4349 = vld [vmem:[%s1059 + $0xd8] sm:$0xff]
        %v4350 = vld [vmem:[%s1059 + $0xe0] sm:$0xff]
        %v4351 = vld [vmem:[%s1059 + $0xe8] sm:$0xff]
        %v4352 = vld [vmem:[%s1059 + $0xf0] sm:$0xff]
        %v4353 = vld [vmem:[%s1059 + $0xf8] sm:$0xff]
        %v4354 = vld [vmem:[%s1059 + $0x100] sm:$0xff]
        %v4355 = vld [vmem:[%s1059 + $0x108] sm:$0xff]
        %v4356 = vld [vmem:[%s1059 + $0x110] sm:$0xff]
        %v4357 = vld [vmem:[%s1059 + $0x118] sm:$0xff]
        %v4358 = vld [vmem:[%s1059 + $0x120] sm:$0xff]
        %v4359 = vld [vmem:[%s1059 + $0x128] sm:$0xff]
        %v4360 = vld [vmem:[%s1059 + $0x130] sm:$0xff]
        %v4361 = vld [vmem:[%s1059 + $0x138] sm:$0xff]
        %v4362 = vld [vmem:[%s1059 + $0x140] sm:$0xff]
        %v4363 = vld [vmem:[%s1059 + $0x148] sm:$0xff]
        %v4364 = vld [vmem:[%s1059 + $0x150] sm:$0xff]
        %v4365 = vld [vmem:[%s1059 + $0x158] sm:$0xff]
        %v4366 = vld [vmem:[%s1059 + $0x160] sm:$0xff]
        %v4367 = vld [vmem:[%s1059 + $0x168] sm:$0xff]
        %v4368 = vld [vmem:[%s1059 + $0x170] sm:$0xff]
        %v4369 = vld [vmem:[%s1059 + $0x178] sm:$0xff]
        %v4370 = vmax.f32 %v4274, %v4322
        %v4371 = vmax.f32 %v4275, %v4323
        %v4372 = vmax.f32 %v4276, %v4324
        %v4373 = vmax.f32 %v4277, %v4325
        %v4374 = vmax.f32 %v4278, %v4326
        %v4375 = vmax.f32 %v4279, %v4327
        %v4376 = vmax.f32 %v4280, %v4328
        %v4377 = vmax.f32 %v4281, %v4329
        %v4378 = vmax.f32 %v4282, %v4330
        %v4379 = vmax.f32 %v4283, %v4331
        %v4380 = vmax.f32 %v4284, %v4332
        %v4381 = vmax.f32 %v4285, %v4333
        %v4382 = vmax.f32 %v4286, %v4334
        %v4383 = vmax.f32 %v4287, %v4335
        %v4384 = vmax.f32 %v4288, %v4336
        %v4385 = vmax.f32 %v4289, %v4337
        %v4386 = vmax.f32 %v4290, %v4338
        %v4387 = vmax.f32 %v4291, %v4339
        %v4388 = vmax.f32 %v4292, %v4340
        %v4389 = vmax.f32 %v4293, %v4341
        %v4390 = vmax.f32 %v4294, %v4342
        %v4391 = vmax.f32 %v4295, %v4343
        %v4392 = vmax.f32 %v4296, %v4344
        %v4393 = vmax.f32 %v4297, %v4345
        %v4394 = vmax.f32 %v4298, %v4346
        %v4395 = vmax.f32 %v4299, %v4347
        %v4396 = vmax.f32 %v4300, %v4348
        %v4397 = vmax.f32 %v4301, %v4349
        %v4398 = vmax.f32 %v4302, %v4350
        %v4399 = vmax.f32 %v4303, %v4351
        %v4400 = vmax.f32 %v4304, %v4352
        %v4401 = vmax.f32 %v4305, %v4353
        %v4402 = vmax.f32 %v4306, %v4354
        %v4403 = vmax.f32 %v4307, %v4355
        %v4404 = vmax.f32 %v4308, %v4356
        %v4405 = vmax.f32 %v4309, %v4357
        %v4406 = vmax.f32 %v4310, %v4358
        %v4407 = vmax.f32 %v4311, %v4359
        %v4408 = vmax.f32 %v4312, %v4360
        %v4409 = vmax.f32 %v4313, %v4361
        %v4410 = vmax.f32 %v4314, %v4362
        %v4411 = vmax.f32 %v4315, %v4363
        %v4412 = vmax.f32 %v4316, %v4364
        %v4413 = vmax.f32 %v4317, %v4365
        %v4414 = vmax.f32 %v4318, %v4366
        %v4415 = vmax.f32 %v4319, %v4367
        %v4416 = vmax.f32 %v4320, %v4368
        %v4417 = vmax.f32 %v4321, %v4369
        %v4418 = vld [vmem:[%s1333] sm:$0xff]
        %v4419 = vld [vmem:[%s1333 + $0x8] sm:$0xff]
        %v4420 = vld [vmem:[%s1333 + $0x10] sm:$0xff]
        %v4421 = vld [vmem:[%s1333 + $0x18] sm:$0xff]
        %v4422 = vld [vmem:[%s1333 + $0x20] sm:$0xff]
        %v4423 = vld [vmem:[%s1333 + $0x28] sm:$0xff]
        %v4424 = vld [vmem:[%s1333 + $0x30] sm:$0xff]
        %v4425 = vld [vmem:[%s1333 + $0x38] sm:$0xff]
        %v4426 = vld [vmem:[%s1333 + $0x40] sm:$0xff]
        %v4427 = vld [vmem:[%s1333 + $0x48] sm:$0xff]
        %v4428 = vld [vmem:[%s1333 + $0x50] sm:$0xff]
        %v4429 = vld [vmem:[%s1333 + $0x58] sm:$0xff]
        %v4430 = vld [vmem:[%s1333 + $0x60] sm:$0xff]
        %v4431 = vld [vmem:[%s1333 + $0x68] sm:$0xff]
        %v4432 = vld [vmem:[%s1333 + $0x70] sm:$0xff]
        %v4433 = vld [vmem:[%s1333 + $0x78] sm:$0xff]
        %v4434 = vld [vmem:[%s1333 + $0x80] sm:$0xff]
        %v4435 = vld [vmem:[%s1333 + $0x88] sm:$0xff]
        %v4436 = vld [vmem:[%s1333 + $0x90] sm:$0xff]
        %v4437 = vld [vmem:[%s1333 + $0x98] sm:$0xff]
        %v4438 = vld [vmem:[%s1333 + $0xa0] sm:$0xff]
        %v4439 = vld [vmem:[%s1333 + $0xa8] sm:$0xff]
        %v4440 = vld [vmem:[%s1333 + $0xb0] sm:$0xff]
        %v4441 = vld [vmem:[%s1333 + $0xb8] sm:$0xff]
        %v4442 = vld [vmem:[%s1333 + $0xc0] sm:$0xff]
        %v4443 = vld [vmem:[%s1333 + $0xc8] sm:$0xff]
        %v4444 = vld [vmem:[%s1333 + $0xd0] sm:$0xff]
        %v4445 = vld [vmem:[%s1333 + $0xd8] sm:$0xff]
        %v4446 = vld [vmem:[%s1333 + $0xe0] sm:$0xff]
        %v4447 = vld [vmem:[%s1333 + $0xe8] sm:$0xff]
        %v4448 = vld [vmem:[%s1333 + $0xf0] sm:$0xff]
        %v4449 = vld [vmem:[%s1333 + $0xf8] sm:$0xff]
        %v4450 = vld [vmem:[%s1333 + $0x100] sm:$0xff]
        %v4451 = vld [vmem:[%s1333 + $0x108] sm:$0xff]
        %v4452 = vld [vmem:[%s1333 + $0x110] sm:$0xff]
        %v4453 = vld [vmem:[%s1333 + $0x118] sm:$0xff]
        %v4454 = vld [vmem:[%s1333 + $0x120] sm:$0xff]
        %v4455 = vld [vmem:[%s1333 + $0x128] sm:$0xff]
        %v4456 = vld [vmem:[%s1333 + $0x130] sm:$0xff]
        %v4457 = vld [vmem:[%s1333 + $0x138] sm:$0xff]
        %v4458 = vld [vmem:[%s1333 + $0x140] sm:$0xff]
        %v4459 = vld [vmem:[%s1333 + $0x148] sm:$0xff]
        %v4460 = vld [vmem:[%s1333 + $0x150] sm:$0xff]
        %v4461 = vld [vmem:[%s1333 + $0x158] sm:$0xff]
        %v4462 = vld [vmem:[%s1333 + $0x160] sm:$0xff]
        %v4463 = vld [vmem:[%s1333 + $0x168] sm:$0xff]
        %v4464 = vld [vmem:[%s1333 + $0x170] sm:$0xff]
        %v4465 = vld [vmem:[%s1333 + $0x178] sm:$0xff]
        %v4466 = vmax.f32 %v4370, %v4418
        %v4467 = vmax.f32 %v4371, %v4419
        %v4468 = vmax.f32 %v4372, %v4420
        %v4469 = vmax.f32 %v4373, %v4421
        %v4470 = vmax.f32 %v4374, %v4422
        %v4471 = vmax.f32 %v4375, %v4423
        %v4472 = vmax.f32 %v4376, %v4424
        %v4473 = vmax.f32 %v4377, %v4425
        %v4474 = vmax.f32 %v4378, %v4426
        %v4475 = vmax.f32 %v4379, %v4427
        %v4476 = vmax.f32 %v4380, %v4428
        %v4477 = vmax.f32 %v4381, %v4429
        %v4478 = vmax.f32 %v4382, %v4430
        %v4479 = vmax.f32 %v4383, %v4431
        %v4480 = vmax.f32 %v4384, %v4432
        %v4481 = vmax.f32 %v4385, %v4433
        %v4482 = vmax.f32 %v4386, %v4434
        %v4483 = vmax.f32 %v4387, %v4435
        %v4484 = vmax.f32 %v4388, %v4436
        %v4485 = vmax.f32 %v4389, %v4437
        %v4486 = vmax.f32 %v4390, %v4438
        %v4487 = vmax.f32 %v4391, %v4439
        %v4488 = vmax.f32 %v4392, %v4440
        %v4489 = vmax.f32 %v4393, %v4441
        %v4490 = vmax.f32 %v4394, %v4442
        %v4491 = vmax.f32 %v4395, %v4443
        %v4492 = vmax.f32 %v4396, %v4444
        %v4493 = vmax.f32 %v4397, %v4445
        %v4494 = vmax.f32 %v4398, %v4446
        %v4495 = vmax.f32 %v4399, %v4447
        %v4496 = vmax.f32 %v4400, %v4448
        %v4497 = vmax.f32 %v4401, %v4449
        %v4498 = vmax.f32 %v4402, %v4450
        %v4499 = vmax.f32 %v4403, %v4451
        %v4500 = vmax.f32 %v4404, %v4452
        %v4501 = vmax.f32 %v4405, %v4453
        %v4502 = vmax.f32 %v4406, %v4454
        %v4503 = vmax.f32 %v4407, %v4455
        %v4504 = vmax.f32 %v4408, %v4456
        %v4505 = vmax.f32 %v4409, %v4457
        %v4506 = vmax.f32 %v4410, %v4458
        %v4507 = vmax.f32 %v4411, %v4459
        %v4508 = vmax.f32 %v4412, %v4460
        %v4509 = vmax.f32 %v4413, %v4461
        %v4510 = vmax.f32 %v4414, %v4462
        %v4511 = vmax.f32 %v4415, %v4463
        %v4512 = vmax.f32 %v4416, %v4464
        %v4513 = vmax.f32 %v4417, %v4465
        %v4514 = vld [vmem:[%s1430] sm:$0xff]
        %v4515 = vld [vmem:[%s1430 + $0x8] sm:$0xff]
        %v4516 = vld [vmem:[%s1430 + $0x10] sm:$0xff]
        %v4517 = vld [vmem:[%s1430 + $0x18] sm:$0xff]
        %v4518 = vld [vmem:[%s1430 + $0x20] sm:$0xff]
        %v4519 = vld [vmem:[%s1430 + $0x28] sm:$0xff]
        %v4520 = vld [vmem:[%s1430 + $0x30] sm:$0xff]
        %v4521 = vld [vmem:[%s1430 + $0x38] sm:$0xff]
        %v4522 = vld [vmem:[%s1430 + $0x40] sm:$0xff]
        %v4523 = vld [vmem:[%s1430 + $0x48] sm:$0xff]
        %v4524 = vld [vmem:[%s1430 + $0x50] sm:$0xff]
        %v4525 = vld [vmem:[%s1430 + $0x58] sm:$0xff]
        %v4526 = vld [vmem:[%s1430 + $0x60] sm:$0xff]
        %v4527 = vld [vmem:[%s1430 + $0x68] sm:$0xff]
        %v4528 = vld [vmem:[%s1430 + $0x70] sm:$0xff]
        %v4529 = vld [vmem:[%s1430 + $0x78] sm:$0xff]
        %v4530 = vld [vmem:[%s1430 + $0x80] sm:$0xff]
        %v4531 = vld [vmem:[%s1430 + $0x88] sm:$0xff]
        %v4532 = vld [vmem:[%s1430 + $0x90] sm:$0xff]
        %v4533 = vld [vmem:[%s1430 + $0x98] sm:$0xff]
        %v4534 = vld [vmem:[%s1430 + $0xa0] sm:$0xff]
        %v4535 = vld [vmem:[%s1430 + $0xa8] sm:$0xff]
        %v4536 = vld [vmem:[%s1430 + $0xb0] sm:$0xff]
        %v4537 = vld [vmem:[%s1430 + $0xb8] sm:$0xff]
        %v4538 = vld [vmem:[%s1430 + $0xc0] sm:$0xff]
        %v4539 = vld [vmem:[%s1430 + $0xc8] sm:$0xff]
        %v4540 = vld [vmem:[%s1430 + $0xd0] sm:$0xff]
        %v4541 = vld [vmem:[%s1430 + $0xd8] sm:$0xff]
        %v4542 = vld [vmem:[%s1430 + $0xe0] sm:$0xff]
        %v4543 = vld [vmem:[%s1430 + $0xe8] sm:$0xff]
        %v4544 = vld [vmem:[%s1430 + $0xf0] sm:$0xff]
        %v4545 = vld [vmem:[%s1430 + $0xf8] sm:$0xff]
        %v4546 = vld [vmem:[%s1430 + $0x100] sm:$0xff]
        %v4547 = vld [vmem:[%s1430 + $0x108] sm:$0xff]
        %v4548 = vld [vmem:[%s1430 + $0x110] sm:$0xff]
        %v4549 = vld [vmem:[%s1430 + $0x118] sm:$0xff]
        %v4550 = vld [vmem:[%s1430 + $0x120] sm:$0xff]
        %v4551 = vld [vmem:[%s1430 + $0x128] sm:$0xff]
        %v4552 = vld [vmem:[%s1430 + $0x130] sm:$0xff]
        %v4553 = vld [vmem:[%s1430 + $0x138] sm:$0xff]
        %v4554 = vld [vmem:[%s1430 + $0x140] sm:$0xff]
        %v4555 = vld [vmem:[%s1430 + $0x148] sm:$0xff]
        %v4556 = vld [vmem:[%s1430 + $0x150] sm:$0xff]
        %v4557 = vld [vmem:[%s1430 + $0x158] sm:$0xff]
        %v4558 = vld [vmem:[%s1430 + $0x160] sm:$0xff]
        %v4559 = vld [vmem:[%s1430 + $0x168] sm:$0xff]
        %v4560 = vld [vmem:[%s1430 + $0x170] sm:$0xff]
        %v4561 = vld [vmem:[%s1430 + $0x178] sm:$0xff]
        %v4562 = vmax.f32 %v4466, %v4514
        %v4563 = vmax.f32 %v4467, %v4515
        %v4564 = vmax.f32 %v4468, %v4516
        %v4565 = vmax.f32 %v4469, %v4517
        %v4566 = vmax.f32 %v4470, %v4518
        %v4567 = vmax.f32 %v4471, %v4519
        %v4568 = vmax.f32 %v4472, %v4520
        %v4569 = vmax.f32 %v4473, %v4521
        %v4570 = vmax.f32 %v4474, %v4522
        %v4571 = vmax.f32 %v4475, %v4523
        %v4572 = vmax.f32 %v4476, %v4524
        %v4573 = vmax.f32 %v4477, %v4525
        %v4574 = vmax.f32 %v4478, %v4526
        %v4575 = vmax.f32 %v4479, %v4527
        %v4576 = vmax.f32 %v4480, %v4528
        %v4577 = vmax.f32 %v4481, %v4529
        %v4578 = vmax.f32 %v4482, %v4530
        %v4579 = vmax.f32 %v4483, %v4531
        %v4580 = vmax.f32 %v4484, %v4532
        %v4581 = vmax.f32 %v4485, %v4533
        %v4582 = vmax.f32 %v4486, %v4534
        %v4583 = vmax.f32 %v4487, %v4535
        %v4584 = vmax.f32 %v4488, %v4536
        %v4585 = vmax.f32 %v4489, %v4537
        %v4586 = vmax.f32 %v4490, %v4538
        %v4587 = vmax.f32 %v4491, %v4539
        %v4588 = vmax.f32 %v4492, %v4540
        %v4589 = vmax.f32 %v4493, %v4541
        %v4590 = vmax.f32 %v4494, %v4542
        %v4591 = vmax.f32 %v4495, %v4543
        %v4592 = vmax.f32 %v4496, %v4544
        %v4593 = vmax.f32 %v4497, %v4545
        %v4594 = vmax.f32 %v4498, %v4546
        %v4595 = vmax.f32 %v4499, %v4547
        %v4596 = vmax.f32 %v4500, %v4548
        %v4597 = vmax.f32 %v4501, %v4549
        %v4598 = vmax.f32 %v4502, %v4550
        %v4599 = vmax.f32 %v4503, %v4551
        %v4600 = vmax.f32 %v4504, %v4552
        %v4601 = vmax.f32 %v4505, %v4553
        %v4602 = vmax.f32 %v4506, %v4554
        %v4603 = vmax.f32 %v4507, %v4555
        %v4604 = vmax.f32 %v4508, %v4556
        %v4605 = vmax.f32 %v4509, %v4557
        %v4606 = vmax.f32 %v4510, %v4558
        %v4607 = vmax.f32 %v4511, %v4559
        %v4608 = vmax.f32 %v4512, %v4560
        %v4609 = vmax.f32 %v4513, %v4561
        %v4610 = vrot.slane %v4562, 1
        %v4611 = vrot.slane %v4563, 1
        %v4612 = vrot.slane %v4564, 1
        %v4613 = vrot.slane %v4565, 1
        %v4614 = vrot.slane %v4566, 1
        %v4615 = vrot.slane %v4567, 1
        %v4616 = vrot.slane %v4568, 1
        %v4617 = vrot.slane %v4569, 1
        %v4618 = vrot.slane %v4570, 1
        %v4619 = vrot.slane %v4571, 1
        %v4620 = vrot.slane %v4572, 1
        %v4621 = vrot.slane %v4573, 1
        %v4622 = vrot.slane %v4574, 1
        %v4623 = vrot.slane %v4575, 1
        %v4624 = vrot.slane %v4576, 1
        %v4625 = vrot.slane %v4577, 1
        %v4626 = vrot.slane %v4578, 1
        %v4627 = vrot.slane %v4579, 1
        %v4628 = vrot.slane %v4580, 1
        %v4629 = vrot.slane %v4581, 1
        %v4630 = vrot.slane %v4582, 1
        %v4631 = vrot.slane %v4583, 1
        %v4632 = vrot.slane %v4584, 1
        %v4633 = vrot.slane %v4585, 1
        %v4634 = vrot.slane %v4586, 1
        %v4635 = vrot.slane %v4587, 1
        %v4636 = vrot.slane %v4588, 1
        %v4637 = vrot.slane %v4589, 1
        %v4638 = vrot.slane %v4590, 1
        %v4639 = vrot.slane %v4591, 1
        %v4640 = vrot.slane %v4592, 1
        %v4641 = vrot.slane %v4593, 1
        %v4642 = vrot.slane %v4594, 1
        %v4643 = vrot.slane %v4595, 1
        %v4644 = vrot.slane %v4596, 1
        %v4645 = vrot.slane %v4597, 1
        %v4646 = vrot.slane %v4598, 1
        %v4647 = vrot.slane %v4599, 1
        %v4648 = vrot.slane %v4600, 1
        %v4649 = vrot.slane %v4601, 1
        %v4650 = vrot.slane %v4602, 1
        %v4651 = vrot.slane %v4603, 1
        %v4652 = vrot.slane %v4604, 1
        %v4653 = vrot.slane %v4605, 1
        %v4654 = vrot.slane %v4606, 1
        %v4655 = vrot.slane %v4607, 1
        %v4656 = vrot.slane %v4608, 1
        %v4657 = vrot.slane %v4609, 1
        %v4658 = vsel %vm1577, %v4656, %v4657
        %v4659 = vsel %vm1577, %v4655, %v4656
        %v4660 = vsel %vm1577, %v4654, %v4655
        %v4661 = vsel %vm1577, %v4653, %v4654
        %v4662 = vsel %vm1577, %v4652, %v4653
        %v4663 = vsel %vm1577, %v4651, %v4652
        %v4664 = vsel %vm1577, %v4650, %v4651
        %v4665 = vsel %vm1577, %v4649, %v4650
        %v4666 = vsel %vm1577, %v4648, %v4649
        %v4667 = vsel %vm1577, %v4647, %v4648
        %v4668 = vsel %vm1577, %v4646, %v4647
        %v4669 = vsel %vm1577, %v4645, %v4646
        %v4670 = vsel %vm1577, %v4644, %v4645
        %v4671 = vsel %vm1577, %v4643, %v4644
        %v4672 = vsel %vm1577, %v4642, %v4643
        %v4673 = vsel %vm1577, %v4641, %v4642
        %v4674 = vsel %vm1577, %v4640, %v4641
        %v4675 = vsel %vm1577, %v4639, %v4640
        %v4676 = vsel %vm1577, %v4638, %v4639
        %v4677 = vsel %vm1577, %v4637, %v4638
        %v4678 = vsel %vm1577, %v4636, %v4637
        %v4679 = vsel %vm1577, %v4635, %v4636
        %v4680 = vsel %vm1577, %v4634, %v4635
        %v4681 = vsel %vm1577, %v4633, %v4634
        %v4682 = vsel %vm1577, %v4632, %v4633
        %v4683 = vsel %vm1577, %v4631, %v4632
        %v4684 = vsel %vm1577, %v4630, %v4631
        %v4685 = vsel %vm1577, %v4629, %v4630
        %v4686 = vsel %vm1577, %v4628, %v4629
        %v4687 = vsel %vm1577, %v4627, %v4628
        %v4688 = vsel %vm1577, %v4626, %v4627
        %v4689 = vsel %vm1577, %v4625, %v4626
        %v4690 = vsel %vm1577, %v4624, %v4625
        %v4691 = vsel %vm1577, %v4623, %v4624
        %v4692 = vsel %vm1577, %v4622, %v4623
        %v4693 = vsel %vm1577, %v4621, %v4622
        %v4694 = vsel %vm1577, %v4620, %v4621
        %v4695 = vsel %vm1577, %v4619, %v4620
        %v4696 = vsel %vm1577, %v4618, %v4619
        %v4697 = vsel %vm1577, %v4617, %v4618
        %v4698 = vsel %vm1577, %v4616, %v4617
        %v4699 = vsel %vm1577, %v4615, %v4616
        %v4700 = vsel %vm1577, %v4614, %v4615
        %v4701 = vsel %vm1577, %v4613, %v4614
        %v4702 = vsel %vm1577, %v4612, %v4613
        %v4703 = vsel %vm1577, %v4611, %v4612
        %v4704 = vsel %vm1577, %v4610, %v4611
        %v4705 = vsel %vm1577, %v4657, %v4610
        %v4706 = vmax.f32 %v4562, %v4704
        %v4707 = vmax.f32 %v4563, %v4703
        %v4708 = vmax.f32 %v4564, %v4702
        %v4709 = vmax.f32 %v4565, %v4701
        %v4710 = vmax.f32 %v4566, %v4700
        %v4711 = vmax.f32 %v4567, %v4699
        %v4712 = vmax.f32 %v4568, %v4698
        %v4713 = vmax.f32 %v4569, %v4697
        %v4714 = vmax.f32 %v4570, %v4696
        %v4715 = vmax.f32 %v4571, %v4695
        %v4716 = vmax.f32 %v4572, %v4694
        %v4717 = vmax.f32 %v4573, %v4693
        %v4718 = vmax.f32 %v4574, %v4692
        %v4719 = vmax.f32 %v4575, %v4691
        %v4720 = vmax.f32 %v4576, %v4690
        %v4721 = vmax.f32 %v4577, %v4689
        %v4722 = vmax.f32 %v4578, %v4688
        %v4723 = vmax.f32 %v4579, %v4687
        %v4724 = vmax.f32 %v4580, %v4686
        %v4725 = vmax.f32 %v4581, %v4685
        %v4726 = vmax.f32 %v4582, %v4684
        %v4727 = vmax.f32 %v4583, %v4683
        %v4728 = vmax.f32 %v4584, %v4682
        %v4729 = vmax.f32 %v4585, %v4681
        %v4730 = vmax.f32 %v4586, %v4680
        %v4731 = vmax.f32 %v4587, %v4679
        %v4732 = vmax.f32 %v4588, %v4678
        %v4733 = vmax.f32 %v4589, %v4677
        %v4734 = vmax.f32 %v4590, %v4676
        %v4735 = vmax.f32 %v4591, %v4675
        %v4736 = vmax.f32 %v4592, %v4674
        %v4737 = vmax.f32 %v4593, %v4673
        %v4738 = vmax.f32 %v4594, %v4672
        %v4739 = vmax.f32 %v4595, %v4671
        %v4740 = vmax.f32 %v4596, %v4670
        %v4741 = vmax.f32 %v4597, %v4669
        %v4742 = vmax.f32 %v4598, %v4668
        %v4743 = vmax.f32 %v4599, %v4667
        %v4744 = vmax.f32 %v4600, %v4666
        %v4745 = vmax.f32 %v4601, %v4665
        %v4746 = vmax.f32 %v4602, %v4664
        %v4747 = vmax.f32 %v4603, %v4663
        %v4748 = vmax.f32 %v4604, %v4662
        %v4749 = vmax.f32 %v4605, %v4661
        %v4750 = vmax.f32 %v4606, %v4660
        %v4751 = vmax.f32 %v4607, %v4659
        %v4752 = vmax.f32 %v4608, %v4658
        %v4753 = vmax.f32 %v4609, %v4705
        %v4754 = vrot.slane %v4562, 7
        %v4755 = vrot.slane %v4563, 7
        %v4756 = vrot.slane %v4564, 7
        %v4757 = vrot.slane %v4565, 7
        %v4758 = vrot.slane %v4566, 7
        %v4759 = vrot.slane %v4567, 7
        %v4760 = vrot.slane %v4568, 7
        %v4761 = vrot.slane %v4569, 7
        %v4762 = vrot.slane %v4570, 7
        %v4763 = vrot.slane %v4571, 7
        %v4764 = vrot.slane %v4572, 7
        %v4765 = vrot.slane %v4573, 7
        %v4766 = vrot.slane %v4574, 7
        %v4767 = vrot.slane %v4575, 7
        %v4768 = vrot.slane %v4576, 7
        %v4769 = vrot.slane %v4577, 7
        %v4770 = vrot.slane %v4578, 7
        %v4771 = vrot.slane %v4579, 7
        %v4772 = vrot.slane %v4580, 7
        %v4773 = vrot.slane %v4581, 7
        %v4774 = vrot.slane %v4582, 7
        %v4775 = vrot.slane %v4583, 7
        %v4776 = vrot.slane %v4584, 7
        %v4777 = vrot.slane %v4585, 7
        %v4778 = vrot.slane %v4586, 7
        %v4779 = vrot.slane %v4587, 7
        %v4780 = vrot.slane %v4588, 7
        %v4781 = vrot.slane %v4589, 7
        %v4782 = vrot.slane %v4590, 7
        %v4783 = vrot.slane %v4591, 7
        %v4784 = vrot.slane %v4592, 7
        %v4785 = vrot.slane %v4593, 7
        %v4786 = vrot.slane %v4594, 7
        %v4787 = vrot.slane %v4595, 7
        %v4788 = vrot.slane %v4596, 7
        %v4789 = vrot.slane %v4597, 7
        %v4790 = vrot.slane %v4598, 7
        %v4791 = vrot.slane %v4599, 7
        %v4792 = vrot.slane %v4600, 7
        %v4793 = vrot.slane %v4601, 7
        %v4794 = vrot.slane %v4602, 7
        %v4795 = vrot.slane %v4603, 7
        %v4796 = vrot.slane %v4604, 7
        %v4797 = vrot.slane %v4605, 7
        %v4798 = vrot.slane %v4606, 7
        %v4799 = vrot.slane %v4607, 7
        %v4800 = vrot.slane %v4608, 7
        %v4801 = vrot.slane %v4609, 7
        %v4802 = vsel %vm1722, %v4800, %v4801
        %v4803 = vsel %vm1722, %v4799, %v4800
        %v4804 = vsel %vm1722, %v4798, %v4799
        %v4805 = vsel %vm1722, %v4797, %v4798
        %v4806 = vsel %vm1722, %v4796, %v4797
        %v4807 = vsel %vm1722, %v4795, %v4796
        %v4808 = vsel %vm1722, %v4794, %v4795
        %v4809 = vsel %vm1722, %v4793, %v4794
        %v4810 = vsel %vm1722, %v4792, %v4793
        %v4811 = vsel %vm1722, %v4791, %v4792
        %v4812 = vsel %vm1722, %v4790, %v4791
        %v4813 = vsel %vm1722, %v4789, %v4790
        %v4814 = vsel %vm1722, %v4788, %v4789
        %v4815 = vsel %vm1722, %v4787, %v4788
        %v4816 = vsel %vm1722, %v4786, %v4787
        %v4817 = vsel %vm1722, %v4785, %v4786
        %v4818 = vsel %vm1722, %v4784, %v4785
        %v4819 = vsel %vm1722, %v4783, %v4784
        %v4820 = vsel %vm1722, %v4782, %v4783
        %v4821 = vsel %vm1722, %v4781, %v4782
        %v4822 = vsel %vm1722, %v4780, %v4781
        %v4823 = vsel %vm1722, %v4779, %v4780
        %v4824 = vsel %vm1722, %v4778, %v4779
        %v4825 = vsel %vm1722, %v4777, %v4778
        %v4826 = vsel %vm1722, %v4776, %v4777
        %v4827 = vsel %vm1722, %v4775, %v4776
        %v4828 = vsel %vm1722, %v4774, %v4775
        %v4829 = vsel %vm1722, %v4773, %v4774
        %v4830 = vsel %vm1722, %v4772, %v4773
        %v4831 = vsel %vm1722, %v4771, %v4772
        %v4832 = vsel %vm1722, %v4770, %v4771
        %v4833 = vsel %vm1722, %v4769, %v4770
        %v4834 = vsel %vm1722, %v4768, %v4769
        %v4835 = vsel %vm1722, %v4767, %v4768
        %v4836 = vsel %vm1722, %v4766, %v4767
        %v4837 = vsel %vm1722, %v4765, %v4766
        %v4838 = vsel %vm1722, %v4764, %v4765
        %v4839 = vsel %vm1722, %v4763, %v4764
        %v4840 = vsel %vm1722, %v4762, %v4763
        %v4841 = vsel %vm1722, %v4761, %v4762
        %v4842 = vsel %vm1722, %v4760, %v4761
        %v4843 = vsel %vm1722, %v4759, %v4760
        %v4844 = vsel %vm1722, %v4758, %v4759
        %v4845 = vsel %vm1722, %v4757, %v4758
        %v4846 = vsel %vm1722, %v4756, %v4757
        %v4847 = vsel %vm1722, %v4755, %v4756
        %v4848 = vsel %vm1722, %v4754, %v4755
        %v4849 = vsel %vm1722, %v4801, %v4754
        %v4850 = vmax.f32 %v4706, %v4849
        %v4851 = vmax.f32 %v4707, %v4848
        %v4852 = vmax.f32 %v4708, %v4847
        %v4853 = vmax.f32 %v4709, %v4846
        %v4854 = vmax.f32 %v4710, %v4845
        %v4855 = vmax.f32 %v4711, %v4844
        %v4856 = vmax.f32 %v4712, %v4843
        %v4857 = vmax.f32 %v4713, %v4842
        %v4858 = vmax.f32 %v4714, %v4841
        %v4859 = vmax.f32 %v4715, %v4840
        %v4860 = vmax.f32 %v4716, %v4839
        %v4861 = vmax.f32 %v4717, %v4838
        %v4862 = vmax.f32 %v4718, %v4837
        %v4863 = vmax.f32 %v4719, %v4836
        %v4864 = vmax.f32 %v4720, %v4835
        %v4865 = vmax.f32 %v4721, %v4834
        %v4866 = vmax.f32 %v4722, %v4833
        %v4867 = vmax.f32 %v4723, %v4832
        %v4868 = vmax.f32 %v4724, %v4831
        %v4869 = vmax.f32 %v4725, %v4830
        %v4870 = vmax.f32 %v4726, %v4829
        %v4871 = vmax.f32 %v4727, %v4828
        %v4872 = vmax.f32 %v4728, %v4827
        %v4873 = vmax.f32 %v4729, %v4826
        %v4874 = vmax.f32 %v4730, %v4825
        %v4875 = vmax.f32 %v4731, %v4824
        %v4876 = vmax.f32 %v4732, %v4823
        %v4877 = vmax.f32 %v4733, %v4822
        %v4878 = vmax.f32 %v4734, %v4821
        %v4879 = vmax.f32 %v4735, %v4820
        %v4880 = vmax.f32 %v4736, %v4819
        %v4881 = vmax.f32 %v4737, %v4818
        %v4882 = vmax.f32 %v4738, %v4817
        %v4883 = vmax.f32 %v4739, %v4816
        %v4884 = vmax.f32 %v4740, %v4815
        %v4885 = vmax.f32 %v4741, %v4814
        %v4886 = vmax.f32 %v4742, %v4813
        %v4887 = vmax.f32 %v4743, %v4812
        %v4888 = vmax.f32 %v4744, %v4811
        %v4889 = vmax.f32 %v4745, %v4810
        %v4890 = vmax.f32 %v4746, %v4809
        %v4891 = vmax.f32 %v4747, %v4808
        %v4892 = vmax.f32 %v4748, %v4807
        %v4893 = vmax.f32 %v4749, %v4806
        %v4894 = vmax.f32 %v4750, %v4805
        %v4895 = vmax.f32 %v4751, %v4804
        %v4896 = vmax.f32 %v4752, %v4803
        %v4897 = vmax.f32 %v4753, %v4802
        %v4898 = vrot.slane %v4562, 2
        %v4899 = vrot.slane %v4563, 2
        %v4900 = vrot.slane %v4564, 2
        %v4901 = vrot.slane %v4565, 2
        %v4902 = vrot.slane %v4566, 2
        %v4903 = vrot.slane %v4567, 2
        %v4904 = vrot.slane %v4568, 2
        %v4905 = vrot.slane %v4569, 2
        %v4906 = vrot.slane %v4570, 2
        %v4907 = vrot.slane %v4571, 2
        %v4908 = vrot.slane %v4572, 2
        %v4909 = vrot.slane %v4573, 2
        %v4910 = vrot.slane %v4574, 2
        %v4911 = vrot.slane %v4575, 2
        %v4912 = vrot.slane %v4576, 2
        %v4913 = vrot.slane %v4577, 2
        %v4914 = vrot.slane %v4578, 2
        %v4915 = vrot.slane %v4579, 2
        %v4916 = vrot.slane %v4580, 2
        %v4917 = vrot.slane %v4581, 2
        %v4918 = vrot.slane %v4582, 2
        %v4919 = vrot.slane %v4583, 2
        %v4920 = vrot.slane %v4584, 2
        %v4921 = vrot.slane %v4585, 2
        %v4922 = vrot.slane %v4586, 2
        %v4923 = vrot.slane %v4587, 2
        %v4924 = vrot.slane %v4588, 2
        %v4925 = vrot.slane %v4589, 2
        %v4926 = vrot.slane %v4590, 2
        %v4927 = vrot.slane %v4591, 2
        %v4928 = vrot.slane %v4592, 2
        %v4929 = vrot.slane %v4593, 2
        %v4930 = vrot.slane %v4594, 2
        %v4931 = vrot.slane %v4595, 2
        %v4932 = vrot.slane %v4596, 2
        %v4933 = vrot.slane %v4597, 2
        %v4934 = vrot.slane %v4598, 2
        %v4935 = vrot.slane %v4599, 2
        %v4936 = vrot.slane %v4600, 2
        %v4937 = vrot.slane %v4601, 2
        %v4938 = vrot.slane %v4602, 2
        %v4939 = vrot.slane %v4603, 2
        %v4940 = vrot.slane %v4604, 2
        %v4941 = vrot.slane %v4605, 2
        %v4942 = vrot.slane %v4606, 2
        %v4943 = vrot.slane %v4607, 2
        %v4944 = vrot.slane %v4608, 2
        %v4945 = vrot.slane %v4609, 2
        %v4946 = vsel %vm1867, %v4944, %v4945
        %v4947 = vsel %vm1867, %v4943, %v4944
        %v4948 = vsel %vm1867, %v4942, %v4943
        %v4949 = vsel %vm1867, %v4941, %v4942
        %v4950 = vsel %vm1867, %v4940, %v4941
        %v4951 = vsel %vm1867, %v4939, %v4940
        %v4952 = vsel %vm1867, %v4938, %v4939
        %v4953 = vsel %vm1867, %v4937, %v4938
        %v4954 = vsel %vm1867, %v4936, %v4937
        %v4955 = vsel %vm1867, %v4935, %v4936
        %v4956 = vsel %vm1867, %v4934, %v4935
        %v4957 = vsel %vm1867, %v4933, %v4934
        %v4958 = vsel %vm1867, %v4932, %v4933
        %v4959 = vsel %vm1867, %v4931, %v4932
        %v4960 = vsel %vm1867, %v4930, %v4931
        %v4961 = vsel %vm1867, %v4929, %v4930
        %v4962 = vsel %vm1867, %v4928, %v4929
        %v4963 = vsel %vm1867, %v4927, %v4928
        %v4964 = vsel %vm1867, %v4926, %v4927
        %v4965 = vsel %vm1867, %v4925, %v4926
        %v4966 = vsel %vm1867, %v4924, %v4925
        %v4967 = vsel %vm1867, %v4923, %v4924
        %v4968 = vsel %vm1867, %v4922, %v4923
        %v4969 = vsel %vm1867, %v4921, %v4922
        %v4970 = vsel %vm1867, %v4920, %v4921
        %v4971 = vsel %vm1867, %v4919, %v4920
        %v4972 = vsel %vm1867, %v4918, %v4919
        %v4973 = vsel %vm1867, %v4917, %v4918
        %v4974 = vsel %vm1867, %v4916, %v4917
        %v4975 = vsel %vm1867, %v4915, %v4916
        %v4976 = vsel %vm1867, %v4914, %v4915
        %v4977 = vsel %vm1867, %v4913, %v4914
        %v4978 = vsel %vm1867, %v4912, %v4913
        %v4979 = vsel %vm1867, %v4911, %v4912
        %v4980 = vsel %vm1867, %v4910, %v4911
        %v4981 = vsel %vm1867, %v4909, %v4910
        %v4982 = vsel %vm1867, %v4908, %v4909
        %v4983 = vsel %vm1867, %v4907, %v4908
        %v4984 = vsel %vm1867, %v4906, %v4907
        %v4985 = vsel %vm1867, %v4905, %v4906
        %v4986 = vsel %vm1867, %v4904, %v4905
        %v4987 = vsel %vm1867, %v4903, %v4904
        %v4988 = vsel %vm1867, %v4902, %v4903
        %v4989 = vsel %vm1867, %v4901, %v4902
        %v4990 = vsel %vm1867, %v4900, %v4901
        %v4991 = vsel %vm1867, %v4899, %v4900
        %v4992 = vsel %vm1867, %v4898, %v4899
        %v4993 = vsel %vm1867, %v4945, %v4898
        %v4994 = vmax.f32 %v4850, %v4992
        %v4995 = vmax.f32 %v4851, %v4991
        %v4996 = vmax.f32 %v4852, %v4990
        %v4997 = vmax.f32 %v4853, %v4989
        %v4998 = vmax.f32 %v4854, %v4988
        %v4999 = vmax.f32 %v4855, %v4987
        %v5000 = vmax.f32 %v4856, %v4986
        %v5001 = vmax.f32 %v4857, %v4985
        %v5002 = vmax.f32 %v4858, %v4984
        %v5003 = vmax.f32 %v4859, %v4983
        %v5004 = vmax.f32 %v4860, %v4982
        %v5005 = vmax.f32 %v4861, %v4981
        %v5006 = vmax.f32 %v4862, %v4980
        %v5007 = vmax.f32 %v4863, %v4979
        %v5008 = vmax.f32 %v4864, %v4978
        %v5009 = vmax.f32 %v4865, %v4977
        %v5010 = vmax.f32 %v4866, %v4976
        %v5011 = vmax.f32 %v4867, %v4975
        %v5012 = vmax.f32 %v4868, %v4974
        %v5013 = vmax.f32 %v4869, %v4973
        %v5014 = vmax.f32 %v4870, %v4972
        %v5015 = vmax.f32 %v4871, %v4971
        %v5016 = vmax.f32 %v4872, %v4970
        %v5017 = vmax.f32 %v4873, %v4969
        %v5018 = vmax.f32 %v4874, %v4968
        %v5019 = vmax.f32 %v4875, %v4967
        %v5020 = vmax.f32 %v4876, %v4966
        %v5021 = vmax.f32 %v4877, %v4965
        %v5022 = vmax.f32 %v4878, %v4964
        %v5023 = vmax.f32 %v4879, %v4963
        %v5024 = vmax.f32 %v4880, %v4962
        %v5025 = vmax.f32 %v4881, %v4961
        %v5026 = vmax.f32 %v4882, %v4960
        %v5027 = vmax.f32 %v4883, %v4959
        %v5028 = vmax.f32 %v4884, %v4958
        %v5029 = vmax.f32 %v4885, %v4957
        %v5030 = vmax.f32 %v4886, %v4956
        %v5031 = vmax.f32 %v4887, %v4955
        %v5032 = vmax.f32 %v4888, %v4954
        %v5033 = vmax.f32 %v4889, %v4953
        %v5034 = vmax.f32 %v4890, %v4952
        %v5035 = vmax.f32 %v4891, %v4951
        %v5036 = vmax.f32 %v4892, %v4950
        %v5037 = vmax.f32 %v4893, %v4949
        %v5038 = vmax.f32 %v4894, %v4948
        %v5039 = vmax.f32 %v4895, %v4947
        %v5040 = vmax.f32 %v4896, %v4946
        %v5041 = vmax.f32 %v4897, %v4993
        %v5042 = vrot.slane %v4562, 6
        %v5043 = vrot.slane %v4563, 6
        %v5044 = vrot.slane %v4564, 6
        %v5045 = vrot.slane %v4565, 6
        %v5046 = vrot.slane %v4566, 6
        %v5047 = vrot.slane %v4567, 6
        %v5048 = vrot.slane %v4568, 6
        %v5049 = vrot.slane %v4569, 6
        %v5050 = vrot.slane %v4570, 6
        %v5051 = vrot.slane %v4571, 6
        %v5052 = vrot.slane %v4572, 6
        %v5053 = vrot.slane %v4573, 6
        %v5054 = vrot.slane %v4574, 6
        %v5055 = vrot.slane %v4575, 6
        %v5056 = vrot.slane %v4576, 6
        %v5057 = vrot.slane %v4577, 6
        %v5058 = vrot.slane %v4578, 6
        %v5059 = vrot.slane %v4579, 6
        %v5060 = vrot.slane %v4580, 6
        %v5061 = vrot.slane %v4581, 6
        %v5062 = vrot.slane %v4582, 6
        %v5063 = vrot.slane %v4583, 6
        %v5064 = vrot.slane %v4584, 6
        %v5065 = vrot.slane %v4585, 6
        %v5066 = vrot.slane %v4586, 6
        %v5067 = vrot.slane %v4587, 6
        %v5068 = vrot.slane %v4588, 6
        %v5069 = vrot.slane %v4589, 6
        %v5070 = vrot.slane %v4590, 6
        %v5071 = vrot.slane %v4591, 6
        %v5072 = vrot.slane %v4592, 6
        %v5073 = vrot.slane %v4593, 6
        %v5074 = vrot.slane %v4594, 6
        %v5075 = vrot.slane %v4595, 6
        %v5076 = vrot.slane %v4596, 6
        %v5077 = vrot.slane %v4597, 6
        %v5078 = vrot.slane %v4598, 6
        %v5079 = vrot.slane %v4599, 6
        %v5080 = vrot.slane %v4600, 6
        %v5081 = vrot.slane %v4601, 6
        %v5082 = vrot.slane %v4602, 6
        %v5083 = vrot.slane %v4603, 6
        %v5084 = vrot.slane %v4604, 6
        %v5085 = vrot.slane %v4605, 6
        %v5086 = vrot.slane %v4606, 6
        %v5087 = vrot.slane %v4607, 6
        %v5088 = vrot.slane %v4608, 6
        %v5089 = vrot.slane %v4609, 6
        %v5090 = vsel %vm2012, %v5088, %v5089
        %v5091 = vsel %vm2012, %v5087, %v5088
        %v5092 = vsel %vm2012, %v5086, %v5087
        %v5093 = vsel %vm2012, %v5085, %v5086
        %v5094 = vsel %vm2012, %v5084, %v5085
        %v5095 = vsel %vm2012, %v5083, %v5084
        %v5096 = vsel %vm2012, %v5082, %v5083
        %v5097 = vsel %vm2012, %v5081, %v5082
        %v5098 = vsel %vm2012, %v5080, %v5081
        %v5099 = vsel %vm2012, %v5079, %v5080
        %v5100 = vsel %vm2012, %v5078, %v5079
        %v5101 = vsel %vm2012, %v5077, %v5078
        %v5102 = vsel %vm2012, %v5076, %v5077
        %v5103 = vsel %vm2012, %v5075, %v5076
        %v5104 = vsel %vm2012, %v5074, %v5075
        %v5105 = vsel %vm2012, %v5073, %v5074
        %v5106 = vsel %vm2012, %v5072, %v5073
        %v5107 = vsel %vm2012, %v5071, %v5072
        %v5108 = vsel %vm2012, %v5070, %v5071
        %v5109 = vsel %vm2012, %v5069, %v5070
        %v5110 = vsel %vm2012, %v5068, %v5069
        %v5111 = vsel %vm2012, %v5067, %v5068
        %v5112 = vsel %vm2012, %v5066, %v5067
        %v5113 = vsel %vm2012, %v5065, %v5066
        %v5114 = vsel %vm2012, %v5064, %v5065
        %v5115 = vsel %vm2012, %v5063, %v5064
        %v5116 = vsel %vm2012, %v5062, %v5063
        %v5117 = vsel %vm2012, %v5061, %v5062
        %v5118 = vsel %vm2012, %v5060, %v5061
        %v5119 = vsel %vm2012, %v5059, %v5060
        %v5120 = vsel %vm2012, %v5058, %v5059
        %v5121 = vsel %vm2012, %v5057, %v5058
        %v5122 = vsel %vm2012, %v5056, %v5057
        %v5123 = vsel %vm2012, %v5055, %v5056
        %v5124 = vsel %vm2012, %v5054, %v5055
        %v5125 = vsel %vm2012, %v5053, %v5054
        %v5126 = vsel %vm2012, %v5052, %v5053
        %v5127 = vsel %vm2012, %v5051, %v5052
        %v5128 = vsel %vm2012, %v5050, %v5051
        %v5129 = vsel %vm2012, %v5049, %v5050
        %v5130 = vsel %vm2012, %v5048, %v5049
        %v5131 = vsel %vm2012, %v5047, %v5048
        %v5132 = vsel %vm2012, %v5046, %v5047
        %v5133 = vsel %vm2012, %v5045, %v5046
        %v5134 = vsel %vm2012, %v5044, %v5045
        %v5135 = vsel %vm2012, %v5043, %v5044
        %v5136 = vsel %vm2012, %v5042, %v5043
        %v5137 = vsel %vm2012, %v5089, %v5042
        %v5138 = vmax.f32 %v4994, %v5137
        %v5139 = vmax.f32 %v4995, %v5136
        %v5140 = vmax.f32 %v4996, %v5135
        %v5141 = vmax.f32 %v4997, %v5134
        %v5142 = vmax.f32 %v4998, %v5133
        %v5143 = vmax.f32 %v4999, %v5132
        %v5144 = vmax.f32 %v5000, %v5131
        %v5145 = vmax.f32 %v5001, %v5130
        %v5146 = vmax.f32 %v5002, %v5129
        %v5147 = vmax.f32 %v5003, %v5128
        %v5148 = vmax.f32 %v5004, %v5127
        %v5149 = vmax.f32 %v5005, %v5126
        %v5150 = vmax.f32 %v5006, %v5125
        %v5151 = vmax.f32 %v5007, %v5124
        %v5152 = vmax.f32 %v5008, %v5123
        %v5153 = vmax.f32 %v5009, %v5122
        %v5154 = vmax.f32 %v5010, %v5121
        %v5155 = vmax.f32 %v5011, %v5120
        %v5156 = vmax.f32 %v5012, %v5119
        %v5157 = vmax.f32 %v5013, %v5118
        %v5158 = vmax.f32 %v5014, %v5117
        %v5159 = vmax.f32 %v5015, %v5116
        %v5160 = vmax.f32 %v5016, %v5115
        %v5161 = vmax.f32 %v5017, %v5114
        %v5162 = vmax.f32 %v5018, %v5113
        %v5163 = vmax.f32 %v5019, %v5112
        %v5164 = vmax.f32 %v5020, %v5111
        %v5165 = vmax.f32 %v5021, %v5110
        %v5166 = vmax.f32 %v5022, %v5109
        %v5167 = vmax.f32 %v5023, %v5108
        %v5168 = vmax.f32 %v5024, %v5107
        %v5169 = vmax.f32 %v5025, %v5106
        %v5170 = vmax.f32 %v5026, %v5105
        %v5171 = vmax.f32 %v5027, %v5104
        %v5172 = vmax.f32 %v5028, %v5103
        %v5173 = vmax.f32 %v5029, %v5102
        %v5174 = vmax.f32 %v5030, %v5101
        %v5175 = vmax.f32 %v5031, %v5100
        %v5176 = vmax.f32 %v5032, %v5099
        %v5177 = vmax.f32 %v5033, %v5098
        %v5178 = vmax.f32 %v5034, %v5097
        %v5179 = vmax.f32 %v5035, %v5096
        %v5180 = vmax.f32 %v5036, %v5095
        %v5181 = vmax.f32 %v5037, %v5094
        %v5182 = vmax.f32 %v5038, %v5093
        %v5183 = vmax.f32 %v5039, %v5092
        %v5184 = vmax.f32 %v5040, %v5091
        %v5185 = vmax.f32 %v5041, %v5090
        %s5186 = scalar_lea.vmem [#allocation9], 384
        %v5187 = vld [vmem:[%s5186] sm:$0xff]
        %v5188 = vld [vmem:[%s5186 + $0x8] sm:$0xff]
        %v5189 = vld [vmem:[%s5186 + $0x10] sm:$0xff]
        %v5190 = vld [vmem:[%s5186 + $0x18] sm:$0xff]
        %v5191 = vld [vmem:[%s5186 + $0x20] sm:$0xff]
        %v5192 = vld [vmem:[%s5186 + $0x28] sm:$0xff]
        %v5193 = vld [vmem:[%s5186 + $0x30] sm:$0xff]
        %v5194 = vld [vmem:[%s5186 + $0x38] sm:$0xff]
        %v5195 = vld [vmem:[%s5186 + $0x40] sm:$0xff]
        %v5196 = vld [vmem:[%s5186 + $0x48] sm:$0xff]
        %v5197 = vld [vmem:[%s5186 + $0x50] sm:$0xff]
        %v5198 = vld [vmem:[%s5186 + $0x58] sm:$0xff]
        %v5199 = vld [vmem:[%s5186 + $0x60] sm:$0xff]
        %v5200 = vld [vmem:[%s5186 + $0x68] sm:$0xff]
        %v5201 = vld [vmem:[%s5186 + $0x70] sm:$0xff]
        %v5202 = vld [vmem:[%s5186 + $0x78] sm:$0xff]
        %5203 = vmatprep.subr.mxu0 0.0
        %5204 = vmatpush1.msra.mxu0 %v5187
        %5205 = vmatprep.subr.mxu0 0.0
        %5206 = vmatpush1.msra.mxu0 %v5188
        %5207 = vmatprep.subr.mxu0 0.0
        %5208 = vmatpush1.msra.mxu0 %v5189
        %5209 = vmatprep.subr.mxu0 0.0
        %5210 = vmatpush1.msra.mxu0 %v5190
        %5211 = vmatprep.subr.mxu0 0.0
        %5212 = vmatpush1.msra.mxu0 %v5191
        %5213 = vmatprep.subr.mxu0 0.0
        %5214 = vmatpush1.msra.mxu0 %v5192
        %5215 = vmatprep.subr.mxu0 0.0
        %5216 = vmatpush1.msra.mxu0 %v5193
        %5217 = vmatprep.subr.mxu0 0.0
        %5218 = vmatpush1.msra.mxu0 %v5194
        %5219 = vmatprep.subr.mxu0 0.0
        %5220 = vmatpush1.msra.mxu0 %v5195
        %5221 = vmatprep.subr.mxu0 0.0
        %5222 = vmatpush1.msra.mxu0 %v5196
        %5223 = vmatprep.subr.mxu0 0.0
        %5224 = vmatpush1.msra.mxu0 %v5197
        %5225 = vmatprep.subr.mxu0 0.0
        %5226 = vmatpush1.msra.mxu0 %v5198
        %5227 = vmatprep.subr.mxu0 0.0
        %5228 = vmatpush1.msra.mxu0 %v5199
        %5229 = vmatprep.subr.mxu0 0.0
        %5230 = vmatpush1.msra.mxu0 %v5200
        %5231 = vmatprep.subr.mxu0 0.0
        %5232 = vmatpush1.msra.mxu0 %v5201
        %5233 = vmatprep.subr.mxu0 0.0
        %5234 = vmatpush1.msra.mxu0 %v5202
        %5235 = vmatprep.subr.mxu0 0.0
        %5236 = vmatpush1.msra.mxu0 0.0
        %5237 = vmatprep.subr.mxu0 0.0
        %5238 = vmatpush1.msra.mxu0 0.0
        %5239 = vmatprep.subr.mxu0 0.0
        %5240 = vmatpush1.msra.mxu0 0.0
        %5241 = vmatprep.subr.mxu0 0.0
        %5242 = vmatpush1.msra.mxu0 0.0
        %5243 = vmatprep.subr.mxu0 0.0
        %5244 = vmatpush1.msra.mxu0 0.0
        %5245 = vmatprep.subr.mxu0 0.0
        %5246 = vmatpush1.msra.mxu0 0.0
        %5247 = vmatprep.subr.mxu0 0.0
        %5248 = vmatpush1.msra.mxu0 0.0
        %5249 = vmatprep.subr.mxu0 0.0
        %5250 = vmatpush1.msra.mxu0 0.0
        %5251 = vmatprep.subr.mxu0 0.0
        %5252 = vmatpush1.msra.mxu0 0.0
        %5253 = vmatprep.subr.mxu0 0.0
        %5254 = vmatpush1.msra.mxu0 0.0
        %5255 = vmatprep.subr.mxu0 0.0
        %5256 = vmatpush1.msra.mxu0 0.0
        %5257 = vmatprep.subr.mxu0 0.0
        %5258 = vmatpush1.msra.mxu0 0.0
        %5259 = vmatprep.subr.mxu0 0.0
        %5260 = vmatpush1.msra.mxu0 0.0
        %5261 = vmatprep.subr.mxu0 0.0
        %5262 = vmatpush1.msra.mxu0 0.0
        %5263 = vmatprep.subr.mxu0 0.0
        %5264 = vmatpush1.msra.mxu0 0.0
        %5265 = vmatprep.subr.mxu0 0.0
        %5266 = vmatpush1.msra.mxu0 0.0
        %5267 = vmatprep.mubr.f32.mxu0 0.0
        %5268 = vmatmul.mubr.f32.gmra.mrb[0].mxu0 %v5138
        %v5269 = vpop.f32.mrb[0].mxu0
        %v5270 = vadd.f32 0.0, %v5269
        %v5271 = vpop.f32.mrb[0].mxu0
        %5272 = vmatprep.mubr.f32.mxu0 0.0
        %5273 = vmatmul.mubr.f32.gmra.mrb[0].mxu0 %v5139
        %v5274 = vpop.f32.mrb[0].mxu0
        %v5275 = vadd.f32 0.0, %v5274
        %v5276 = vpop.f32.mrb[0].mxu0
        %5277 = vmatprep.mubr.f32.mxu0 0.0
        %5278 = vmatmul.mubr.f32.gmra.mrb[0].mxu0 %v5140
        %v5279 = vpop.f32.mrb[0].mxu0
        %v5280 = vadd.f32 0.0, %v5279
        %v5281 = vpop.f32.mrb[0].mxu0
        %5282 = vmatprep.mubr.f32.mxu0 0.0
        %5283 = vmatmul.mubr.f32.gmra.mrb[0].mxu0 %v5141
        %v5284 = vpop.f32.mrb[0].mxu0
        %v5285 = vadd.f32 0.0, %v5284
        %v5286 = vpop.f32.mrb[0].mxu0
        %5287 = vmatprep.mubr.f32.mxu0 0.0
        %5288 = vmatmul.mubr.f32.gmra.mrb[0].mxu0 %v5142
        %v5289 = vpop.f32.mrb[0].mxu0
        %v5290 = vadd.f32 0.0, %v5289
        %v5291 = vpop.f32.mrb[0].mxu0
        %5292 = vmatprep.mubr.f32.mxu0 0.0
        %5293 = vmatmul.mubr.f32.gmra.mrb[0].mxu0 %v5143
        %v5294 = vpop.f32.mrb[0].mxu0
        %v5295 = vadd.f32 0.0, %v5294
        %v5296 = vpop.f32.mrb[0].mxu0
        %5297 = vmatprep.mubr.f32.mxu0 0.0
        %5298 = vmatmul.mubr.f32.gmra.mrb[0].mxu0 %v5144
        %v5299 = vpop.f32.mrb[0].mxu0
        %v5300 = vadd.f32 0.0, %v5299
        %v5301 = vpop.f32.mrb[0].mxu0
        %5302 = vmatprep.mubr.f32.mxu0 0.0
        %5303 = vmatmul.mubr.f32.gmra.mrb[0].mxu0 %v5145
        %v5304 = vpop.f32.mrb[0].mxu0
        %v5305 = vadd.f32 0.0, %v5304
        %v5306 = vpop.f32.mrb[0].mxu0
        %5307 = vmatprep.mubr.f32.mxu0 0.0
        %5308 = vmatmul.mubr.f32.gmra.mrb[0].mxu0 %v5146
        %v5309 = vpop.f32.mrb[0].mxu0
        %v5310 = vadd.f32 0.0, %v5309
        %v5311 = vpop.f32.mrb[0].mxu0
        %5312 = vmatprep.mubr.f32.mxu0 0.0
        %5313 = vmatmul.mubr.f32.gmra.mrb[0].mxu0 %v5147
        %v5314 = vpop.f32.mrb[0].mxu0
        %v5315 = vadd.f32 0.0, %v5314
        %v5316 = vpop.f32.mrb[0].mxu0
        %5317 = vmatprep.mubr.f32.mxu0 0.0
        %5318 = vmatmul.mubr.f32.gmra.mrb[0].mxu0 %v5148
        %v5319 = vpop.f32.mrb[0].mxu0
        %v5320 = vadd.f32 0.0, %v5319
        %v5321 = vpop.f32.mrb[0].mxu0
        %5322 = vmatprep.mubr.f32.mxu0 0.0
        %5323 = vmatmul.mubr.f32.gmra.mrb[0].mxu0 %v5149
        %v5324 = vpop.f32.mrb[0].mxu0
        %v5325 = vadd.f32 0.0, %v5324
        %v5326 = vpop.f32.mrb[0].mxu0
        %5327 = vmatprep.mubr.f32.mxu0 0.0
        %5328 = vmatmul.mubr.f32.gmra.mrb[0].mxu0 %v5150
        %v5329 = vpop.f32.mrb[0].mxu0
        %v5330 = vadd.f32 0.0, %v5329
        %v5331 = vpop.f32.mrb[0].mxu0
        %5332 = vmatprep.mubr.f32.mxu0 0.0
        %5333 = vmatmul.mubr.f32.gmra.mrb[0].mxu0 %v5151
        %v5334 = vpop.f32.mrb[0].mxu0
        %v5335 = vadd.f32 0.0, %v5334
        %v5336 = vpop.f32.mrb[0].mxu0
        %5337 = vmatprep.mubr.f32.mxu0 0.0
        %5338 = vmatmul.mubr.f32.gmra.mrb[0].mxu0 %v5152
        %v5339 = vpop.f32.mrb[0].mxu0
        %v5340 = vadd.f32 0.0, %v5339
        %v5341 = vpop.f32.mrb[0].mxu0
        %5342 = vmatprep.mubr.f32.mxu0 0.0
        %5343 = vmatmul.mubr.f32.gmra.mrb[0].mxu0 %v5153
        %v5344 = vpop.f32.mrb[0].mxu0
        %v5345 = vadd.f32 0.0, %v5344
        %v5346 = vpop.f32.mrb[0].mxu0
        %5347 = vmatprep.mubr.f32.mxu0 0.0
        %5348 = vmatmul.mubr.f32.gmra.mrb[0].mxu0 %v5154
        %v5349 = vpop.f32.mrb[0].mxu0
        %v5350 = vadd.f32 0.0, %v5349
        %v5351 = vpop.f32.mrb[0].mxu0
        %5352 = vmatprep.mubr.f32.mxu0 0.0
        %5353 = vmatmul.mubr.f32.gmra.mrb[0].mxu0 %v5155
        %v5354 = vpop.f32.mrb[0].mxu0
        %v5355 = vadd.f32 0.0, %v5354
        %v5356 = vpop.f32.mrb[0].mxu0
        %5357 = vmatprep.mubr.f32.mxu0 0.0
        %5358 = vmatmul.mubr.f32.gmra.mrb[0].mxu0 %v5156
        %v5359 = vpop.f32.mrb[0].mxu0
        %v5360 = vadd.f32 0.0, %v5359
        %v5361 = vpop.f32.mrb[0].mxu0
        %5362 = vmatprep.mubr.f32.mxu0 0.0
        %5363 = vmatmul.mubr.f32.gmra.mrb[0].mxu0 %v5157
        %v5364 = vpop.f32.mrb[0].mxu0
        %v5365 = vadd.f32 0.0, %v5364
        %v5366 = vpop.f32.mrb[0].mxu0
        %5367 = vmatprep.mubr.f32.mxu0 0.0
        %5368 = vmatmul.mubr.f32.gmra.mrb[0].mxu0 %v5158
        %v5369 = vpop.f32.mrb[0].mxu0
        %v5370 = vadd.f32 0.0, %v5369
        %v5371 = vpop.f32.mrb[0].mxu0
        %5372 = vmatprep.mubr.f32.mxu0 0.0
        %5373 = vmatmul.mubr.f32.gmra.mrb[0].mxu0 %v5159
        %v5374 = vpop.f32.mrb[0].mxu0
        %v5375 = vadd.f32 0.0, %v5374
        %v5376 = vpop.f32.mrb[0].mxu0
        %5377 = vmatprep.mubr.f32.mxu0 0.0
        %5378 = vmatmul.mubr.f32.gmra.mrb[0].mxu0 %v5160
        %v5379 = vpop.f32.mrb[0].mxu0
        %v5380 = vadd.f32 0.0, %v5379
        %v5381 = vpop.f32.mrb[0].mxu0
        %5382 = vmatprep.mubr.f32.mxu0 0.0
        %5383 = vmatmul.mubr.f32.gmra.mrb[0].mxu0 %v5161
        %v5384 = vpop.f32.mrb[0].mxu0
        %v5385 = vadd.f32 0.0, %v5384
        %v5386 = vpop.f32.mrb[0].mxu0
        %5387 = vmatprep.mubr.f32.mxu0 0.0
        %5388 = vmatmul.mubr.f32.gmra.mrb[0].mxu0 %v5162
        %v5389 = vpop.f32.mrb[0].mxu0
        %v5390 = vadd.f32 0.0, %v5389
        %v5391 = vpop.f32.mrb[0].mxu0
        %5392 = vmatprep.mubr.f32.mxu0 0.0
        %5393 = vmatmul.mubr.f32.gmra.mrb[0].mxu0 %v5163
        %v5394 = vpop.f32.mrb[0].mxu0
        %v5395 = vadd.f32 0.0, %v5394
        %v5396 = vpop.f32.mrb[0].mxu0
        %5397 = vmatprep.mubr.f32.mxu0 0.0
        %5398 = vmatmul.mubr.f32.gmra.mrb[0].mxu0 %v5164
        %v5399 = vpop.f32.mrb[0].mxu0
        %v5400 = vadd.f32 0.0, %v5399
        %v5401 = vpop.f32.mrb[0].mxu0
        %5402 = vmatprep.mubr.f32.mxu0 0.0
        %5403 = vmatmul.mubr.f32.gmra.mrb[0].mxu0 %v5165
        %v5404 = vpop.f32.mrb[0].mxu0
        %v5405 = vadd.f32 0.0, %v5404
        %v5406 = vpop.f32.mrb[0].mxu0
        %5407 = vmatprep.mubr.f32.mxu0 0.0
        %5408 = vmatmul.mubr.f32.gmra.mrb[0].mxu0 %v5166
        %v5409 = vpop.f32.mrb[0].mxu0
        %v5410 = vadd.f32 0.0, %v5409
        %v5411 = vpop.f32.mrb[0].mxu0
        %5412 = vmatprep.mubr.f32.mxu0 0.0
        %5413 = vmatmul.mubr.f32.gmra.mrb[0].mxu0 %v5167
        %v5414 = vpop.f32.mrb[0].mxu0
        %v5415 = vadd.f32 0.0, %v5414
        %v5416 = vpop.f32.mrb[0].mxu0
        %5417 = vmatprep.mubr.f32.mxu0 0.0
        %5418 = vmatmul.mubr.f32.gmra.mrb[0].mxu0 %v5168
        %v5419 = vpop.f32.mrb[0].mxu0
        %v5420 = vadd.f32 0.0, %v5419
        %v5421 = vpop.f32.mrb[0].mxu0
        %5422 = vmatprep.mubr.f32.mxu0 0.0
        %5423 = vmatmul.mubr.f32.gmra.mrb[0].mxu0 %v5169
        %v5424 = vpop.f32.mrb[0].mxu0
        %v5425 = vadd.f32 0.0, %v5424
        %v5426 = vpop.f32.mrb[0].mxu0
        %5427 = vmatprep.mubr.f32.mxu0 0.0
        %5428 = vmatmul.mubr.f32.gmra.mrb[0].mxu0 %v5170
        %v5429 = vpop.f32.mrb[0].mxu0
        %v5430 = vadd.f32 0.0, %v5429
        %v5431 = vpop.f32.mrb[0].mxu0
        %5432 = vmatprep.mubr.f32.mxu0 0.0
        %5433 = vmatmul.mubr.f32.gmra.mrb[0].mxu0 %v5171
        %v5434 = vpop.f32.mrb[0].mxu0
        %v5435 = vadd.f32 0.0, %v5434
        %v5436 = vpop.f32.mrb[0].mxu0
        %5437 = vmatprep.mubr.f32.mxu0 0.0
        %5438 = vmatmul.mubr.f32.gmra.mrb[0].mxu0 %v5172
        %v5439 = vpop.f32.mrb[0].mxu0
        %v5440 = vadd.f32 0.0, %v5439
        %v5441 = vpop.f32.mrb[0].mxu0
        %5442 = vmatprep.mubr.f32.mxu0 0.0
        %5443 = vmatmul.mubr.f32.gmra.mrb[0].mxu0 %v5173
        %v5444 = vpop.f32.mrb[0].mxu0
        %v5445 = vadd.f32 0.0, %v5444
        %v5446 = vpop.f32.mrb[0].mxu0
        %5447 = vmatprep.mubr.f32.mxu0 0.0
        %5448 = vmatmul.mubr.f32.gmra.mrb[0].mxu0 %v5174
        %v5449 = vpop.f32.mrb[0].mxu0
        %v5450 = vadd.f32 0.0, %v5449
        %v5451 = vpop.f32.mrb[0].mxu0
        %5452 = vmatprep.mubr.f32.mxu0 0.0
        %5453 = vmatmul.mubr.f32.gmra.mrb[0].mxu0 %v5175
        %v5454 = vpop.f32.mrb[0].mxu0
        %v5455 = vadd.f32 0.0, %v5454
        %v5456 = vpop.f32.mrb[0].mxu0
        %5457 = vmatprep.mubr.f32.mxu0 0.0
        %5458 = vmatmul.mubr.f32.gmra.mrb[0].mxu0 %v5176
        %v5459 = vpop.f32.mrb[0].mxu0
        %v5460 = vadd.f32 0.0, %v5459
        %v5461 = vpop.f32.mrb[0].mxu0
        %5462 = vmatprep.mubr.f32.mxu0 0.0
        %5463 = vmatmul.mubr.f32.gmra.mrb[0].mxu0 %v5177
        %v5464 = vpop.f32.mrb[0].mxu0
        %v5465 = vadd.f32 0.0, %v5464
        %v5466 = vpop.f32.mrb[0].mxu0
        %5467 = vmatprep.mubr.f32.mxu0 0.0
        %5468 = vmatmul.mubr.f32.gmra.mrb[0].mxu0 %v5178
        %v5469 = vpop.f32.mrb[0].mxu0
        %v5470 = vadd.f32 0.0, %v5469
        %v5471 = vpop.f32.mrb[0].mxu0
        %5472 = vmatprep.mubr.f32.mxu0 0.0
        %5473 = vmatmul.mubr.f32.gmra.mrb[0].mxu0 %v5179
        %v5474 = vpop.f32.mrb[0].mxu0
        %v5475 = vadd.f32 0.0, %v5474
        %v5476 = vpop.f32.mrb[0].mxu0
        %5477 = vmatprep.mubr.f32.mxu0 0.0
        %5478 = vmatmul.mubr.f32.gmra.mrb[0].mxu0 %v5180
        %v5479 = vpop.f32.mrb[0].mxu0
        %v5480 = vadd.f32 0.0, %v5479
        %v5481 = vpop.f32.mrb[0].mxu0
        %5482 = vmatprep.mubr.f32.mxu0 0.0
        %5483 = vmatmul.mubr.f32.gmra.mrb[0].mxu0 %v5181
        %v5484 = vpop.f32.mrb[0].mxu0
        %v5485 = vadd.f32 0.0, %v5484
        %v5486 = vpop.f32.mrb[0].mxu0
        %5487 = vmatprep.mubr.f32.mxu0 0.0
        %5488 = vmatmul.mubr.f32.gmra.mrb[0].mxu0 %v5182
        %v5489 = vpop.f32.mrb[0].mxu0
        %v5490 = vadd.f32 0.0, %v5489
        %v5491 = vpop.f32.mrb[0].mxu0
        %5492 = vmatprep.mubr.f32.mxu0 0.0
        %5493 = vmatmul.mubr.f32.gmra.mrb[0].mxu0 %v5183
        %v5494 = vpop.f32.mrb[0].mxu0
        %v5495 = vadd.f32 0.0, %v5494
        %v5496 = vpop.f32.mrb[0].mxu0
        %5497 = vmatprep.mubr.f32.mxu0 0.0
        %5498 = vmatmul.mubr.f32.gmra.mrb[0].mxu0 %v5184
        %v5499 = vpop.f32.mrb[0].mxu0
        %v5500 = vadd.f32 0.0, %v5499
        %v5501 = vpop.f32.mrb[0].mxu0
        %5502 = vmatprep.mubr.f32.mxu0 0.0
        %5503 = vmatmul.mubr.f32.gmra.mrb[0].mxu0 %v5185
        %v5504 = vpop.f32.mrb[0].mxu0
        %v5505 = vadd.f32 0.0, %v5504
        %v5506 = vpop.f32.mrb[0].mxu0
        %5507 = vdwg.mxu0
        %v5508 = vadd.f32 %v4098, %v5270
        %v5509 = vadd.f32 %v4099, %v5275
        %v5510 = vadd.f32 %v4100, %v5280
        %v5511 = vadd.f32 %v4101, %v5285
        %v5512 = vadd.f32 %v4102, %v5290
        %v5513 = vadd.f32 %v4103, %v5295
        %v5514 = vadd.f32 %v4104, %v5300
        %v5515 = vadd.f32 %v4105, %v5305
        %v5516 = vadd.f32 %v4106, %v5310
        %v5517 = vadd.f32 %v4107, %v5315
        %v5518 = vadd.f32 %v4108, %v5320
        %v5519 = vadd.f32 %v4109, %v5325
        %v5520 = vadd.f32 %v4110, %v5330
        %v5521 = vadd.f32 %v4111, %v5335
        %v5522 = vadd.f32 %v4112, %v5340
        %v5523 = vadd.f32 %v4113, %v5345
        %v5524 = vadd.f32 %v4114, %v5350
        %v5525 = vadd.f32 %v4115, %v5355
        %v5526 = vadd.f32 %v4116, %v5360
        %v5527 = vadd.f32 %v4117, %v5365
        %v5528 = vadd.f32 %v4118, %v5370
        %v5529 = vadd.f32 %v4119, %v5375
        %v5530 = vadd.f32 %v4120, %v5380
        %v5531 = vadd.f32 %v4121, %v5385
        %v5532 = vadd.f32 %v4122, %v5390
        %v5533 = vadd.f32 %v4123, %v5395
        %v5534 = vadd.f32 %v4124, %v5400
        %v5535 = vadd.f32 %v4125, %v5405
        %v5536 = vadd.f32 %v4126, %v5410
        %v5537 = vadd.f32 %v4127, %v5415
        %v5538 = vadd.f32 %v4128, %v5420
        %v5539 = vadd.f32 %v4129, %v5425
        %v5540 = vadd.f32 %v4130, %v5430
        %v5541 = vadd.f32 %v4131, %v5435
        %v5542 = vadd.f32 %v4132, %v5440
        %v5543 = vadd.f32 %v4133, %v5445
        %v5544 = vadd.f32 %v4134, %v5450
        %v5545 = vadd.f32 %v4135, %v5455
        %v5546 = vadd.f32 %v4136, %v5460
        %v5547 = vadd.f32 %v4137, %v5465
        %v5548 = vadd.f32 %v4138, %v5470
        %v5549 = vadd.f32 %v4139, %v5475
        %v5550 = vadd.f32 %v4140, %v5480
        %v5551 = vadd.f32 %v4141, %v5485
        %v5552 = vadd.f32 %v4142, %v5490
        %v5553 = vadd.f32 %v4143, %v5495
        %v5554 = vadd.f32 %v4144, %v5500
        %v5555 = vadd.f32 %v4145, %v5505
        %v5556 = vld [vmem:[#allocation11] sm:$0x1]
        %v5558 = vlaneseq
        %v5559 = vshrl.u32 %v5558, 7
        %v5560 = vsub.s32 0, %v5559
        %v5561 = vrot.slane %v5556, %v5560
        %v5563 = vadd.f32 %v5508, %v5561
        %v5564 = vadd.f32 %v5509, %v5561
        %v5565 = vadd.f32 %v5510, %v5561
        %v5566 = vadd.f32 %v5511, %v5561
        %v5567 = vadd.f32 %v5512, %v5561
        %v5568 = vadd.f32 %v5513, %v5561
        %v5569 = vadd.f32 %v5514, %v5561
        %v5570 = vadd.f32 %v5515, %v5561
        %v5571 = vadd.f32 %v5516, %v5561
        %v5572 = vadd.f32 %v5517, %v5561
        %v5573 = vadd.f32 %v5518, %v5561
        %v5574 = vadd.f32 %v5519, %v5561
        %v5575 = vadd.f32 %v5520, %v5561
        %v5576 = vadd.f32 %v5521, %v5561
        %v5577 = vadd.f32 %v5522, %v5561
        %v5578 = vadd.f32 %v5523, %v5561
        %v5579 = vadd.f32 %v5524, %v5561
        %v5580 = vadd.f32 %v5525, %v5561
        %v5581 = vadd.f32 %v5526, %v5561
        %v5582 = vadd.f32 %v5527, %v5561
        %v5583 = vadd.f32 %v5528, %v5561
        %v5584 = vadd.f32 %v5529, %v5561
        %v5585 = vadd.f32 %v5530, %v5561
        %v5586 = vadd.f32 %v5531, %v5561
        %v5587 = vadd.f32 %v5532, %v5561
        %v5588 = vadd.f32 %v5533, %v5561
        %v5589 = vadd.f32 %v5534, %v5561
        %v5590 = vadd.f32 %v5535, %v5561
        %v5591 = vadd.f32 %v5536, %v5561
        %v5592 = vadd.f32 %v5537, %v5561
        %v5593 = vadd.f32 %v5538, %v5561
        %v5594 = vadd.f32 %v5539, %v5561
        %v5595 = vadd.f32 %v5540, %v5561
        %v5596 = vadd.f32 %v5541, %v5561
        %v5597 = vadd.f32 %v5542, %v5561
        %v5598 = vadd.f32 %v5543, %v5561
        %v5599 = vadd.f32 %v5544, %v5561
        %v5600 = vadd.f32 %v5545, %v5561
        %v5601 = vadd.f32 %v5546, %v5561
        %v5602 = vadd.f32 %v5547, %v5561
        %v5603 = vadd.f32 %v5548, %v5561
        %v5604 = vadd.f32 %v5549, %v5561
        %v5605 = vadd.f32 %v5550, %v5561
        %v5606 = vadd.f32 %v5551, %v5561
        %v5607 = vadd.f32 %v5552, %v5561
        %v5608 = vadd.f32 %v5553, %v5561
        %v5609 = vadd.f32 %v5554, %v5561
        %v5610 = vadd.f32 %v5555, %v5561
        %v5611 = vxor.u32 %v5563, 2147483648
        %v5612 = vxor.u32 %v5564, 2147483648
        %v5613 = vxor.u32 %v5565, 2147483648
        %v5614 = vxor.u32 %v5566, 2147483648
        %v5615 = vxor.u32 %v5567, 2147483648
        %v5616 = vxor.u32 %v5568, 2147483648
        %v5617 = vxor.u32 %v5569, 2147483648
        %v5618 = vxor.u32 %v5570, 2147483648
        %v5619 = vxor.u32 %v5571, 2147483648
        %v5620 = vxor.u32 %v5572, 2147483648
        %v5621 = vxor.u32 %v5573, 2147483648
        %v5622 = vxor.u32 %v5574, 2147483648
        %v5623 = vxor.u32 %v5575, 2147483648
        %v5624 = vxor.u32 %v5576, 2147483648
        %v5625 = vxor.u32 %v5577, 2147483648
        %v5626 = vxor.u32 %v5578, 2147483648
        %v5627 = vxor.u32 %v5579, 2147483648
        %v5628 = vxor.u32 %v5580, 2147483648
        %v5629 = vxor.u32 %v5581, 2147483648
        %v5630 = vxor.u32 %v5582, 2147483648
        %v5631 = vxor.u32 %v5583, 2147483648
        %v5632 = vxor.u32 %v5584, 2147483648
        %v5633 = vxor.u32 %v5585, 2147483648
        %v5634 = vxor.u32 %v5586, 2147483648
        %v5635 = vxor.u32 %v5587, 2147483648
        %v5636 = vxor.u32 %v5588, 2147483648
        %v5637 = vxor.u32 %v5589, 2147483648
        %v5638 = vxor.u32 %v5590, 2147483648
        %v5639 = vxor.u32 %v5591, 2147483648
        %v5640 = vxor.u32 %v5592, 2147483648
        %v5641 = vxor.u32 %v5593, 2147483648
        %v5642 = vxor.u32 %v5594, 2147483648
        %v5643 = vxor.u32 %v5595, 2147483648
        %v5644 = vxor.u32 %v5596, 2147483648
        %v5645 = vxor.u32 %v5597, 2147483648
        %v5646 = vxor.u32 %v5598, 2147483648
        %v5647 = vxor.u32 %v5599, 2147483648
        %v5648 = vxor.u32 %v5600, 2147483648
        %v5649 = vxor.u32 %v5601, 2147483648
        %v5650 = vxor.u32 %v5602, 2147483648
        %v5651 = vxor.u32 %v5603, 2147483648
        %v5652 = vxor.u32 %v5604, 2147483648
        %v5653 = vxor.u32 %v5605, 2147483648
        %v5654 = vxor.u32 %v5606, 2147483648
        %v5655 = vxor.u32 %v5607, 2147483648
        %v5656 = vxor.u32 %v5608, 2147483648
        %v5657 = vxor.u32 %v5609, 2147483648
        %v5658 = vxor.u32 %v5610, 2147483648
        %v5659 = vmul.f32 %v5611, 1.442695
        %v5660 = vpow.pop %v5659
        %v5661 = vmul.f32 %v5612, 1.442695
        %v5662 = vpow.pop %v5661
        %v5663 = vmul.f32 %v5613, 1.442695
        %v5664 = vpow.pop %v5663
        %v5665 = vmul.f32 %v5614, 1.442695
        %v5666 = vpow.pop %v5665
        %v5667 = vmul.f32 %v5615, 1.442695
        %v5668 = vpow.pop %v5667
        %v5669 = vmul.f32 %v5616, 1.442695
        %v5670 = vpow.pop %v5669
        %v5671 = vmul.f32 %v5617, 1.442695
        %v5672 = vpow.pop %v5671
        %v5673 = vmul.f32 %v5618, 1.442695
        %v5674 = vpow.pop %v5673
        %v5675 = vmul.f32 %v5619, 1.442695
        %v5676 = vpow.pop %v5675
        %v5677 = vmul.f32 %v5620, 1.442695
        %v5678 = vpow.pop %v5677
        %v5679 = vmul.f32 %v5621, 1.442695
        %v5680 = vpow.pop %v5679
        %v5681 = vmul.f32 %v5622, 1.442695
        %v5682 = vpow.pop %v5681
        %v5683 = vmul.f32 %v5623, 1.442695
        %v5684 = vpow.pop %v5683
        %v5685 = vmul.f32 %v5624, 1.442695
        %v5686 = vpow.pop %v5685
        %v5687 = vmul.f32 %v5625, 1.442695
        %v5688 = vpow.pop %v5687
        %v5689 = vmul.f32 %v5626, 1.442695
        %v5690 = vpow.pop %v5689
        %v5691 = vmul.f32 %v5627, 1.442695
        %v5692 = vpow.pop %v5691
        %v5693 = vmul.f32 %v5628, 1.442695
        %v5694 = vpow.pop %v5693
        %v5695 = vmul.f32 %v5629, 1.442695
        %v5696 = vpow.pop %v5695
        %v5697 = vmul.f32 %v5630, 1.442695
        %v5698 = vpow.pop %v5697
        %v5699 = vmul.f32 %v5631, 1.442695
        %v5700 = vpow.pop %v5699
        %v5701 = vmul.f32 %v5632, 1.442695
        %v5702 = vpow.pop %v5701
        %v5703 = vmul.f32 %v5633, 1.442695
        %v5704 = vpow.pop %v5703
        %v5705 = vmul.f32 %v5634, 1.442695
        %v5706 = vpow.pop %v5705
        %v5707 = vmul.f32 %v5635, 1.442695
        %v5708 = vpow.pop %v5707
        %v5709 = vmul.f32 %v5636, 1.442695
        %v5710 = vpow.pop %v5709
        %v5711 = vmul.f32 %v5637, 1.442695
        %v5712 = vpow.pop %v5711
        %v5713 = vmul.f32 %v5638, 1.442695
        %v5714 = vpow.pop %v5713
        %v5715 = vmul.f32 %v5639, 1.442695
        %v5716 = vpow.pop %v5715
        %v5717 = vmul.f32 %v5640, 1.442695
        %v5718 = vpow.pop %v5717
        %v5719 = vmul.f32 %v5641, 1.442695
        %v5720 = vpow.pop %v5719
        %v5721 = vmul.f32 %v5642, 1.442695
        %v5722 = vpow.pop %v5721
        %v5723 = vmul.f32 %v5643, 1.442695
        %v5724 = vpow.pop %v5723
        %v5725 = vmul.f32 %v5644, 1.442695
        %v5726 = vpow.pop %v5725
        %v5727 = vmul.f32 %v5645, 1.442695
        %v5728 = vpow.pop %v5727
        %v5729 = vmul.f32 %v5646, 1.442695
        %v5730 = vpow.pop %v5729
        %v5731 = vmul.f32 %v5647, 1.442695
        %v5732 = vpow.pop %v5731
        %v5733 = vmul.f32 %v5648, 1.442695
        %v5734 = vpow.pop %v5733
        %v5735 = vmul.f32 %v5649, 1.442695
        %v5736 = vpow.pop %v5735
        %v5737 = vmul.f32 %v5650, 1.442695
        %v5738 = vpow.pop %v5737
        %v5739 = vmul.f32 %v5651, 1.442695
        %v5740 = vpow.pop %v5739
        %v5741 = vmul.f32 %v5652, 1.442695
        %v5742 = vpow.pop %v5741
        %v5743 = vmul.f32 %v5653, 1.442695
        %v5744 = vpow.pop %v5743
        %v5745 = vmul.f32 %v5654, 1.442695
        %v5746 = vpow.pop %v5745
        %v5747 = vmul.f32 %v5655, 1.442695
        %v5748 = vpow.pop %v5747
        %v5749 = vmul.f32 %v5656, 1.442695
        %v5750 = vpow.pop %v5749
        %v5751 = vmul.f32 %v5657, 1.442695
        %v5752 = vpow.pop %v5751
        %v5753 = vmul.f32 %v5658, 1.442695
        %v5754 = vpow.pop %v5753
        %v5755 = vadd.f32 %v5660, 1.0
        %v5756 = vadd.f32 %v5662, 1.0
        %v5757 = vadd.f32 %v5664, 1.0
        %v5758 = vadd.f32 %v5666, 1.0
        %v5759 = vadd.f32 %v5668, 1.0
        %v5760 = vadd.f32 %v5670, 1.0
        %v5761 = vadd.f32 %v5672, 1.0
        %v5762 = vadd.f32 %v5674, 1.0
        %v5763 = vadd.f32 %v5676, 1.0
        %v5764 = vadd.f32 %v5678, 1.0
        %v5765 = vadd.f32 %v5680, 1.0
        %v5766 = vadd.f32 %v5682, 1.0
        %v5767 = vadd.f32 %v5684, 1.0
        %v5768 = vadd.f32 %v5686, 1.0
        %v5769 = vadd.f32 %v5688, 1.0
        %v5770 = vadd.f32 %v5690, 1.0
        %v5771 = vadd.f32 %v5692, 1.0
        %v5772 = vadd.f32 %v5694, 1.0
        %v5773 = vadd.f32 %v5696, 1.0
        %v5774 = vadd.f32 %v5698, 1.0
        %v5775 = vadd.f32 %v5700, 1.0
        %v5776 = vadd.f32 %v5702, 1.0
        %v5777 = vadd.f32 %v5704, 1.0
        %v5778 = vadd.f32 %v5706, 1.0
        %v5779 = vadd.f32 %v5708, 1.0
        %v5780 = vadd.f32 %v5710, 1.0
        %v5781 = vadd.f32 %v5712, 1.0
        %v5782 = vadd.f32 %v5714, 1.0
        %v5783 = vadd.f32 %v5716, 1.0
        %v5784 = vadd.f32 %v5718, 1.0
        %v5785 = vadd.f32 %v5720, 1.0
        %v5786 = vadd.f32 %v5722, 1.0
        %v5787 = vadd.f32 %v5724, 1.0
        %v5788 = vadd.f32 %v5726, 1.0
        %v5789 = vadd.f32 %v5728, 1.0
        %v5790 = vadd.f32 %v5730, 1.0
        %v5791 = vadd.f32 %v5732, 1.0
        %v5792 = vadd.f32 %v5734, 1.0
        %v5793 = vadd.f32 %v5736, 1.0
        %v5794 = vadd.f32 %v5738, 1.0
        %v5795 = vadd.f32 %v5740, 1.0
        %v5796 = vadd.f32 %v5742, 1.0
        %v5797 = vadd.f32 %v5744, 1.0
        %v5798 = vadd.f32 %v5746, 1.0
        %v5799 = vadd.f32 %v5748, 1.0
        %v5800 = vadd.f32 %v5750, 1.0
        %v5801 = vadd.f32 %v5752, 1.0
        %v5802 = vadd.f32 %v5754, 1.0
        %v5803 = vrcp.pop %v5755
        %v5804 = vmul.f32 1.0, %v5803
        %v5805 = vrcp.pop %v5756
        %v5806 = vmul.f32 1.0, %v5805
        %v5807 = vrcp.pop %v5757
        %v5808 = vmul.f32 1.0, %v5807
        %v5809 = vrcp.pop %v5758
        %v5810 = vmul.f32 1.0, %v5809
        %v5811 = vrcp.pop %v5759
        %v5812 = vmul.f32 1.0, %v5811
        %v5813 = vrcp.pop %v5760
        %v5814 = vmul.f32 1.0, %v5813
        %v5815 = vrcp.pop %v5761
        %v5816 = vmul.f32 1.0, %v5815
        %v5817 = vrcp.pop %v5762
        %v5818 = vmul.f32 1.0, %v5817
        %v5819 = vrcp.pop %v5763
        %v5820 = vmul.f32 1.0, %v5819
        %v5821 = vrcp.pop %v5764
        %v5822 = vmul.f32 1.0, %v5821
        %v5823 = vrcp.pop %v5765
        %v5824 = vmul.f32 1.0, %v5823
        %v5825 = vrcp.pop %v5766
        %v5826 = vmul.f32 1.0, %v5825
        %v5827 = vrcp.pop %v5767
        %v5828 = vmul.f32 1.0, %v5827
        %v5829 = vrcp.pop %v5768
        %v5830 = vmul.f32 1.0, %v5829
        %v5831 = vrcp.pop %v5769
        %v5832 = vmul.f32 1.0, %v5831
        %v5833 = vrcp.pop %v5770
        %v5834 = vmul.f32 1.0, %v5833
        %v5835 = vrcp.pop %v5771
        %v5836 = vmul.f32 1.0, %v5835
        %v5837 = vrcp.pop %v5772
        %v5838 = vmul.f32 1.0, %v5837
        %v5839 = vrcp.pop %v5773
        %v5840 = vmul.f32 1.0, %v5839
        %v5841 = vrcp.pop %v5774
        %v5842 = vmul.f32 1.0, %v5841
        %v5843 = vrcp.pop %v5775
        %v5844 = vmul.f32 1.0, %v5843
        %v5845 = vrcp.pop %v5776
        %v5846 = vmul.f32 1.0, %v5845
        %v5847 = vrcp.pop %v5777
        %v5848 = vmul.f32 1.0, %v5847
        %v5849 = vrcp.pop %v5778
        %v5850 = vmul.f32 1.0, %v5849
        %v5851 = vrcp.pop %v5779
        %v5852 = vmul.f32 1.0, %v5851
        %v5853 = vrcp.pop %v5780
        %v5854 = vmul.f32 1.0, %v5853
        %v5855 = vrcp.pop %v5781
        %v5856 = vmul.f32 1.0, %v5855
        %v5857 = vrcp.pop %v5782
        %v5858 = vmul.f32 1.0, %v5857
        %v5859 = vrcp.pop %v5783
        %v5860 = vmul.f32 1.0, %v5859
        %v5861 = vrcp.pop %v5784
        %v5862 = vmul.f32 1.0, %v5861
        %v5863 = vrcp.pop %v5785
        %v5864 = vmul.f32 1.0, %v5863
        %v5865 = vrcp.pop %v5786
        %v5866 = vmul.f32 1.0, %v5865
        %v5867 = vrcp.pop %v5787
        %v5868 = vmul.f32 1.0, %v5867
        %v5869 = vrcp.pop %v5788
        %v5870 = vmul.f32 1.0, %v5869
        %v5871 = vrcp.pop %v5789
        %v5872 = vmul.f32 1.0, %v5871
        %v5873 = vrcp.pop %v5790
        %v5874 = vmul.f32 1.0, %v5873
        %v5875 = vrcp.pop %v5791
        %v5876 = vmul.f32 1.0, %v5875
        %v5877 = vrcp.pop %v5792
        %v5878 = vmul.f32 1.0, %v5877
        %v5879 = vrcp.pop %v5793
        %v5880 = vmul.f32 1.0, %v5879
        %v5881 = vrcp.pop %v5794
        %v5882 = vmul.f32 1.0, %v5881
        %v5883 = vrcp.pop %v5795
        %v5884 = vmul.f32 1.0, %v5883
        %v5885 = vrcp.pop %v5796
        %v5886 = vmul.f32 1.0, %v5885
        %v5887 = vrcp.pop %v5797
        %v5888 = vmul.f32 1.0, %v5887
        %v5889 = vrcp.pop %v5798
        %v5890 = vmul.f32 1.0, %v5889
        %v5891 = vrcp.pop %v5799
        %v5892 = vmul.f32 1.0, %v5891
        %v5893 = vrcp.pop %v5800
        %v5894 = vmul.f32 1.0, %v5893
        %v5895 = vrcp.pop %v5801
        %v5896 = vmul.f32 1.0, %v5895
        %v5897 = vrcp.pop %v5802
        %v5898 = vmul.f32 1.0, %v5897
        %v5899 = vmul.f32 %v5563, %v5804
        %v5900 = vmul.f32 %v5564, %v5806
        %v5901 = vmul.f32 %v5565, %v5808
        %v5902 = vmul.f32 %v5566, %v5810
        %v5903 = vmul.f32 %v5567, %v5812
        %v5904 = vmul.f32 %v5568, %v5814
        %v5905 = vmul.f32 %v5569, %v5816
        %v5906 = vmul.f32 %v5570, %v5818
        %v5907 = vmul.f32 %v5571, %v5820
        %v5908 = vmul.f32 %v5572, %v5822
        %v5909 = vmul.f32 %v5573, %v5824
        %v5910 = vmul.f32 %v5574, %v5826
        %v5911 = vmul.f32 %v5575, %v5828
        %v5912 = vmul.f32 %v5576, %v5830
        %v5913 = vmul.f32 %v5577, %v5832
        %v5914 = vmul.f32 %v5578, %v5834
        %v5915 = vmul.f32 %v5579, %v5836
        %v5916 = vmul.f32 %v5580, %v5838
        %v5917 = vmul.f32 %v5581, %v5840
        %v5918 = vmul.f32 %v5582, %v5842
        %v5919 = vmul.f32 %v5583, %v5844
        %v5920 = vmul.f32 %v5584, %v5846
        %v5921 = vmul.f32 %v5585, %v5848
        %v5922 = vmul.f32 %v5586, %v5850
        %v5923 = vmul.f32 %v5587, %v5852
        %v5924 = vmul.f32 %v5588, %v5854
        %v5925 = vmul.f32 %v5589, %v5856
        %v5926 = vmul.f32 %v5590, %v5858
        %v5927 = vmul.f32 %v5591, %v5860
        %v5928 = vmul.f32 %v5592, %v5862
        %v5929 = vmul.f32 %v5593, %v5864
        %v5930 = vmul.f32 %v5594, %v5866
        %v5931 = vmul.f32 %v5595, %v5868
        %v5932 = vmul.f32 %v5596, %v5870
        %v5933 = vmul.f32 %v5597, %v5872
        %v5934 = vmul.f32 %v5598, %v5874
        %v5935 = vmul.f32 %v5599, %v5876
        %v5936 = vmul.f32 %v5600, %v5878
        %v5937 = vmul.f32 %v5601, %v5880
        %v5938 = vmul.f32 %v5602, %v5882
        %v5939 = vmul.f32 %v5603, %v5884
        %v5940 = vmul.f32 %v5604, %v5886
        %v5941 = vmul.f32 %v5605, %v5888
        %v5942 = vmul.f32 %v5606, %v5890
        %v5943 = vmul.f32 %v5607, %v5892
        %v5944 = vmul.f32 %v5608, %v5894
        %v5945 = vmul.f32 %v5609, %v5896
        %v5946 = vmul.f32 %v5610, %v5898
        %5947 = vst [vmem:[%s296] sm:$0xff] %v5899
        %5948 = vst [vmem:[%s296 + $0x8] sm:$0xff] %v5900
        %5949 = vst [vmem:[%s296 + $0x10] sm:$0xff] %v5901
        %5950 = vst [vmem:[%s296 + $0x18] sm:$0xff] %v5902
        %5951 = vst [vmem:[%s296 + $0x20] sm:$0xff] %v5903
        %5952 = vst [vmem:[%s296 + $0x28] sm:$0xff] %v5904
        %5953 = vst [vmem:[%s296 + $0x30] sm:$0xff] %v5905
        %5954 = vst [vmem:[%s296 + $0x38] sm:$0xff] %v5906
        %5955 = vst [vmem:[%s296 + $0x40] sm:$0xff] %v5907
        %5956 = vst [vmem:[%s296 + $0x48] sm:$0xff] %v5908
        %5957 = vst [vmem:[%s296 + $0x50] sm:$0xff] %v5909
        %5958 = vst [vmem:[%s296 + $0x58] sm:$0xff] %v5910
        %5959 = vst [vmem:[%s296 + $0x60] sm:$0xff] %v5911
        %5960 = vst [vmem:[%s296 + $0x68] sm:$0xff] %v5912
        %5961 = vst [vmem:[%s296 + $0x70] sm:$0xff] %v5913
        %5962 = vst [vmem:[%s296 + $0x78] sm:$0xff] %v5914
        %5963 = vst [vmem:[%s296 + $0x80] sm:$0xff] %v5915
        %5964 = vst [vmem:[%s296 + $0x88] sm:$0xff] %v5916
        %5965 = vst [vmem:[%s296 + $0x90] sm:$0xff] %v5917
        %5966 = vst [vmem:[%s296 + $0x98] sm:$0xff] %v5918
        %5967 = vst [vmem:[%s296 + $0xa0] sm:$0xff] %v5919
        %5968 = vst [vmem:[%s296 + $0xa8] sm:$0xff] %v5920
        %5969 = vst [vmem:[%s296 + $0xb0] sm:$0xff] %v5921
        %5970 = vst [vmem:[%s296 + $0xb8] sm:$0xff] %v5922
        %5971 = vst [vmem:[%s296 + $0xc0] sm:$0xff] %v5923
        %5972 = vst [vmem:[%s296 + $0xc8] sm:$0xff] %v5924
        %5973 = vst [vmem:[%s296 + $0xd0] sm:$0xff] %v5925
        %5974 = vst [vmem:[%s296 + $0xd8] sm:$0xff] %v5926
        %5975 = vst [vmem:[%s296 + $0xe0] sm:$0xff] %v5927
        %5976 = vst [vmem:[%s296 + $0xe8] sm:$0xff] %v5928
        %5977 = vst [vmem:[%s296 + $0xf0] sm:$0xff] %v5929
        %5978 = vst [vmem:[%s296 + $0xf8] sm:$0xff] %v5930
        %5979 = vst [vmem:[%s296 + $0x100] sm:$0xff] %v5931
        %5980 = vst [vmem:[%s296 + $0x108] sm:$0xff] %v5932
        %5981 = vst [vmem:[%s296 + $0x110] sm:$0xff] %v5933
        %5982 = vst [vmem:[%s296 + $0x118] sm:$0xff] %v5934
        %5983 = vst [vmem:[%s296 + $0x120] sm:$0xff] %v5935
        %5984 = vst [vmem:[%s296 + $0x128] sm:$0xff] %v5936
        %5985 = vst [vmem:[%s296 + $0x130] sm:$0xff] %v5937
        %5986 = vst [vmem:[%s296 + $0x138] sm:$0xff] %v5938
        %5987 = vst [vmem:[%s296 + $0x140] sm:$0xff] %v5939
        %5988 = vst [vmem:[%s296 + $0x148] sm:$0xff] %v5940
        %5989 = vst [vmem:[%s296 + $0x150] sm:$0xff] %v5941
        %5990 = vst [vmem:[%s296 + $0x158] sm:$0xff] %v5942
        %5991 = vst [vmem:[%s296 + $0x160] sm:$0xff] %v5943
        %5992 = vst [vmem:[%s296 + $0x168] sm:$0xff] %v5944
        %5993 = vst [vmem:[%s296 + $0x170] sm:$0xff] %v5945
        %5994 = vst [vmem:[%s296 + $0x178] sm:$0xff] %v5946
        %s5995 = sand.u32 %s142, 1
        %s5996 = scalar_lea.sflag [#allocation5], %s5995
        %s5997 = sand.u32 %s142, 1
        %s5998 = smul.addr %s5997, 384
        %s5999 = scalar_lea.vmem [#allocation12], %s5998
        // Predicated region
        $region65: #{tpu_custom_call.1} parent=39 // pred_check
          %p6000 = pneg %p152
        $region66: #{tpu_custom_call.1} parent=39 // pred_check_branch
          %6002 = sbr.rel (%p6000) target = $region68
        $region67: #{tpu_custom_call.1} parent=39 // pred_region
          %s6004 = ssub.s32 6144, 6144
          %6005 = vsyncadd %s5996, %s6004
          %s6006 = smul.addr %s24, 48
          %s6007 = smul.addr %s6006, 128
          %s6008 = scalar_lea.hbm %s5, %s6007
          %s6009 = sshll.u32 %s5999, 4
          %s6010 = int_to_ptr.vmem [resolvable:$true] %s6009
          %6015 = dma.vmem_to_hbm [thread:$0]  %s6010, 6144, %s6008, %s5996, 128, 128, 8
        $region68: #{tpu_custom_call.1} parent=39 // pred_fallthru
          _
      $region40: #{tpu_custom_call.1} parent=5 // pred_fallthru
        _
      %p6016 = scmp.le.s32.totalorder 2, %s19
      // Predicated region
      $region69: #{tpu_custom_call.1} parent=5 // pred_check
        %p6017 = pneg %p6016
      $region70: #{tpu_custom_call.1} parent=5 // pred_check_branch
        %6019 = sbr.rel (%p6017) target = $region72
      $region71: #{tpu_custom_call.1} parent=5 // pred_region
        %s6020 = ssub.s32 %s19, 2
        // Predicated region
        $region73: #{tpu_custom_call.1} parent=71 // pred_check
          %p6021 = pneg %p158
        $region74: #{tpu_custom_call.1} parent=71 // pred_check_branch
          %6023 = sbr.rel (%p6021) target = $region76
        $region75: #{tpu_custom_call.1} parent=71 // pred_region
          %s6024 = sand.u32 %s143, 1
          %s6025 = scalar_lea.sflag [#allocation5], %s6024
          %s6026 = sand.u32 %s143, 1
          %s6027 = smul.addr %s6026, 384
          %s6028 = scalar_lea.vmem [#allocation12], %s6027
          %6029 = dma.done %s6025, 6144
        $region76: #{tpu_custom_call.1} parent=71 // pred_fallthru
          _
      $region72: #{tpu_custom_call.1} parent=5 // pred_fallthru
        _
    $region6: #{tpu_custom_call.1} parent=1 // loop_footer
      %s23 = sadd.s32 1, %s19
    $region7: #{tpu_custom_call.1} parent=1 // loop_footer_branch
      %18 = sbr.rel target = $region3
    $region8: #{tpu_custom_call.1} parent=1 // loop_exit
      _
    %6030 = vsyncpa [#allocation4], 1
    %s6031 = scalar_lea.sflag [#allocation4], 1
    %6032 = vsyncpa %s6031, 1
    %6033 = vsyncpa [#allocation7], 1
    %6034 = vsyncpa [#allocation10], 1
    %6035 = vsyncpa [#allocation5], 1
    %s6036 = scalar_lea.sflag [#allocation5], 1
    %6037 = vsyncpa %s6036, 1

</llo_original>
